<compile_context>
chip_gen: v5e
topology: v5e:2x2
jax: 0.10.0
libtpu: 0.0.40
codegen_flags: <defaults>
</compile_context>

<pallas_src>
import functools

import jax
import jax.numpy as jnp
from jax.experimental import pallas as pl
from jax.experimental.pallas import tpu as pltpu

# Full-precision f32 matmuls everywhere (kernel MXU passes and XLA reference)
# so the numerical check below is meaningful.
jax.config.update("jax_default_matmul_precision", "highest")

D_MODEL = 32
KERNEL_SIZE = 3
DILATIONS = (1, 2, 4, 8, 16)
LN_EPS = 1e-5
PAD = max(DILATIONS)  # (kernel_size - 1) * dilation // 2 == dilation for k=3

# distinct shifted-slice offsets into the zero-padded sequence (11 of them)
OFFSETS = tuple(sorted({PAD + (k - 1) * d
                        for d in DILATIONS for k in range(KERNEL_SIZE)}))
N_TAPS = len(OFFSETS)
N_DIL = len(DILATIONS)


# ---------------------------------------------------------------------------
# Pallas kernel
# ---------------------------------------------------------------------------
def _tcn_kernel(x_ref, wconv_ref, convb_ref, wproj_ref, projb_ref,
                gamma_ref, beta_ref, out_ref, *, seq_len, pad, b_blk):
    # x_ref     : (Bblk, L, D)          input sequences (unpadded)
    # wconv_ref : (N_TAPS*D, N_DIL*D)   packed (zero-filled) conv weights
    # convb_ref : (1, N_DIL*D)          packed conv biases
    # wproj_ref : (N_DIL*D, D)          out_proj weight (transposed)
    # projb_ref : (1, D)
    # gamma_ref / beta_ref : (1, D)     LayerNorm affine
    # out_ref   : (1, L, Bblk*D)        lane-dense packed output
    L = seq_len
    Bb = b_blk
    D = x_ref.shape[-1]

    x = x_ref[...]                                          # (Bb, L, D) f32

    # zero-pad the time axis in VMEM (no HBM pad copy)
    zpad = jnp.zeros((Bb, pad, D), jnp.float32)
    x_pad = jnp.concatenate([zpad, x, zpad], axis=1)        # (Bb, L+2*pad, D)

    # tap matrix: one shifted copy per distinct offset, built once per block.
    # (sublane-misaligned slices are paid a single time here, not per matmul)
    taps = jnp.concatenate([x_pad[:, off:off + L, :] for off in OFFSETS],
                           axis=-1)                         # (Bb, L, N_TAPS*D)
    taps2d = taps.reshape(Bb * L, N_TAPS * D)               # (Bb*L, 352)

    # all 5 dilated convs in ONE MXU matmul (K = 352, N = 160)
    h = jnp.dot(taps2d, wconv_ref[...],
                preferred_element_type=jnp.float32,
                precision=jax.lax.Precision.HIGHEST)
    h = jnp.maximum(h + convb_ref[...], 0.0)                # bias + ReLU

    # concat-over-dilations + out_proj Linear == one (K=160, N=32) matmul
    o = jnp.dot(h, wproj_ref[...],
                preferred_element_type=jnp.float32,
                precision=jax.lax.Precision.HIGHEST)
    o = o + projb_ref[...]                                  # (Bb*L, D)

    # LayerNorm over D (float32)
    mean = jnp.mean(o, axis=-1, keepdims=True)
    var = jnp.mean((o - mean) ** 2, axis=-1, keepdims=True)
    o = (o - mean) * jax.lax.rsqrt(var + LN_EPS)
    o = o * gamma_ref[...] + beta_ref[...]

    # dropout == identity (eval mode); residual add with the original input
    o = o + x.reshape(Bb * L, D)

    # lane-dense packed store: (L, Bblk*D) with Bblk*D a multiple of 128
    packed = jnp.concatenate([o[b * L:(b + 1) * L, :] for b in range(Bb)],
                             axis=-1)                       # (L, Bb*D)
    out_ref[0] = packed.astype(out_ref.dtype)


# ---------------------------------------------------------------------------
# Wrapper
# ---------------------------------------------------------------------------
def tcn_forward(x, params, *, b_blk=4):
    """x: (B, L, D) float32 -> (B, L, D) float32."""
    B, L, D = x.shape
    b_blk = min(b_blk, B)
    assert B % b_blk == 0, "batch must be divisible by the batch block"
    G = B // b_blk

    wconv = params["wconv_packed"]           # (N_TAPS*D, N_DIL*D)
    convb = params["conv_b_packed"]          # (1, N_DIL*D)
    wproj = params["wproj_packed"]           # (N_DIL*D, D)
    projb = params["proj_b"].reshape(1, D)
    gamma = params["gamma"].reshape(1, D)
    beta = params["beta"].reshape(1, D)

    kernel = functools.partial(_tcn_kernel, seq_len=L, pad=PAD, b_blk=b_blk)

    out_packed = pl.pallas_call(
        kernel,
        out_shape=jax.ShapeDtypeStruct((G, L, b_blk * D), x.dtype),
        grid_spec=pltpu.PrefetchScalarGridSpec(
            num_scalar_prefetch=0,
            grid=(G,),
            in_specs=[
                pl.BlockSpec((b_blk, L, D), lambda g: (g, 0, 0)),
                pl.BlockSpec((N_TAPS * D, N_DIL * D), lambda g: (0, 0)),
                pl.BlockSpec((1, N_DIL * D), lambda g: (0, 0)),
                pl.BlockSpec((N_DIL * D, D), lambda g: (0, 0)),
                pl.BlockSpec((1, D), lambda g: (0, 0)),
                pl.BlockSpec((1, D), lambda g: (0, 0)),
                pl.BlockSpec((1, D), lambda g: (0, 0)),
            ],
            out_specs=pl.BlockSpec((1, L, b_blk * D), lambda g: (g, 0, 0)),
        ),
        compiler_params=pltpu.CompilerParams(
            dimension_semantics=("parallel",)),
    )(x, wconv, convb, wproj, projb, gamma, beta)

    # un-pack the lane-dense output: (G, L, Bblk*D) -> (B, L, D)
    out = out_packed.reshape(G, L, b_blk, D).transpose(0, 2, 1, 3)
    return out.reshape(B, L, D)


# ---------------------------------------------------------------------------
# Weight packing (done once, outside the kernel)
# ---------------------------------------------------------------------------
def _pack_conv_weights(conv_w_raw):
    """(n_dil, D, D, K) torch (out,in,k) layout -> (N_TAPS*D, N_DIL*D)."""
    n_dil, D, _, K = conv_w_raw.shape
    w = jnp.zeros((N_TAPS * D, n_dil * D), jnp.float32)
    for i, dil in enumerate(DILATIONS):
        for k in range(K):
            j = OFFSETS.index(PAD + (k - 1) * dil)
            w = w.at[j * D:(j + 1) * D, i * D:(i + 1) * D].set(
                conv_w_raw[i, :, :, k].T)        # (ci, co)
    return w


# ---------------------------------------------------------------------------
# Deterministic parameter init (synthetic, matches nn.Module shapes)
# ---------------------------------------------------------------------------
def init_params(key, d_model):
    n_dil = N_DIL
    keys = jax.random.split(key, 2 * n_dil + 2)
    conv_w_raw, conv_b = [], []
    for i in range(n_dil):
        conv_w_raw.append(0.1 * jax.random.normal(
            keys[2 * i], (d_model, d_model, KERNEL_SIZE), jnp.float32))
        conv_b.append(0.1 * jax.random.normal(
            keys[2 * i + 1], (d_model,), jnp.float32))
    conv_w_raw = jnp.stack(conv_w_raw)                     # (n_dil, D, D, 3)
    conv_b = jnp.stack(conv_b)                             # (n_dil, D)
    proj_w_raw = 0.1 * jax.random.normal(
        keys[-2], (d_model, d_model * n_dil), jnp.float32)  # torch Linear (D, 5D)
    proj_b = 0.1 * jax.random.normal(keys[-1], (d_model,), jnp.float32)
    gamma = jnp.ones((d_model,), jnp.float32)
    beta = jnp.zeros((d_model,), jnp.float32)

    return {
        # torch-layout (for the reference)
        "conv_w_raw": conv_w_raw, "conv_b": conv_b,
        "proj_w_raw": proj_w_raw, "proj_b": proj_b,
        "gamma": gamma, "beta": beta,
        # kernel-friendly packed layouts
        "wconv_packed": _pack_conv_weights(conv_w_raw),        # (352, 160)
        "conv_b_packed": conv_b.reshape(1, n_dil * d_model),   # (1, 160)
        "wproj_packed": proj_w_raw.T,                          # (160, 32)
    }


# ---------------------------------------------------------------------------
# Pure-JAX reference (mirrors the PyTorch forward)
# ---------------------------------------------------------------------------
def ref_forward(x, params):
    xt = jnp.transpose(x, (0, 2, 1))  # (B, D, L)  == x.transpose(1, 2)
    outs = []
    for i, dil in enumerate(DILATIONS):
        w = params["conv_w_raw"][i]   # (D, D, 3)  OIW
        b = params["conv_b"][i]
        y = jax.lax.conv_general_dilated(
            xt, w, window_strides=(1,), padding=[(dil, dil)],
            rhs_dilation=(dil,), dimension_numbers=("NCH", "OIH", "NCH"),
            precision=jax.lax.Precision.HIGHEST)
        y = y + b[None, :, None]
        outs.append(jax.nn.relu(y))
    comb = jnp.concatenate(outs, axis=1)           # (B, 5D, L)
    comb = jnp.transpose(comb, (0, 2, 1))          # (B, L, 5D)
    o = jnp.dot(comb, params["proj_w_raw"].T,
                precision=jax.lax.Precision.HIGHEST) + params["proj_b"]
    mean = o.mean(-1, keepdims=True)
    var = ((o - mean) ** 2).mean(-1, keepdims=True)
    o = (o - mean) / jnp.sqrt(var + LN_EPS) * params["gamma"] + params["beta"]
    return o + x  # dropout = identity (eval)


if __name__ == "__main__":
    key = jax.random.PRNGKey(0)
    k_x, k_p = jax.random.split(key)

    B, L, D = 8, 32, D_MODEL
    x = jax.random.normal(k_x, (B, L, D), jnp.float32)
    params = init_params(k_p, D)

    fwd = jax.jit(functools.partial(tcn_forward, b_blk=4))
    out = jax.block_until_ready(fwd(x, params))
    ref = jax.block_until_ready(ref_forward(x, params))

    assert out.shape == (B, L, D)
    assert jnp.allclose(out, ref, atol=1e-3, rtol=1e-3), (
        float(jnp.max(jnp.abs(out - ref))))

    print("KERNEL_OK")
</pallas_src>

<mosaic_0001>
module attributes {stable_mosaic.version = 11 : i64} {
  func.func @_tcn_kernel(%arg0: i32, %arg1: memref<4x32x32xf32, #tpu.memory_space<vmem>>, %arg2: memref<352x160xf32, #tpu.memory_space<vmem>>, %arg3: memref<1x160xf32, #tpu.memory_space<vmem>>, %arg4: memref<160x32xf32, #tpu.memory_space<vmem>>, %arg5: memref<1x32xf32, #tpu.memory_space<vmem>>, %arg6: memref<1x32xf32, #tpu.memory_space<vmem>>, %arg7: memref<1x32xf32, #tpu.memory_space<vmem>>, %arg8: memref<1x32x128xf32, #tpu.memory_space<vmem>>) attributes {dimension_semantics = [#tpu.dimension_semantics<parallel>], iteration_bounds = array<i64: 2>, scalar_prefetch = 0 : i64, scratch_operands = 0 : i64, tpu.core_type = #tpu.core_type<tc>, window_params = [{transform_indices = @transform_0, window_bounds = array<i64: 4, 32, 32>}, {pipeline_mode = #tpu.pipeline_mode<synchronous>, transform_indices = @transform_1, window_bounds = array<i64: 352, 160>}, {pipeline_mode = #tpu.pipeline_mode<synchronous>, transform_indices = @transform_2, window_bounds = array<i64: 1, 160>}, {pipeline_mode = #tpu.pipeline_mode<synchronous>, transform_indices = @transform_3, window_bounds = array<i64: 160, 32>}, {pipeline_mode = #tpu.pipeline_mode<synchronous>, transform_indices = @transform_4, window_bounds = array<i64: 1, 32>}, {pipeline_mode = #tpu.pipeline_mode<synchronous>, transform_indices = @transform_5, window_bounds = array<i64: 1, 32>}, {pipeline_mode = #tpu.pipeline_mode<synchronous>, transform_indices = @transform_6, window_bounds = array<i64: 1, 32>}, {transform_indices = @transform_7, window_bounds = array<i64: 1, 32, 128>}]} {
    %c0 = arith.constant 0 : index
    %c0_0 = arith.constant 0 : index
    %c0_1 = arith.constant 0 : index
    %0 = vector.load %arg1[%c0, %c0_0, %c0_1] : memref<4x32x32xf32, #tpu.memory_space<vmem>>, vector<4x32x32xf32>
    %cst = arith.constant 0.000000e+00 : f32
    %1 = vector.broadcast %cst : f32 to vector<4x16x32xf32>
    %2 = tpu.concatenate %1, %0, %1 in 1 : vector<4x16x32xf32>, vector<4x32x32xf32>, vector<4x16x32xf32> -> vector<4x64x32xf32>
    %3 = vector.extract_strided_slice %2 {offsets = [0, 0, 0], sizes = [4, 32, 32], strides = [1, 1, 1]} : vector<4x64x32xf32> to vector<4x32x32xf32>
    %4 = vector.extract_strided_slice %2 {offsets = [0, 8, 0], sizes = [4, 32, 32], strides = [1, 1, 1]} : vector<4x64x32xf32> to vector<4x32x32xf32>
    %5 = vector.extract_strided_slice %2 {offsets = [0, 12, 0], sizes = [4, 32, 32], strides = [1, 1, 1]} : vector<4x64x32xf32> to vector<4x32x32xf32>
    %6 = vector.extract_strided_slice %2 {offsets = [0, 14, 0], sizes = [4, 32, 32], strides = [1, 1, 1]} : vector<4x64x32xf32> to vector<4x32x32xf32>
    %7 = vector.extract_strided_slice %2 {offsets = [0, 15, 0], sizes = [4, 32, 32], strides = [1, 1, 1]} : vector<4x64x32xf32> to vector<4x32x32xf32>
    %8 = vector.extract_strided_slice %2 {offsets = [0, 16, 0], sizes = [4, 32, 32], strides = [1, 1, 1]} : vector<4x64x32xf32> to vector<4x32x32xf32>
    %9 = vector.extract_strided_slice %2 {offsets = [0, 17, 0], sizes = [4, 32, 32], strides = [1, 1, 1]} : vector<4x64x32xf32> to vector<4x32x32xf32>
    %10 = vector.extract_strided_slice %2 {offsets = [0, 18, 0], sizes = [4, 32, 32], strides = [1, 1, 1]} : vector<4x64x32xf32> to vector<4x32x32xf32>
    %11 = vector.extract_strided_slice %2 {offsets = [0, 20, 0], sizes = [4, 32, 32], strides = [1, 1, 1]} : vector<4x64x32xf32> to vector<4x32x32xf32>
    %12 = vector.extract_strided_slice %2 {offsets = [0, 24, 0], sizes = [4, 32, 32], strides = [1, 1, 1]} : vector<4x64x32xf32> to vector<4x32x32xf32>
    %13 = vector.extract_strided_slice %2 {offsets = [0, 32, 0], sizes = [4, 32, 32], strides = [1, 1, 1]} : vector<4x64x32xf32> to vector<4x32x32xf32>
    %14 = tpu.concatenate %3, %4, %5, %6, %7, %8, %9, %10, %11, %12, %13 in 2 : vector<4x32x32xf32>, vector<4x32x32xf32>, vector<4x32x32xf32>, vector<4x32x32xf32>, vector<4x32x32xf32>, vector<4x32x32xf32>, vector<4x32x32xf32>, vector<4x32x32xf32>, vector<4x32x32xf32>, vector<4x32x32xf32>, vector<4x32x32xf32> -> vector<4x32x352xf32>
    %15 = vector.shape_cast %14 : vector<4x32x352xf32> to vector<128x352xf32>
    %c0_2 = arith.constant 0 : index
    %c0_3 = arith.constant 0 : index
    %16 = vector.load %arg2[%c0_2, %c0_3] : memref<352x160xf32, #tpu.memory_space<vmem>>, vector<352x160xf32>
    %cst_4 = arith.constant dense<0.000000e+00> : vector<128x160xf32>
    %17 = tpu.matmul %15, %16, %cst_4 {dimension_numbers = #tpu.dot_dimension_numbers<[1], [0], [0], [1], [0, 0, 1, 1], [], []>, precision = #tpu.contract_precision<fp32>} : vector<128x352xf32>, vector<352x160xf32>, vector<128x160xf32> -> vector<128x160xf32>
    %c0_5 = arith.constant 0 : index
    %c0_6 = arith.constant 0 : index
    %18 = vector.load %arg3[%c0_5, %c0_6] : memref<1x160xf32, #tpu.memory_space<vmem>>, vector<1x160xf32>
    %19 = vector.broadcast %18 : vector<1x160xf32> to vector<128x160xf32>
    %20 = arith.addf %17, %19 : vector<128x160xf32>
    %cst_7 = arith.constant 0.000000e+00 : f32
    %21 = vector.broadcast %cst_7 : f32 to vector<128x160xf32>
    %22 = arith.maximumf %20, %21 : vector<128x160xf32>
    %c0_8 = arith.constant 0 : index
    %c0_9 = arith.constant 0 : index
    %23 = vector.load %arg4[%c0_8, %c0_9] : memref<160x32xf32, #tpu.memory_space<vmem>>, vector<160x32xf32>
    %cst_10 = arith.constant dense<0.000000e+00> : vector<128x32xf32>
    %24 = tpu.matmul %22, %23, %cst_10 {dimension_numbers = #tpu.dot_dimension_numbers<[1], [0], [0], [1], [0, 0, 1, 1], [], []>, precision = #tpu.contract_precision<fp32>} : vector<128x160xf32>, vector<160x32xf32>, vector<128x32xf32> -> vector<128x32xf32>
    %c0_11 = arith.constant 0 : index
    %c0_12 = arith.constant 0 : index
    %25 = vector.load %arg5[%c0_11, %c0_12] : memref<1x32xf32, #tpu.memory_space<vmem>>, vector<1x32xf32>
    %26 = vector.broadcast %25 : vector<1x32xf32> to vector<128x32xf32>
    %27 = arith.addf %24, %26 : vector<128x32xf32>
    %cst_13 = arith.constant dense<0.000000e+00> : vector<128xf32>
    %28 = vector.multi_reduction <add>, %27, %cst_13 [1] : vector<128x32xf32> to vector<128xf32>
    %29 = vector.shape_cast %28 : vector<128xf32> to vector<128x1xf32>
    %cst_14 = arith.constant 3.200000e+01 : f32
    %30 = vector.broadcast %cst_14 : f32 to vector<128x1xf32>
    %31 = arith.divf %29, %30 : vector<128x1xf32>
    %32 = vector.broadcast %31 : vector<128x1xf32> to vector<128x32xf32>
    %33 = arith.subf %27, %32 : vector<128x32xf32>
    %34 = arith.mulf %33, %33 : vector<128x32xf32>
    %cst_15 = arith.constant dense<0.000000e+00> : vector<128xf32>
    %35 = vector.multi_reduction <add>, %34, %cst_15 [1] : vector<128x32xf32> to vector<128xf32>
    %36 = vector.shape_cast %35 : vector<128xf32> to vector<128x1xf32>
    %cst_16 = arith.constant 3.200000e+01 : f32
    %37 = vector.broadcast %cst_16 : f32 to vector<128x1xf32>
    %38 = arith.divf %36, %37 : vector<128x1xf32>
    %39 = vector.broadcast %31 : vector<128x1xf32> to vector<128x32xf32>
    %40 = arith.subf %27, %39 : vector<128x32xf32>
    %cst_17 = arith.constant 9.99999974E-6 : f32
    %41 = vector.broadcast %cst_17 : f32 to vector<128x1xf32>
    %42 = arith.addf %38, %41 : vector<128x1xf32>
    %43 = math.rsqrt %42 : vector<128x1xf32>
    %44 = vector.broadcast %43 : vector<128x1xf32> to vector<128x32xf32>
    %45 = arith.mulf %40, %44 : vector<128x32xf32>
    %c0_18 = arith.constant 0 : index
    %c0_19 = arith.constant 0 : index
    %46 = vector.load %arg6[%c0_18, %c0_19] : memref<1x32xf32, #tpu.memory_space<vmem>>, vector<1x32xf32>
    %47 = vector.broadcast %46 : vector<1x32xf32> to vector<128x32xf32>
    %48 = arith.mulf %45, %47 : vector<128x32xf32>
    %c0_20 = arith.constant 0 : index
    %c0_21 = arith.constant 0 : index
    %49 = vector.load %arg7[%c0_20, %c0_21] : memref<1x32xf32, #tpu.memory_space<vmem>>, vector<1x32xf32>
    %50 = vector.broadcast %49 : vector<1x32xf32> to vector<128x32xf32>
    %51 = arith.addf %48, %50 : vector<128x32xf32>
    %52 = vector.shape_cast %0 : vector<4x32x32xf32> to vector<128x32xf32>
    %53 = arith.addf %51, %52 : vector<128x32xf32>
    %54 = vector.extract_strided_slice %53 {offsets = [0, 0], sizes = [32, 32], strides = [1, 1]} : vector<128x32xf32> to vector<32x32xf32>
    %55 = vector.extract_strided_slice %53 {offsets = [32, 0], sizes = [32, 32], strides = [1, 1]} : vector<128x32xf32> to vector<32x32xf32>
    %56 = vector.extract_strided_slice %53 {offsets = [64, 0], sizes = [32, 32], strides = [1, 1]} : vector<128x32xf32> to vector<32x32xf32>
    %57 = vector.extract_strided_slice %53 {offsets = [96, 0], sizes = [32, 32], strides = [1, 1]} : vector<128x32xf32> to vector<32x32xf32>
    %58 = tpu.concatenate %54, %55, %56, %57 in 1 : vector<32x32xf32>, vector<32x32xf32>, vector<32x32xf32>, vector<32x32xf32> -> vector<32x128xf32>
    %c0_22 = arith.constant 0 : index
    %c0_23 = arith.constant 0 : index
    %c0_24 = arith.constant 0 : index
    %59 = vector.load %arg8[%c0_22, %c0_23, %c0_24] : memref<1x32x128xf32, #tpu.memory_space<vmem>>, vector<1x32x128xf32>
    %60 = vector.shape_cast %59 : vector<1x32x128xf32> to vector<32x128xf32>
    %61 = vector.shape_cast %58 : vector<32x128xf32> to vector<1x32x128xf32>
    tpu.vector_store %arg8[%c0_22, %c0_23, %c0_24], %61 {strides = array<i32>} : memref<1x32x128xf32, #tpu.memory_space<vmem>>, vector<1x32x128xf32>,
    return
  }
  func.func @transform_0(%arg0: i32) -> (i32, i32, i32) {
    %c0_i32 = arith.constant 0 : i32
    %c0_i32_0 = arith.constant 0 : i32
    %c0_i32_1 = arith.constant 0 : i32
    return %arg0, %c0_i32, %c0_i32_0 : i32, i32, i32
  }
  func.func @transform_1(%arg0: i32) -> (i32, i32) {
    %c0_i32 = arith.constant 0 : i32
    %c0_i32_0 = arith.constant 0 : i32
    %c0_i32_1 = arith.constant 0 : i32
    return %c0_i32, %c0_i32_0 : i32, i32
  }
  func.func @transform_2(%arg0: i32) -> (i32, i32) {
    %c0_i32 = arith.constant 0 : i32
    %c0_i32_0 = arith.constant 0 : i32
    %c0_i32_1 = arith.constant 0 : i32
    return %c0_i32, %c0_i32_0 : i32, i32
  }
  func.func @transform_3(%arg0: i32) -> (i32, i32) {
    %c0_i32 = arith.constant 0 : i32
    %c0_i32_0 = arith.constant 0 : i32
    %c0_i32_1 = arith.constant 0 : i32
    return %c0_i32, %c0_i32_0 : i32, i32
  }
  func.func @transform_4(%arg0: i32) -> (i32, i32) {
    %c0_i32 = arith.constant 0 : i32
    %c0_i32_0 = arith.constant 0 : i32
    %c0_i32_1 = arith.constant 0 : i32
    return %c0_i32, %c0_i32_0 : i32, i32
  }
  func.func @transform_5(%arg0: i32) -> (i32, i32) {
    %c0_i32 = arith.constant 0 : i32
    %c0_i32_0 = arith.constant 0 : i32
    %c0_i32_1 = arith.constant 0 : i32
    return %c0_i32, %c0_i32_0 : i32, i32
  }
  func.func @transform_6(%arg0: i32) -> (i32, i32) {
    %c0_i32 = arith.constant 0 : i32
    %c0_i32_0 = arith.constant 0 : i32
    %c0_i32_1 = arith.constant 0 : i32
    return %c0_i32, %c0_i32_0 : i32, i32
  }
  func.func @transform_7(%arg0: i32) -> (i32, i32, i32) {
    %c0_i32 = arith.constant 0 : i32
    %c0_i32_0 = arith.constant 0 : i32
    %c0_i32_1 = arith.constant 0 : i32
    return %arg0, %c0_i32, %c0_i32_0 : i32, i32, i32
  }
}

</mosaic_0001>

<llo_original>
// kernel: tcn_forward.1
$region0: #{tcn_forward.1}
  #allocation0 [shape = 'u32[]', space=smem, size = 0x4, offset = 0x4, fixed_abs, tag = 'smem constant byte address 0x4 - core index']
  #allocation1 [shape = 'u32[72,128]{1,0:T(1,128)}', space=vmem, size = 0x9000, scoped, tag = 'internal scratch']
  %s0 = inlined_call_operand.vmem [shape: f32[8,32,32], index: 0, kind: input, shape index: {}]
  %s1 = inlined_call_operand.vmem [shape: f32[352,160], index: 1, kind: input, shape index: {}]
  %s2 = inlined_call_operand.vmem [shape: f32[1,160], index: 2, kind: input, shape index: {}]
  %s3 = inlined_call_operand.vmem [shape: f32[160,32], index: 3, kind: input, shape index: {}]
  %s4 = inlined_call_operand.vmem [shape: f32[1,32], index: 4, kind: input, shape index: {}]
  %s5 = inlined_call_operand.vmem [shape: f32[1,32], index: 5, kind: input, shape index: {}]
  %s6 = inlined_call_operand.vmem [shape: f32[1,32], index: 6, kind: input, shape index: {}]
  %s7 = inlined_call_operand.vmem [shape: f32[2,32,128], index: 7, kind: output, shape index: {}]
  %s8 = sld [smem:[#allocation0]]
  $region61: #{tcn_forward.1} parent=0
    _
  %s10 = ssub.s32 1, %s8
  %s11 = scalar_select 0, %s10, %s8
  loop: start=0, step=1, limit=4
  $region2: #{tcn_forward.1} parent=0 // loop_pre_header
    _
  $region3: #{tcn_forward.1} parent=0 // loop_header
    %s13 = sphi 0, %s17
    %p14 = scmp.ge.s32.totalorder %s13, 4
    %s23 = sphi 0, %s25
    %s26 = sphi 0, %s23
    %s27 = sphi 0, %s26
    %s43 = sphi 0, %s27
    %s47 = sphi 0, %s47
    %s49 = sphi 0, %s47
    %s50 = sphi 0, %s49
    %s64 = sphi 0, %s50
    %s68 = sphi 0, %s68
    %s70 = sphi 0, %s68
    %s71 = sphi 0, %s70
    %s85 = sphi 0, %s71
    %s89 = sphi 0, %s89
    %s91 = sphi 0, %s89
    %s92 = sphi 0, %s91
    %s106 = sphi 0, %s92
    %s110 = sphi 0, %s110
    %s112 = sphi 0, %s110
    %s113 = sphi 0, %s112
    %s127 = sphi 0, %s113
    %s131 = sphi 0, %s131
    %s133 = sphi 0, %s131
    %s134 = sphi 0, %s133
    %s148 = sphi 0, %s134
    %s152 = sphi 0, %s152
    %s154 = sphi 0, %s152
    %s155 = sphi 0, %s154
    %s169 = sphi 0, %s155
    %s175 = sphi 0, %s177
    %s178 = sphi 0, %s175
    %s179 = sphi 0, %s178
    %s195 = sphi 0, %s179
  $region4: #{tcn_forward.1} parent=0 // loop_header_branch
    %16 = sbr.rel (%p14) target = $region8
  $region5: #{tcn_forward.1} parent=0 // loop_body
    %s18 = ssub.s32 %s13, 1
    %s19 = ssub.s32 %s13, 2
    %s20 = sadd.s32 %s13, 1
    %s21 = ssub.s32 %s13, %s20
    %p22 = scmp.eq.s32.totalorder %s21, 0
    %s24 = sadd.s32 %s23, 1
    %s25 = scalar_select %p22, %s23, %s24
    %p28 = pneg %p22
    %p29 = scmp.eq.s32.totalorder %s13, 1
    %p30 = por %p28, %p29
    %p31 = scmp.ne.s32.totalorder %s23, %s26
    %p32 = scmp.eq.s32.totalorder %s13, 0
    %p33 = por %p31, %p32
    %p34 = scmp.ne.s32.totalorder %s23, %s26
    %p35 = scmp.eq.s32.totalorder %s18, 1
    %p36 = por %p34, %p35
    %p37 = scmp.ne.s32.totalorder %s26, %s27
    %p38 = scmp.eq.s32.totalorder %s18, 0
    %p39 = por %p37, %p38
    %p40 = scmp.ne.s32.totalorder %s26, %s27
    %p41 = scmp.eq.s32.totalorder %s19, 1
    %p42 = por %p40, %p41
    %p44 = scmp.ne.s32.totalorder %s27, %s43
    %p45 = scmp.eq.s32.totalorder %s19, 0
    %p46 = por %p44, %p45
    %s48 = sadd.s32 %s47, 1
    %p51 = scmp.eq.s32.totalorder %s13, 1
    %p52 = scmp.ne.s32.totalorder %s47, %s49
    %p53 = scmp.eq.s32.totalorder %s13, 0
    %p54 = por %p52, %p53
    %p55 = scmp.ne.s32.totalorder %s47, %s49
    %p56 = scmp.eq.s32.totalorder %s18, 1
    %p57 = por %p55, %p56
    %p58 = scmp.ne.s32.totalorder %s49, %s50
    %p59 = scmp.eq.s32.totalorder %s18, 0
    %p60 = por %p58, %p59
    %p61 = scmp.ne.s32.totalorder %s49, %s50
    %p62 = scmp.eq.s32.totalorder %s19, 1
    %p63 = por %p61, %p62
    %p65 = scmp.ne.s32.totalorder %s50, %s64
    %p66 = scmp.eq.s32.totalorder %s19, 0
    %p67 = por %p65, %p66
    %s69 = sadd.s32 %s68, 1
    %p72 = scmp.eq.s32.totalorder %s13, 1
    %p73 = scmp.ne.s32.totalorder %s68, %s70
    %p74 = scmp.eq.s32.totalorder %s13, 0
    %p75 = por %p73, %p74
    %p76 = scmp.ne.s32.totalorder %s68, %s70
    %p77 = scmp.eq.s32.totalorder %s18, 1
    %p78 = por %p76, %p77
    %p79 = scmp.ne.s32.totalorder %s70, %s71
    %p80 = scmp.eq.s32.totalorder %s18, 0
    %p81 = por %p79, %p80
    %p82 = scmp.ne.s32.totalorder %s70, %s71
    %p83 = scmp.eq.s32.totalorder %s19, 1
    %p84 = por %p82, %p83
    %p86 = scmp.ne.s32.totalorder %s71, %s85
    %p87 = scmp.eq.s32.totalorder %s19, 0
    %p88 = por %p86, %p87
    %s90 = sadd.s32 %s89, 1
    %p93 = scmp.eq.s32.totalorder %s13, 1
    %p94 = scmp.ne.s32.totalorder %s89, %s91
    %p95 = scmp.eq.s32.totalorder %s13, 0
    %p96 = por %p94, %p95
    %p97 = scmp.ne.s32.totalorder %s89, %s91
    %p98 = scmp.eq.s32.totalorder %s18, 1
    %p99 = por %p97, %p98
    %p100 = scmp.ne.s32.totalorder %s91, %s92
    %p101 = scmp.eq.s32.totalorder %s18, 0
    %p102 = por %p100, %p101
    %p103 = scmp.ne.s32.totalorder %s91, %s92
    %p104 = scmp.eq.s32.totalorder %s19, 1
    %p105 = por %p103, %p104
    %p107 = scmp.ne.s32.totalorder %s92, %s106
    %p108 = scmp.eq.s32.totalorder %s19, 0
    %p109 = por %p107, %p108
    %s111 = sadd.s32 %s110, 1
    %p114 = scmp.eq.s32.totalorder %s13, 1
    %p115 = scmp.ne.s32.totalorder %s110, %s112
    %p116 = scmp.eq.s32.totalorder %s13, 0
    %p117 = por %p115, %p116
    %p118 = scmp.ne.s32.totalorder %s110, %s112
    %p119 = scmp.eq.s32.totalorder %s18, 1
    %p120 = por %p118, %p119
    %p121 = scmp.ne.s32.totalorder %s112, %s113
    %p122 = scmp.eq.s32.totalorder %s18, 0
    %p123 = por %p121, %p122
    %p124 = scmp.ne.s32.totalorder %s112, %s113
    %p125 = scmp.eq.s32.totalorder %s19, 1
    %p126 = por %p124, %p125
    %p128 = scmp.ne.s32.totalorder %s113, %s127
    %p129 = scmp.eq.s32.totalorder %s19, 0
    %p130 = por %p128, %p129
    %s132 = sadd.s32 %s131, 1
    %p135 = scmp.eq.s32.totalorder %s13, 1
    %p136 = scmp.ne.s32.totalorder %s131, %s133
    %p137 = scmp.eq.s32.totalorder %s13, 0
    %p138 = por %p136, %p137
    %p139 = scmp.ne.s32.totalorder %s131, %s133
    %p140 = scmp.eq.s32.totalorder %s18, 1
    %p141 = por %p139, %p140
    %p142 = scmp.ne.s32.totalorder %s133, %s134
    %p143 = scmp.eq.s32.totalorder %s18, 0
    %p144 = por %p142, %p143
    %p145 = scmp.ne.s32.totalorder %s133, %s134
    %p146 = scmp.eq.s32.totalorder %s19, 1
    %p147 = por %p145, %p146
    %p149 = scmp.ne.s32.totalorder %s134, %s148
    %p150 = scmp.eq.s32.totalorder %s19, 0
    %p151 = por %p149, %p150
    %s153 = sadd.s32 %s152, 1
    %p156 = scmp.eq.s32.totalorder %s13, 1
    %p157 = scmp.ne.s32.totalorder %s152, %s154
    %p158 = scmp.eq.s32.totalorder %s13, 0
    %p159 = por %p157, %p158
    %p160 = scmp.ne.s32.totalorder %s152, %s154
    %p161 = scmp.eq.s32.totalorder %s18, 1
    %p162 = por %p160, %p161
    %p163 = scmp.ne.s32.totalorder %s154, %s155
    %p164 = scmp.eq.s32.totalorder %s18, 0
    %p165 = por %p163, %p164
    %p166 = scmp.ne.s32.totalorder %s154, %s155
    %p167 = scmp.eq.s32.totalorder %s19, 1
    %p168 = por %p166, %p167
    %p170 = scmp.ne.s32.totalorder %s155, %s169
    %p171 = scmp.eq.s32.totalorder %s19, 0
    %p172 = por %p170, %p171
    %s173 = ssub.s32 %s13, %s20
    %p174 = scmp.eq.s32.totalorder %s173, 0
    %s176 = sadd.s32 %s175, 1
    %s177 = scalar_select %p174, %s175, %s176
    %p180 = pneg %p174
    %p181 = scmp.eq.s32.totalorder %s13, 1
    %p182 = por %p180, %p181
    %p183 = scmp.ne.s32.totalorder %s175, %s178
    %p184 = scmp.eq.s32.totalorder %s13, 0
    %p185 = por %p183, %p184
    %p186 = scmp.ne.s32.totalorder %s175, %s178
    %p187 = scmp.eq.s32.totalorder %s18, 1
    %p188 = por %p186, %p187
    %p189 = scmp.ne.s32.totalorder %s178, %s179
    %p190 = scmp.eq.s32.totalorder %s18, 0
    %p191 = por %p189, %p190
    %p192 = scmp.ne.s32.totalorder %s178, %s179
    %p193 = scmp.eq.s32.totalorder %s19, 1
    %p194 = por %p192, %p193
    %p196 = scmp.ne.s32.totalorder %s179, %s195
    %p197 = scmp.eq.s32.totalorder %s19, 0
    %p198 = por %p196, %p197
    %p199 = scmp.le.s32.totalorder 1, %s13
    %p200 = scmp.lt.s32.totalorder %s13, 3
    %p201 = pnand %p199, %p200
    %p202 = pneg %p201
    // Predicated region
    $region9: #{tcn_forward.1} parent=5 // pred_check
      _
    $region10: #{tcn_forward.1} parent=5 // pred_check_branch
      %204 = sbr.rel (%p201) target = $region12
    $region11: #{tcn_forward.1} parent=5 // pred_region
      %s205 = ssub.s32 %s13, 1
      // Predicated region
      $region13: #{tcn_forward.1} parent=11 // pred_check
        %p206 = pneg %p60
      $region14: #{tcn_forward.1} parent=11 // pred_check_branch
        %208 = sbr.rel (%p206) target = $region16
      $region15: #{tcn_forward.1} parent=11 // pred_region
        _
      $region16: #{tcn_forward.1} parent=11 // pred_fallthru
        _
      // Predicated region
      $region17: #{tcn_forward.1} parent=11 // pred_check
        %p209 = pneg %p81
      $region18: #{tcn_forward.1} parent=11 // pred_check_branch
        %211 = sbr.rel (%p209) target = $region20
      $region19: #{tcn_forward.1} parent=11 // pred_region
        _
      $region20: #{tcn_forward.1} parent=11 // pred_fallthru
        _
      // Predicated region
      $region21: #{tcn_forward.1} parent=11 // pred_check
        %p212 = pneg %p102
      $region22: #{tcn_forward.1} parent=11 // pred_check_branch
        %214 = sbr.rel (%p212) target = $region24
      $region23: #{tcn_forward.1} parent=11 // pred_region
        _
      $region24: #{tcn_forward.1} parent=11 // pred_fallthru
        _
      // Predicated region
      $region25: #{tcn_forward.1} parent=11 // pred_check
        %p215 = pneg %p123
      $region26: #{tcn_forward.1} parent=11 // pred_check_branch
        %217 = sbr.rel (%p215) target = $region28
      $region27: #{tcn_forward.1} parent=11 // pred_region
        _
      $region28: #{tcn_forward.1} parent=11 // pred_fallthru
        _
      // Predicated region
      $region29: #{tcn_forward.1} parent=11 // pred_check
        %p218 = pneg %p144
      $region30: #{tcn_forward.1} parent=11 // pred_check_branch
        %220 = sbr.rel (%p218) target = $region32
      $region31: #{tcn_forward.1} parent=11 // pred_region
        _
      $region32: #{tcn_forward.1} parent=11 // pred_fallthru
        _
      // Predicated region
      $region33: #{tcn_forward.1} parent=11 // pred_check
        %p221 = pneg %p165
      $region34: #{tcn_forward.1} parent=11 // pred_check_branch
        %223 = sbr.rel (%p221) target = $region36
      $region35: #{tcn_forward.1} parent=11 // pred_region
        _
      $region36: #{tcn_forward.1} parent=11 // pred_fallthru
        _
    $region12: #{tcn_forward.1} parent=5 // pred_fallthru
      _
    %p224 = scmp.lt.s32.totalorder %s13, 2
    // Predicated region
    $region37: #{tcn_forward.1} parent=5 // pred_check
      %p225 = pneg %p224
    $region38: #{tcn_forward.1} parent=5 // pred_check_branch
      %227 = sbr.rel (%p225) target = $region40
    $region39: #{tcn_forward.1} parent=5 // pred_region
      // Predicated region
      $region41: #{tcn_forward.1} parent=39 // pred_check
        %p228 = pneg %p33
      $region42: #{tcn_forward.1} parent=39 // pred_check_branch
        %230 = sbr.rel (%p228) target = $region44
      $region43: #{tcn_forward.1} parent=39 // pred_region
        %s231 = smul.u32 4, %s13
        %p232 = scmp.lt.s32.totalorder %s231, 7
        %s233 = scalar_select %p232, %s231, 7
        %s234 = smul.addr %s233, 4
        %s235 = smul.addr %s234, 8
        %s236 = scalar_lea.vmem %s0, %s235
        %s237 = smul.u32 4, %s13
      $region44: #{tcn_forward.1} parent=39 // pred_fallthru
        _
    $region40: #{tcn_forward.1} parent=5 // pred_fallthru
      _
    %p238 = scmp.le.s32.totalorder 1, %s13
    %p239 = scmp.lt.s32.totalorder %s13, 3
    %p240 = pnand %p238, %p239
    %p241 = pneg %p240
    // Predicated region
    $region45: #{tcn_forward.1} parent=5 // pred_check
      _
    $region46: #{tcn_forward.1} parent=5 // pred_check_branch
      %243 = sbr.rel (%p240) target = $region48
    $region47: #{tcn_forward.1} parent=5 // pred_region
      %s244 = ssub.s32 %s13, 1
      %s245 = smul.u32 4, %s18
      %p246 = scmp.lt.s32.totalorder %s245, 7
      %s247 = scalar_select %p246, %s245, 7
      %s248 = smul.addr %s247, 4
      %s249 = smul.addr %s248, 8
      %s250 = scalar_lea.vmem %s0, %s249
      %p251 = pneg %p39
      %p252 = pneg %p36
      %p253 = pneg %p60
      %p254 = pneg %p57
      %p255 = pneg %p81
      %p256 = pneg %p78
      %p257 = pneg %p102
      %p258 = pneg %p99
      %p259 = pneg %p123
      %p260 = pneg %p120
      %p261 = pneg %p144
      %p262 = pneg %p141
      %p263 = pneg %p165
      %p264 = pneg %p162
      %p265 = pneg %p191
      %p266 = pneg %p188
      %p267 = scmp.lt.s32.totalorder %s18, 1
      %s268 = scalar_select %p267, %s18, 1
      %s269 = smul.addr %s268, 4
      %s270 = smul.addr %s269, 8
      %s271 = scalar_lea.vmem %s7, %s270
      %s272 = smul.u32 4, %s18
      %p273 = scmp.lt.s32.totalorder %s272, 7
      %s274 = scalar_select %p273, %s272, 7
      %s275 = smul.addr %s274, 4
      %s276 = smul.addr %s275, 8
      %s277 = scalar_lea.vmem %s0, %s276
      %s278 = smul.u32 4, %s18
      %p279 = scmp.lt.s32.totalorder %s18, 1
      %s280 = scalar_select %p279, %s18, 1
      %s281 = smul.addr %s280, 4
      %s282 = smul.addr %s281, 8
      %s283 = scalar_lea.vmem %s7, %s282
      %v284 = vld [vmem:[%s277] sm:$0xff]
      %v285 = vld [vmem:[%s277 + $0x8] sm:$0xff]
      %v286 = vld [vmem:[%s277 + $0x10] sm:$0xff]
      %v287 = vld [vmem:[%s277 + $0x18] sm:$0xff]
      %v288 = vld [vmem:[%s277 + $0x20] sm:$0xff]
      %v289 = vld [vmem:[%s277 + $0x28] sm:$0xff]
      %v290 = vld [vmem:[%s277 + $0x30] sm:$0xff]
      %v291 = vld [vmem:[%s277 + $0x38] sm:$0xff]
      %v292 = vld [vmem:[%s277 + $0x40] sm:$0xff]
      %v293 = vld [vmem:[%s277 + $0x48] sm:$0xff]
      %v294 = vld [vmem:[%s277 + $0x50] sm:$0xff]
      %v295 = vld [vmem:[%s277 + $0x58] sm:$0xff]
      %v296 = vld [vmem:[%s277 + $0x60] sm:$0xff]
      %v297 = vld [vmem:[%s277 + $0x68] sm:$0xff]
      %v298 = vld [vmem:[%s277 + $0x70] sm:$0xff]
      %v299 = vld [vmem:[%s277 + $0x78] sm:$0xff]
      %313 = vrot.lane.b32.xlu0 0.0, 32
      %v314 = vpop.permute.xlu0 %313
      %315 = vrot.lane.b32.xlu0 %v284, 32
      %v316 = vpop.permute.xlu0 %315
      %317 = vrot.lane.b32.xlu0 %v285, 32
      %v318 = vpop.permute.xlu0 %317
      %319 = vrot.lane.b32.xlu0 %v286, 32
      %v320 = vpop.permute.xlu0 %319
      %321 = vrot.lane.b32.xlu0 %v288, 32
      %v322 = vpop.permute.xlu0 %321
      %323 = vrot.lane.b32.xlu0 %v289, 32
      %v324 = vpop.permute.xlu0 %323
      %325 = vrot.lane.b32.xlu0 %v290, 32
      %v326 = vpop.permute.xlu0 %325
      %327 = vrot.lane.b32.xlu0 %v292, 32
      %v328 = vpop.permute.xlu0 %327
      %329 = vrot.lane.b32.xlu0 %v293, 32
      %v330 = vpop.permute.xlu0 %329
      %331 = vrot.lane.b32.xlu0 %v294, 32
      %v332 = vpop.permute.xlu0 %331
      %333 = vrot.lane.b32.xlu0 %v296, 32
      %v334 = vpop.permute.xlu0 %333
      %335 = vrot.lane.b32.xlu0 %v297, 32
      %v336 = vpop.permute.xlu0 %335
      %337 = vrot.lane.b32.xlu0 %v298, 32
      %v338 = vpop.permute.xlu0 %337
      %vm356 = vcmask 1043456
      %v357 = vrot.slane 0.0, 4
      %v358 = vrot.slane %v284, 4
      %v359 = vsel %vm356, %v357, %v358
      %v360 = vrot.slane %v285, 4
      %v361 = vsel %vm356, %v358, %v360
      %v362 = vrot.slane %v286, 4
      %v363 = vsel %vm356, %v360, %v362
      %v364 = vrot.slane %v287, 4
      %v365 = vsel %vm356, %v362, %v364
      %v366 = vrot.slane %v288, 4
      %v367 = vsel %vm356, %v357, %v366
      %v368 = vrot.slane %v289, 4
      %v369 = vsel %vm356, %v366, %v368
      %v370 = vrot.slane %v290, 4
      %v371 = vsel %vm356, %v368, %v370
      %v372 = vrot.slane %v291, 4
      %v373 = vsel %vm356, %v370, %v372
      %v374 = vrot.slane %v292, 4
      %v375 = vsel %vm356, %v357, %v374
      %v376 = vrot.slane %v293, 4
      %v377 = vsel %vm356, %v374, %v376
      %v378 = vrot.slane %v294, 4
      %v379 = vsel %vm356, %v376, %v378
      %v380 = vrot.slane %v295, 4
      %v381 = vsel %vm356, %v378, %v380
      %v382 = vrot.slane %v296, 4
      %v383 = vsel %vm356, %v357, %v382
      %v384 = vrot.slane %v297, 4
      %v385 = vsel %vm356, %v382, %v384
      %v386 = vrot.slane %v298, 4
      %v387 = vsel %vm356, %v384, %v386
      %v388 = vrot.slane %v299, 4
      %v389 = vsel %vm356, %v386, %v388
      %390 = vrot.lane.b32.xlu0 %v359, 64
      %v391 = vpop.permute.xlu0 %390
      %392 = vrot.lane.b32.xlu0 %v361, 64
      %v393 = vpop.permute.xlu0 %392
      %394 = vrot.lane.b32.xlu0 %v363, 64
      %v395 = vpop.permute.xlu0 %394
      %396 = vrot.lane.b32.xlu0 %v365, 64
      %v397 = vpop.permute.xlu0 %396
      %398 = vrot.lane.b32.xlu0 %v367, 64
      %v399 = vpop.permute.xlu0 %398
      %400 = vrot.lane.b32.xlu0 %v369, 64
      %v401 = vpop.permute.xlu0 %400
      %402 = vrot.lane.b32.xlu0 %v371, 64
      %v403 = vpop.permute.xlu0 %402
      %404 = vrot.lane.b32.xlu0 %v373, 64
      %v405 = vpop.permute.xlu0 %404
      %406 = vrot.lane.b32.xlu0 %v375, 64
      %v407 = vpop.permute.xlu0 %406
      %408 = vrot.lane.b32.xlu0 %v377, 64
      %v409 = vpop.permute.xlu0 %408
      %410 = vrot.lane.b32.xlu0 %v379, 64
      %v411 = vpop.permute.xlu0 %410
      %412 = vrot.lane.b32.xlu0 %v381, 64
      %v413 = vpop.permute.xlu0 %412
      %414 = vrot.lane.b32.xlu0 %v383, 64
      %v415 = vpop.permute.xlu0 %414
      %416 = vrot.lane.b32.xlu0 %v385, 64
      %v417 = vpop.permute.xlu0 %416
      %418 = vrot.lane.b32.xlu0 %v387, 64
      %v419 = vpop.permute.xlu0 %418
      %420 = vrot.lane.b32.xlu0 %v389, 64
      %v421 = vpop.permute.xlu0 %420
      %vm438 = vcmask 1041408
      %v439 = vrot.slane 0.0, 6
      %v440 = vrot.slane %v284, 6
      %v441 = vsel %vm438, %v439, %v440
      %v442 = vrot.slane %v285, 6
      %v443 = vsel %vm438, %v440, %v442
      %v444 = vrot.slane %v286, 6
      %v445 = vsel %vm438, %v442, %v444
      %v446 = vrot.slane %v287, 6
      %v447 = vsel %vm438, %v444, %v446
      %v448 = vrot.slane %v288, 6
      %v449 = vsel %vm438, %v439, %v448
      %v450 = vrot.slane %v289, 6
      %v451 = vsel %vm438, %v448, %v450
      %v452 = vrot.slane %v290, 6
      %v453 = vsel %vm438, %v450, %v452
      %v454 = vrot.slane %v291, 6
      %v455 = vsel %vm438, %v452, %v454
      %v456 = vrot.slane %v292, 6
      %v457 = vsel %vm438, %v439, %v456
      %v458 = vrot.slane %v293, 6
      %v459 = vsel %vm438, %v456, %v458
      %v460 = vrot.slane %v294, 6
      %v461 = vsel %vm438, %v458, %v460
      %v462 = vrot.slane %v295, 6
      %v463 = vsel %vm438, %v460, %v462
      %v464 = vrot.slane %v296, 6
      %v465 = vsel %vm438, %v439, %v464
      %v466 = vrot.slane %v297, 6
      %v467 = vsel %vm438, %v464, %v466
      %v468 = vrot.slane %v298, 6
      %v469 = vsel %vm438, %v466, %v468
      %v470 = vrot.slane %v299, 6
      %v471 = vsel %vm438, %v468, %v470
      %472 = vrot.lane.b32.xlu0 %v441, 96
      %v473 = vpop.permute.xlu0 %472
      %474 = vrot.lane.b32.xlu0 %v443, 96
      %v475 = vpop.permute.xlu0 %474
      %476 = vrot.lane.b32.xlu0 %v445, 96
      %v477 = vpop.permute.xlu0 %476
      %478 = vrot.lane.b32.xlu0 %v447, 96
      %v479 = vpop.permute.xlu0 %478
      %480 = vrot.lane.b32.xlu0 %v449, 96
      %v481 = vpop.permute.xlu0 %480
      %482 = vrot.lane.b32.xlu0 %v451, 96
      %v483 = vpop.permute.xlu0 %482
      %484 = vrot.lane.b32.xlu0 %v453, 96
      %v485 = vpop.permute.xlu0 %484
      %486 = vrot.lane.b32.xlu0 %v455, 96
      %v487 = vpop.permute.xlu0 %486
      %488 = vrot.lane.b32.xlu0 %v457, 96
      %v489 = vpop.permute.xlu0 %488
      %490 = vrot.lane.b32.xlu0 %v459, 96
      %v491 = vpop.permute.xlu0 %490
      %492 = vrot.lane.b32.xlu0 %v461, 96
      %v493 = vpop.permute.xlu0 %492
      %494 = vrot.lane.b32.xlu0 %v463, 96
      %v495 = vpop.permute.xlu0 %494
      %496 = vrot.lane.b32.xlu0 %v465, 96
      %v497 = vpop.permute.xlu0 %496
      %498 = vrot.lane.b32.xlu0 %v467, 96
      %v499 = vpop.permute.xlu0 %498
      %500 = vrot.lane.b32.xlu0 %v469, 96
      %v501 = vpop.permute.xlu0 %500
      %502 = vrot.lane.b32.xlu0 %v471, 96
      %v503 = vpop.permute.xlu0 %502
      %vm520 = vcmask 1040384
      %v521 = vrot.slane 0.0, 7
      %v522 = vrot.slane %v284, 7
      %v523 = vsel %vm520, %v521, %v522
      %v524 = vrot.slane %v285, 7
      %v525 = vsel %vm520, %v522, %v524
      %v526 = vrot.slane %v286, 7
      %v527 = vsel %vm520, %v524, %v526
      %v528 = vrot.slane %v287, 7
      %v529 = vsel %vm520, %v526, %v528
      %v530 = vrot.slane %v288, 7
      %v531 = vsel %vm520, %v521, %v530
      %v532 = vrot.slane %v289, 7
      %v533 = vsel %vm520, %v530, %v532
      %v534 = vrot.slane %v290, 7
      %v535 = vsel %vm520, %v532, %v534
      %v536 = vrot.slane %v291, 7
      %v537 = vsel %vm520, %v534, %v536
      %v538 = vrot.slane %v292, 7
      %v539 = vsel %vm520, %v521, %v538
      %v540 = vrot.slane %v293, 7
      %v541 = vsel %vm520, %v538, %v540
      %v542 = vrot.slane %v294, 7
      %v543 = vsel %vm520, %v540, %v542
      %v544 = vrot.slane %v295, 7
      %v545 = vsel %vm520, %v542, %v544
      %v546 = vrot.slane %v296, 7
      %v547 = vsel %vm520, %v521, %v546
      %v548 = vrot.slane %v297, 7
      %v549 = vsel %vm520, %v546, %v548
      %v550 = vrot.slane %v298, 7
      %v551 = vsel %vm520, %v548, %v550
      %v552 = vrot.slane %v299, 7
      %v553 = vsel %vm520, %v550, %v552
      %570 = vrot.lane.b32.xlu0 %v287, 32
      %v571 = vpop.permute.xlu0 %570
      %572 = vrot.lane.b32.xlu0 %v291, 32
      %v573 = vpop.permute.xlu0 %572
      %574 = vrot.lane.b32.xlu0 %v295, 32
      %v575 = vpop.permute.xlu0 %574
      %576 = vrot.lane.b32.xlu0 %v299, 32
      %v577 = vpop.permute.xlu0 %576
      %vm582 = vcmask 1046528
      %v583 = vrot.slane %v284, 1
      %v584 = vrot.slane %v285, 1
      %v585 = vsel %vm582, %v583, %v584
      %v586 = vrot.slane %v286, 1
      %v587 = vsel %vm582, %v584, %v586
      %v588 = vrot.slane %v287, 1
      %v589 = vsel %vm582, %v586, %v588
      %v590 = vrot.slane 0.0, 1
      %v591 = vsel %vm582, %v588, %v590
      %v592 = vrot.slane %v288, 1
      %v593 = vrot.slane %v289, 1
      %v594 = vsel %vm582, %v592, %v593
      %v595 = vrot.slane %v290, 1
      %v596 = vsel %vm582, %v593, %v595
      %v597 = vrot.slane %v291, 1
      %v598 = vsel %vm582, %v595, %v597
      %v599 = vsel %vm582, %v597, %v590
      %v600 = vrot.slane %v292, 1
      %v601 = vrot.slane %v293, 1
      %v602 = vsel %vm582, %v600, %v601
      %v603 = vrot.slane %v294, 1
      %v604 = vsel %vm582, %v601, %v603
      %v605 = vrot.slane %v295, 1
      %v606 = vsel %vm582, %v603, %v605
      %v607 = vsel %vm582, %v605, %v590
      %v608 = vrot.slane %v296, 1
      %v609 = vrot.slane %v297, 1
      %v610 = vsel %vm582, %v608, %v609
      %v611 = vrot.slane %v298, 1
      %v612 = vsel %vm582, %v609, %v611
      %v613 = vrot.slane %v299, 1
      %v614 = vsel %vm582, %v611, %v613
      %v615 = vsel %vm582, %v613, %v590
      %616 = vrot.lane.b32.xlu0 %v585, 64
      %v617 = vpop.permute.xlu0 %616
      %618 = vrot.lane.b32.xlu0 %v587, 64
      %v619 = vpop.permute.xlu0 %618
      %620 = vrot.lane.b32.xlu0 %v589, 64
      %v621 = vpop.permute.xlu0 %620
      %622 = vrot.lane.b32.xlu0 %v591, 64
      %v623 = vpop.permute.xlu0 %622
      %624 = vrot.lane.b32.xlu0 %v594, 64
      %v625 = vpop.permute.xlu0 %624
      %626 = vrot.lane.b32.xlu0 %v596, 64
      %v627 = vpop.permute.xlu0 %626
      %628 = vrot.lane.b32.xlu0 %v598, 64
      %v629 = vpop.permute.xlu0 %628
      %630 = vrot.lane.b32.xlu0 %v599, 64
      %v631 = vpop.permute.xlu0 %630
      %632 = vrot.lane.b32.xlu0 %v602, 64
      %v633 = vpop.permute.xlu0 %632
      %634 = vrot.lane.b32.xlu0 %v604, 64
      %v635 = vpop.permute.xlu0 %634
      %636 = vrot.lane.b32.xlu0 %v606, 64
      %v637 = vpop.permute.xlu0 %636
      %638 = vrot.lane.b32.xlu0 %v607, 64
      %v639 = vpop.permute.xlu0 %638
      %640 = vrot.lane.b32.xlu0 %v610, 64
      %v641 = vpop.permute.xlu0 %640
      %642 = vrot.lane.b32.xlu0 %v612, 64
      %v643 = vpop.permute.xlu0 %642
      %644 = vrot.lane.b32.xlu0 %v614, 64
      %v645 = vpop.permute.xlu0 %644
      %646 = vrot.lane.b32.xlu0 %v615, 64
      %v647 = vpop.permute.xlu0 %646
      %vm664 = vcmask 1045504
      %v665 = vrot.slane %v284, 2
      %v666 = vrot.slane %v285, 2
      %v667 = vsel %vm664, %v665, %v666
      %v668 = vrot.slane %v286, 2
      %v669 = vsel %vm664, %v666, %v668
      %v670 = vrot.slane %v287, 2
      %v671 = vsel %vm664, %v668, %v670
      %v672 = vrot.slane 0.0, 2
      %v673 = vsel %vm664, %v670, %v672
      %v674 = vrot.slane %v288, 2
      %v675 = vrot.slane %v289, 2
      %v676 = vsel %vm664, %v674, %v675
      %v677 = vrot.slane %v290, 2
      %v678 = vsel %vm664, %v675, %v677
      %v679 = vrot.slane %v291, 2
      %v680 = vsel %vm664, %v677, %v679
      %v681 = vsel %vm664, %v679, %v672
      %v682 = vrot.slane %v292, 2
      %v683 = vrot.slane %v293, 2
      %v684 = vsel %vm664, %v682, %v683
      %v685 = vrot.slane %v294, 2
      %v686 = vsel %vm664, %v683, %v685
      %v687 = vrot.slane %v295, 2
      %v688 = vsel %vm664, %v685, %v687
      %v689 = vsel %vm664, %v687, %v672
      %v690 = vrot.slane %v296, 2
      %v691 = vrot.slane %v297, 2
      %v692 = vsel %vm664, %v690, %v691
      %v693 = vrot.slane %v298, 2
      %v694 = vsel %vm664, %v691, %v693
      %v695 = vrot.slane %v299, 2
      %v696 = vsel %vm664, %v693, %v695
      %v697 = vsel %vm664, %v695, %v672
      %698 = vrot.lane.b32.xlu0 %v667, 96
      %v699 = vpop.permute.xlu0 %698
      %700 = vrot.lane.b32.xlu0 %v669, 96
      %v701 = vpop.permute.xlu0 %700
      %702 = vrot.lane.b32.xlu0 %v671, 96
      %v703 = vpop.permute.xlu0 %702
      %704 = vrot.lane.b32.xlu0 %v673, 96
      %v705 = vpop.permute.xlu0 %704
      %706 = vrot.lane.b32.xlu0 %v676, 96
      %v707 = vpop.permute.xlu0 %706
      %708 = vrot.lane.b32.xlu0 %v678, 96
      %v709 = vpop.permute.xlu0 %708
      %710 = vrot.lane.b32.xlu0 %v680, 96
      %v711 = vpop.permute.xlu0 %710
      %712 = vrot.lane.b32.xlu0 %v681, 96
      %v713 = vpop.permute.xlu0 %712
      %714 = vrot.lane.b32.xlu0 %v684, 96
      %v715 = vpop.permute.xlu0 %714
      %716 = vrot.lane.b32.xlu0 %v686, 96
      %v717 = vpop.permute.xlu0 %716
      %718 = vrot.lane.b32.xlu0 %v688, 96
      %v719 = vpop.permute.xlu0 %718
      %720 = vrot.lane.b32.xlu0 %v689, 96
      %v721 = vpop.permute.xlu0 %720
      %722 = vrot.lane.b32.xlu0 %v692, 96
      %v723 = vpop.permute.xlu0 %722
      %724 = vrot.lane.b32.xlu0 %v694, 96
      %v725 = vpop.permute.xlu0 %724
      %726 = vrot.lane.b32.xlu0 %v696, 96
      %v727 = vpop.permute.xlu0 %726
      %728 = vrot.lane.b32.xlu0 %v697, 96
      %v729 = vpop.permute.xlu0 %728
      %v746 = vsel %vm356, %v364, %v357
      %v747 = vsel %vm356, %v372, %v357
      %v748 = vsel %vm356, %v380, %v357
      %v749 = vsel %vm356, %v388, %v357
      %766 = vrot.lane.b32.xlu0 %v286, 64
      %v767 = vpop.permute.xlu0 %766
      %768 = vrot.lane.b32.xlu0 %v287, 64
      %v769 = vpop.permute.xlu0 %768
      %770 = vrot.lane.b32.xlu0 0.0, 64
      %v771 = vpop.permute.xlu0 %770
      %772 = vrot.lane.b32.xlu0 %v290, 64
      %v773 = vpop.permute.xlu0 %772
      %774 = vrot.lane.b32.xlu0 %v291, 64
      %v775 = vpop.permute.xlu0 %774
      %776 = vrot.lane.b32.xlu0 %v294, 64
      %v777 = vpop.permute.xlu0 %776
      %778 = vrot.lane.b32.xlu0 %v295, 64
      %v779 = vpop.permute.xlu0 %778
      %780 = vrot.lane.b32.xlu0 %v298, 64
      %v781 = vpop.permute.xlu0 %780
      %782 = vrot.lane.b32.xlu0 %v299, 64
      %v783 = vpop.permute.xlu0 %782
      %vm793 = vcmask 261120
      %v794 = vsel %vm793, 0.0, %v314
      %v795 = vsel %vm793, 0.0, %v316
      %v796 = vsel %vm793, %v284, %v318
      %v797 = vsel %vm793, %v285, %v320
      %v798 = vsel %vm793, 0.0, %v322
      %v799 = vsel %vm793, %v288, %v324
      %v800 = vsel %vm793, %v289, %v326
      %v801 = vsel %vm793, 0.0, %v328
      %v802 = vsel %vm793, %v292, %v330
      %v803 = vsel %vm793, %v293, %v332
      %v804 = vsel %vm793, 0.0, %v334
      %v805 = vsel %vm793, %v296, %v336
      %v806 = vsel %vm793, %v297, %v338
      %vm807 = vcmask 523264
      %v808 = vsel %vm807, %v794, %v391
      %v809 = vsel %vm807, %v795, %v393
      %v810 = vsel %vm807, %v796, %v395
      %v811 = vsel %vm807, %v797, %v397
      %v812 = vsel %vm807, %v794, %v399
      %v813 = vsel %vm807, %v798, %v401
      %v814 = vsel %vm807, %v799, %v403
      %v815 = vsel %vm807, %v800, %v405
      %v816 = vsel %vm807, %v794, %v407
      %v817 = vsel %vm807, %v801, %v409
      %v818 = vsel %vm807, %v802, %v411
      %v819 = vsel %vm807, %v803, %v413
      %v820 = vsel %vm807, %v794, %v415
      %v821 = vsel %vm807, %v804, %v417
      %v822 = vsel %vm807, %v805, %v419
      %v823 = vsel %vm807, %v806, %v421
      %vm824 = vcmask 785408
      %v825 = vsel %vm824, %v808, %v473
      %v826 = vsel %vm824, %v809, %v475
      %v827 = vsel %vm824, %v810, %v477
      %v828 = vsel %vm824, %v811, %v479
      %v829 = vsel %vm824, %v812, %v481
      %v830 = vsel %vm824, %v813, %v483
      %v831 = vsel %vm824, %v814, %v485
      %v832 = vsel %vm824, %v815, %v487
      %v833 = vsel %vm824, %v816, %v489
      %v834 = vsel %vm824, %v817, %v491
      %v835 = vsel %vm824, %v818, %v493
      %v836 = vsel %vm824, %v819, %v495
      %v837 = vsel %vm824, %v820, %v497
      %v838 = vsel %vm824, %v821, %v499
      %v839 = vsel %vm824, %v822, %v501
      %v840 = vsel %vm824, %v823, %v503
      %v841 = vsel %vm793, %v523, %v316
      %v842 = vsel %vm793, %v525, %v318
      %v843 = vsel %vm793, %v527, %v320
      %v844 = vsel %vm793, %v529, %v571
      %v845 = vsel %vm793, %v531, %v322
      %v846 = vsel %vm793, %v533, %v324
      %v847 = vsel %vm793, %v535, %v326
      %v848 = vsel %vm793, %v537, %v573
      %v849 = vsel %vm793, %v539, %v328
      %v850 = vsel %vm793, %v541, %v330
      %v851 = vsel %vm793, %v543, %v332
      %v852 = vsel %vm793, %v545, %v575
      %v853 = vsel %vm793, %v547, %v334
      %v854 = vsel %vm793, %v549, %v336
      %v855 = vsel %vm793, %v551, %v338
      %v856 = vsel %vm793, %v553, %v577
      %v857 = vsel %vm807, %v841, %v617
      %v858 = vsel %vm807, %v842, %v619
      %v859 = vsel %vm807, %v843, %v621
      %v860 = vsel %vm807, %v844, %v623
      %v861 = vsel %vm807, %v845, %v625
      %v862 = vsel %vm807, %v846, %v627
      %v863 = vsel %vm807, %v847, %v629
      %v864 = vsel %vm807, %v848, %v631
      %v865 = vsel %vm807, %v849, %v633
      %v866 = vsel %vm807, %v850, %v635
      %v867 = vsel %vm807, %v851, %v637
      %v868 = vsel %vm807, %v852, %v639
      %v869 = vsel %vm807, %v853, %v641
      %v870 = vsel %vm807, %v854, %v643
      %v871 = vsel %vm807, %v855, %v645
      %v872 = vsel %vm807, %v856, %v647
      %v873 = vsel %vm824, %v857, %v699
      %v874 = vsel %vm824, %v858, %v701
      %v875 = vsel %vm824, %v859, %v703
      %v876 = vsel %vm824, %v860, %v705
      %v877 = vsel %vm824, %v861, %v707
      %v878 = vsel %vm824, %v862, %v709
      %v879 = vsel %vm824, %v863, %v711
      %v880 = vsel %vm824, %v864, %v713
      %v881 = vsel %vm824, %v865, %v715
      %v882 = vsel %vm824, %v866, %v717
      %v883 = vsel %vm824, %v867, %v719
      %v884 = vsel %vm824, %v868, %v721
      %v885 = vsel %vm824, %v869, %v723
      %v886 = vsel %vm824, %v870, %v725
      %v887 = vsel %vm824, %v871, %v727
      %v888 = vsel %vm824, %v872, %v729
      %v889 = vsel %vm793, %v361, %v318
      %v890 = vsel %vm793, %v363, %v320
      %v891 = vsel %vm793, %v365, %v571
      %v892 = vsel %vm793, %v746, %v314
      %v893 = vsel %vm793, %v369, %v324
      %v894 = vsel %vm793, %v371, %v326
      %v895 = vsel %vm793, %v373, %v573
      %v896 = vsel %vm793, %v747, %v314
      %v897 = vsel %vm793, %v377, %v330
      %v898 = vsel %vm793, %v379, %v332
      %v899 = vsel %vm793, %v381, %v575
      %v900 = vsel %vm793, %v748, %v314
      %v901 = vsel %vm793, %v385, %v336
      %v902 = vsel %vm793, %v387, %v338
      %v903 = vsel %vm793, %v389, %v577
      %v904 = vsel %vm793, %v749, %v314
      %v905 = vsel %vm807, %v889, %v767
      %v906 = vsel %vm807, %v890, %v769
      %v907 = vsel %vm807, %v891, %v771
      %v908 = vsel %vm807, %v892, %v771
      %v909 = vsel %vm807, %v893, %v773
      %v910 = vsel %vm807, %v894, %v775
      %v911 = vsel %vm807, %v895, %v771
      %v912 = vsel %vm807, %v896, %v771
      %v913 = vsel %vm807, %v897, %v777
      %v914 = vsel %vm807, %v898, %v779
      %v915 = vsel %vm807, %v899, %v771
      %v916 = vsel %vm807, %v900, %v771
      %v917 = vsel %vm807, %v901, %v781
      %v918 = vsel %vm807, %v902, %v783
      %v919 = vsel %vm807, %v903, %v771
      %v920 = vsel %vm807, %v904, %v771
      %v921 = vld [vmem:[%s1] sm:$0xff]
      %v922 = vld [vmem:[%s1 + $0x8] sm:$0xff]
      %v923 = vld [vmem:[%s1 + $0x10] sm:$0xff]
      %v924 = vld [vmem:[%s1 + $0x18] sm:$0xff]
      %v925 = vld [vmem:[%s1 + $0x20] sm:$0xff]
      %v926 = vld [vmem:[%s1 + $0x28] sm:$0xff]
      %v927 = vld [vmem:[%s1 + $0x30] sm:$0xff]
      %v928 = vld [vmem:[%s1 + $0x38] sm:$0xff]
      %v929 = vld [vmem:[%s1 + $0x40] sm:$0xff]
      %v930 = vld [vmem:[%s1 + $0x48] sm:$0xff]
      %v931 = vld [vmem:[%s1 + $0x50] sm:$0xff]
      %v932 = vld [vmem:[%s1 + $0x58] sm:$0xff]
      %v933 = vld [vmem:[%s1 + $0x60] sm:$0xff]
      %v934 = vld [vmem:[%s1 + $0x68] sm:$0xff]
      %v935 = vld [vmem:[%s1 + $0x70] sm:$0xff]
      %v936 = vld [vmem:[%s1 + $0x78] sm:$0xff]
      %v937 = vld [vmem:[%s1 + $0x80] sm:$0xff]
      %v938 = vld [vmem:[%s1 + $0x88] sm:$0xff]
      %v939 = vld [vmem:[%s1 + $0x90] sm:$0xff]
      %v940 = vld [vmem:[%s1 + $0x98] sm:$0xff]
      %v941 = vld [vmem:[%s1 + $0xa0] sm:$0xff]
      %v942 = vld [vmem:[%s1 + $0xa8] sm:$0xff]
      %v943 = vld [vmem:[%s1 + $0xb0] sm:$0xff]
      %v944 = vld [vmem:[%s1 + $0xb8] sm:$0xff]
      %v945 = vld [vmem:[%s1 + $0xc0] sm:$0xff]
      %v946 = vld [vmem:[%s1 + $0xc8] sm:$0xff]
      %v947 = vld [vmem:[%s1 + $0xd0] sm:$0xff]
      %v948 = vld [vmem:[%s1 + $0xd8] sm:$0xff]
      %v949 = vld [vmem:[%s1 + $0xe0] sm:$0xff]
      %v950 = vld [vmem:[%s1 + $0xe8] sm:$0xff]
      %v951 = vld [vmem:[%s1 + $0xf0] sm:$0xff]
      %v952 = vld [vmem:[%s1 + $0xf8] sm:$0xff]
      %v953 = vld [vmem:[%s1 + $0x100] sm:$0xff]
      %v954 = vld [vmem:[%s1 + $0x108] sm:$0xff]
      %v955 = vld [vmem:[%s1 + $0x110] sm:$0xff]
      %v956 = vld [vmem:[%s1 + $0x118] sm:$0xff]
      %v957 = vld [vmem:[%s1 + $0x120] sm:$0xff]
      %v958 = vld [vmem:[%s1 + $0x128] sm:$0xff]
      %v959 = vld [vmem:[%s1 + $0x130] sm:$0xff]
      %v960 = vld [vmem:[%s1 + $0x138] sm:$0xff]
      %v961 = vld [vmem:[%s1 + $0x140] sm:$0xff]
      %v962 = vld [vmem:[%s1 + $0x148] sm:$0xff]
      %v963 = vld [vmem:[%s1 + $0x150] sm:$0xff]
      %v964 = vld [vmem:[%s1 + $0x158] sm:$0xff]
      %v965 = vld [vmem:[%s1 + $0x160] sm:$0xff]
      %v966 = vld [vmem:[%s1 + $0x168] sm:$0xff]
      %v967 = vld [vmem:[%s1 + $0x170] sm:$0xff]
      %v968 = vld [vmem:[%s1 + $0x178] sm:$0xff]
      %v969 = vld [vmem:[%s1 + $0x180] sm:$0xff]
      %v970 = vld [vmem:[%s1 + $0x188] sm:$0xff]
      %v971 = vld [vmem:[%s1 + $0x190] sm:$0xff]
      %v972 = vld [vmem:[%s1 + $0x198] sm:$0xff]
      %v973 = vld [vmem:[%s1 + $0x1a0] sm:$0xff]
      %v974 = vld [vmem:[%s1 + $0x1a8] sm:$0xff]
      %v975 = vld [vmem:[%s1 + $0x1b0] sm:$0xff]
      %v976 = vld [vmem:[%s1 + $0x1b8] sm:$0xff]
      %v977 = vld [vmem:[%s1 + $0x1c0] sm:$0xff]
      %v978 = vld [vmem:[%s1 + $0x1c8] sm:$0xff]
      %v979 = vld [vmem:[%s1 + $0x1d0] sm:$0xff]
      %v980 = vld [vmem:[%s1 + $0x1d8] sm:$0xff]
      %v981 = vld [vmem:[%s1 + $0x1e0] sm:$0xff]
      %v982 = vld [vmem:[%s1 + $0x1e8] sm:$0xff]
      %v983 = vld [vmem:[%s1 + $0x1f0] sm:$0xff]
      %v984 = vld [vmem:[%s1 + $0x1f8] sm:$0xff]
      %v985 = vld [vmem:[%s1 + $0x200] sm:$0xff]
      %v986 = vld [vmem:[%s1 + $0x208] sm:$0xff]
      %v987 = vld [vmem:[%s1 + $0x210] sm:$0xff]
      %v988 = vld [vmem:[%s1 + $0x218] sm:$0xff]
      %v989 = vld [vmem:[%s1 + $0x220] sm:$0xff]
      %v990 = vld [vmem:[%s1 + $0x228] sm:$0xff]
      %v991 = vld [vmem:[%s1 + $0x230] sm:$0xff]
      %v992 = vld [vmem:[%s1 + $0x238] sm:$0xff]
      %v993 = vld [vmem:[%s1 + $0x240] sm:$0xff]
      %v994 = vld [vmem:[%s1 + $0x248] sm:$0xff]
      %v995 = vld [vmem:[%s1 + $0x250] sm:$0xff]
      %v996 = vld [vmem:[%s1 + $0x258] sm:$0xff]
      %v997 = vld [vmem:[%s1 + $0x260] sm:$0xff]
      %v998 = vld [vmem:[%s1 + $0x268] sm:$0xff]
      %v999 = vld [vmem:[%s1 + $0x270] sm:$0xff]
      %v1000 = vld [vmem:[%s1 + $0x278] sm:$0xff]
      %v1001 = vld [vmem:[%s1 + $0x280] sm:$0xff]
      %v1002 = vld [vmem:[%s1 + $0x288] sm:$0xff]
      %v1003 = vld [vmem:[%s1 + $0x290] sm:$0xff]
      %v1004 = vld [vmem:[%s1 + $0x298] sm:$0xff]
      %v1005 = vld [vmem:[%s1 + $0x2a0] sm:$0xff]
      %v1006 = vld [vmem:[%s1 + $0x2a8] sm:$0xff]
      %v1007 = vld [vmem:[%s1 + $0x2b0] sm:$0xff]
      %v1008 = vld [vmem:[%s1 + $0x2b8] sm:$0xff]
      %v1009 = vld [vmem:[%s2] sm:$0x3]
      %v1011 = vperm.slane %v1009, 0
      %v1012 = vperm.slane %v1009, 1
      %v1016 = vsel %vm824, %v905, 0
      %v1019 = vsel %vm824, %v906, 0
      %v1022 = vsel %vm824, %v907, 0
      %v1025 = vsel %vm824, %v908, 0
      %v1028 = vsel %vm824, %v909, 0
      %v1031 = vsel %vm824, %v910, 0
      %v1034 = vsel %vm824, %v911, 0
      %v1037 = vsel %vm824, %v912, 0
      %v1040 = vsel %vm824, %v913, 0
      %v1043 = vsel %vm824, %v914, 0
      %v1046 = vsel %vm824, %v915, 0
      %v1049 = vsel %vm824, %v916, 0
      %v1052 = vsel %vm824, %v917, 0
      %v1055 = vsel %vm824, %v918, 0
      %v1058 = vsel %vm824, %v919, 0
      %v1061 = vsel %vm824, %v920, 0
      %v1063 = vand.u32 %v951, 4294901760
      %1064 = vmatpush.msra.mxu0 %v1063
      %v1065 = vand.u32 %v949, 4294901760
      %1066 = vmatpush.msra.mxu0 %v1065
      %v1067 = vand.u32 %v947, 4294901760
      %1068 = vmatpush.msra.mxu0 %v1067
      %v1069 = vand.u32 %v945, 4294901760
      %1070 = vmatpush.msra.mxu0 %v1069
      %v1071 = vand.u32 %v943, 4294901760
      %1072 = vmatpush.msra.mxu0 %v1071
      %v1073 = vand.u32 %v941, 4294901760
      %1074 = vmatpush.msra.mxu0 %v1073
      %v1075 = vand.u32 %v939, 4294901760
      %1076 = vmatpush.msra.mxu0 %v1075
      %v1077 = vand.u32 %v937, 4294901760
      %1078 = vmatpush.msra.mxu0 %v1077
      %v1079 = vand.u32 %v935, 4294901760
      %1080 = vmatpush.msra.mxu0 %v1079
      %v1081 = vand.u32 %v933, 4294901760
      %1082 = vmatpush.msra.mxu0 %v1081
      %v1083 = vand.u32 %v931, 4294901760
      %1084 = vmatpush.msra.mxu0 %v1083
      %v1085 = vand.u32 %v929, 4294901760
      %1086 = vmatpush.msra.mxu0 %v1085
      %v1087 = vand.u32 %v927, 4294901760
      %1088 = vmatpush.msra.mxu0 %v1087
      %v1089 = vand.u32 %v925, 4294901760
      %1090 = vmatpush.msra.mxu0 %v1089
      %v1091 = vand.u32 %v923, 4294901760
      %1092 = vmatpush.msra.mxu0 %v1091
      %v1093 = vand.u32 %v921, 4294901760
      %1094 = vmatpush.msra.mxu0 %v1093
      %v1095 = vand.u32 %v825, 4294901760
      %v1096 = vsub.f32 %v825, %v1095
      %v1097 = vand.u32 %v1096, 4294901760
      %v1098 = vsub.f32 %v1096, %v1097
      %v1099 = vand.u32 %v1098, 4294901760
      %1100 = vmatmul.f32.gmra.mxu0 %v1099
      %v1101 = vpop.f32.mrf.mxu0
      %v1102 = vadd.f32 %v1011, %v1101
      %v1103 = vand.u32 %v826, 4294901760
      %v1104 = vsub.f32 %v826, %v1103
      %v1105 = vand.u32 %v1104, 4294901760
      %v1106 = vsub.f32 %v1104, %v1105
      %v1107 = vand.u32 %v1106, 4294901760
      %1108 = vmatmul.f32.gmra.mxu0 %v1107
      %v1109 = vpop.f32.mrf.mxu0
      %v1110 = vadd.f32 %v1011, %v1109
      %v1111 = vand.u32 %v827, 4294901760
      %v1112 = vsub.f32 %v827, %v1111
      %v1113 = vand.u32 %v1112, 4294901760
      %v1114 = vsub.f32 %v1112, %v1113
      %v1115 = vand.u32 %v1114, 4294901760
      %1116 = vmatmul.f32.gmra.mxu0 %v1115
      %v1117 = vpop.f32.mrf.mxu0
      %v1118 = vadd.f32 %v1011, %v1117
      %v1119 = vand.u32 %v828, 4294901760
      %v1120 = vsub.f32 %v828, %v1119
      %v1121 = vand.u32 %v1120, 4294901760
      %v1122 = vsub.f32 %v1120, %v1121
      %v1123 = vand.u32 %v1122, 4294901760
      %1124 = vmatmul.f32.gmra.mxu0 %v1123
      %v1125 = vpop.f32.mrf.mxu0
      %v1126 = vadd.f32 %v1011, %v1125
      %v1127 = vand.u32 %v829, 4294901760
      %v1128 = vsub.f32 %v829, %v1127
      %v1129 = vand.u32 %v1128, 4294901760
      %v1130 = vsub.f32 %v1128, %v1129
      %v1131 = vand.u32 %v1130, 4294901760
      %1132 = vmatmul.f32.gmra.mxu0 %v1131
      %v1133 = vpop.f32.mrf.mxu0
      %v1134 = vadd.f32 %v1011, %v1133
      %v1135 = vand.u32 %v830, 4294901760
      %v1136 = vsub.f32 %v830, %v1135
      %v1137 = vand.u32 %v1136, 4294901760
      %v1138 = vsub.f32 %v1136, %v1137
      %v1139 = vand.u32 %v1138, 4294901760
      %1140 = vmatmul.f32.gmra.mxu0 %v1139
      %v1141 = vpop.f32.mrf.mxu0
      %v1142 = vadd.f32 %v1011, %v1141
      %v1143 = vand.u32 %v831, 4294901760
      %v1144 = vsub.f32 %v831, %v1143
      %v1145 = vand.u32 %v1144, 4294901760
      %v1146 = vsub.f32 %v1144, %v1145
      %v1147 = vand.u32 %v1146, 4294901760
      %1148 = vmatmul.f32.gmra.mxu0 %v1147
      %v1149 = vpop.f32.mrf.mxu0
      %v1150 = vadd.f32 %v1011, %v1149
      %v1151 = vand.u32 %v832, 4294901760
      %v1152 = vsub.f32 %v832, %v1151
      %v1153 = vand.u32 %v1152, 4294901760
      %v1154 = vsub.f32 %v1152, %v1153
      %v1155 = vand.u32 %v1154, 4294901760
      %1156 = vmatmul.f32.gmra.mxu0 %v1155
      %v1157 = vpop.f32.mrf.mxu0
      %v1158 = vadd.f32 %v1011, %v1157
      %v1159 = vand.u32 %v833, 4294901760
      %v1160 = vsub.f32 %v833, %v1159
      %v1161 = vand.u32 %v1160, 4294901760
      %v1162 = vsub.f32 %v1160, %v1161
      %v1163 = vand.u32 %v1162, 4294901760
      %1164 = vmatmul.f32.gmra.mxu0 %v1163
      %v1165 = vpop.f32.mrf.mxu0
      %v1166 = vadd.f32 %v1011, %v1165
      %v1167 = vand.u32 %v834, 4294901760
      %v1168 = vsub.f32 %v834, %v1167
      %v1169 = vand.u32 %v1168, 4294901760
      %v1170 = vsub.f32 %v1168, %v1169
      %v1171 = vand.u32 %v1170, 4294901760
      %1172 = vmatmul.f32.gmra.mxu0 %v1171
      %v1173 = vpop.f32.mrf.mxu0
      %v1174 = vadd.f32 %v1011, %v1173
      %v1175 = vand.u32 %v835, 4294901760
      %v1176 = vsub.f32 %v835, %v1175
      %v1177 = vand.u32 %v1176, 4294901760
      %v1178 = vsub.f32 %v1176, %v1177
      %v1179 = vand.u32 %v1178, 4294901760
      %1180 = vmatmul.f32.gmra.mxu0 %v1179
      %v1181 = vpop.f32.mrf.mxu0
      %v1182 = vadd.f32 %v1011, %v1181
      %v1183 = vand.u32 %v836, 4294901760
      %v1184 = vsub.f32 %v836, %v1183
      %v1185 = vand.u32 %v1184, 4294901760
      %v1186 = vsub.f32 %v1184, %v1185
      %v1187 = vand.u32 %v1186, 4294901760
      %1188 = vmatmul.f32.gmra.mxu0 %v1187
      %v1189 = vpop.f32.mrf.mxu0
      %v1190 = vadd.f32 %v1011, %v1189
      %v1191 = vand.u32 %v837, 4294901760
      %v1192 = vsub.f32 %v837, %v1191
      %v1193 = vand.u32 %v1192, 4294901760
      %v1194 = vsub.f32 %v1192, %v1193
      %v1195 = vand.u32 %v1194, 4294901760
      %1196 = vmatmul.f32.gmra.mxu0 %v1195
      %v1197 = vpop.f32.mrf.mxu0
      %v1198 = vadd.f32 %v1011, %v1197
      %v1199 = vand.u32 %v838, 4294901760
      %v1200 = vsub.f32 %v838, %v1199
      %v1201 = vand.u32 %v1200, 4294901760
      %v1202 = vsub.f32 %v1200, %v1201
      %v1203 = vand.u32 %v1202, 4294901760
      %1204 = vmatmul.f32.gmra.mxu0 %v1203
      %v1205 = vpop.f32.mrf.mxu0
      %v1206 = vadd.f32 %v1011, %v1205
      %v1207 = vand.u32 %v839, 4294901760
      %v1208 = vsub.f32 %v839, %v1207
      %v1209 = vand.u32 %v1208, 4294901760
      %v1210 = vsub.f32 %v1208, %v1209
      %v1211 = vand.u32 %v1210, 4294901760
      %1212 = vmatmul.f32.gmra.mxu0 %v1211
      %v1213 = vpop.f32.mrf.mxu0
      %v1214 = vadd.f32 %v1011, %v1213
      %v1215 = vand.u32 %v840, 4294901760
      %v1216 = vsub.f32 %v840, %v1215
      %v1217 = vand.u32 %v1216, 4294901760
      %v1218 = vsub.f32 %v1216, %v1217
      %v1219 = vand.u32 %v1218, 4294901760
      %1220 = vmatmul.f32.gmra.mxu0 %v1219
      %v1221 = vpop.f32.mrf.mxu0
      %v1222 = vadd.f32 %v1011, %v1221
      %1223 = vdwg.mxu0
      %v1224 = vand.u32 %v951, 4294901760
      %v1225 = vsub.f32 %v951, %v1224
      %v1226 = vand.u32 %v1225, 4294901760
      %v1227 = vsub.f32 %v1225, %v1226
      %v1228 = vand.u32 %v1227, 4294901760
      %1229 = vmatpush.msra.mxu0 %v1228
      %v1230 = vand.u32 %v949, 4294901760
      %v1231 = vsub.f32 %v949, %v1230
      %v1232 = vand.u32 %v1231, 4294901760
      %v1233 = vsub.f32 %v1231, %v1232
      %v1234 = vand.u32 %v1233, 4294901760
      %1235 = vmatpush.msra.mxu0 %v1234
      %v1236 = vand.u32 %v947, 4294901760
      %v1237 = vsub.f32 %v947, %v1236
      %v1238 = vand.u32 %v1237, 4294901760
      %v1239 = vsub.f32 %v1237, %v1238
      %v1240 = vand.u32 %v1239, 4294901760
      %1241 = vmatpush.msra.mxu0 %v1240
      %v1242 = vand.u32 %v945, 4294901760
      %v1243 = vsub.f32 %v945, %v1242
      %v1244 = vand.u32 %v1243, 4294901760
      %v1245 = vsub.f32 %v1243, %v1244
      %v1246 = vand.u32 %v1245, 4294901760
      %1247 = vmatpush.msra.mxu0 %v1246
      %v1248 = vand.u32 %v943, 4294901760
      %v1249 = vsub.f32 %v943, %v1248
      %v1250 = vand.u32 %v1249, 4294901760
      %v1251 = vsub.f32 %v1249, %v1250
      %v1252 = vand.u32 %v1251, 4294901760
      %1253 = vmatpush.msra.mxu0 %v1252
      %v1254 = vand.u32 %v941, 4294901760
      %v1255 = vsub.f32 %v941, %v1254
      %v1256 = vand.u32 %v1255, 4294901760
      %v1257 = vsub.f32 %v1255, %v1256
      %v1258 = vand.u32 %v1257, 4294901760
      %1259 = vmatpush.msra.mxu0 %v1258
      %v1260 = vand.u32 %v939, 4294901760
      %v1261 = vsub.f32 %v939, %v1260
      %v1262 = vand.u32 %v1261, 4294901760
      %v1263 = vsub.f32 %v1261, %v1262
      %v1264 = vand.u32 %v1263, 4294901760
      %1265 = vmatpush.msra.mxu0 %v1264
      %v1266 = vand.u32 %v937, 4294901760
      %v1267 = vsub.f32 %v937, %v1266
      %v1268 = vand.u32 %v1267, 4294901760
      %v1269 = vsub.f32 %v1267, %v1268
      %v1270 = vand.u32 %v1269, 4294901760
      %1271 = vmatpush.msra.mxu0 %v1270
      %v1272 = vand.u32 %v935, 4294901760
      %v1273 = vsub.f32 %v935, %v1272
      %v1274 = vand.u32 %v1273, 4294901760
      %v1275 = vsub.f32 %v1273, %v1274
      %v1276 = vand.u32 %v1275, 4294901760
      %1277 = vmatpush.msra.mxu0 %v1276
      %v1278 = vand.u32 %v933, 4294901760
      %v1279 = vsub.f32 %v933, %v1278
      %v1280 = vand.u32 %v1279, 4294901760
      %v1281 = vsub.f32 %v1279, %v1280
      %v1282 = vand.u32 %v1281, 4294901760
      %1283 = vmatpush.msra.mxu0 %v1282
      %v1284 = vand.u32 %v931, 4294901760
      %v1285 = vsub.f32 %v931, %v1284
      %v1286 = vand.u32 %v1285, 4294901760
      %v1287 = vsub.f32 %v1285, %v1286
      %v1288 = vand.u32 %v1287, 4294901760
      %1289 = vmatpush.msra.mxu0 %v1288
      %v1290 = vand.u32 %v929, 4294901760
      %v1291 = vsub.f32 %v929, %v1290
      %v1292 = vand.u32 %v1291, 4294901760
      %v1293 = vsub.f32 %v1291, %v1292
      %v1294 = vand.u32 %v1293, 4294901760
      %1295 = vmatpush.msra.mxu0 %v1294
      %v1296 = vand.u32 %v927, 4294901760
      %v1297 = vsub.f32 %v927, %v1296
      %v1298 = vand.u32 %v1297, 4294901760
      %v1299 = vsub.f32 %v1297, %v1298
      %v1300 = vand.u32 %v1299, 4294901760
      %1301 = vmatpush.msra.mxu0 %v1300
      %v1302 = vand.u32 %v925, 4294901760
      %v1303 = vsub.f32 %v925, %v1302
      %v1304 = vand.u32 %v1303, 4294901760
      %v1305 = vsub.f32 %v1303, %v1304
      %v1306 = vand.u32 %v1305, 4294901760
      %1307 = vmatpush.msra.mxu0 %v1306
      %v1308 = vand.u32 %v923, 4294901760
      %v1309 = vsub.f32 %v923, %v1308
      %v1310 = vand.u32 %v1309, 4294901760
      %v1311 = vsub.f32 %v1309, %v1310
      %v1312 = vand.u32 %v1311, 4294901760
      %1313 = vmatpush.msra.mxu0 %v1312
      %v1314 = vand.u32 %v921, 4294901760
      %v1315 = vsub.f32 %v921, %v1314
      %v1316 = vand.u32 %v1315, 4294901760
      %v1317 = vsub.f32 %v1315, %v1316
      %v1318 = vand.u32 %v1317, 4294901760
      %1319 = vmatpush.msra.mxu0 %v1318
      %v1320 = vand.u32 %v825, 4294901760
      %1321 = vmatmul.f32.gmra.mxu0 %v1320
      %v1322 = vpop.f32.mrf.mxu0
      %v1323 = vadd.f32 %v1102, %v1322
      %v1324 = vand.u32 %v826, 4294901760
      %1325 = vmatmul.f32.gmra.mxu0 %v1324
      %v1326 = vpop.f32.mrf.mxu0
      %v1327 = vadd.f32 %v1110, %v1326
      %v1328 = vand.u32 %v827, 4294901760
      %1329 = vmatmul.f32.gmra.mxu0 %v1328
      %v1330 = vpop.f32.mrf.mxu0
      %v1331 = vadd.f32 %v1118, %v1330
      %v1332 = vand.u32 %v828, 4294901760
      %1333 = vmatmul.f32.gmra.mxu0 %v1332
      %v1334 = vpop.f32.mrf.mxu0
      %v1335 = vadd.f32 %v1126, %v1334
      %v1336 = vand.u32 %v829, 4294901760
      %1337 = vmatmul.f32.gmra.mxu0 %v1336
      %v1338 = vpop.f32.mrf.mxu0
      %v1339 = vadd.f32 %v1134, %v1338
      %v1340 = vand.u32 %v830, 4294901760
      %1341 = vmatmul.f32.gmra.mxu0 %v1340
      %v1342 = vpop.f32.mrf.mxu0
      %v1343 = vadd.f32 %v1142, %v1342
      %v1344 = vand.u32 %v831, 4294901760
      %1345 = vmatmul.f32.gmra.mxu0 %v1344
      %v1346 = vpop.f32.mrf.mxu0
      %v1347 = vadd.f32 %v1150, %v1346
      %v1348 = vand.u32 %v832, 4294901760
      %1349 = vmatmul.f32.gmra.mxu0 %v1348
      %v1350 = vpop.f32.mrf.mxu0
      %v1351 = vadd.f32 %v1158, %v1350
      %v1352 = vand.u32 %v833, 4294901760
      %1353 = vmatmul.f32.gmra.mxu0 %v1352
      %v1354 = vpop.f32.mrf.mxu0
      %v1355 = vadd.f32 %v1166, %v1354
      %v1356 = vand.u32 %v834, 4294901760
      %1357 = vmatmul.f32.gmra.mxu0 %v1356
      %v1358 = vpop.f32.mrf.mxu0
      %v1359 = vadd.f32 %v1174, %v1358
      %v1360 = vand.u32 %v835, 4294901760
      %1361 = vmatmul.f32.gmra.mxu0 %v1360
      %v1362 = vpop.f32.mrf.mxu0
      %v1363 = vadd.f32 %v1182, %v1362
      %v1364 = vand.u32 %v836, 4294901760
      %1365 = vmatmul.f32.gmra.mxu0 %v1364
      %v1366 = vpop.f32.mrf.mxu0
      %v1367 = vadd.f32 %v1190, %v1366
      %v1368 = vand.u32 %v837, 4294901760
      %1369 = vmatmul.f32.gmra.mxu0 %v1368
      %v1370 = vpop.f32.mrf.mxu0
      %v1371 = vadd.f32 %v1198, %v1370
      %v1372 = vand.u32 %v838, 4294901760
      %1373 = vmatmul.f32.gmra.mxu0 %v1372
      %v1374 = vpop.f32.mrf.mxu0
      %v1375 = vadd.f32 %v1206, %v1374
      %v1376 = vand.u32 %v839, 4294901760
      %1377 = vmatmul.f32.gmra.mxu0 %v1376
      %v1378 = vpop.f32.mrf.mxu0
      %v1379 = vadd.f32 %v1214, %v1378
      %v1380 = vand.u32 %v840, 4294901760
      %1381 = vmatmul.f32.gmra.mxu0 %v1380
      %v1382 = vpop.f32.mrf.mxu0
      %v1383 = vadd.f32 %v1222, %v1382
      %1384 = vdwg.mxu0
      %v1385 = vand.u32 %v951, 4294901760
      %v1386 = vsub.f32 %v951, %v1385
      %1387 = vmatpush.msra.mxu0 %v1386
      %v1388 = vand.u32 %v949, 4294901760
      %v1389 = vsub.f32 %v949, %v1388
      %1390 = vmatpush.msra.mxu0 %v1389
      %v1391 = vand.u32 %v947, 4294901760
      %v1392 = vsub.f32 %v947, %v1391
      %1393 = vmatpush.msra.mxu0 %v1392
      %v1394 = vand.u32 %v945, 4294901760
      %v1395 = vsub.f32 %v945, %v1394
      %1396 = vmatpush.msra.mxu0 %v1395
      %v1397 = vand.u32 %v943, 4294901760
      %v1398 = vsub.f32 %v943, %v1397
      %1399 = vmatpush.msra.mxu0 %v1398
      %v1400 = vand.u32 %v941, 4294901760
      %v1401 = vsub.f32 %v941, %v1400
      %1402 = vmatpush.msra.mxu0 %v1401
      %v1403 = vand.u32 %v939, 4294901760
      %v1404 = vsub.f32 %v939, %v1403
      %1405 = vmatpush.msra.mxu0 %v1404
      %v1406 = vand.u32 %v937, 4294901760
      %v1407 = vsub.f32 %v937, %v1406
      %1408 = vmatpush.msra.mxu0 %v1407
      %v1409 = vand.u32 %v935, 4294901760
      %v1410 = vsub.f32 %v935, %v1409
      %1411 = vmatpush.msra.mxu0 %v1410
      %v1412 = vand.u32 %v933, 4294901760
      %v1413 = vsub.f32 %v933, %v1412
      %1414 = vmatpush.msra.mxu0 %v1413
      %v1415 = vand.u32 %v931, 4294901760
      %v1416 = vsub.f32 %v931, %v1415
      %1417 = vmatpush.msra.mxu0 %v1416
      %v1418 = vand.u32 %v929, 4294901760
      %v1419 = vsub.f32 %v929, %v1418
      %1420 = vmatpush.msra.mxu0 %v1419
      %v1421 = vand.u32 %v927, 4294901760
      %v1422 = vsub.f32 %v927, %v1421
      %1423 = vmatpush.msra.mxu0 %v1422
      %v1424 = vand.u32 %v925, 4294901760
      %v1425 = vsub.f32 %v925, %v1424
      %1426 = vmatpush.msra.mxu0 %v1425
      %v1427 = vand.u32 %v923, 4294901760
      %v1428 = vsub.f32 %v923, %v1427
      %1429 = vmatpush.msra.mxu0 %v1428
      %v1430 = vand.u32 %v921, 4294901760
      %v1431 = vsub.f32 %v921, %v1430
      %1432 = vmatpush.msra.mxu0 %v1431
      %v1433 = vand.u32 %v825, 4294901760
      %v1434 = vsub.f32 %v825, %v1433
      %1435 = vmatmul.f32.gmra.mxu0 %v1434
      %v1436 = vpop.f32.mrf.mxu0
      %v1437 = vadd.f32 %v1323, %v1436
      %v1438 = vand.u32 %v826, 4294901760
      %v1439 = vsub.f32 %v826, %v1438
      %1440 = vmatmul.f32.gmra.mxu0 %v1439
      %v1441 = vpop.f32.mrf.mxu0
      %v1442 = vadd.f32 %v1327, %v1441
      %v1443 = vand.u32 %v827, 4294901760
      %v1444 = vsub.f32 %v827, %v1443
      %1445 = vmatmul.f32.gmra.mxu0 %v1444
      %v1446 = vpop.f32.mrf.mxu0
      %v1447 = vadd.f32 %v1331, %v1446
      %v1448 = vand.u32 %v828, 4294901760
      %v1449 = vsub.f32 %v828, %v1448
      %1450 = vmatmul.f32.gmra.mxu0 %v1449
      %v1451 = vpop.f32.mrf.mxu0
      %v1452 = vadd.f32 %v1335, %v1451
      %v1453 = vand.u32 %v829, 4294901760
      %v1454 = vsub.f32 %v829, %v1453
      %1455 = vmatmul.f32.gmra.mxu0 %v1454
      %v1456 = vpop.f32.mrf.mxu0
      %v1457 = vadd.f32 %v1339, %v1456
      %v1458 = vand.u32 %v830, 4294901760
      %v1459 = vsub.f32 %v830, %v1458
      %1460 = vmatmul.f32.gmra.mxu0 %v1459
      %v1461 = vpop.f32.mrf.mxu0
      %v1462 = vadd.f32 %v1343, %v1461
      %v1463 = vand.u32 %v831, 4294901760
      %v1464 = vsub.f32 %v831, %v1463
      %1465 = vmatmul.f32.gmra.mxu0 %v1464
      %v1466 = vpop.f32.mrf.mxu0
      %v1467 = vadd.f32 %v1347, %v1466
      %v1468 = vand.u32 %v832, 4294901760
      %v1469 = vsub.f32 %v832, %v1468
      %1470 = vmatmul.f32.gmra.mxu0 %v1469
      %v1471 = vpop.f32.mrf.mxu0
      %v1472 = vadd.f32 %v1351, %v1471
      %v1473 = vand.u32 %v833, 4294901760
      %v1474 = vsub.f32 %v833, %v1473
      %1475 = vmatmul.f32.gmra.mxu0 %v1474
      %v1476 = vpop.f32.mrf.mxu0
      %v1477 = vadd.f32 %v1355, %v1476
      %v1478 = vand.u32 %v834, 4294901760
      %v1479 = vsub.f32 %v834, %v1478
      %1480 = vmatmul.f32.gmra.mxu0 %v1479
      %v1481 = vpop.f32.mrf.mxu0
      %v1482 = vadd.f32 %v1359, %v1481
      %v1483 = vand.u32 %v835, 4294901760
      %v1484 = vsub.f32 %v835, %v1483
      %1485 = vmatmul.f32.gmra.mxu0 %v1484
      %v1486 = vpop.f32.mrf.mxu0
      %v1487 = vadd.f32 %v1363, %v1486
      %v1488 = vand.u32 %v836, 4294901760
      %v1489 = vsub.f32 %v836, %v1488
      %1490 = vmatmul.f32.gmra.mxu0 %v1489
      %v1491 = vpop.f32.mrf.mxu0
      %v1492 = vadd.f32 %v1367, %v1491
      %v1493 = vand.u32 %v837, 4294901760
      %v1494 = vsub.f32 %v837, %v1493
      %1495 = vmatmul.f32.gmra.mxu0 %v1494
      %v1496 = vpop.f32.mrf.mxu0
      %v1497 = vadd.f32 %v1371, %v1496
      %v1498 = vand.u32 %v838, 4294901760
      %v1499 = vsub.f32 %v838, %v1498
      %1500 = vmatmul.f32.gmra.mxu0 %v1499
      %v1501 = vpop.f32.mrf.mxu0
      %v1502 = vadd.f32 %v1375, %v1501
      %v1503 = vand.u32 %v839, 4294901760
      %v1504 = vsub.f32 %v839, %v1503
      %1505 = vmatmul.f32.gmra.mxu0 %v1504
      %v1506 = vpop.f32.mrf.mxu0
      %v1507 = vadd.f32 %v1379, %v1506
      %v1508 = vand.u32 %v840, 4294901760
      %v1509 = vsub.f32 %v840, %v1508
      %1510 = vmatmul.f32.gmra.mxu0 %v1509
      %v1511 = vpop.f32.mrf.mxu0
      %v1512 = vadd.f32 %v1383, %v1511
      %1513 = vdwg.mxu0
      %v1514 = vand.u32 %v951, 4294901760
      %1515 = vmatpush.msra.mxu0 %v1514
      %v1516 = vand.u32 %v949, 4294901760
      %1517 = vmatpush.msra.mxu0 %v1516
      %v1518 = vand.u32 %v947, 4294901760
      %1519 = vmatpush.msra.mxu0 %v1518
      %v1520 = vand.u32 %v945, 4294901760
      %1521 = vmatpush.msra.mxu0 %v1520
      %v1522 = vand.u32 %v943, 4294901760
      %1523 = vmatpush.msra.mxu0 %v1522
      %v1524 = vand.u32 %v941, 4294901760
      %1525 = vmatpush.msra.mxu0 %v1524
      %v1526 = vand.u32 %v939, 4294901760
      %1527 = vmatpush.msra.mxu0 %v1526
      %v1528 = vand.u32 %v937, 4294901760
      %1529 = vmatpush.msra.mxu0 %v1528
      %v1530 = vand.u32 %v935, 4294901760
      %1531 = vmatpush.msra.mxu0 %v1530
      %v1532 = vand.u32 %v933, 4294901760
      %1533 = vmatpush.msra.mxu0 %v1532
      %v1534 = vand.u32 %v931, 4294901760
      %1535 = vmatpush.msra.mxu0 %v1534
      %v1536 = vand.u32 %v929, 4294901760
      %1537 = vmatpush.msra.mxu0 %v1536
      %v1538 = vand.u32 %v927, 4294901760
      %1539 = vmatpush.msra.mxu0 %v1538
      %v1540 = vand.u32 %v925, 4294901760
      %1541 = vmatpush.msra.mxu0 %v1540
      %v1542 = vand.u32 %v923, 4294901760
      %1543 = vmatpush.msra.mxu0 %v1542
      %v1544 = vand.u32 %v921, 4294901760
      %1545 = vmatpush.msra.mxu0 %v1544
      %v1546 = vand.u32 %v825, 4294901760
      %v1547 = vsub.f32 %v825, %v1546
      %v1548 = vand.u32 %v1547, 4294901760
      %1549 = vmatmul.f32.gmra.mxu0 %v1548
      %v1550 = vpop.f32.mrf.mxu0
      %v1551 = vadd.f32 %v1437, %v1550
      %v1552 = vand.u32 %v826, 4294901760
      %v1553 = vsub.f32 %v826, %v1552
      %v1554 = vand.u32 %v1553, 4294901760
      %1555 = vmatmul.f32.gmra.mxu0 %v1554
      %v1556 = vpop.f32.mrf.mxu0
      %v1557 = vadd.f32 %v1442, %v1556
      %v1558 = vand.u32 %v827, 4294901760
      %v1559 = vsub.f32 %v827, %v1558
      %v1560 = vand.u32 %v1559, 4294901760
      %1561 = vmatmul.f32.gmra.mxu0 %v1560
      %v1562 = vpop.f32.mrf.mxu0
      %v1563 = vadd.f32 %v1447, %v1562
      %v1564 = vand.u32 %v828, 4294901760
      %v1565 = vsub.f32 %v828, %v1564
      %v1566 = vand.u32 %v1565, 4294901760
      %1567 = vmatmul.f32.gmra.mxu0 %v1566
      %v1568 = vpop.f32.mrf.mxu0
      %v1569 = vadd.f32 %v1452, %v1568
      %v1570 = vand.u32 %v829, 4294901760
      %v1571 = vsub.f32 %v829, %v1570
      %v1572 = vand.u32 %v1571, 4294901760
      %1573 = vmatmul.f32.gmra.mxu0 %v1572
      %v1574 = vpop.f32.mrf.mxu0
      %v1575 = vadd.f32 %v1457, %v1574
      %v1576 = vand.u32 %v830, 4294901760
      %v1577 = vsub.f32 %v830, %v1576
      %v1578 = vand.u32 %v1577, 4294901760
      %1579 = vmatmul.f32.gmra.mxu0 %v1578
      %v1580 = vpop.f32.mrf.mxu0
      %v1581 = vadd.f32 %v1462, %v1580
      %v1582 = vand.u32 %v831, 4294901760
      %v1583 = vsub.f32 %v831, %v1582
      %v1584 = vand.u32 %v1583, 4294901760
      %1585 = vmatmul.f32.gmra.mxu0 %v1584
      %v1586 = vpop.f32.mrf.mxu0
      %v1587 = vadd.f32 %v1467, %v1586
      %v1588 = vand.u32 %v832, 4294901760
      %v1589 = vsub.f32 %v832, %v1588
      %v1590 = vand.u32 %v1589, 4294901760
      %1591 = vmatmul.f32.gmra.mxu0 %v1590
      %v1592 = vpop.f32.mrf.mxu0
      %v1593 = vadd.f32 %v1472, %v1592
      %v1594 = vand.u32 %v833, 4294901760
      %v1595 = vsub.f32 %v833, %v1594
      %v1596 = vand.u32 %v1595, 4294901760
      %1597 = vmatmul.f32.gmra.mxu0 %v1596
      %v1598 = vpop.f32.mrf.mxu0
      %v1599 = vadd.f32 %v1477, %v1598
      %v1600 = vand.u32 %v834, 4294901760
      %v1601 = vsub.f32 %v834, %v1600
      %v1602 = vand.u32 %v1601, 4294901760
      %1603 = vmatmul.f32.gmra.mxu0 %v1602
      %v1604 = vpop.f32.mrf.mxu0
      %v1605 = vadd.f32 %v1482, %v1604
      %v1606 = vand.u32 %v835, 4294901760
      %v1607 = vsub.f32 %v835, %v1606
      %v1608 = vand.u32 %v1607, 4294901760
      %1609 = vmatmul.f32.gmra.mxu0 %v1608
      %v1610 = vpop.f32.mrf.mxu0
      %v1611 = vadd.f32 %v1487, %v1610
      %v1612 = vand.u32 %v836, 4294901760
      %v1613 = vsub.f32 %v836, %v1612
      %v1614 = vand.u32 %v1613, 4294901760
      %1615 = vmatmul.f32.gmra.mxu0 %v1614
      %v1616 = vpop.f32.mrf.mxu0
      %v1617 = vadd.f32 %v1492, %v1616
      %v1618 = vand.u32 %v837, 4294901760
      %v1619 = vsub.f32 %v837, %v1618
      %v1620 = vand.u32 %v1619, 4294901760
      %1621 = vmatmul.f32.gmra.mxu0 %v1620
      %v1622 = vpop.f32.mrf.mxu0
      %v1623 = vadd.f32 %v1497, %v1622
      %v1624 = vand.u32 %v838, 4294901760
      %v1625 = vsub.f32 %v838, %v1624
      %v1626 = vand.u32 %v1625, 4294901760
      %1627 = vmatmul.f32.gmra.mxu0 %v1626
      %v1628 = vpop.f32.mrf.mxu0
      %v1629 = vadd.f32 %v1502, %v1628
      %v1630 = vand.u32 %v839, 4294901760
      %v1631 = vsub.f32 %v839, %v1630
      %v1632 = vand.u32 %v1631, 4294901760
      %1633 = vmatmul.f32.gmra.mxu0 %v1632
      %v1634 = vpop.f32.mrf.mxu0
      %v1635 = vadd.f32 %v1507, %v1634
      %v1636 = vand.u32 %v840, 4294901760
      %v1637 = vsub.f32 %v840, %v1636
      %v1638 = vand.u32 %v1637, 4294901760
      %1639 = vmatmul.f32.gmra.mxu0 %v1638
      %v1640 = vpop.f32.mrf.mxu0
      %v1641 = vadd.f32 %v1512, %v1640
      %1642 = vdwg.mxu0
      %v1643 = vand.u32 %v951, 4294901760
      %v1644 = vsub.f32 %v951, %v1643
      %v1645 = vand.u32 %v1644, 4294901760
      %1646 = vmatpush.msra.mxu0 %v1645
      %v1647 = vand.u32 %v949, 4294901760
      %v1648 = vsub.f32 %v949, %v1647
      %v1649 = vand.u32 %v1648, 4294901760
      %1650 = vmatpush.msra.mxu0 %v1649
      %v1651 = vand.u32 %v947, 4294901760
      %v1652 = vsub.f32 %v947, %v1651
      %v1653 = vand.u32 %v1652, 4294901760
      %1654 = vmatpush.msra.mxu0 %v1653
      %v1655 = vand.u32 %v945, 4294901760
      %v1656 = vsub.f32 %v945, %v1655
      %v1657 = vand.u32 %v1656, 4294901760
      %1658 = vmatpush.msra.mxu0 %v1657
      %v1659 = vand.u32 %v943, 4294901760
      %v1660 = vsub.f32 %v943, %v1659
      %v1661 = vand.u32 %v1660, 4294901760
      %1662 = vmatpush.msra.mxu0 %v1661
      %v1663 = vand.u32 %v941, 4294901760
      %v1664 = vsub.f32 %v941, %v1663
      %v1665 = vand.u32 %v1664, 4294901760
      %1666 = vmatpush.msra.mxu0 %v1665
      %v1667 = vand.u32 %v939, 4294901760
      %v1668 = vsub.f32 %v939, %v1667
      %v1669 = vand.u32 %v1668, 4294901760
      %1670 = vmatpush.msra.mxu0 %v1669
      %v1671 = vand.u32 %v937, 4294901760
      %v1672 = vsub.f32 %v937, %v1671
      %v1673 = vand.u32 %v1672, 4294901760
      %1674 = vmatpush.msra.mxu0 %v1673
      %v1675 = vand.u32 %v935, 4294901760
      %v1676 = vsub.f32 %v935, %v1675
      %v1677 = vand.u32 %v1676, 4294901760
      %1678 = vmatpush.msra.mxu0 %v1677
      %v1679 = vand.u32 %v933, 4294901760
      %v1680 = vsub.f32 %v933, %v1679
      %v1681 = vand.u32 %v1680, 4294901760
      %1682 = vmatpush.msra.mxu0 %v1681
      %v1683 = vand.u32 %v931, 4294901760
      %v1684 = vsub.f32 %v931, %v1683
      %v1685 = vand.u32 %v1684, 4294901760
      %1686 = vmatpush.msra.mxu0 %v1685
      %v1687 = vand.u32 %v929, 4294901760
      %v1688 = vsub.f32 %v929, %v1687
      %v1689 = vand.u32 %v1688, 4294901760
      %1690 = vmatpush.msra.mxu0 %v1689
      %v1691 = vand.u32 %v927, 4294901760
      %v1692 = vsub.f32 %v927, %v1691
      %v1693 = vand.u32 %v1692, 4294901760
      %1694 = vmatpush.msra.mxu0 %v1693
      %v1695 = vand.u32 %v925, 4294901760
      %v1696 = vsub.f32 %v925, %v1695
      %v1697 = vand.u32 %v1696, 4294901760
      %1698 = vmatpush.msra.mxu0 %v1697
      %v1699 = vand.u32 %v923, 4294901760
      %v1700 = vsub.f32 %v923, %v1699
      %v1701 = vand.u32 %v1700, 4294901760
      %1702 = vmatpush.msra.mxu0 %v1701
      %v1703 = vand.u32 %v921, 4294901760
      %v1704 = vsub.f32 %v921, %v1703
      %v1705 = vand.u32 %v1704, 4294901760
      %1706 = vmatpush.msra.mxu0 %v1705
      %v1707 = vand.u32 %v825, 4294901760
      %1708 = vmatmul.f32.gmra.mxu0 %v1707
      %v1709 = vpop.f32.mrf.mxu0
      %v1710 = vadd.f32 %v1551, %v1709
      %v1711 = vand.u32 %v826, 4294901760
      %1712 = vmatmul.f32.gmra.mxu0 %v1711
      %v1713 = vpop.f32.mrf.mxu0
      %v1714 = vadd.f32 %v1557, %v1713
      %v1715 = vand.u32 %v827, 4294901760
      %1716 = vmatmul.f32.gmra.mxu0 %v1715
      %v1717 = vpop.f32.mrf.mxu0
      %v1718 = vadd.f32 %v1563, %v1717
      %v1719 = vand.u32 %v828, 4294901760
      %1720 = vmatmul.f32.gmra.mxu0 %v1719
      %v1721 = vpop.f32.mrf.mxu0
      %v1722 = vadd.f32 %v1569, %v1721
      %v1723 = vand.u32 %v829, 4294901760
      %1724 = vmatmul.f32.gmra.mxu0 %v1723
      %v1725 = vpop.f32.mrf.mxu0
      %v1726 = vadd.f32 %v1575, %v1725
      %v1727 = vand.u32 %v830, 4294901760
      %1728 = vmatmul.f32.gmra.mxu0 %v1727
      %v1729 = vpop.f32.mrf.mxu0
      %v1730 = vadd.f32 %v1581, %v1729
      %v1731 = vand.u32 %v831, 4294901760
      %1732 = vmatmul.f32.gmra.mxu0 %v1731
      %v1733 = vpop.f32.mrf.mxu0
      %v1734 = vadd.f32 %v1587, %v1733
      %v1735 = vand.u32 %v832, 4294901760
      %1736 = vmatmul.f32.gmra.mxu0 %v1735
      %v1737 = vpop.f32.mrf.mxu0
      %v1738 = vadd.f32 %v1593, %v1737
      %v1739 = vand.u32 %v833, 4294901760
      %1740 = vmatmul.f32.gmra.mxu0 %v1739
      %v1741 = vpop.f32.mrf.mxu0
      %v1742 = vadd.f32 %v1599, %v1741
      %v1743 = vand.u32 %v834, 4294901760
      %1744 = vmatmul.f32.gmra.mxu0 %v1743
      %v1745 = vpop.f32.mrf.mxu0
      %v1746 = vadd.f32 %v1605, %v1745
      %v1747 = vand.u32 %v835, 4294901760
      %1748 = vmatmul.f32.gmra.mxu0 %v1747
      %v1749 = vpop.f32.mrf.mxu0
      %v1750 = vadd.f32 %v1611, %v1749
      %v1751 = vand.u32 %v836, 4294901760
      %1752 = vmatmul.f32.gmra.mxu0 %v1751
      %v1753 = vpop.f32.mrf.mxu0
      %v1754 = vadd.f32 %v1617, %v1753
      %v1755 = vand.u32 %v837, 4294901760
      %1756 = vmatmul.f32.gmra.mxu0 %v1755
      %v1757 = vpop.f32.mrf.mxu0
      %v1758 = vadd.f32 %v1623, %v1757
      %v1759 = vand.u32 %v838, 4294901760
      %1760 = vmatmul.f32.gmra.mxu0 %v1759
      %v1761 = vpop.f32.mrf.mxu0
      %v1762 = vadd.f32 %v1629, %v1761
      %v1763 = vand.u32 %v839, 4294901760
      %1764 = vmatmul.f32.gmra.mxu0 %v1763
      %v1765 = vpop.f32.mrf.mxu0
      %v1766 = vadd.f32 %v1635, %v1765
      %v1767 = vand.u32 %v840, 4294901760
      %1768 = vmatmul.f32.gmra.mxu0 %v1767
      %v1769 = vpop.f32.mrf.mxu0
      %v1770 = vadd.f32 %v1641, %v1769
      %1771 = vdwg.mxu0
      %v1772 = vand.u32 %v951, 4294901760
      %1773 = vmatpush.msra.mxu0 %v1772
      %v1774 = vand.u32 %v949, 4294901760
      %1775 = vmatpush.msra.mxu0 %v1774
      %v1776 = vand.u32 %v947, 4294901760
      %1777 = vmatpush.msra.mxu0 %v1776
      %v1778 = vand.u32 %v945, 4294901760
      %1779 = vmatpush.msra.mxu0 %v1778
      %v1780 = vand.u32 %v943, 4294901760
      %1781 = vmatpush.msra.mxu0 %v1780
      %v1782 = vand.u32 %v941, 4294901760
      %1783 = vmatpush.msra.mxu0 %v1782
      %v1784 = vand.u32 %v939, 4294901760
      %1785 = vmatpush.msra.mxu0 %v1784
      %v1786 = vand.u32 %v937, 4294901760
      %1787 = vmatpush.msra.mxu0 %v1786
      %v1788 = vand.u32 %v935, 4294901760
      %1789 = vmatpush.msra.mxu0 %v1788
      %v1790 = vand.u32 %v933, 4294901760
      %1791 = vmatpush.msra.mxu0 %v1790
      %v1792 = vand.u32 %v931, 4294901760
      %1793 = vmatpush.msra.mxu0 %v1792
      %v1794 = vand.u32 %v929, 4294901760
      %1795 = vmatpush.msra.mxu0 %v1794
      %v1796 = vand.u32 %v927, 4294901760
      %1797 = vmatpush.msra.mxu0 %v1796
      %v1798 = vand.u32 %v925, 4294901760
      %1799 = vmatpush.msra.mxu0 %v1798
      %v1800 = vand.u32 %v923, 4294901760
      %1801 = vmatpush.msra.mxu0 %v1800
      %v1802 = vand.u32 %v921, 4294901760
      %1803 = vmatpush.msra.mxu0 %v1802
      %v1804 = vand.u32 %v825, 4294901760
      %1805 = vmatmul.f32.gmra.mxu0 %v1804
      %v1806 = vpop.f32.mrf.mxu0
      %v1807 = vadd.f32 %v1710, %v1806
      %v1808 = vand.u32 %v826, 4294901760
      %1809 = vmatmul.f32.gmra.mxu0 %v1808
      %v1810 = vpop.f32.mrf.mxu0
      %v1811 = vadd.f32 %v1714, %v1810
      %v1812 = vand.u32 %v827, 4294901760
      %1813 = vmatmul.f32.gmra.mxu0 %v1812
      %v1814 = vpop.f32.mrf.mxu0
      %v1815 = vadd.f32 %v1718, %v1814
      %v1816 = vand.u32 %v828, 4294901760
      %1817 = vmatmul.f32.gmra.mxu0 %v1816
      %v1818 = vpop.f32.mrf.mxu0
      %v1819 = vadd.f32 %v1722, %v1818
      %v1820 = vand.u32 %v829, 4294901760
      %1821 = vmatmul.f32.gmra.mxu0 %v1820
      %v1822 = vpop.f32.mrf.mxu0
      %v1823 = vadd.f32 %v1726, %v1822
      %v1824 = vand.u32 %v830, 4294901760
      %1825 = vmatmul.f32.gmra.mxu0 %v1824
      %v1826 = vpop.f32.mrf.mxu0
      %v1827 = vadd.f32 %v1730, %v1826
      %v1828 = vand.u32 %v831, 4294901760
      %1829 = vmatmul.f32.gmra.mxu0 %v1828
      %v1830 = vpop.f32.mrf.mxu0
      %v1831 = vadd.f32 %v1734, %v1830
      %v1832 = vand.u32 %v832, 4294901760
      %1833 = vmatmul.f32.gmra.mxu0 %v1832
      %v1834 = vpop.f32.mrf.mxu0
      %v1835 = vadd.f32 %v1738, %v1834
      %v1836 = vand.u32 %v833, 4294901760
      %1837 = vmatmul.f32.gmra.mxu0 %v1836
      %v1838 = vpop.f32.mrf.mxu0
      %v1839 = vadd.f32 %v1742, %v1838
      %v1840 = vand.u32 %v834, 4294901760
      %1841 = vmatmul.f32.gmra.mxu0 %v1840
      %v1842 = vpop.f32.mrf.mxu0
      %v1843 = vadd.f32 %v1746, %v1842
      %v1844 = vand.u32 %v835, 4294901760
      %1845 = vmatmul.f32.gmra.mxu0 %v1844
      %v1846 = vpop.f32.mrf.mxu0
      %v1847 = vadd.f32 %v1750, %v1846
      %v1848 = vand.u32 %v836, 4294901760
      %1849 = vmatmul.f32.gmra.mxu0 %v1848
      %v1850 = vpop.f32.mrf.mxu0
      %v1851 = vadd.f32 %v1754, %v1850
      %v1852 = vand.u32 %v837, 4294901760
      %1853 = vmatmul.f32.gmra.mxu0 %v1852
      %v1854 = vpop.f32.mrf.mxu0
      %v1855 = vadd.f32 %v1758, %v1854
      %v1856 = vand.u32 %v838, 4294901760
      %1857 = vmatmul.f32.gmra.mxu0 %v1856
      %v1858 = vpop.f32.mrf.mxu0
      %v1859 = vadd.f32 %v1762, %v1858
      %v1860 = vand.u32 %v839, 4294901760
      %1861 = vmatmul.f32.gmra.mxu0 %v1860
      %v1862 = vpop.f32.mrf.mxu0
      %v1863 = vadd.f32 %v1766, %v1862
      %v1864 = vand.u32 %v840, 4294901760
      %1865 = vmatmul.f32.gmra.mxu0 %v1864
      %v1866 = vpop.f32.mrf.mxu0
      %v1867 = vadd.f32 %v1770, %v1866
      %1868 = vdwg.mxu0
      %v1869 = vand.u32 %v983, 4294901760
      %1870 = vmatpush.msra.mxu0 %v1869
      %v1871 = vand.u32 %v981, 4294901760
      %1872 = vmatpush.msra.mxu0 %v1871
      %v1873 = vand.u32 %v979, 4294901760
      %1874 = vmatpush.msra.mxu0 %v1873
      %v1875 = vand.u32 %v977, 4294901760
      %1876 = vmatpush.msra.mxu0 %v1875
      %v1877 = vand.u32 %v975, 4294901760
      %1878 = vmatpush.msra.mxu0 %v1877
      %v1879 = vand.u32 %v973, 4294901760
      %1880 = vmatpush.msra.mxu0 %v1879
      %v1881 = vand.u32 %v971, 4294901760
      %1882 = vmatpush.msra.mxu0 %v1881
      %v1883 = vand.u32 %v969, 4294901760
      %1884 = vmatpush.msra.mxu0 %v1883
      %v1885 = vand.u32 %v967, 4294901760
      %1886 = vmatpush.msra.mxu0 %v1885
      %v1887 = vand.u32 %v965, 4294901760
      %1888 = vmatpush.msra.mxu0 %v1887
      %v1889 = vand.u32 %v963, 4294901760
      %1890 = vmatpush.msra.mxu0 %v1889
      %v1891 = vand.u32 %v961, 4294901760
      %1892 = vmatpush.msra.mxu0 %v1891
      %v1893 = vand.u32 %v959, 4294901760
      %1894 = vmatpush.msra.mxu0 %v1893
      %v1895 = vand.u32 %v957, 4294901760
      %1896 = vmatpush.msra.mxu0 %v1895
      %v1897 = vand.u32 %v955, 4294901760
      %1898 = vmatpush.msra.mxu0 %v1897
      %v1899 = vand.u32 %v953, 4294901760
      %1900 = vmatpush.msra.mxu0 %v1899
      %v1901 = vand.u32 %v873, 4294901760
      %v1902 = vsub.f32 %v873, %v1901
      %v1903 = vand.u32 %v1902, 4294901760
      %v1904 = vsub.f32 %v1902, %v1903
      %v1905 = vand.u32 %v1904, 4294901760
      %1906 = vmatmul.f32.gmra.mxu0 %v1905
      %v1907 = vpop.f32.mrf.mxu0
      %v1908 = vadd.f32 %v1807, %v1907
      %v1909 = vand.u32 %v874, 4294901760
      %v1910 = vsub.f32 %v874, %v1909
      %v1911 = vand.u32 %v1910, 4294901760
      %v1912 = vsub.f32 %v1910, %v1911
      %v1913 = vand.u32 %v1912, 4294901760
      %1914 = vmatmul.f32.gmra.mxu0 %v1913
      %v1915 = vpop.f32.mrf.mxu0
      %v1916 = vadd.f32 %v1811, %v1915
      %v1917 = vand.u32 %v875, 4294901760
      %v1918 = vsub.f32 %v875, %v1917
      %v1919 = vand.u32 %v1918, 4294901760
      %v1920 = vsub.f32 %v1918, %v1919
      %v1921 = vand.u32 %v1920, 4294901760
      %1922 = vmatmul.f32.gmra.mxu0 %v1921
      %v1923 = vpop.f32.mrf.mxu0
      %v1924 = vadd.f32 %v1815, %v1923
      %v1925 = vand.u32 %v876, 4294901760
      %v1926 = vsub.f32 %v876, %v1925
      %v1927 = vand.u32 %v1926, 4294901760
      %v1928 = vsub.f32 %v1926, %v1927
      %v1929 = vand.u32 %v1928, 4294901760
      %1930 = vmatmul.f32.gmra.mxu0 %v1929
      %v1931 = vpop.f32.mrf.mxu0
      %v1932 = vadd.f32 %v1819, %v1931
      %v1933 = vand.u32 %v877, 4294901760
      %v1934 = vsub.f32 %v877, %v1933
      %v1935 = vand.u32 %v1934, 4294901760
      %v1936 = vsub.f32 %v1934, %v1935
      %v1937 = vand.u32 %v1936, 4294901760
      %1938 = vmatmul.f32.gmra.mxu0 %v1937
      %v1939 = vpop.f32.mrf.mxu0
      %v1940 = vadd.f32 %v1823, %v1939
      %v1941 = vand.u32 %v878, 4294901760
      %v1942 = vsub.f32 %v878, %v1941
      %v1943 = vand.u32 %v1942, 4294901760
      %v1944 = vsub.f32 %v1942, %v1943
      %v1945 = vand.u32 %v1944, 4294901760
      %1946 = vmatmul.f32.gmra.mxu0 %v1945
      %v1947 = vpop.f32.mrf.mxu0
      %v1948 = vadd.f32 %v1827, %v1947
      %v1949 = vand.u32 %v879, 4294901760
      %v1950 = vsub.f32 %v879, %v1949
      %v1951 = vand.u32 %v1950, 4294901760
      %v1952 = vsub.f32 %v1950, %v1951
      %v1953 = vand.u32 %v1952, 4294901760
      %1954 = vmatmul.f32.gmra.mxu0 %v1953
      %v1955 = vpop.f32.mrf.mxu0
      %v1956 = vadd.f32 %v1831, %v1955
      %v1957 = vand.u32 %v880, 4294901760
      %v1958 = vsub.f32 %v880, %v1957
      %v1959 = vand.u32 %v1958, 4294901760
      %v1960 = vsub.f32 %v1958, %v1959
      %v1961 = vand.u32 %v1960, 4294901760
      %1962 = vmatmul.f32.gmra.mxu0 %v1961
      %v1963 = vpop.f32.mrf.mxu0
      %v1964 = vadd.f32 %v1835, %v1963
      %v1965 = vand.u32 %v881, 4294901760
      %v1966 = vsub.f32 %v881, %v1965
      %v1967 = vand.u32 %v1966, 4294901760
      %v1968 = vsub.f32 %v1966, %v1967
      %v1969 = vand.u32 %v1968, 4294901760
      %1970 = vmatmul.f32.gmra.mxu0 %v1969
      %v1971 = vpop.f32.mrf.mxu0
      %v1972 = vadd.f32 %v1839, %v1971
      %v1973 = vand.u32 %v882, 4294901760
      %v1974 = vsub.f32 %v882, %v1973
      %v1975 = vand.u32 %v1974, 4294901760
      %v1976 = vsub.f32 %v1974, %v1975
      %v1977 = vand.u32 %v1976, 4294901760
      %1978 = vmatmul.f32.gmra.mxu0 %v1977
      %v1979 = vpop.f32.mrf.mxu0
      %v1980 = vadd.f32 %v1843, %v1979
      %v1981 = vand.u32 %v883, 4294901760
      %v1982 = vsub.f32 %v883, %v1981
      %v1983 = vand.u32 %v1982, 4294901760
      %v1984 = vsub.f32 %v1982, %v1983
      %v1985 = vand.u32 %v1984, 4294901760
      %1986 = vmatmul.f32.gmra.mxu0 %v1985
      %v1987 = vpop.f32.mrf.mxu0
      %v1988 = vadd.f32 %v1847, %v1987
      %v1989 = vand.u32 %v884, 4294901760
      %v1990 = vsub.f32 %v884, %v1989
      %v1991 = vand.u32 %v1990, 4294901760
      %v1992 = vsub.f32 %v1990, %v1991
      %v1993 = vand.u32 %v1992, 4294901760
      %1994 = vmatmul.f32.gmra.mxu0 %v1993
      %v1995 = vpop.f32.mrf.mxu0
      %v1996 = vadd.f32 %v1851, %v1995
      %v1997 = vand.u32 %v885, 4294901760
      %v1998 = vsub.f32 %v885, %v1997
      %v1999 = vand.u32 %v1998, 4294901760
      %v2000 = vsub.f32 %v1998, %v1999
      %v2001 = vand.u32 %v2000, 4294901760
      %2002 = vmatmul.f32.gmra.mxu0 %v2001
      %v2003 = vpop.f32.mrf.mxu0
      %v2004 = vadd.f32 %v1855, %v2003
      %v2005 = vand.u32 %v886, 4294901760
      %v2006 = vsub.f32 %v886, %v2005
      %v2007 = vand.u32 %v2006, 4294901760
      %v2008 = vsub.f32 %v2006, %v2007
      %v2009 = vand.u32 %v2008, 4294901760
      %2010 = vmatmul.f32.gmra.mxu0 %v2009
      %v2011 = vpop.f32.mrf.mxu0
      %v2012 = vadd.f32 %v1859, %v2011
      %v2013 = vand.u32 %v887, 4294901760
      %v2014 = vsub.f32 %v887, %v2013
      %v2015 = vand.u32 %v2014, 4294901760
      %v2016 = vsub.f32 %v2014, %v2015
      %v2017 = vand.u32 %v2016, 4294901760
      %2018 = vmatmul.f32.gmra.mxu0 %v2017
      %v2019 = vpop.f32.mrf.mxu0
      %v2020 = vadd.f32 %v1863, %v2019
      %v2021 = vand.u32 %v888, 4294901760
      %v2022 = vsub.f32 %v888, %v2021
      %v2023 = vand.u32 %v2022, 4294901760
      %v2024 = vsub.f32 %v2022, %v2023
      %v2025 = vand.u32 %v2024, 4294901760
      %2026 = vmatmul.f32.gmra.mxu0 %v2025
      %v2027 = vpop.f32.mrf.mxu0
      %v2028 = vadd.f32 %v1867, %v2027
      %2029 = vdwg.mxu0
      %v2030 = vand.u32 %v983, 4294901760
      %v2031 = vsub.f32 %v983, %v2030
      %v2032 = vand.u32 %v2031, 4294901760
      %v2033 = vsub.f32 %v2031, %v2032
      %v2034 = vand.u32 %v2033, 4294901760
      %2035 = vmatpush.msra.mxu0 %v2034
      %v2036 = vand.u32 %v981, 4294901760
      %v2037 = vsub.f32 %v981, %v2036
      %v2038 = vand.u32 %v2037, 4294901760
      %v2039 = vsub.f32 %v2037, %v2038
      %v2040 = vand.u32 %v2039, 4294901760
      %2041 = vmatpush.msra.mxu0 %v2040
      %v2042 = vand.u32 %v979, 4294901760
      %v2043 = vsub.f32 %v979, %v2042
      %v2044 = vand.u32 %v2043, 4294901760
      %v2045 = vsub.f32 %v2043, %v2044
      %v2046 = vand.u32 %v2045, 4294901760
      %2047 = vmatpush.msra.mxu0 %v2046
      %v2048 = vand.u32 %v977, 4294901760
      %v2049 = vsub.f32 %v977, %v2048
      %v2050 = vand.u32 %v2049, 4294901760
      %v2051 = vsub.f32 %v2049, %v2050
      %v2052 = vand.u32 %v2051, 4294901760
      %2053 = vmatpush.msra.mxu0 %v2052
      %v2054 = vand.u32 %v975, 4294901760
      %v2055 = vsub.f32 %v975, %v2054
      %v2056 = vand.u32 %v2055, 4294901760
      %v2057 = vsub.f32 %v2055, %v2056
      %v2058 = vand.u32 %v2057, 4294901760
      %2059 = vmatpush.msra.mxu0 %v2058
      %v2060 = vand.u32 %v973, 4294901760
      %v2061 = vsub.f32 %v973, %v2060
      %v2062 = vand.u32 %v2061, 4294901760
      %v2063 = vsub.f32 %v2061, %v2062
      %v2064 = vand.u32 %v2063, 4294901760
      %2065 = vmatpush.msra.mxu0 %v2064
      %v2066 = vand.u32 %v971, 4294901760
      %v2067 = vsub.f32 %v971, %v2066
      %v2068 = vand.u32 %v2067, 4294901760
      %v2069 = vsub.f32 %v2067, %v2068
      %v2070 = vand.u32 %v2069, 4294901760
      %2071 = vmatpush.msra.mxu0 %v2070
      %v2072 = vand.u32 %v969, 4294901760
      %v2073 = vsub.f32 %v969, %v2072
      %v2074 = vand.u32 %v2073, 4294901760
      %v2075 = vsub.f32 %v2073, %v2074
      %v2076 = vand.u32 %v2075, 4294901760
      %2077 = vmatpush.msra.mxu0 %v2076
      %v2078 = vand.u32 %v967, 4294901760
      %v2079 = vsub.f32 %v967, %v2078
      %v2080 = vand.u32 %v2079, 4294901760
      %v2081 = vsub.f32 %v2079, %v2080
      %v2082 = vand.u32 %v2081, 4294901760
      %2083 = vmatpush.msra.mxu0 %v2082
      %v2084 = vand.u32 %v965, 4294901760
      %v2085 = vsub.f32 %v965, %v2084
      %v2086 = vand.u32 %v2085, 4294901760
      %v2087 = vsub.f32 %v2085, %v2086
      %v2088 = vand.u32 %v2087, 4294901760
      %2089 = vmatpush.msra.mxu0 %v2088
      %v2090 = vand.u32 %v963, 4294901760
      %v2091 = vsub.f32 %v963, %v2090
      %v2092 = vand.u32 %v2091, 4294901760
      %v2093 = vsub.f32 %v2091, %v2092
      %v2094 = vand.u32 %v2093, 4294901760
      %2095 = vmatpush.msra.mxu0 %v2094
      %v2096 = vand.u32 %v961, 4294901760
      %v2097 = vsub.f32 %v961, %v2096
      %v2098 = vand.u32 %v2097, 4294901760
      %v2099 = vsub.f32 %v2097, %v2098
      %v2100 = vand.u32 %v2099, 4294901760
      %2101 = vmatpush.msra.mxu0 %v2100
      %v2102 = vand.u32 %v959, 4294901760
      %v2103 = vsub.f32 %v959, %v2102
      %v2104 = vand.u32 %v2103, 4294901760
      %v2105 = vsub.f32 %v2103, %v2104
      %v2106 = vand.u32 %v2105, 4294901760
      %2107 = vmatpush.msra.mxu0 %v2106
      %v2108 = vand.u32 %v957, 4294901760
      %v2109 = vsub.f32 %v957, %v2108
      %v2110 = vand.u32 %v2109, 4294901760
      %v2111 = vsub.f32 %v2109, %v2110
      %v2112 = vand.u32 %v2111, 4294901760
      %2113 = vmatpush.msra.mxu0 %v2112
      %v2114 = vand.u32 %v955, 4294901760
      %v2115 = vsub.f32 %v955, %v2114
      %v2116 = vand.u32 %v2115, 4294901760
      %v2117 = vsub.f32 %v2115, %v2116
      %v2118 = vand.u32 %v2117, 4294901760
      %2119 = vmatpush.msra.mxu0 %v2118
      %v2120 = vand.u32 %v953, 4294901760
      %v2121 = vsub.f32 %v953, %v2120
      %v2122 = vand.u32 %v2121, 4294901760
      %v2123 = vsub.f32 %v2121, %v2122
      %v2124 = vand.u32 %v2123, 4294901760
      %2125 = vmatpush.msra.mxu0 %v2124
      %v2126 = vand.u32 %v873, 4294901760
      %2127 = vmatmul.f32.gmra.mxu0 %v2126
      %v2128 = vpop.f32.mrf.mxu0
      %v2129 = vadd.f32 %v1908, %v2128
      %v2130 = vand.u32 %v874, 4294901760
      %2131 = vmatmul.f32.gmra.mxu0 %v2130
      %v2132 = vpop.f32.mrf.mxu0
      %v2133 = vadd.f32 %v1916, %v2132
      %v2134 = vand.u32 %v875, 4294901760
      %2135 = vmatmul.f32.gmra.mxu0 %v2134
      %v2136 = vpop.f32.mrf.mxu0
      %v2137 = vadd.f32 %v1924, %v2136
      %v2138 = vand.u32 %v876, 4294901760
      %2139 = vmatmul.f32.gmra.mxu0 %v2138
      %v2140 = vpop.f32.mrf.mxu0
      %v2141 = vadd.f32 %v1932, %v2140
      %v2142 = vand.u32 %v877, 4294901760
      %2143 = vmatmul.f32.gmra.mxu0 %v2142
      %v2144 = vpop.f32.mrf.mxu0
      %v2145 = vadd.f32 %v1940, %v2144
      %v2146 = vand.u32 %v878, 4294901760
      %2147 = vmatmul.f32.gmra.mxu0 %v2146
      %v2148 = vpop.f32.mrf.mxu0
      %v2149 = vadd.f32 %v1948, %v2148
      %v2150 = vand.u32 %v879, 4294901760
      %2151 = vmatmul.f32.gmra.mxu0 %v2150
      %v2152 = vpop.f32.mrf.mxu0
      %v2153 = vadd.f32 %v1956, %v2152
      %v2154 = vand.u32 %v880, 4294901760
      %2155 = vmatmul.f32.gmra.mxu0 %v2154
      %v2156 = vpop.f32.mrf.mxu0
      %v2157 = vadd.f32 %v1964, %v2156
      %v2158 = vand.u32 %v881, 4294901760
      %2159 = vmatmul.f32.gmra.mxu0 %v2158
      %v2160 = vpop.f32.mrf.mxu0
      %v2161 = vadd.f32 %v1972, %v2160
      %v2162 = vand.u32 %v882, 4294901760
      %2163 = vmatmul.f32.gmra.mxu0 %v2162
      %v2164 = vpop.f32.mrf.mxu0
      %v2165 = vadd.f32 %v1980, %v2164
      %v2166 = vand.u32 %v883, 4294901760
      %2167 = vmatmul.f32.gmra.mxu0 %v2166
      %v2168 = vpop.f32.mrf.mxu0
      %v2169 = vadd.f32 %v1988, %v2168
      %v2170 = vand.u32 %v884, 4294901760
      %2171 = vmatmul.f32.gmra.mxu0 %v2170
      %v2172 = vpop.f32.mrf.mxu0
      %v2173 = vadd.f32 %v1996, %v2172
      %v2174 = vand.u32 %v885, 4294901760
      %2175 = vmatmul.f32.gmra.mxu0 %v2174
      %v2176 = vpop.f32.mrf.mxu0
      %v2177 = vadd.f32 %v2004, %v2176
      %v2178 = vand.u32 %v886, 4294901760
      %2179 = vmatmul.f32.gmra.mxu0 %v2178
      %v2180 = vpop.f32.mrf.mxu0
      %v2181 = vadd.f32 %v2012, %v2180
      %v2182 = vand.u32 %v887, 4294901760
      %2183 = vmatmul.f32.gmra.mxu0 %v2182
      %v2184 = vpop.f32.mrf.mxu0
      %v2185 = vadd.f32 %v2020, %v2184
      %v2186 = vand.u32 %v888, 4294901760
      %2187 = vmatmul.f32.gmra.mxu0 %v2186
      %v2188 = vpop.f32.mrf.mxu0
      %v2189 = vadd.f32 %v2028, %v2188
      %2190 = vdwg.mxu0
      %v2191 = vand.u32 %v983, 4294901760
      %v2192 = vsub.f32 %v983, %v2191
      %2193 = vmatpush.msra.mxu0 %v2192
      %v2194 = vand.u32 %v981, 4294901760
      %v2195 = vsub.f32 %v981, %v2194
      %2196 = vmatpush.msra.mxu0 %v2195
      %v2197 = vand.u32 %v979, 4294901760
      %v2198 = vsub.f32 %v979, %v2197
      %2199 = vmatpush.msra.mxu0 %v2198
      %v2200 = vand.u32 %v977, 4294901760
      %v2201 = vsub.f32 %v977, %v2200
      %2202 = vmatpush.msra.mxu0 %v2201
      %v2203 = vand.u32 %v975, 4294901760
      %v2204 = vsub.f32 %v975, %v2203
      %2205 = vmatpush.msra.mxu0 %v2204
      %v2206 = vand.u32 %v973, 4294901760
      %v2207 = vsub.f32 %v973, %v2206
      %2208 = vmatpush.msra.mxu0 %v2207
      %v2209 = vand.u32 %v971, 4294901760
      %v2210 = vsub.f32 %v971, %v2209
      %2211 = vmatpush.msra.mxu0 %v2210
      %v2212 = vand.u32 %v969, 4294901760
      %v2213 = vsub.f32 %v969, %v2212
      %2214 = vmatpush.msra.mxu0 %v2213
      %v2215 = vand.u32 %v967, 4294901760
      %v2216 = vsub.f32 %v967, %v2215
      %2217 = vmatpush.msra.mxu0 %v2216
      %v2218 = vand.u32 %v965, 4294901760
      %v2219 = vsub.f32 %v965, %v2218
      %2220 = vmatpush.msra.mxu0 %v2219
      %v2221 = vand.u32 %v963, 4294901760
      %v2222 = vsub.f32 %v963, %v2221
      %2223 = vmatpush.msra.mxu0 %v2222
      %v2224 = vand.u32 %v961, 4294901760
      %v2225 = vsub.f32 %v961, %v2224
      %2226 = vmatpush.msra.mxu0 %v2225
      %v2227 = vand.u32 %v959, 4294901760
      %v2228 = vsub.f32 %v959, %v2227
      %2229 = vmatpush.msra.mxu0 %v2228
      %v2230 = vand.u32 %v957, 4294901760
      %v2231 = vsub.f32 %v957, %v2230
      %2232 = vmatpush.msra.mxu0 %v2231
      %v2233 = vand.u32 %v955, 4294901760
      %v2234 = vsub.f32 %v955, %v2233
      %2235 = vmatpush.msra.mxu0 %v2234
      %v2236 = vand.u32 %v953, 4294901760
      %v2237 = vsub.f32 %v953, %v2236
      %2238 = vmatpush.msra.mxu0 %v2237
      %v2239 = vand.u32 %v873, 4294901760
      %v2240 = vsub.f32 %v873, %v2239
      %2241 = vmatmul.f32.gmra.mxu0 %v2240
      %v2242 = vpop.f32.mrf.mxu0
      %v2243 = vadd.f32 %v2129, %v2242
      %v2244 = vand.u32 %v874, 4294901760
      %v2245 = vsub.f32 %v874, %v2244
      %2246 = vmatmul.f32.gmra.mxu0 %v2245
      %v2247 = vpop.f32.mrf.mxu0
      %v2248 = vadd.f32 %v2133, %v2247
      %v2249 = vand.u32 %v875, 4294901760
      %v2250 = vsub.f32 %v875, %v2249
      %2251 = vmatmul.f32.gmra.mxu0 %v2250
      %v2252 = vpop.f32.mrf.mxu0
      %v2253 = vadd.f32 %v2137, %v2252
      %v2254 = vand.u32 %v876, 4294901760
      %v2255 = vsub.f32 %v876, %v2254
      %2256 = vmatmul.f32.gmra.mxu0 %v2255
      %v2257 = vpop.f32.mrf.mxu0
      %v2258 = vadd.f32 %v2141, %v2257
      %v2259 = vand.u32 %v877, 4294901760
      %v2260 = vsub.f32 %v877, %v2259
      %2261 = vmatmul.f32.gmra.mxu0 %v2260
      %v2262 = vpop.f32.mrf.mxu0
      %v2263 = vadd.f32 %v2145, %v2262
      %v2264 = vand.u32 %v878, 4294901760
      %v2265 = vsub.f32 %v878, %v2264
      %2266 = vmatmul.f32.gmra.mxu0 %v2265
      %v2267 = vpop.f32.mrf.mxu0
      %v2268 = vadd.f32 %v2149, %v2267
      %v2269 = vand.u32 %v879, 4294901760
      %v2270 = vsub.f32 %v879, %v2269
      %2271 = vmatmul.f32.gmra.mxu0 %v2270
      %v2272 = vpop.f32.mrf.mxu0
      %v2273 = vadd.f32 %v2153, %v2272
      %v2274 = vand.u32 %v880, 4294901760
      %v2275 = vsub.f32 %v880, %v2274
      %2276 = vmatmul.f32.gmra.mxu0 %v2275
      %v2277 = vpop.f32.mrf.mxu0
      %v2278 = vadd.f32 %v2157, %v2277
      %v2279 = vand.u32 %v881, 4294901760
      %v2280 = vsub.f32 %v881, %v2279
      %2281 = vmatmul.f32.gmra.mxu0 %v2280
      %v2282 = vpop.f32.mrf.mxu0
      %v2283 = vadd.f32 %v2161, %v2282
      %v2284 = vand.u32 %v882, 4294901760
      %v2285 = vsub.f32 %v882, %v2284
      %2286 = vmatmul.f32.gmra.mxu0 %v2285
      %v2287 = vpop.f32.mrf.mxu0
      %v2288 = vadd.f32 %v2165, %v2287
      %v2289 = vand.u32 %v883, 4294901760
      %v2290 = vsub.f32 %v883, %v2289
      %2291 = vmatmul.f32.gmra.mxu0 %v2290
      %v2292 = vpop.f32.mrf.mxu0
      %v2293 = vadd.f32 %v2169, %v2292
      %v2294 = vand.u32 %v884, 4294901760
      %v2295 = vsub.f32 %v884, %v2294
      %2296 = vmatmul.f32.gmra.mxu0 %v2295
      %v2297 = vpop.f32.mrf.mxu0
      %v2298 = vadd.f32 %v2173, %v2297
      %v2299 = vand.u32 %v885, 4294901760
      %v2300 = vsub.f32 %v885, %v2299
      %2301 = vmatmul.f32.gmra.mxu0 %v2300
      %v2302 = vpop.f32.mrf.mxu0
      %v2303 = vadd.f32 %v2177, %v2302
      %v2304 = vand.u32 %v886, 4294901760
      %v2305 = vsub.f32 %v886, %v2304
      %2306 = vmatmul.f32.gmra.mxu0 %v2305
      %v2307 = vpop.f32.mrf.mxu0
      %v2308 = vadd.f32 %v2181, %v2307
      %v2309 = vand.u32 %v887, 4294901760
      %v2310 = vsub.f32 %v887, %v2309
      %2311 = vmatmul.f32.gmra.mxu0 %v2310
      %v2312 = vpop.f32.mrf.mxu0
      %v2313 = vadd.f32 %v2185, %v2312
      %v2314 = vand.u32 %v888, 4294901760
      %v2315 = vsub.f32 %v888, %v2314
      %2316 = vmatmul.f32.gmra.mxu0 %v2315
      %v2317 = vpop.f32.mrf.mxu0
      %v2318 = vadd.f32 %v2189, %v2317
      %2319 = vdwg.mxu0
      %v2320 = vand.u32 %v983, 4294901760
      %2321 = vmatpush.msra.mxu0 %v2320
      %v2322 = vand.u32 %v981, 4294901760
      %2323 = vmatpush.msra.mxu0 %v2322
      %v2324 = vand.u32 %v979, 4294901760
      %2325 = vmatpush.msra.mxu0 %v2324
      %v2326 = vand.u32 %v977, 4294901760
      %2327 = vmatpush.msra.mxu0 %v2326
      %v2328 = vand.u32 %v975, 4294901760
      %2329 = vmatpush.msra.mxu0 %v2328
      %v2330 = vand.u32 %v973, 4294901760
      %2331 = vmatpush.msra.mxu0 %v2330
      %v2332 = vand.u32 %v971, 4294901760
      %2333 = vmatpush.msra.mxu0 %v2332
      %v2334 = vand.u32 %v969, 4294901760
      %2335 = vmatpush.msra.mxu0 %v2334
      %v2336 = vand.u32 %v967, 4294901760
      %2337 = vmatpush.msra.mxu0 %v2336
      %v2338 = vand.u32 %v965, 4294901760
      %2339 = vmatpush.msra.mxu0 %v2338
      %v2340 = vand.u32 %v963, 4294901760
      %2341 = vmatpush.msra.mxu0 %v2340
      %v2342 = vand.u32 %v961, 4294901760
      %2343 = vmatpush.msra.mxu0 %v2342
      %v2344 = vand.u32 %v959, 4294901760
      %2345 = vmatpush.msra.mxu0 %v2344
      %v2346 = vand.u32 %v957, 4294901760
      %2347 = vmatpush.msra.mxu0 %v2346
      %v2348 = vand.u32 %v955, 4294901760
      %2349 = vmatpush.msra.mxu0 %v2348
      %v2350 = vand.u32 %v953, 4294901760
      %2351 = vmatpush.msra.mxu0 %v2350
      %v2352 = vand.u32 %v873, 4294901760
      %v2353 = vsub.f32 %v873, %v2352
      %v2354 = vand.u32 %v2353, 4294901760
      %2355 = vmatmul.f32.gmra.mxu0 %v2354
      %v2356 = vpop.f32.mrf.mxu0
      %v2357 = vadd.f32 %v2243, %v2356
      %v2358 = vand.u32 %v874, 4294901760
      %v2359 = vsub.f32 %v874, %v2358
      %v2360 = vand.u32 %v2359, 4294901760
      %2361 = vmatmul.f32.gmra.mxu0 %v2360
      %v2362 = vpop.f32.mrf.mxu0
      %v2363 = vadd.f32 %v2248, %v2362
      %v2364 = vand.u32 %v875, 4294901760
      %v2365 = vsub.f32 %v875, %v2364
      %v2366 = vand.u32 %v2365, 4294901760
      %2367 = vmatmul.f32.gmra.mxu0 %v2366
      %v2368 = vpop.f32.mrf.mxu0
      %v2369 = vadd.f32 %v2253, %v2368
      %v2370 = vand.u32 %v876, 4294901760
      %v2371 = vsub.f32 %v876, %v2370
      %v2372 = vand.u32 %v2371, 4294901760
      %2373 = vmatmul.f32.gmra.mxu0 %v2372
      %v2374 = vpop.f32.mrf.mxu0
      %v2375 = vadd.f32 %v2258, %v2374
      %v2376 = vand.u32 %v877, 4294901760
      %v2377 = vsub.f32 %v877, %v2376
      %v2378 = vand.u32 %v2377, 4294901760
      %2379 = vmatmul.f32.gmra.mxu0 %v2378
      %v2380 = vpop.f32.mrf.mxu0
      %v2381 = vadd.f32 %v2263, %v2380
      %v2382 = vand.u32 %v878, 4294901760
      %v2383 = vsub.f32 %v878, %v2382
      %v2384 = vand.u32 %v2383, 4294901760
      %2385 = vmatmul.f32.gmra.mxu0 %v2384
      %v2386 = vpop.f32.mrf.mxu0
      %v2387 = vadd.f32 %v2268, %v2386
      %v2388 = vand.u32 %v879, 4294901760
      %v2389 = vsub.f32 %v879, %v2388
      %v2390 = vand.u32 %v2389, 4294901760
      %2391 = vmatmul.f32.gmra.mxu0 %v2390
      %v2392 = vpop.f32.mrf.mxu0
      %v2393 = vadd.f32 %v2273, %v2392
      %v2394 = vand.u32 %v880, 4294901760
      %v2395 = vsub.f32 %v880, %v2394
      %v2396 = vand.u32 %v2395, 4294901760
      %2397 = vmatmul.f32.gmra.mxu0 %v2396
      %v2398 = vpop.f32.mrf.mxu0
      %v2399 = vadd.f32 %v2278, %v2398
      %v2400 = vand.u32 %v881, 4294901760
      %v2401 = vsub.f32 %v881, %v2400
      %v2402 = vand.u32 %v2401, 4294901760
      %2403 = vmatmul.f32.gmra.mxu0 %v2402
      %v2404 = vpop.f32.mrf.mxu0
      %v2405 = vadd.f32 %v2283, %v2404
      %v2406 = vand.u32 %v882, 4294901760
      %v2407 = vsub.f32 %v882, %v2406
      %v2408 = vand.u32 %v2407, 4294901760
      %2409 = vmatmul.f32.gmra.mxu0 %v2408
      %v2410 = vpop.f32.mrf.mxu0
      %v2411 = vadd.f32 %v2288, %v2410
      %v2412 = vand.u32 %v883, 4294901760
      %v2413 = vsub.f32 %v883, %v2412
      %v2414 = vand.u32 %v2413, 4294901760
      %2415 = vmatmul.f32.gmra.mxu0 %v2414
      %v2416 = vpop.f32.mrf.mxu0
      %v2417 = vadd.f32 %v2293, %v2416
      %v2418 = vand.u32 %v884, 4294901760
      %v2419 = vsub.f32 %v884, %v2418
      %v2420 = vand.u32 %v2419, 4294901760
      %2421 = vmatmul.f32.gmra.mxu0 %v2420
      %v2422 = vpop.f32.mrf.mxu0
      %v2423 = vadd.f32 %v2298, %v2422
      %v2424 = vand.u32 %v885, 4294901760
      %v2425 = vsub.f32 %v885, %v2424
      %v2426 = vand.u32 %v2425, 4294901760
      %2427 = vmatmul.f32.gmra.mxu0 %v2426
      %v2428 = vpop.f32.mrf.mxu0
      %v2429 = vadd.f32 %v2303, %v2428
      %v2430 = vand.u32 %v886, 4294901760
      %v2431 = vsub.f32 %v886, %v2430
      %v2432 = vand.u32 %v2431, 4294901760
      %2433 = vmatmul.f32.gmra.mxu0 %v2432
      %v2434 = vpop.f32.mrf.mxu0
      %v2435 = vadd.f32 %v2308, %v2434
      %v2436 = vand.u32 %v887, 4294901760
      %v2437 = vsub.f32 %v887, %v2436
      %v2438 = vand.u32 %v2437, 4294901760
      %2439 = vmatmul.f32.gmra.mxu0 %v2438
      %v2440 = vpop.f32.mrf.mxu0
      %v2441 = vadd.f32 %v2313, %v2440
      %v2442 = vand.u32 %v888, 4294901760
      %v2443 = vsub.f32 %v888, %v2442
      %v2444 = vand.u32 %v2443, 4294901760
      %2445 = vmatmul.f32.gmra.mxu0 %v2444
      %v2446 = vpop.f32.mrf.mxu0
      %v2447 = vadd.f32 %v2318, %v2446
      %2448 = vdwg.mxu0
      %v2449 = vand.u32 %v983, 4294901760
      %v2450 = vsub.f32 %v983, %v2449
      %v2451 = vand.u32 %v2450, 4294901760
      %2452 = vmatpush.msra.mxu0 %v2451
      %v2453 = vand.u32 %v981, 4294901760
      %v2454 = vsub.f32 %v981, %v2453
      %v2455 = vand.u32 %v2454, 4294901760
      %2456 = vmatpush.msra.mxu0 %v2455
      %v2457 = vand.u32 %v979, 4294901760
      %v2458 = vsub.f32 %v979, %v2457
      %v2459 = vand.u32 %v2458, 4294901760
      %2460 = vmatpush.msra.mxu0 %v2459
      %v2461 = vand.u32 %v977, 4294901760
      %v2462 = vsub.f32 %v977, %v2461
      %v2463 = vand.u32 %v2462, 4294901760
      %2464 = vmatpush.msra.mxu0 %v2463
      %v2465 = vand.u32 %v975, 4294901760
      %v2466 = vsub.f32 %v975, %v2465
      %v2467 = vand.u32 %v2466, 4294901760
      %2468 = vmatpush.msra.mxu0 %v2467
      %v2469 = vand.u32 %v973, 4294901760
      %v2470 = vsub.f32 %v973, %v2469
      %v2471 = vand.u32 %v2470, 4294901760
      %2472 = vmatpush.msra.mxu0 %v2471
      %v2473 = vand.u32 %v971, 4294901760
      %v2474 = vsub.f32 %v971, %v2473
      %v2475 = vand.u32 %v2474, 4294901760
      %2476 = vmatpush.msra.mxu0 %v2475
      %v2477 = vand.u32 %v969, 4294901760
      %v2478 = vsub.f32 %v969, %v2477
      %v2479 = vand.u32 %v2478, 4294901760
      %2480 = vmatpush.msra.mxu0 %v2479
      %v2481 = vand.u32 %v967, 4294901760
      %v2482 = vsub.f32 %v967, %v2481
      %v2483 = vand.u32 %v2482, 4294901760
      %2484 = vmatpush.msra.mxu0 %v2483
      %v2485 = vand.u32 %v965, 4294901760
      %v2486 = vsub.f32 %v965, %v2485
      %v2487 = vand.u32 %v2486, 4294901760
      %2488 = vmatpush.msra.mxu0 %v2487
      %v2489 = vand.u32 %v963, 4294901760
      %v2490 = vsub.f32 %v963, %v2489
      %v2491 = vand.u32 %v2490, 4294901760
      %2492 = vmatpush.msra.mxu0 %v2491
      %v2493 = vand.u32 %v961, 4294901760
      %v2494 = vsub.f32 %v961, %v2493
      %v2495 = vand.u32 %v2494, 4294901760
      %2496 = vmatpush.msra.mxu0 %v2495
      %v2497 = vand.u32 %v959, 4294901760
      %v2498 = vsub.f32 %v959, %v2497
      %v2499 = vand.u32 %v2498, 4294901760
      %2500 = vmatpush.msra.mxu0 %v2499
      %v2501 = vand.u32 %v957, 4294901760
      %v2502 = vsub.f32 %v957, %v2501
      %v2503 = vand.u32 %v2502, 4294901760
      %2504 = vmatpush.msra.mxu0 %v2503
      %v2505 = vand.u32 %v955, 4294901760
      %v2506 = vsub.f32 %v955, %v2505
      %v2507 = vand.u32 %v2506, 4294901760
      %2508 = vmatpush.msra.mxu0 %v2507
      %v2509 = vand.u32 %v953, 4294901760
      %v2510 = vsub.f32 %v953, %v2509
      %v2511 = vand.u32 %v2510, 4294901760
      %2512 = vmatpush.msra.mxu0 %v2511
      %v2513 = vand.u32 %v873, 4294901760
      %2514 = vmatmul.f32.gmra.mxu0 %v2513
      %v2515 = vpop.f32.mrf.mxu0
      %v2516 = vadd.f32 %v2357, %v2515
      %v2517 = vand.u32 %v874, 4294901760
      %2518 = vmatmul.f32.gmra.mxu0 %v2517
      %v2519 = vpop.f32.mrf.mxu0
      %v2520 = vadd.f32 %v2363, %v2519
      %v2521 = vand.u32 %v875, 4294901760
      %2522 = vmatmul.f32.gmra.mxu0 %v2521
      %v2523 = vpop.f32.mrf.mxu0
      %v2524 = vadd.f32 %v2369, %v2523
      %v2525 = vand.u32 %v876, 4294901760
      %2526 = vmatmul.f32.gmra.mxu0 %v2525
      %v2527 = vpop.f32.mrf.mxu0
      %v2528 = vadd.f32 %v2375, %v2527
      %v2529 = vand.u32 %v877, 4294901760
      %2530 = vmatmul.f32.gmra.mxu0 %v2529
      %v2531 = vpop.f32.mrf.mxu0
      %v2532 = vadd.f32 %v2381, %v2531
      %v2533 = vand.u32 %v878, 4294901760
      %2534 = vmatmul.f32.gmra.mxu0 %v2533
      %v2535 = vpop.f32.mrf.mxu0
      %v2536 = vadd.f32 %v2387, %v2535
      %v2537 = vand.u32 %v879, 4294901760
      %2538 = vmatmul.f32.gmra.mxu0 %v2537
      %v2539 = vpop.f32.mrf.mxu0
      %v2540 = vadd.f32 %v2393, %v2539
      %v2541 = vand.u32 %v880, 4294901760
      %2542 = vmatmul.f32.gmra.mxu0 %v2541
      %v2543 = vpop.f32.mrf.mxu0
      %v2544 = vadd.f32 %v2399, %v2543
      %v2545 = vand.u32 %v881, 4294901760
      %2546 = vmatmul.f32.gmra.mxu0 %v2545
      %v2547 = vpop.f32.mrf.mxu0
      %v2548 = vadd.f32 %v2405, %v2547
      %v2549 = vand.u32 %v882, 4294901760
      %2550 = vmatmul.f32.gmra.mxu0 %v2549
      %v2551 = vpop.f32.mrf.mxu0
      %v2552 = vadd.f32 %v2411, %v2551
      %v2553 = vand.u32 %v883, 4294901760
      %2554 = vmatmul.f32.gmra.mxu0 %v2553
      %v2555 = vpop.f32.mrf.mxu0
      %v2556 = vadd.f32 %v2417, %v2555
      %v2557 = vand.u32 %v884, 4294901760
      %2558 = vmatmul.f32.gmra.mxu0 %v2557
      %v2559 = vpop.f32.mrf.mxu0
      %v2560 = vadd.f32 %v2423, %v2559
      %v2561 = vand.u32 %v885, 4294901760
      %2562 = vmatmul.f32.gmra.mxu0 %v2561
      %v2563 = vpop.f32.mrf.mxu0
      %v2564 = vadd.f32 %v2429, %v2563
      %v2565 = vand.u32 %v886, 4294901760
      %2566 = vmatmul.f32.gmra.mxu0 %v2565
      %v2567 = vpop.f32.mrf.mxu0
      %v2568 = vadd.f32 %v2435, %v2567
      %v2569 = vand.u32 %v887, 4294901760
      %2570 = vmatmul.f32.gmra.mxu0 %v2569
      %v2571 = vpop.f32.mrf.mxu0
      %v2572 = vadd.f32 %v2441, %v2571
      %v2573 = vand.u32 %v888, 4294901760
      %2574 = vmatmul.f32.gmra.mxu0 %v2573
      %v2575 = vpop.f32.mrf.mxu0
      %v2576 = vadd.f32 %v2447, %v2575
      %2577 = vdwg.mxu0
      %v2578 = vand.u32 %v983, 4294901760
      %2579 = vmatpush.msra.mxu0 %v2578
      %v2580 = vand.u32 %v981, 4294901760
      %2581 = vmatpush.msra.mxu0 %v2580
      %v2582 = vand.u32 %v979, 4294901760
      %2583 = vmatpush.msra.mxu0 %v2582
      %v2584 = vand.u32 %v977, 4294901760
      %2585 = vmatpush.msra.mxu0 %v2584
      %v2586 = vand.u32 %v975, 4294901760
      %2587 = vmatpush.msra.mxu0 %v2586
      %v2588 = vand.u32 %v973, 4294901760
      %2589 = vmatpush.msra.mxu0 %v2588
      %v2590 = vand.u32 %v971, 4294901760
      %2591 = vmatpush.msra.mxu0 %v2590
      %v2592 = vand.u32 %v969, 4294901760
      %2593 = vmatpush.msra.mxu0 %v2592
      %v2594 = vand.u32 %v967, 4294901760
      %2595 = vmatpush.msra.mxu0 %v2594
      %v2596 = vand.u32 %v965, 4294901760
      %2597 = vmatpush.msra.mxu0 %v2596
      %v2598 = vand.u32 %v963, 4294901760
      %2599 = vmatpush.msra.mxu0 %v2598
      %v2600 = vand.u32 %v961, 4294901760
      %2601 = vmatpush.msra.mxu0 %v2600
      %v2602 = vand.u32 %v959, 4294901760
      %2603 = vmatpush.msra.mxu0 %v2602
      %v2604 = vand.u32 %v957, 4294901760
      %2605 = vmatpush.msra.mxu0 %v2604
      %v2606 = vand.u32 %v955, 4294901760
      %2607 = vmatpush.msra.mxu0 %v2606
      %v2608 = vand.u32 %v953, 4294901760
      %2609 = vmatpush.msra.mxu0 %v2608
      %v2610 = vand.u32 %v873, 4294901760
      %2611 = vmatmul.f32.gmra.mxu0 %v2610
      %v2612 = vpop.f32.mrf.mxu0
      %v2613 = vadd.f32 %v2516, %v2612
      %v2614 = vand.u32 %v874, 4294901760
      %2615 = vmatmul.f32.gmra.mxu0 %v2614
      %v2616 = vpop.f32.mrf.mxu0
      %v2617 = vadd.f32 %v2520, %v2616
      %v2618 = vand.u32 %v875, 4294901760
      %2619 = vmatmul.f32.gmra.mxu0 %v2618
      %v2620 = vpop.f32.mrf.mxu0
      %v2621 = vadd.f32 %v2524, %v2620
      %v2622 = vand.u32 %v876, 4294901760
      %2623 = vmatmul.f32.gmra.mxu0 %v2622
      %v2624 = vpop.f32.mrf.mxu0
      %v2625 = vadd.f32 %v2528, %v2624
      %v2626 = vand.u32 %v877, 4294901760
      %2627 = vmatmul.f32.gmra.mxu0 %v2626
      %v2628 = vpop.f32.mrf.mxu0
      %v2629 = vadd.f32 %v2532, %v2628
      %v2630 = vand.u32 %v878, 4294901760
      %2631 = vmatmul.f32.gmra.mxu0 %v2630
      %v2632 = vpop.f32.mrf.mxu0
      %v2633 = vadd.f32 %v2536, %v2632
      %v2634 = vand.u32 %v879, 4294901760
      %2635 = vmatmul.f32.gmra.mxu0 %v2634
      %v2636 = vpop.f32.mrf.mxu0
      %v2637 = vadd.f32 %v2540, %v2636
      %v2638 = vand.u32 %v880, 4294901760
      %2639 = vmatmul.f32.gmra.mxu0 %v2638
      %v2640 = vpop.f32.mrf.mxu0
      %v2641 = vadd.f32 %v2544, %v2640
      %v2642 = vand.u32 %v881, 4294901760
      %2643 = vmatmul.f32.gmra.mxu0 %v2642
      %v2644 = vpop.f32.mrf.mxu0
      %v2645 = vadd.f32 %v2548, %v2644
      %v2646 = vand.u32 %v882, 4294901760
      %2647 = vmatmul.f32.gmra.mxu0 %v2646
      %v2648 = vpop.f32.mrf.mxu0
      %v2649 = vadd.f32 %v2552, %v2648
      %v2650 = vand.u32 %v883, 4294901760
      %2651 = vmatmul.f32.gmra.mxu0 %v2650
      %v2652 = vpop.f32.mrf.mxu0
      %v2653 = vadd.f32 %v2556, %v2652
      %v2654 = vand.u32 %v884, 4294901760
      %2655 = vmatmul.f32.gmra.mxu0 %v2654
      %v2656 = vpop.f32.mrf.mxu0
      %v2657 = vadd.f32 %v2560, %v2656
      %v2658 = vand.u32 %v885, 4294901760
      %2659 = vmatmul.f32.gmra.mxu0 %v2658
      %v2660 = vpop.f32.mrf.mxu0
      %v2661 = vadd.f32 %v2564, %v2660
      %v2662 = vand.u32 %v886, 4294901760
      %2663 = vmatmul.f32.gmra.mxu0 %v2662
      %v2664 = vpop.f32.mrf.mxu0
      %v2665 = vadd.f32 %v2568, %v2664
      %v2666 = vand.u32 %v887, 4294901760
      %2667 = vmatmul.f32.gmra.mxu0 %v2666
      %v2668 = vpop.f32.mrf.mxu0
      %v2669 = vadd.f32 %v2572, %v2668
      %v2670 = vand.u32 %v888, 4294901760
      %2671 = vmatmul.f32.gmra.mxu0 %v2670
      %v2672 = vpop.f32.mrf.mxu0
      %v2673 = vadd.f32 %v2576, %v2672
      %2674 = vdwg.mxu0
      %2675 = vmatpush.msra.mxu0 0.0
      %2676 = vmatpush.msra.mxu0 0.0
      %2677 = vmatpush.msra.mxu0 0.0
      %2678 = vmatpush.msra.mxu0 0.0
      %v2679 = vand.u32 %v1007, 4294901760
      %2680 = vmatpush.msra.mxu0 %v2679
      %v2681 = vand.u32 %v1005, 4294901760
      %2682 = vmatpush.msra.mxu0 %v2681
      %v2683 = vand.u32 %v1003, 4294901760
      %2684 = vmatpush.msra.mxu0 %v2683
      %v2685 = vand.u32 %v1001, 4294901760
      %2686 = vmatpush.msra.mxu0 %v2685
      %v2687 = vand.u32 %v999, 4294901760
      %2688 = vmatpush.msra.mxu0 %v2687
      %v2689 = vand.u32 %v997, 4294901760
      %2690 = vmatpush.msra.mxu0 %v2689
      %v2691 = vand.u32 %v995, 4294901760
      %2692 = vmatpush.msra.mxu0 %v2691
      %v2693 = vand.u32 %v993, 4294901760
      %2694 = vmatpush.msra.mxu0 %v2693
      %v2695 = vand.u32 %v991, 4294901760
      %2696 = vmatpush.msra.mxu0 %v2695
      %v2697 = vand.u32 %v989, 4294901760
      %2698 = vmatpush.msra.mxu0 %v2697
      %v2699 = vand.u32 %v987, 4294901760
      %2700 = vmatpush.msra.mxu0 %v2699
      %v2701 = vand.u32 %v985, 4294901760
      %2702 = vmatpush.msra.mxu0 %v2701
      %v2703 = vand.u32 %v1016, 4294901760
      %v2704 = vsub.f32 %v1016, %v2703
      %v2705 = vand.u32 %v2704, 4294901760
      %v2706 = vsub.f32 %v2704, %v2705
      %v2707 = vand.u32 %v2706, 4294901760
      %2708 = vmatmul.f32.gmra.mxu0 %v2707
      %v2709 = vpop.f32.mrf.mxu0
      %v2710 = vadd.f32 %v2613, %v2709
      %v2711 = vand.u32 %v1019, 4294901760
      %v2712 = vsub.f32 %v1019, %v2711
      %v2713 = vand.u32 %v2712, 4294901760
      %v2714 = vsub.f32 %v2712, %v2713
      %v2715 = vand.u32 %v2714, 4294901760
      %2716 = vmatmul.f32.gmra.mxu0 %v2715
      %v2717 = vpop.f32.mrf.mxu0
      %v2718 = vadd.f32 %v2617, %v2717
      %v2719 = vand.u32 %v1022, 4294901760
      %v2720 = vsub.f32 %v1022, %v2719
      %v2721 = vand.u32 %v2720, 4294901760
      %v2722 = vsub.f32 %v2720, %v2721
      %v2723 = vand.u32 %v2722, 4294901760
      %2724 = vmatmul.f32.gmra.mxu0 %v2723
      %v2725 = vpop.f32.mrf.mxu0
      %v2726 = vadd.f32 %v2621, %v2725
      %v2727 = vand.u32 %v1025, 4294901760
      %v2728 = vsub.f32 %v1025, %v2727
      %v2729 = vand.u32 %v2728, 4294901760
      %v2730 = vsub.f32 %v2728, %v2729
      %v2731 = vand.u32 %v2730, 4294901760
      %2732 = vmatmul.f32.gmra.mxu0 %v2731
      %v2733 = vpop.f32.mrf.mxu0
      %v2734 = vadd.f32 %v2625, %v2733
      %v2735 = vand.u32 %v1028, 4294901760
      %v2736 = vsub.f32 %v1028, %v2735
      %v2737 = vand.u32 %v2736, 4294901760
      %v2738 = vsub.f32 %v2736, %v2737
      %v2739 = vand.u32 %v2738, 4294901760
      %2740 = vmatmul.f32.gmra.mxu0 %v2739
      %v2741 = vpop.f32.mrf.mxu0
      %v2742 = vadd.f32 %v2629, %v2741
      %v2743 = vand.u32 %v1031, 4294901760
      %v2744 = vsub.f32 %v1031, %v2743
      %v2745 = vand.u32 %v2744, 4294901760
      %v2746 = vsub.f32 %v2744, %v2745
      %v2747 = vand.u32 %v2746, 4294901760
      %2748 = vmatmul.f32.gmra.mxu0 %v2747
      %v2749 = vpop.f32.mrf.mxu0
      %v2750 = vadd.f32 %v2633, %v2749
      %v2751 = vand.u32 %v1034, 4294901760
      %v2752 = vsub.f32 %v1034, %v2751
      %v2753 = vand.u32 %v2752, 4294901760
      %v2754 = vsub.f32 %v2752, %v2753
      %v2755 = vand.u32 %v2754, 4294901760
      %2756 = vmatmul.f32.gmra.mxu0 %v2755
      %v2757 = vpop.f32.mrf.mxu0
      %v2758 = vadd.f32 %v2637, %v2757
      %v2759 = vand.u32 %v1037, 4294901760
      %v2760 = vsub.f32 %v1037, %v2759
      %v2761 = vand.u32 %v2760, 4294901760
      %v2762 = vsub.f32 %v2760, %v2761
      %v2763 = vand.u32 %v2762, 4294901760
      %2764 = vmatmul.f32.gmra.mxu0 %v2763
      %v2765 = vpop.f32.mrf.mxu0
      %v2766 = vadd.f32 %v2641, %v2765
      %v2767 = vand.u32 %v1040, 4294901760
      %v2768 = vsub.f32 %v1040, %v2767
      %v2769 = vand.u32 %v2768, 4294901760
      %v2770 = vsub.f32 %v2768, %v2769
      %v2771 = vand.u32 %v2770, 4294901760
      %2772 = vmatmul.f32.gmra.mxu0 %v2771
      %v2773 = vpop.f32.mrf.mxu0
      %v2774 = vadd.f32 %v2645, %v2773
      %v2775 = vand.u32 %v1043, 4294901760
      %v2776 = vsub.f32 %v1043, %v2775
      %v2777 = vand.u32 %v2776, 4294901760
      %v2778 = vsub.f32 %v2776, %v2777
      %v2779 = vand.u32 %v2778, 4294901760
      %2780 = vmatmul.f32.gmra.mxu0 %v2779
      %v2781 = vpop.f32.mrf.mxu0
      %v2782 = vadd.f32 %v2649, %v2781
      %v2783 = vand.u32 %v1046, 4294901760
      %v2784 = vsub.f32 %v1046, %v2783
      %v2785 = vand.u32 %v2784, 4294901760
      %v2786 = vsub.f32 %v2784, %v2785
      %v2787 = vand.u32 %v2786, 4294901760
      %2788 = vmatmul.f32.gmra.mxu0 %v2787
      %v2789 = vpop.f32.mrf.mxu0
      %v2790 = vadd.f32 %v2653, %v2789
      %v2791 = vand.u32 %v1049, 4294901760
      %v2792 = vsub.f32 %v1049, %v2791
      %v2793 = vand.u32 %v2792, 4294901760
      %v2794 = vsub.f32 %v2792, %v2793
      %v2795 = vand.u32 %v2794, 4294901760
      %2796 = vmatmul.f32.gmra.mxu0 %v2795
      %v2797 = vpop.f32.mrf.mxu0
      %v2798 = vadd.f32 %v2657, %v2797
      %v2799 = vand.u32 %v1052, 4294901760
      %v2800 = vsub.f32 %v1052, %v2799
      %v2801 = vand.u32 %v2800, 4294901760
      %v2802 = vsub.f32 %v2800, %v2801
      %v2803 = vand.u32 %v2802, 4294901760
      %2804 = vmatmul.f32.gmra.mxu0 %v2803
      %v2805 = vpop.f32.mrf.mxu0
      %v2806 = vadd.f32 %v2661, %v2805
      %v2807 = vand.u32 %v1055, 4294901760
      %v2808 = vsub.f32 %v1055, %v2807
      %v2809 = vand.u32 %v2808, 4294901760
      %v2810 = vsub.f32 %v2808, %v2809
      %v2811 = vand.u32 %v2810, 4294901760
      %2812 = vmatmul.f32.gmra.mxu0 %v2811
      %v2813 = vpop.f32.mrf.mxu0
      %v2814 = vadd.f32 %v2665, %v2813
      %v2815 = vand.u32 %v1058, 4294901760
      %v2816 = vsub.f32 %v1058, %v2815
      %v2817 = vand.u32 %v2816, 4294901760
      %v2818 = vsub.f32 %v2816, %v2817
      %v2819 = vand.u32 %v2818, 4294901760
      %2820 = vmatmul.f32.gmra.mxu0 %v2819
      %v2821 = vpop.f32.mrf.mxu0
      %v2822 = vadd.f32 %v2669, %v2821
      %v2823 = vand.u32 %v1061, 4294901760
      %v2824 = vsub.f32 %v1061, %v2823
      %v2825 = vand.u32 %v2824, 4294901760
      %v2826 = vsub.f32 %v2824, %v2825
      %v2827 = vand.u32 %v2826, 4294901760
      %2828 = vmatmul.f32.gmra.mxu0 %v2827
      %v2829 = vpop.f32.mrf.mxu0
      %v2830 = vadd.f32 %v2673, %v2829
      %2831 = vdwg.mxu0
      %2832 = vmatpush.msra.mxu0 0.0
      %2833 = vmatpush.msra.mxu0 0.0
      %2834 = vmatpush.msra.mxu0 0.0
      %2835 = vmatpush.msra.mxu0 0.0
      %v2836 = vand.u32 %v1007, 4294901760
      %v2837 = vsub.f32 %v1007, %v2836
      %v2838 = vand.u32 %v2837, 4294901760
      %v2839 = vsub.f32 %v2837, %v2838
      %v2840 = vand.u32 %v2839, 4294901760
      %2841 = vmatpush.msra.mxu0 %v2840
      %v2842 = vand.u32 %v1005, 4294901760
      %v2843 = vsub.f32 %v1005, %v2842
      %v2844 = vand.u32 %v2843, 4294901760
      %v2845 = vsub.f32 %v2843, %v2844
      %v2846 = vand.u32 %v2845, 4294901760
      %2847 = vmatpush.msra.mxu0 %v2846
      %v2848 = vand.u32 %v1003, 4294901760
      %v2849 = vsub.f32 %v1003, %v2848
      %v2850 = vand.u32 %v2849, 4294901760
      %v2851 = vsub.f32 %v2849, %v2850
      %v2852 = vand.u32 %v2851, 4294901760
      %2853 = vmatpush.msra.mxu0 %v2852
      %v2854 = vand.u32 %v1001, 4294901760
      %v2855 = vsub.f32 %v1001, %v2854
      %v2856 = vand.u32 %v2855, 4294901760
      %v2857 = vsub.f32 %v2855, %v2856
      %v2858 = vand.u32 %v2857, 4294901760
      %2859 = vmatpush.msra.mxu0 %v2858
      %v2860 = vand.u32 %v999, 4294901760
      %v2861 = vsub.f32 %v999, %v2860
      %v2862 = vand.u32 %v2861, 4294901760
      %v2863 = vsub.f32 %v2861, %v2862
      %v2864 = vand.u32 %v2863, 4294901760
      %2865 = vmatpush.msra.mxu0 %v2864
      %v2866 = vand.u32 %v997, 4294901760
      %v2867 = vsub.f32 %v997, %v2866
      %v2868 = vand.u32 %v2867, 4294901760
      %v2869 = vsub.f32 %v2867, %v2868
      %v2870 = vand.u32 %v2869, 4294901760
      %2871 = vmatpush.msra.mxu0 %v2870
      %v2872 = vand.u32 %v995, 4294901760
      %v2873 = vsub.f32 %v995, %v2872
      %v2874 = vand.u32 %v2873, 4294901760
      %v2875 = vsub.f32 %v2873, %v2874
      %v2876 = vand.u32 %v2875, 4294901760
      %2877 = vmatpush.msra.mxu0 %v2876
      %v2878 = vand.u32 %v993, 4294901760
      %v2879 = vsub.f32 %v993, %v2878
      %v2880 = vand.u32 %v2879, 4294901760
      %v2881 = vsub.f32 %v2879, %v2880
      %v2882 = vand.u32 %v2881, 4294901760
      %2883 = vmatpush.msra.mxu0 %v2882
      %v2884 = vand.u32 %v991, 4294901760
      %v2885 = vsub.f32 %v991, %v2884
      %v2886 = vand.u32 %v2885, 4294901760
      %v2887 = vsub.f32 %v2885, %v2886
      %v2888 = vand.u32 %v2887, 4294901760
      %2889 = vmatpush.msra.mxu0 %v2888
      %v2890 = vand.u32 %v989, 4294901760
      %v2891 = vsub.f32 %v989, %v2890
      %v2892 = vand.u32 %v2891, 4294901760
      %v2893 = vsub.f32 %v2891, %v2892
      %v2894 = vand.u32 %v2893, 4294901760
      %2895 = vmatpush.msra.mxu0 %v2894
      %v2896 = vand.u32 %v987, 4294901760
      %v2897 = vsub.f32 %v987, %v2896
      %v2898 = vand.u32 %v2897, 4294901760
      %v2899 = vsub.f32 %v2897, %v2898
      %v2900 = vand.u32 %v2899, 4294901760
      %2901 = vmatpush.msra.mxu0 %v2900
      %v2902 = vand.u32 %v985, 4294901760
      %v2903 = vsub.f32 %v985, %v2902
      %v2904 = vand.u32 %v2903, 4294901760
      %v2905 = vsub.f32 %v2903, %v2904
      %v2906 = vand.u32 %v2905, 4294901760
      %2907 = vmatpush.msra.mxu0 %v2906
      %v2908 = vand.u32 %v1016, 4294901760
      %2909 = vmatmul.f32.gmra.mxu0 %v2908
      %v2910 = vpop.f32.mrf.mxu0
      %v2911 = vadd.f32 %v2710, %v2910
      %v2912 = vand.u32 %v1019, 4294901760
      %2913 = vmatmul.f32.gmra.mxu0 %v2912
      %v2914 = vpop.f32.mrf.mxu0
      %v2915 = vadd.f32 %v2718, %v2914
      %v2916 = vand.u32 %v1022, 4294901760
      %2917 = vmatmul.f32.gmra.mxu0 %v2916
      %v2918 = vpop.f32.mrf.mxu0
      %v2919 = vadd.f32 %v2726, %v2918
      %v2920 = vand.u32 %v1025, 4294901760
      %2921 = vmatmul.f32.gmra.mxu0 %v2920
      %v2922 = vpop.f32.mrf.mxu0
      %v2923 = vadd.f32 %v2734, %v2922
      %v2924 = vand.u32 %v1028, 4294901760
      %2925 = vmatmul.f32.gmra.mxu0 %v2924
      %v2926 = vpop.f32.mrf.mxu0
      %v2927 = vadd.f32 %v2742, %v2926
      %v2928 = vand.u32 %v1031, 4294901760
      %2929 = vmatmul.f32.gmra.mxu0 %v2928
      %v2930 = vpop.f32.mrf.mxu0
      %v2931 = vadd.f32 %v2750, %v2930
      %v2932 = vand.u32 %v1034, 4294901760
      %2933 = vmatmul.f32.gmra.mxu0 %v2932
      %v2934 = vpop.f32.mrf.mxu0
      %v2935 = vadd.f32 %v2758, %v2934
      %v2936 = vand.u32 %v1037, 4294901760
      %2937 = vmatmul.f32.gmra.mxu0 %v2936
      %v2938 = vpop.f32.mrf.mxu0
      %v2939 = vadd.f32 %v2766, %v2938
      %v2940 = vand.u32 %v1040, 4294901760
      %2941 = vmatmul.f32.gmra.mxu0 %v2940
      %v2942 = vpop.f32.mrf.mxu0
      %v2943 = vadd.f32 %v2774, %v2942
      %v2944 = vand.u32 %v1043, 4294901760
      %2945 = vmatmul.f32.gmra.mxu0 %v2944
      %v2946 = vpop.f32.mrf.mxu0
      %v2947 = vadd.f32 %v2782, %v2946
      %v2948 = vand.u32 %v1046, 4294901760
      %2949 = vmatmul.f32.gmra.mxu0 %v2948
      %v2950 = vpop.f32.mrf.mxu0
      %v2951 = vadd.f32 %v2790, %v2950
      %v2952 = vand.u32 %v1049, 4294901760
      %2953 = vmatmul.f32.gmra.mxu0 %v2952
      %v2954 = vpop.f32.mrf.mxu0
      %v2955 = vadd.f32 %v2798, %v2954
      %v2956 = vand.u32 %v1052, 4294901760
      %2957 = vmatmul.f32.gmra.mxu0 %v2956
      %v2958 = vpop.f32.mrf.mxu0
      %v2959 = vadd.f32 %v2806, %v2958
      %v2960 = vand.u32 %v1055, 4294901760
      %2961 = vmatmul.f32.gmra.mxu0 %v2960
      %v2962 = vpop.f32.mrf.mxu0
      %v2963 = vadd.f32 %v2814, %v2962
      %v2964 = vand.u32 %v1058, 4294901760
      %2965 = vmatmul.f32.gmra.mxu0 %v2964
      %v2966 = vpop.f32.mrf.mxu0
      %v2967 = vadd.f32 %v2822, %v2966
      %v2968 = vand.u32 %v1061, 4294901760
      %2969 = vmatmul.f32.gmra.mxu0 %v2968
      %v2970 = vpop.f32.mrf.mxu0
      %v2971 = vadd.f32 %v2830, %v2970
      %2972 = vdwg.mxu0
      %2973 = vmatpush.msra.mxu0 0.0
      %2974 = vmatpush.msra.mxu0 0.0
      %2975 = vmatpush.msra.mxu0 0.0
      %2976 = vmatpush.msra.mxu0 0.0
      %v2977 = vand.u32 %v1007, 4294901760
      %v2978 = vsub.f32 %v1007, %v2977
      %2979 = vmatpush.msra.mxu0 %v2978
      %v2980 = vand.u32 %v1005, 4294901760
      %v2981 = vsub.f32 %v1005, %v2980
      %2982 = vmatpush.msra.mxu0 %v2981
      %v2983 = vand.u32 %v1003, 4294901760
      %v2984 = vsub.f32 %v1003, %v2983
      %2985 = vmatpush.msra.mxu0 %v2984
      %v2986 = vand.u32 %v1001, 4294901760
      %v2987 = vsub.f32 %v1001, %v2986
      %2988 = vmatpush.msra.mxu0 %v2987
      %v2989 = vand.u32 %v999, 4294901760
      %v2990 = vsub.f32 %v999, %v2989
      %2991 = vmatpush.msra.mxu0 %v2990
      %v2992 = vand.u32 %v997, 4294901760
      %v2993 = vsub.f32 %v997, %v2992
      %2994 = vmatpush.msra.mxu0 %v2993
      %v2995 = vand.u32 %v995, 4294901760
      %v2996 = vsub.f32 %v995, %v2995
      %2997 = vmatpush.msra.mxu0 %v2996
      %v2998 = vand.u32 %v993, 4294901760
      %v2999 = vsub.f32 %v993, %v2998
      %3000 = vmatpush.msra.mxu0 %v2999
      %v3001 = vand.u32 %v991, 4294901760
      %v3002 = vsub.f32 %v991, %v3001
      %3003 = vmatpush.msra.mxu0 %v3002
      %v3004 = vand.u32 %v989, 4294901760
      %v3005 = vsub.f32 %v989, %v3004
      %3006 = vmatpush.msra.mxu0 %v3005
      %v3007 = vand.u32 %v987, 4294901760
      %v3008 = vsub.f32 %v987, %v3007
      %3009 = vmatpush.msra.mxu0 %v3008
      %v3010 = vand.u32 %v985, 4294901760
      %v3011 = vsub.f32 %v985, %v3010
      %3012 = vmatpush.msra.mxu0 %v3011
      %v3013 = vand.u32 %v1016, 4294901760
      %v3014 = vsub.f32 %v1016, %v3013
      %3015 = vmatmul.f32.gmra.mxu0 %v3014
      %v3016 = vpop.f32.mrf.mxu0
      %v3017 = vadd.f32 %v2911, %v3016
      %v3018 = vand.u32 %v1019, 4294901760
      %v3019 = vsub.f32 %v1019, %v3018
      %3020 = vmatmul.f32.gmra.mxu0 %v3019
      %v3021 = vpop.f32.mrf.mxu0
      %v3022 = vadd.f32 %v2915, %v3021
      %v3023 = vand.u32 %v1022, 4294901760
      %v3024 = vsub.f32 %v1022, %v3023
      %3025 = vmatmul.f32.gmra.mxu0 %v3024
      %v3026 = vpop.f32.mrf.mxu0
      %v3027 = vadd.f32 %v2919, %v3026
      %v3028 = vand.u32 %v1025, 4294901760
      %v3029 = vsub.f32 %v1025, %v3028
      %3030 = vmatmul.f32.gmra.mxu0 %v3029
      %v3031 = vpop.f32.mrf.mxu0
      %v3032 = vadd.f32 %v2923, %v3031
      %v3033 = vand.u32 %v1028, 4294901760
      %v3034 = vsub.f32 %v1028, %v3033
      %3035 = vmatmul.f32.gmra.mxu0 %v3034
      %v3036 = vpop.f32.mrf.mxu0
      %v3037 = vadd.f32 %v2927, %v3036
      %v3038 = vand.u32 %v1031, 4294901760
      %v3039 = vsub.f32 %v1031, %v3038
      %3040 = vmatmul.f32.gmra.mxu0 %v3039
      %v3041 = vpop.f32.mrf.mxu0
      %v3042 = vadd.f32 %v2931, %v3041
      %v3043 = vand.u32 %v1034, 4294901760
      %v3044 = vsub.f32 %v1034, %v3043
      %3045 = vmatmul.f32.gmra.mxu0 %v3044
      %v3046 = vpop.f32.mrf.mxu0
      %v3047 = vadd.f32 %v2935, %v3046
      %v3048 = vand.u32 %v1037, 4294901760
      %v3049 = vsub.f32 %v1037, %v3048
      %3050 = vmatmul.f32.gmra.mxu0 %v3049
      %v3051 = vpop.f32.mrf.mxu0
      %v3052 = vadd.f32 %v2939, %v3051
      %v3053 = vand.u32 %v1040, 4294901760
      %v3054 = vsub.f32 %v1040, %v3053
      %3055 = vmatmul.f32.gmra.mxu0 %v3054
      %v3056 = vpop.f32.mrf.mxu0
      %v3057 = vadd.f32 %v2943, %v3056
      %v3058 = vand.u32 %v1043, 4294901760
      %v3059 = vsub.f32 %v1043, %v3058
      %3060 = vmatmul.f32.gmra.mxu0 %v3059
      %v3061 = vpop.f32.mrf.mxu0
      %v3062 = vadd.f32 %v2947, %v3061
      %v3063 = vand.u32 %v1046, 4294901760
      %v3064 = vsub.f32 %v1046, %v3063
      %3065 = vmatmul.f32.gmra.mxu0 %v3064
      %v3066 = vpop.f32.mrf.mxu0
      %v3067 = vadd.f32 %v2951, %v3066
      %v3068 = vand.u32 %v1049, 4294901760
      %v3069 = vsub.f32 %v1049, %v3068
      %3070 = vmatmul.f32.gmra.mxu0 %v3069
      %v3071 = vpop.f32.mrf.mxu0
      %v3072 = vadd.f32 %v2955, %v3071
      %v3073 = vand.u32 %v1052, 4294901760
      %v3074 = vsub.f32 %v1052, %v3073
      %3075 = vmatmul.f32.gmra.mxu0 %v3074
      %v3076 = vpop.f32.mrf.mxu0
      %v3077 = vadd.f32 %v2959, %v3076
      %v3078 = vand.u32 %v1055, 4294901760
      %v3079 = vsub.f32 %v1055, %v3078
      %3080 = vmatmul.f32.gmra.mxu0 %v3079
      %v3081 = vpop.f32.mrf.mxu0
      %v3082 = vadd.f32 %v2963, %v3081
      %v3083 = vand.u32 %v1058, 4294901760
      %v3084 = vsub.f32 %v1058, %v3083
      %3085 = vmatmul.f32.gmra.mxu0 %v3084
      %v3086 = vpop.f32.mrf.mxu0
      %v3087 = vadd.f32 %v2967, %v3086
      %v3088 = vand.u32 %v1061, 4294901760
      %v3089 = vsub.f32 %v1061, %v3088
      %3090 = vmatmul.f32.gmra.mxu0 %v3089
      %v3091 = vpop.f32.mrf.mxu0
      %v3092 = vadd.f32 %v2971, %v3091
      %3093 = vdwg.mxu0
      %3094 = vmatpush.msra.mxu0 0.0
      %3095 = vmatpush.msra.mxu0 0.0
      %3096 = vmatpush.msra.mxu0 0.0
      %3097 = vmatpush.msra.mxu0 0.0
      %v3098 = vand.u32 %v1007, 4294901760
      %3099 = vmatpush.msra.mxu0 %v3098
      %v3100 = vand.u32 %v1005, 4294901760
      %3101 = vmatpush.msra.mxu0 %v3100
      %v3102 = vand.u32 %v1003, 4294901760
      %3103 = vmatpush.msra.mxu0 %v3102
      %v3104 = vand.u32 %v1001, 4294901760
      %3105 = vmatpush.msra.mxu0 %v3104
      %v3106 = vand.u32 %v999, 4294901760
      %3107 = vmatpush.msra.mxu0 %v3106
      %v3108 = vand.u32 %v997, 4294901760
      %3109 = vmatpush.msra.mxu0 %v3108
      %v3110 = vand.u32 %v995, 4294901760
      %3111 = vmatpush.msra.mxu0 %v3110
      %v3112 = vand.u32 %v993, 4294901760
      %3113 = vmatpush.msra.mxu0 %v3112
      %v3114 = vand.u32 %v991, 4294901760
      %3115 = vmatpush.msra.mxu0 %v3114
      %v3116 = vand.u32 %v989, 4294901760
      %3117 = vmatpush.msra.mxu0 %v3116
      %v3118 = vand.u32 %v987, 4294901760
      %3119 = vmatpush.msra.mxu0 %v3118
      %v3120 = vand.u32 %v985, 4294901760
      %3121 = vmatpush.msra.mxu0 %v3120
      %v3122 = vand.u32 %v1016, 4294901760
      %v3123 = vsub.f32 %v1016, %v3122
      %v3124 = vand.u32 %v3123, 4294901760
      %3125 = vmatmul.f32.gmra.mxu0 %v3124
      %v3126 = vpop.f32.mrf.mxu0
      %v3127 = vadd.f32 %v3017, %v3126
      %v3128 = vand.u32 %v1019, 4294901760
      %v3129 = vsub.f32 %v1019, %v3128
      %v3130 = vand.u32 %v3129, 4294901760
      %3131 = vmatmul.f32.gmra.mxu0 %v3130
      %v3132 = vpop.f32.mrf.mxu0
      %v3133 = vadd.f32 %v3022, %v3132
      %v3134 = vand.u32 %v1022, 4294901760
      %v3135 = vsub.f32 %v1022, %v3134
      %v3136 = vand.u32 %v3135, 4294901760
      %3137 = vmatmul.f32.gmra.mxu0 %v3136
      %v3138 = vpop.f32.mrf.mxu0
      %v3139 = vadd.f32 %v3027, %v3138
      %v3140 = vand.u32 %v1025, 4294901760
      %v3141 = vsub.f32 %v1025, %v3140
      %v3142 = vand.u32 %v3141, 4294901760
      %3143 = vmatmul.f32.gmra.mxu0 %v3142
      %v3144 = vpop.f32.mrf.mxu0
      %v3145 = vadd.f32 %v3032, %v3144
      %v3146 = vand.u32 %v1028, 4294901760
      %v3147 = vsub.f32 %v1028, %v3146
      %v3148 = vand.u32 %v3147, 4294901760
      %3149 = vmatmul.f32.gmra.mxu0 %v3148
      %v3150 = vpop.f32.mrf.mxu0
      %v3151 = vadd.f32 %v3037, %v3150
      %v3152 = vand.u32 %v1031, 4294901760
      %v3153 = vsub.f32 %v1031, %v3152
      %v3154 = vand.u32 %v3153, 4294901760
      %3155 = vmatmul.f32.gmra.mxu0 %v3154
      %v3156 = vpop.f32.mrf.mxu0
      %v3157 = vadd.f32 %v3042, %v3156
      %v3158 = vand.u32 %v1034, 4294901760
      %v3159 = vsub.f32 %v1034, %v3158
      %v3160 = vand.u32 %v3159, 4294901760
      %3161 = vmatmul.f32.gmra.mxu0 %v3160
      %v3162 = vpop.f32.mrf.mxu0
      %v3163 = vadd.f32 %v3047, %v3162
      %v3164 = vand.u32 %v1037, 4294901760
      %v3165 = vsub.f32 %v1037, %v3164
      %v3166 = vand.u32 %v3165, 4294901760
      %3167 = vmatmul.f32.gmra.mxu0 %v3166
      %v3168 = vpop.f32.mrf.mxu0
      %v3169 = vadd.f32 %v3052, %v3168
      %v3170 = vand.u32 %v1040, 4294901760
      %v3171 = vsub.f32 %v1040, %v3170
      %v3172 = vand.u32 %v3171, 4294901760
      %3173 = vmatmul.f32.gmra.mxu0 %v3172
      %v3174 = vpop.f32.mrf.mxu0
      %v3175 = vadd.f32 %v3057, %v3174
      %v3176 = vand.u32 %v1043, 4294901760
      %v3177 = vsub.f32 %v1043, %v3176
      %v3178 = vand.u32 %v3177, 4294901760
      %3179 = vmatmul.f32.gmra.mxu0 %v3178
      %v3180 = vpop.f32.mrf.mxu0
      %v3181 = vadd.f32 %v3062, %v3180
      %v3182 = vand.u32 %v1046, 4294901760
      %v3183 = vsub.f32 %v1046, %v3182
      %v3184 = vand.u32 %v3183, 4294901760
      %3185 = vmatmul.f32.gmra.mxu0 %v3184
      %v3186 = vpop.f32.mrf.mxu0
      %v3187 = vadd.f32 %v3067, %v3186
      %v3188 = vand.u32 %v1049, 4294901760
      %v3189 = vsub.f32 %v1049, %v3188
      %v3190 = vand.u32 %v3189, 4294901760
      %3191 = vmatmul.f32.gmra.mxu0 %v3190
      %v3192 = vpop.f32.mrf.mxu0
      %v3193 = vadd.f32 %v3072, %v3192
      %v3194 = vand.u32 %v1052, 4294901760
      %v3195 = vsub.f32 %v1052, %v3194
      %v3196 = vand.u32 %v3195, 4294901760
      %3197 = vmatmul.f32.gmra.mxu0 %v3196
      %v3198 = vpop.f32.mrf.mxu0
      %v3199 = vadd.f32 %v3077, %v3198
      %v3200 = vand.u32 %v1055, 4294901760
      %v3201 = vsub.f32 %v1055, %v3200
      %v3202 = vand.u32 %v3201, 4294901760
      %3203 = vmatmul.f32.gmra.mxu0 %v3202
      %v3204 = vpop.f32.mrf.mxu0
      %v3205 = vadd.f32 %v3082, %v3204
      %v3206 = vand.u32 %v1058, 4294901760
      %v3207 = vsub.f32 %v1058, %v3206
      %v3208 = vand.u32 %v3207, 4294901760
      %3209 = vmatmul.f32.gmra.mxu0 %v3208
      %v3210 = vpop.f32.mrf.mxu0
      %v3211 = vadd.f32 %v3087, %v3210
      %v3212 = vand.u32 %v1061, 4294901760
      %v3213 = vsub.f32 %v1061, %v3212
      %v3214 = vand.u32 %v3213, 4294901760
      %3215 = vmatmul.f32.gmra.mxu0 %v3214
      %v3216 = vpop.f32.mrf.mxu0
      %v3217 = vadd.f32 %v3092, %v3216
      %3218 = vdwg.mxu0
      %3219 = vmatpush.msra.mxu0 0.0
      %3220 = vmatpush.msra.mxu0 0.0
      %3221 = vmatpush.msra.mxu0 0.0
      %3222 = vmatpush.msra.mxu0 0.0
      %v3223 = vand.u32 %v1007, 4294901760
      %v3224 = vsub.f32 %v1007, %v3223
      %v3225 = vand.u32 %v3224, 4294901760
      %3226 = vmatpush.msra.mxu0 %v3225
      %v3227 = vand.u32 %v1005, 4294901760
      %v3228 = vsub.f32 %v1005, %v3227
      %v3229 = vand.u32 %v3228, 4294901760
      %3230 = vmatpush.msra.mxu0 %v3229
      %v3231 = vand.u32 %v1003, 4294901760
      %v3232 = vsub.f32 %v1003, %v3231
      %v3233 = vand.u32 %v3232, 4294901760
      %3234 = vmatpush.msra.mxu0 %v3233
      %v3235 = vand.u32 %v1001, 4294901760
      %v3236 = vsub.f32 %v1001, %v3235
      %v3237 = vand.u32 %v3236, 4294901760
      %3238 = vmatpush.msra.mxu0 %v3237
      %v3239 = vand.u32 %v999, 4294901760
      %v3240 = vsub.f32 %v999, %v3239
      %v3241 = vand.u32 %v3240, 4294901760
      %3242 = vmatpush.msra.mxu0 %v3241
      %v3243 = vand.u32 %v997, 4294901760
      %v3244 = vsub.f32 %v997, %v3243
      %v3245 = vand.u32 %v3244, 4294901760
      %3246 = vmatpush.msra.mxu0 %v3245
      %v3247 = vand.u32 %v995, 4294901760
      %v3248 = vsub.f32 %v995, %v3247
      %v3249 = vand.u32 %v3248, 4294901760
      %3250 = vmatpush.msra.mxu0 %v3249
      %v3251 = vand.u32 %v993, 4294901760
      %v3252 = vsub.f32 %v993, %v3251
      %v3253 = vand.u32 %v3252, 4294901760
      %3254 = vmatpush.msra.mxu0 %v3253
      %v3255 = vand.u32 %v991, 4294901760
      %v3256 = vsub.f32 %v991, %v3255
      %v3257 = vand.u32 %v3256, 4294901760
      %3258 = vmatpush.msra.mxu0 %v3257
      %v3259 = vand.u32 %v989, 4294901760
      %v3260 = vsub.f32 %v989, %v3259
      %v3261 = vand.u32 %v3260, 4294901760
      %3262 = vmatpush.msra.mxu0 %v3261
      %v3263 = vand.u32 %v987, 4294901760
      %v3264 = vsub.f32 %v987, %v3263
      %v3265 = vand.u32 %v3264, 4294901760
      %3266 = vmatpush.msra.mxu0 %v3265
      %v3267 = vand.u32 %v985, 4294901760
      %v3268 = vsub.f32 %v985, %v3267
      %v3269 = vand.u32 %v3268, 4294901760
      %3270 = vmatpush.msra.mxu0 %v3269
      %v3271 = vand.u32 %v1016, 4294901760
      %3272 = vmatmul.f32.gmra.mxu0 %v3271
      %v3273 = vpop.f32.mrf.mxu0
      %v3274 = vadd.f32 %v3127, %v3273
      %v3275 = vand.u32 %v1019, 4294901760
      %3276 = vmatmul.f32.gmra.mxu0 %v3275
      %v3277 = vpop.f32.mrf.mxu0
      %v3278 = vadd.f32 %v3133, %v3277
      %v3279 = vand.u32 %v1022, 4294901760
      %3280 = vmatmul.f32.gmra.mxu0 %v3279
      %v3281 = vpop.f32.mrf.mxu0
      %v3282 = vadd.f32 %v3139, %v3281
      %v3283 = vand.u32 %v1025, 4294901760
      %3284 = vmatmul.f32.gmra.mxu0 %v3283
      %v3285 = vpop.f32.mrf.mxu0
      %v3286 = vadd.f32 %v3145, %v3285
      %v3287 = vand.u32 %v1028, 4294901760
      %3288 = vmatmul.f32.gmra.mxu0 %v3287
      %v3289 = vpop.f32.mrf.mxu0
      %v3290 = vadd.f32 %v3151, %v3289
      %v3291 = vand.u32 %v1031, 4294901760
      %3292 = vmatmul.f32.gmra.mxu0 %v3291
      %v3293 = vpop.f32.mrf.mxu0
      %v3294 = vadd.f32 %v3157, %v3293
      %v3295 = vand.u32 %v1034, 4294901760
      %3296 = vmatmul.f32.gmra.mxu0 %v3295
      %v3297 = vpop.f32.mrf.mxu0
      %v3298 = vadd.f32 %v3163, %v3297
      %v3299 = vand.u32 %v1037, 4294901760
      %3300 = vmatmul.f32.gmra.mxu0 %v3299
      %v3301 = vpop.f32.mrf.mxu0
      %v3302 = vadd.f32 %v3169, %v3301
      %v3303 = vand.u32 %v1040, 4294901760
      %3304 = vmatmul.f32.gmra.mxu0 %v3303
      %v3305 = vpop.f32.mrf.mxu0
      %v3306 = vadd.f32 %v3175, %v3305
      %v3307 = vand.u32 %v1043, 4294901760
      %3308 = vmatmul.f32.gmra.mxu0 %v3307
      %v3309 = vpop.f32.mrf.mxu0
      %v3310 = vadd.f32 %v3181, %v3309
      %v3311 = vand.u32 %v1046, 4294901760
      %3312 = vmatmul.f32.gmra.mxu0 %v3311
      %v3313 = vpop.f32.mrf.mxu0
      %v3314 = vadd.f32 %v3187, %v3313
      %v3315 = vand.u32 %v1049, 4294901760
      %3316 = vmatmul.f32.gmra.mxu0 %v3315
      %v3317 = vpop.f32.mrf.mxu0
      %v3318 = vadd.f32 %v3193, %v3317
      %v3319 = vand.u32 %v1052, 4294901760
      %3320 = vmatmul.f32.gmra.mxu0 %v3319
      %v3321 = vpop.f32.mrf.mxu0
      %v3322 = vadd.f32 %v3199, %v3321
      %v3323 = vand.u32 %v1055, 4294901760
      %3324 = vmatmul.f32.gmra.mxu0 %v3323
      %v3325 = vpop.f32.mrf.mxu0
      %v3326 = vadd.f32 %v3205, %v3325
      %v3327 = vand.u32 %v1058, 4294901760
      %3328 = vmatmul.f32.gmra.mxu0 %v3327
      %v3329 = vpop.f32.mrf.mxu0
      %v3330 = vadd.f32 %v3211, %v3329
      %v3331 = vand.u32 %v1061, 4294901760
      %3332 = vmatmul.f32.gmra.mxu0 %v3331
      %v3333 = vpop.f32.mrf.mxu0
      %v3334 = vadd.f32 %v3217, %v3333
      %3335 = vdwg.mxu0
      %3336 = vmatpush.msra.mxu0 0.0
      %3337 = vmatpush.msra.mxu0 0.0
      %3338 = vmatpush.msra.mxu0 0.0
      %3339 = vmatpush.msra.mxu0 0.0
      %v3340 = vand.u32 %v1007, 4294901760
      %3341 = vmatpush.msra.mxu0 %v3340
      %v3342 = vand.u32 %v1005, 4294901760
      %3343 = vmatpush.msra.mxu0 %v3342
      %v3344 = vand.u32 %v1003, 4294901760
      %3345 = vmatpush.msra.mxu0 %v3344
      %v3346 = vand.u32 %v1001, 4294901760
      %3347 = vmatpush.msra.mxu0 %v3346
      %v3348 = vand.u32 %v999, 4294901760
      %3349 = vmatpush.msra.mxu0 %v3348
      %v3350 = vand.u32 %v997, 4294901760
      %3351 = vmatpush.msra.mxu0 %v3350
      %v3352 = vand.u32 %v995, 4294901760
      %3353 = vmatpush.msra.mxu0 %v3352
      %v3354 = vand.u32 %v993, 4294901760
      %3355 = vmatpush.msra.mxu0 %v3354
      %v3356 = vand.u32 %v991, 4294901760
      %3357 = vmatpush.msra.mxu0 %v3356
      %v3358 = vand.u32 %v989, 4294901760
      %3359 = vmatpush.msra.mxu0 %v3358
      %v3360 = vand.u32 %v987, 4294901760
      %3361 = vmatpush.msra.mxu0 %v3360
      %v3362 = vand.u32 %v985, 4294901760
      %3363 = vmatpush.msra.mxu0 %v3362
      %v3364 = vand.u32 %v1016, 4294901760
      %3365 = vmatmul.f32.gmra.mxu0 %v3364
      %v3366 = vpop.f32.mrf.mxu0
      %v3367 = vadd.f32 %v3274, %v3366
      %v3368 = vand.u32 %v1019, 4294901760
      %3369 = vmatmul.f32.gmra.mxu0 %v3368
      %v3370 = vpop.f32.mrf.mxu0
      %v3371 = vadd.f32 %v3278, %v3370
      %v3372 = vand.u32 %v1022, 4294901760
      %3373 = vmatmul.f32.gmra.mxu0 %v3372
      %v3374 = vpop.f32.mrf.mxu0
      %v3375 = vadd.f32 %v3282, %v3374
      %v3376 = vand.u32 %v1025, 4294901760
      %3377 = vmatmul.f32.gmra.mxu0 %v3376
      %v3378 = vpop.f32.mrf.mxu0
      %v3379 = vadd.f32 %v3286, %v3378
      %v3380 = vand.u32 %v1028, 4294901760
      %3381 = vmatmul.f32.gmra.mxu0 %v3380
      %v3382 = vpop.f32.mrf.mxu0
      %v3383 = vadd.f32 %v3290, %v3382
      %v3384 = vand.u32 %v1031, 4294901760
      %3385 = vmatmul.f32.gmra.mxu0 %v3384
      %v3386 = vpop.f32.mrf.mxu0
      %v3387 = vadd.f32 %v3294, %v3386
      %v3388 = vand.u32 %v1034, 4294901760
      %3389 = vmatmul.f32.gmra.mxu0 %v3388
      %v3390 = vpop.f32.mrf.mxu0
      %v3391 = vadd.f32 %v3298, %v3390
      %v3392 = vand.u32 %v1037, 4294901760
      %3393 = vmatmul.f32.gmra.mxu0 %v3392
      %v3394 = vpop.f32.mrf.mxu0
      %v3395 = vadd.f32 %v3302, %v3394
      %v3396 = vand.u32 %v1040, 4294901760
      %3397 = vmatmul.f32.gmra.mxu0 %v3396
      %v3398 = vpop.f32.mrf.mxu0
      %v3399 = vadd.f32 %v3306, %v3398
      %v3400 = vand.u32 %v1043, 4294901760
      %3401 = vmatmul.f32.gmra.mxu0 %v3400
      %v3402 = vpop.f32.mrf.mxu0
      %v3403 = vadd.f32 %v3310, %v3402
      %v3404 = vand.u32 %v1046, 4294901760
      %3405 = vmatmul.f32.gmra.mxu0 %v3404
      %v3406 = vpop.f32.mrf.mxu0
      %v3407 = vadd.f32 %v3314, %v3406
      %v3408 = vand.u32 %v1049, 4294901760
      %3409 = vmatmul.f32.gmra.mxu0 %v3408
      %v3410 = vpop.f32.mrf.mxu0
      %v3411 = vadd.f32 %v3318, %v3410
      %v3412 = vand.u32 %v1052, 4294901760
      %3413 = vmatmul.f32.gmra.mxu0 %v3412
      %v3414 = vpop.f32.mrf.mxu0
      %v3415 = vadd.f32 %v3322, %v3414
      %v3416 = vand.u32 %v1055, 4294901760
      %3417 = vmatmul.f32.gmra.mxu0 %v3416
      %v3418 = vpop.f32.mrf.mxu0
      %v3419 = vadd.f32 %v3326, %v3418
      %v3420 = vand.u32 %v1058, 4294901760
      %3421 = vmatmul.f32.gmra.mxu0 %v3420
      %v3422 = vpop.f32.mrf.mxu0
      %v3423 = vadd.f32 %v3330, %v3422
      %v3424 = vand.u32 %v1061, 4294901760
      %3425 = vmatmul.f32.gmra.mxu0 %v3424
      %v3426 = vpop.f32.mrf.mxu0
      %v3427 = vadd.f32 %v3334, %v3426
      %3428 = vdwg.mxu0
      %v3429 = vand.u32 %v952, 4294901760
      %3430 = vmatpush.msra.mxu0 %v3429
      %v3431 = vand.u32 %v950, 4294901760
      %3432 = vmatpush.msra.mxu0 %v3431
      %v3433 = vand.u32 %v948, 4294901760
      %3434 = vmatpush.msra.mxu0 %v3433
      %v3435 = vand.u32 %v946, 4294901760
      %3436 = vmatpush.msra.mxu0 %v3435
      %v3437 = vand.u32 %v944, 4294901760
      %3438 = vmatpush.msra.mxu0 %v3437
      %v3439 = vand.u32 %v942, 4294901760
      %3440 = vmatpush.msra.mxu0 %v3439
      %v3441 = vand.u32 %v940, 4294901760
      %3442 = vmatpush.msra.mxu0 %v3441
      %v3443 = vand.u32 %v938, 4294901760
      %3444 = vmatpush.msra.mxu0 %v3443
      %v3445 = vand.u32 %v936, 4294901760
      %3446 = vmatpush.msra.mxu0 %v3445
      %v3447 = vand.u32 %v934, 4294901760
      %3448 = vmatpush.msra.mxu0 %v3447
      %v3449 = vand.u32 %v932, 4294901760
      %3450 = vmatpush.msra.mxu0 %v3449
      %v3451 = vand.u32 %v930, 4294901760
      %3452 = vmatpush.msra.mxu0 %v3451
      %v3453 = vand.u32 %v928, 4294901760
      %3454 = vmatpush.msra.mxu0 %v3453
      %v3455 = vand.u32 %v926, 4294901760
      %3456 = vmatpush.msra.mxu0 %v3455
      %v3457 = vand.u32 %v924, 4294901760
      %3458 = vmatpush.msra.mxu0 %v3457
      %v3459 = vand.u32 %v922, 4294901760
      %3460 = vmatpush.msra.mxu0 %v3459
      %v3461 = vand.u32 %v825, 4294901760
      %v3462 = vsub.f32 %v825, %v3461
      %v3463 = vand.u32 %v3462, 4294901760
      %v3464 = vsub.f32 %v3462, %v3463
      %v3465 = vand.u32 %v3464, 4294901760
      %3466 = vmatmul.f32.gmra.mxu0 %v3465
      %v3467 = vpop.f32.mrf.mxu0
      %v3468 = vadd.f32 %v1012, %v3467
      %v3469 = vand.u32 %v826, 4294901760
      %v3470 = vsub.f32 %v826, %v3469
      %v3471 = vand.u32 %v3470, 4294901760
      %v3472 = vsub.f32 %v3470, %v3471
      %v3473 = vand.u32 %v3472, 4294901760
      %3474 = vmatmul.f32.gmra.mxu0 %v3473
      %v3475 = vpop.f32.mrf.mxu0
      %v3476 = vadd.f32 %v1012, %v3475
      %v3477 = vand.u32 %v827, 4294901760
      %v3478 = vsub.f32 %v827, %v3477
      %v3479 = vand.u32 %v3478, 4294901760
      %v3480 = vsub.f32 %v3478, %v3479
      %v3481 = vand.u32 %v3480, 4294901760
      %3482 = vmatmul.f32.gmra.mxu0 %v3481
      %v3483 = vpop.f32.mrf.mxu0
      %v3484 = vadd.f32 %v1012, %v3483
      %v3485 = vand.u32 %v828, 4294901760
      %v3486 = vsub.f32 %v828, %v3485
      %v3487 = vand.u32 %v3486, 4294901760
      %v3488 = vsub.f32 %v3486, %v3487
      %v3489 = vand.u32 %v3488, 4294901760
      %3490 = vmatmul.f32.gmra.mxu0 %v3489
      %v3491 = vpop.f32.mrf.mxu0
      %v3492 = vadd.f32 %v1012, %v3491
      %v3493 = vand.u32 %v829, 4294901760
      %v3494 = vsub.f32 %v829, %v3493
      %v3495 = vand.u32 %v3494, 4294901760
      %v3496 = vsub.f32 %v3494, %v3495
      %v3497 = vand.u32 %v3496, 4294901760
      %3498 = vmatmul.f32.gmra.mxu0 %v3497
      %v3499 = vpop.f32.mrf.mxu0
      %v3500 = vadd.f32 %v1012, %v3499
      %v3501 = vand.u32 %v830, 4294901760
      %v3502 = vsub.f32 %v830, %v3501
      %v3503 = vand.u32 %v3502, 4294901760
      %v3504 = vsub.f32 %v3502, %v3503
      %v3505 = vand.u32 %v3504, 4294901760
      %3506 = vmatmul.f32.gmra.mxu0 %v3505
      %v3507 = vpop.f32.mrf.mxu0
      %v3508 = vadd.f32 %v1012, %v3507
      %v3509 = vand.u32 %v831, 4294901760
      %v3510 = vsub.f32 %v831, %v3509
      %v3511 = vand.u32 %v3510, 4294901760
      %v3512 = vsub.f32 %v3510, %v3511
      %v3513 = vand.u32 %v3512, 4294901760
      %3514 = vmatmul.f32.gmra.mxu0 %v3513
      %v3515 = vpop.f32.mrf.mxu0
      %v3516 = vadd.f32 %v1012, %v3515
      %v3517 = vand.u32 %v832, 4294901760
      %v3518 = vsub.f32 %v832, %v3517
      %v3519 = vand.u32 %v3518, 4294901760
      %v3520 = vsub.f32 %v3518, %v3519
      %v3521 = vand.u32 %v3520, 4294901760
      %3522 = vmatmul.f32.gmra.mxu0 %v3521
      %v3523 = vpop.f32.mrf.mxu0
      %v3524 = vadd.f32 %v1012, %v3523
      %v3525 = vand.u32 %v833, 4294901760
      %v3526 = vsub.f32 %v833, %v3525
      %v3527 = vand.u32 %v3526, 4294901760
      %v3528 = vsub.f32 %v3526, %v3527
      %v3529 = vand.u32 %v3528, 4294901760
      %3530 = vmatmul.f32.gmra.mxu0 %v3529
      %v3531 = vpop.f32.mrf.mxu0
      %v3532 = vadd.f32 %v1012, %v3531
      %v3533 = vand.u32 %v834, 4294901760
      %v3534 = vsub.f32 %v834, %v3533
      %v3535 = vand.u32 %v3534, 4294901760
      %v3536 = vsub.f32 %v3534, %v3535
      %v3537 = vand.u32 %v3536, 4294901760
      %3538 = vmatmul.f32.gmra.mxu0 %v3537
      %v3539 = vpop.f32.mrf.mxu0
      %v3540 = vadd.f32 %v1012, %v3539
      %v3541 = vand.u32 %v835, 4294901760
      %v3542 = vsub.f32 %v835, %v3541
      %v3543 = vand.u32 %v3542, 4294901760
      %v3544 = vsub.f32 %v3542, %v3543
      %v3545 = vand.u32 %v3544, 4294901760
      %3546 = vmatmul.f32.gmra.mxu0 %v3545
      %v3547 = vpop.f32.mrf.mxu0
      %v3548 = vadd.f32 %v1012, %v3547
      %v3549 = vand.u32 %v836, 4294901760
      %v3550 = vsub.f32 %v836, %v3549
      %v3551 = vand.u32 %v3550, 4294901760
      %v3552 = vsub.f32 %v3550, %v3551
      %v3553 = vand.u32 %v3552, 4294901760
      %3554 = vmatmul.f32.gmra.mxu0 %v3553
      %v3555 = vpop.f32.mrf.mxu0
      %v3556 = vadd.f32 %v1012, %v3555
      %v3557 = vand.u32 %v837, 4294901760
      %v3558 = vsub.f32 %v837, %v3557
      %v3559 = vand.u32 %v3558, 4294901760
      %v3560 = vsub.f32 %v3558, %v3559
      %v3561 = vand.u32 %v3560, 4294901760
      %3562 = vmatmul.f32.gmra.mxu0 %v3561
      %v3563 = vpop.f32.mrf.mxu0
      %v3564 = vadd.f32 %v1012, %v3563
      %v3565 = vand.u32 %v838, 4294901760
      %v3566 = vsub.f32 %v838, %v3565
      %v3567 = vand.u32 %v3566, 4294901760
      %v3568 = vsub.f32 %v3566, %v3567
      %v3569 = vand.u32 %v3568, 4294901760
      %3570 = vmatmul.f32.gmra.mxu0 %v3569
      %v3571 = vpop.f32.mrf.mxu0
      %v3572 = vadd.f32 %v1012, %v3571
      %v3573 = vand.u32 %v839, 4294901760
      %v3574 = vsub.f32 %v839, %v3573
      %v3575 = vand.u32 %v3574, 4294901760
      %v3576 = vsub.f32 %v3574, %v3575
      %v3577 = vand.u32 %v3576, 4294901760
      %3578 = vmatmul.f32.gmra.mxu0 %v3577
      %v3579 = vpop.f32.mrf.mxu0
      %v3580 = vadd.f32 %v1012, %v3579
      %v3581 = vand.u32 %v840, 4294901760
      %v3582 = vsub.f32 %v840, %v3581
      %v3583 = vand.u32 %v3582, 4294901760
      %v3584 = vsub.f32 %v3582, %v3583
      %v3585 = vand.u32 %v3584, 4294901760
      %3586 = vmatmul.f32.gmra.mxu0 %v3585
      %v3587 = vpop.f32.mrf.mxu0
      %v3588 = vadd.f32 %v1012, %v3587
      %3589 = vdwg.mxu0
      %v3590 = vand.u32 %v952, 4294901760
      %v3591 = vsub.f32 %v952, %v3590
      %v3592 = vand.u32 %v3591, 4294901760
      %v3593 = vsub.f32 %v3591, %v3592
      %v3594 = vand.u32 %v3593, 4294901760
      %3595 = vmatpush.msra.mxu0 %v3594
      %v3596 = vand.u32 %v950, 4294901760
      %v3597 = vsub.f32 %v950, %v3596
      %v3598 = vand.u32 %v3597, 4294901760
      %v3599 = vsub.f32 %v3597, %v3598
      %v3600 = vand.u32 %v3599, 4294901760
      %3601 = vmatpush.msra.mxu0 %v3600
      %v3602 = vand.u32 %v948, 4294901760
      %v3603 = vsub.f32 %v948, %v3602
      %v3604 = vand.u32 %v3603, 4294901760
      %v3605 = vsub.f32 %v3603, %v3604
      %v3606 = vand.u32 %v3605, 4294901760
      %3607 = vmatpush.msra.mxu0 %v3606
      %v3608 = vand.u32 %v946, 4294901760
      %v3609 = vsub.f32 %v946, %v3608
      %v3610 = vand.u32 %v3609, 4294901760
      %v3611 = vsub.f32 %v3609, %v3610
      %v3612 = vand.u32 %v3611, 4294901760
      %3613 = vmatpush.msra.mxu0 %v3612
      %v3614 = vand.u32 %v944, 4294901760
      %v3615 = vsub.f32 %v944, %v3614
      %v3616 = vand.u32 %v3615, 4294901760
      %v3617 = vsub.f32 %v3615, %v3616
      %v3618 = vand.u32 %v3617, 4294901760
      %3619 = vmatpush.msra.mxu0 %v3618
      %v3620 = vand.u32 %v942, 4294901760
      %v3621 = vsub.f32 %v942, %v3620
      %v3622 = vand.u32 %v3621, 4294901760
      %v3623 = vsub.f32 %v3621, %v3622
      %v3624 = vand.u32 %v3623, 4294901760
      %3625 = vmatpush.msra.mxu0 %v3624
      %v3626 = vand.u32 %v940, 4294901760
      %v3627 = vsub.f32 %v940, %v3626
      %v3628 = vand.u32 %v3627, 4294901760
      %v3629 = vsub.f32 %v3627, %v3628
      %v3630 = vand.u32 %v3629, 4294901760
      %3631 = vmatpush.msra.mxu0 %v3630
      %v3632 = vand.u32 %v938, 4294901760
      %v3633 = vsub.f32 %v938, %v3632
      %v3634 = vand.u32 %v3633, 4294901760
      %v3635 = vsub.f32 %v3633, %v3634
      %v3636 = vand.u32 %v3635, 4294901760
      %3637 = vmatpush.msra.mxu0 %v3636
      %v3638 = vand.u32 %v936, 4294901760
      %v3639 = vsub.f32 %v936, %v3638
      %v3640 = vand.u32 %v3639, 4294901760
      %v3641 = vsub.f32 %v3639, %v3640
      %v3642 = vand.u32 %v3641, 4294901760
      %3643 = vmatpush.msra.mxu0 %v3642
      %v3644 = vand.u32 %v934, 4294901760
      %v3645 = vsub.f32 %v934, %v3644
      %v3646 = vand.u32 %v3645, 4294901760
      %v3647 = vsub.f32 %v3645, %v3646
      %v3648 = vand.u32 %v3647, 4294901760
      %3649 = vmatpush.msra.mxu0 %v3648
      %v3650 = vand.u32 %v932, 4294901760
      %v3651 = vsub.f32 %v932, %v3650
      %v3652 = vand.u32 %v3651, 4294901760
      %v3653 = vsub.f32 %v3651, %v3652
      %v3654 = vand.u32 %v3653, 4294901760
      %3655 = vmatpush.msra.mxu0 %v3654
      %v3656 = vand.u32 %v930, 4294901760
      %v3657 = vsub.f32 %v930, %v3656
      %v3658 = vand.u32 %v3657, 4294901760
      %v3659 = vsub.f32 %v3657, %v3658
      %v3660 = vand.u32 %v3659, 4294901760
      %3661 = vmatpush.msra.mxu0 %v3660
      %v3662 = vand.u32 %v928, 4294901760
      %v3663 = vsub.f32 %v928, %v3662
      %v3664 = vand.u32 %v3663, 4294901760
      %v3665 = vsub.f32 %v3663, %v3664
      %v3666 = vand.u32 %v3665, 4294901760
      %3667 = vmatpush.msra.mxu0 %v3666
      %v3668 = vand.u32 %v926, 4294901760
      %v3669 = vsub.f32 %v926, %v3668
      %v3670 = vand.u32 %v3669, 4294901760
      %v3671 = vsub.f32 %v3669, %v3670
      %v3672 = vand.u32 %v3671, 4294901760
      %3673 = vmatpush.msra.mxu0 %v3672
      %v3674 = vand.u32 %v924, 4294901760
      %v3675 = vsub.f32 %v924, %v3674
      %v3676 = vand.u32 %v3675, 4294901760
      %v3677 = vsub.f32 %v3675, %v3676
      %v3678 = vand.u32 %v3677, 4294901760
      %3679 = vmatpush.msra.mxu0 %v3678
      %v3680 = vand.u32 %v922, 4294901760
      %v3681 = vsub.f32 %v922, %v3680
      %v3682 = vand.u32 %v3681, 4294901760
      %v3683 = vsub.f32 %v3681, %v3682
      %v3684 = vand.u32 %v3683, 4294901760
      %3685 = vmatpush.msra.mxu0 %v3684
      %v3686 = vand.u32 %v825, 4294901760
      %3687 = vmatmul.f32.gmra.mxu0 %v3686
      %v3688 = vpop.f32.mrf.mxu0
      %v3689 = vadd.f32 %v3468, %v3688
      %v3690 = vand.u32 %v826, 4294901760
      %3691 = vmatmul.f32.gmra.mxu0 %v3690
      %v3692 = vpop.f32.mrf.mxu0
      %v3693 = vadd.f32 %v3476, %v3692
      %v3694 = vand.u32 %v827, 4294901760
      %3695 = vmatmul.f32.gmra.mxu0 %v3694
      %v3696 = vpop.f32.mrf.mxu0
      %v3697 = vadd.f32 %v3484, %v3696
      %v3698 = vand.u32 %v828, 4294901760
      %3699 = vmatmul.f32.gmra.mxu0 %v3698
      %v3700 = vpop.f32.mrf.mxu0
      %v3701 = vadd.f32 %v3492, %v3700
      %v3702 = vand.u32 %v829, 4294901760
      %3703 = vmatmul.f32.gmra.mxu0 %v3702
      %v3704 = vpop.f32.mrf.mxu0
      %v3705 = vadd.f32 %v3500, %v3704
      %v3706 = vand.u32 %v830, 4294901760
      %3707 = vmatmul.f32.gmra.mxu0 %v3706
      %v3708 = vpop.f32.mrf.mxu0
      %v3709 = vadd.f32 %v3508, %v3708
      %v3710 = vand.u32 %v831, 4294901760
      %3711 = vmatmul.f32.gmra.mxu0 %v3710
      %v3712 = vpop.f32.mrf.mxu0
      %v3713 = vadd.f32 %v3516, %v3712
      %v3714 = vand.u32 %v832, 4294901760
      %3715 = vmatmul.f32.gmra.mxu0 %v3714
      %v3716 = vpop.f32.mrf.mxu0
      %v3717 = vadd.f32 %v3524, %v3716
      %v3718 = vand.u32 %v833, 4294901760
      %3719 = vmatmul.f32.gmra.mxu0 %v3718
      %v3720 = vpop.f32.mrf.mxu0
      %v3721 = vadd.f32 %v3532, %v3720
      %v3722 = vand.u32 %v834, 4294901760
      %3723 = vmatmul.f32.gmra.mxu0 %v3722
      %v3724 = vpop.f32.mrf.mxu0
      %v3725 = vadd.f32 %v3540, %v3724
      %v3726 = vand.u32 %v835, 4294901760
      %3727 = vmatmul.f32.gmra.mxu0 %v3726
      %v3728 = vpop.f32.mrf.mxu0
      %v3729 = vadd.f32 %v3548, %v3728
      %v3730 = vand.u32 %v836, 4294901760
      %3731 = vmatmul.f32.gmra.mxu0 %v3730
      %v3732 = vpop.f32.mrf.mxu0
      %v3733 = vadd.f32 %v3556, %v3732
      %v3734 = vand.u32 %v837, 4294901760
      %3735 = vmatmul.f32.gmra.mxu0 %v3734
      %v3736 = vpop.f32.mrf.mxu0
      %v3737 = vadd.f32 %v3564, %v3736
      %v3738 = vand.u32 %v838, 4294901760
      %3739 = vmatmul.f32.gmra.mxu0 %v3738
      %v3740 = vpop.f32.mrf.mxu0
      %v3741 = vadd.f32 %v3572, %v3740
      %v3742 = vand.u32 %v839, 4294901760
      %3743 = vmatmul.f32.gmra.mxu0 %v3742
      %v3744 = vpop.f32.mrf.mxu0
      %v3745 = vadd.f32 %v3580, %v3744
      %v3746 = vand.u32 %v840, 4294901760
      %3747 = vmatmul.f32.gmra.mxu0 %v3746
      %v3748 = vpop.f32.mrf.mxu0
      %v3749 = vadd.f32 %v3588, %v3748
      %3750 = vdwg.mxu0
      %v3751 = vand.u32 %v952, 4294901760
      %v3752 = vsub.f32 %v952, %v3751
      %3753 = vmatpush.msra.mxu0 %v3752
      %v3754 = vand.u32 %v950, 4294901760
      %v3755 = vsub.f32 %v950, %v3754
      %3756 = vmatpush.msra.mxu0 %v3755
      %v3757 = vand.u32 %v948, 4294901760
      %v3758 = vsub.f32 %v948, %v3757
      %3759 = vmatpush.msra.mxu0 %v3758
      %v3760 = vand.u32 %v946, 4294901760
      %v3761 = vsub.f32 %v946, %v3760
      %3762 = vmatpush.msra.mxu0 %v3761
      %v3763 = vand.u32 %v944, 4294901760
      %v3764 = vsub.f32 %v944, %v3763
      %3765 = vmatpush.msra.mxu0 %v3764
      %v3766 = vand.u32 %v942, 4294901760
      %v3767 = vsub.f32 %v942, %v3766
      %3768 = vmatpush.msra.mxu0 %v3767
      %v3769 = vand.u32 %v940, 4294901760
      %v3770 = vsub.f32 %v940, %v3769
      %3771 = vmatpush.msra.mxu0 %v3770
      %v3772 = vand.u32 %v938, 4294901760
      %v3773 = vsub.f32 %v938, %v3772
      %3774 = vmatpush.msra.mxu0 %v3773
      %v3775 = vand.u32 %v936, 4294901760
      %v3776 = vsub.f32 %v936, %v3775
      %3777 = vmatpush.msra.mxu0 %v3776
      %v3778 = vand.u32 %v934, 4294901760
      %v3779 = vsub.f32 %v934, %v3778
      %3780 = vmatpush.msra.mxu0 %v3779
      %v3781 = vand.u32 %v932, 4294901760
      %v3782 = vsub.f32 %v932, %v3781
      %3783 = vmatpush.msra.mxu0 %v3782
      %v3784 = vand.u32 %v930, 4294901760
      %v3785 = vsub.f32 %v930, %v3784
      %3786 = vmatpush.msra.mxu0 %v3785
      %v3787 = vand.u32 %v928, 4294901760
      %v3788 = vsub.f32 %v928, %v3787
      %3789 = vmatpush.msra.mxu0 %v3788
      %v3790 = vand.u32 %v926, 4294901760
      %v3791 = vsub.f32 %v926, %v3790
      %3792 = vmatpush.msra.mxu0 %v3791
      %v3793 = vand.u32 %v924, 4294901760
      %v3794 = vsub.f32 %v924, %v3793
      %3795 = vmatpush.msra.mxu0 %v3794
      %v3796 = vand.u32 %v922, 4294901760
      %v3797 = vsub.f32 %v922, %v3796
      %3798 = vmatpush.msra.mxu0 %v3797
      %v3799 = vand.u32 %v825, 4294901760
      %v3800 = vsub.f32 %v825, %v3799
      %3801 = vmatmul.f32.gmra.mxu0 %v3800
      %v3802 = vpop.f32.mrf.mxu0
      %v3803 = vadd.f32 %v3689, %v3802
      %v3804 = vand.u32 %v826, 4294901760
      %v3805 = vsub.f32 %v826, %v3804
      %3806 = vmatmul.f32.gmra.mxu0 %v3805
      %v3807 = vpop.f32.mrf.mxu0
      %v3808 = vadd.f32 %v3693, %v3807
      %v3809 = vand.u32 %v827, 4294901760
      %v3810 = vsub.f32 %v827, %v3809
      %3811 = vmatmul.f32.gmra.mxu0 %v3810
      %v3812 = vpop.f32.mrf.mxu0
      %v3813 = vadd.f32 %v3697, %v3812
      %v3814 = vand.u32 %v828, 4294901760
      %v3815 = vsub.f32 %v828, %v3814
      %3816 = vmatmul.f32.gmra.mxu0 %v3815
      %v3817 = vpop.f32.mrf.mxu0
      %v3818 = vadd.f32 %v3701, %v3817
      %v3819 = vand.u32 %v829, 4294901760
      %v3820 = vsub.f32 %v829, %v3819
      %3821 = vmatmul.f32.gmra.mxu0 %v3820
      %v3822 = vpop.f32.mrf.mxu0
      %v3823 = vadd.f32 %v3705, %v3822
      %v3824 = vand.u32 %v830, 4294901760
      %v3825 = vsub.f32 %v830, %v3824
      %3826 = vmatmul.f32.gmra.mxu0 %v3825
      %v3827 = vpop.f32.mrf.mxu0
      %v3828 = vadd.f32 %v3709, %v3827
      %v3829 = vand.u32 %v831, 4294901760
      %v3830 = vsub.f32 %v831, %v3829
      %3831 = vmatmul.f32.gmra.mxu0 %v3830
      %v3832 = vpop.f32.mrf.mxu0
      %v3833 = vadd.f32 %v3713, %v3832
      %v3834 = vand.u32 %v832, 4294901760
      %v3835 = vsub.f32 %v832, %v3834
      %3836 = vmatmul.f32.gmra.mxu0 %v3835
      %v3837 = vpop.f32.mrf.mxu0
      %v3838 = vadd.f32 %v3717, %v3837
      %v3839 = vand.u32 %v833, 4294901760
      %v3840 = vsub.f32 %v833, %v3839
      %3841 = vmatmul.f32.gmra.mxu0 %v3840
      %v3842 = vpop.f32.mrf.mxu0
      %v3843 = vadd.f32 %v3721, %v3842
      %v3844 = vand.u32 %v834, 4294901760
      %v3845 = vsub.f32 %v834, %v3844
      %3846 = vmatmul.f32.gmra.mxu0 %v3845
      %v3847 = vpop.f32.mrf.mxu0
      %v3848 = vadd.f32 %v3725, %v3847
      %v3849 = vand.u32 %v835, 4294901760
      %v3850 = vsub.f32 %v835, %v3849
      %3851 = vmatmul.f32.gmra.mxu0 %v3850
      %v3852 = vpop.f32.mrf.mxu0
      %v3853 = vadd.f32 %v3729, %v3852
      %v3854 = vand.u32 %v836, 4294901760
      %v3855 = vsub.f32 %v836, %v3854
      %3856 = vmatmul.f32.gmra.mxu0 %v3855
      %v3857 = vpop.f32.mrf.mxu0
      %v3858 = vadd.f32 %v3733, %v3857
      %v3859 = vand.u32 %v837, 4294901760
      %v3860 = vsub.f32 %v837, %v3859
      %3861 = vmatmul.f32.gmra.mxu0 %v3860
      %v3862 = vpop.f32.mrf.mxu0
      %v3863 = vadd.f32 %v3737, %v3862
      %v3864 = vand.u32 %v838, 4294901760
      %v3865 = vsub.f32 %v838, %v3864
      %3866 = vmatmul.f32.gmra.mxu0 %v3865
      %v3867 = vpop.f32.mrf.mxu0
      %v3868 = vadd.f32 %v3741, %v3867
      %v3869 = vand.u32 %v839, 4294901760
      %v3870 = vsub.f32 %v839, %v3869
      %3871 = vmatmul.f32.gmra.mxu0 %v3870
      %v3872 = vpop.f32.mrf.mxu0
      %v3873 = vadd.f32 %v3745, %v3872
      %v3874 = vand.u32 %v840, 4294901760
      %v3875 = vsub.f32 %v840, %v3874
      %3876 = vmatmul.f32.gmra.mxu0 %v3875
      %v3877 = vpop.f32.mrf.mxu0
      %v3878 = vadd.f32 %v3749, %v3877
      %3879 = vdwg.mxu0
      %v3880 = vand.u32 %v952, 4294901760
      %3881 = vmatpush.msra.mxu0 %v3880
      %v3882 = vand.u32 %v950, 4294901760
      %3883 = vmatpush.msra.mxu0 %v3882
      %v3884 = vand.u32 %v948, 4294901760
      %3885 = vmatpush.msra.mxu0 %v3884
      %v3886 = vand.u32 %v946, 4294901760
      %3887 = vmatpush.msra.mxu0 %v3886
      %v3888 = vand.u32 %v944, 4294901760
      %3889 = vmatpush.msra.mxu0 %v3888
      %v3890 = vand.u32 %v942, 4294901760
      %3891 = vmatpush.msra.mxu0 %v3890
      %v3892 = vand.u32 %v940, 4294901760
      %3893 = vmatpush.msra.mxu0 %v3892
      %v3894 = vand.u32 %v938, 4294901760
      %3895 = vmatpush.msra.mxu0 %v3894
      %v3896 = vand.u32 %v936, 4294901760
      %3897 = vmatpush.msra.mxu0 %v3896
      %v3898 = vand.u32 %v934, 4294901760
      %3899 = vmatpush.msra.mxu0 %v3898
      %v3900 = vand.u32 %v932, 4294901760
      %3901 = vmatpush.msra.mxu0 %v3900
      %v3902 = vand.u32 %v930, 4294901760
      %3903 = vmatpush.msra.mxu0 %v3902
      %v3904 = vand.u32 %v928, 4294901760
      %3905 = vmatpush.msra.mxu0 %v3904
      %v3906 = vand.u32 %v926, 4294901760
      %3907 = vmatpush.msra.mxu0 %v3906
      %v3908 = vand.u32 %v924, 4294901760
      %3909 = vmatpush.msra.mxu0 %v3908
      %v3910 = vand.u32 %v922, 4294901760
      %3911 = vmatpush.msra.mxu0 %v3910
      %v3912 = vand.u32 %v825, 4294901760
      %v3913 = vsub.f32 %v825, %v3912
      %v3914 = vand.u32 %v3913, 4294901760
      %3915 = vmatmul.f32.gmra.mxu0 %v3914
      %v3916 = vpop.f32.mrf.mxu0
      %v3917 = vadd.f32 %v3803, %v3916
      %v3918 = vand.u32 %v826, 4294901760
      %v3919 = vsub.f32 %v826, %v3918
      %v3920 = vand.u32 %v3919, 4294901760
      %3921 = vmatmul.f32.gmra.mxu0 %v3920
      %v3922 = vpop.f32.mrf.mxu0
      %v3923 = vadd.f32 %v3808, %v3922
      %v3924 = vand.u32 %v827, 4294901760
      %v3925 = vsub.f32 %v827, %v3924
      %v3926 = vand.u32 %v3925, 4294901760
      %3927 = vmatmul.f32.gmra.mxu0 %v3926
      %v3928 = vpop.f32.mrf.mxu0
      %v3929 = vadd.f32 %v3813, %v3928
      %v3930 = vand.u32 %v828, 4294901760
      %v3931 = vsub.f32 %v828, %v3930
      %v3932 = vand.u32 %v3931, 4294901760
      %3933 = vmatmul.f32.gmra.mxu0 %v3932
      %v3934 = vpop.f32.mrf.mxu0
      %v3935 = vadd.f32 %v3818, %v3934
      %v3936 = vand.u32 %v829, 4294901760
      %v3937 = vsub.f32 %v829, %v3936
      %v3938 = vand.u32 %v3937, 4294901760
      %3939 = vmatmul.f32.gmra.mxu0 %v3938
      %v3940 = vpop.f32.mrf.mxu0
      %v3941 = vadd.f32 %v3823, %v3940
      %v3942 = vand.u32 %v830, 4294901760
      %v3943 = vsub.f32 %v830, %v3942
      %v3944 = vand.u32 %v3943, 4294901760
      %3945 = vmatmul.f32.gmra.mxu0 %v3944
      %v3946 = vpop.f32.mrf.mxu0
      %v3947 = vadd.f32 %v3828, %v3946
      %v3948 = vand.u32 %v831, 4294901760
      %v3949 = vsub.f32 %v831, %v3948
      %v3950 = vand.u32 %v3949, 4294901760
      %3951 = vmatmul.f32.gmra.mxu0 %v3950
      %v3952 = vpop.f32.mrf.mxu0
      %v3953 = vadd.f32 %v3833, %v3952
      %v3954 = vand.u32 %v832, 4294901760
      %v3955 = vsub.f32 %v832, %v3954
      %v3956 = vand.u32 %v3955, 4294901760
      %3957 = vmatmul.f32.gmra.mxu0 %v3956
      %v3958 = vpop.f32.mrf.mxu0
      %v3959 = vadd.f32 %v3838, %v3958
      %v3960 = vand.u32 %v833, 4294901760
      %v3961 = vsub.f32 %v833, %v3960
      %v3962 = vand.u32 %v3961, 4294901760
      %3963 = vmatmul.f32.gmra.mxu0 %v3962
      %v3964 = vpop.f32.mrf.mxu0
      %v3965 = vadd.f32 %v3843, %v3964
      %v3966 = vand.u32 %v834, 4294901760
      %v3967 = vsub.f32 %v834, %v3966
      %v3968 = vand.u32 %v3967, 4294901760
      %3969 = vmatmul.f32.gmra.mxu0 %v3968
      %v3970 = vpop.f32.mrf.mxu0
      %v3971 = vadd.f32 %v3848, %v3970
      %v3972 = vand.u32 %v835, 4294901760
      %v3973 = vsub.f32 %v835, %v3972
      %v3974 = vand.u32 %v3973, 4294901760
      %3975 = vmatmul.f32.gmra.mxu0 %v3974
      %v3976 = vpop.f32.mrf.mxu0
      %v3977 = vadd.f32 %v3853, %v3976
      %v3978 = vand.u32 %v836, 4294901760
      %v3979 = vsub.f32 %v836, %v3978
      %v3980 = vand.u32 %v3979, 4294901760
      %3981 = vmatmul.f32.gmra.mxu0 %v3980
      %v3982 = vpop.f32.mrf.mxu0
      %v3983 = vadd.f32 %v3858, %v3982
      %v3984 = vand.u32 %v837, 4294901760
      %v3985 = vsub.f32 %v837, %v3984
      %v3986 = vand.u32 %v3985, 4294901760
      %3987 = vmatmul.f32.gmra.mxu0 %v3986
      %v3988 = vpop.f32.mrf.mxu0
      %v3989 = vadd.f32 %v3863, %v3988
      %v3990 = vand.u32 %v838, 4294901760
      %v3991 = vsub.f32 %v838, %v3990
      %v3992 = vand.u32 %v3991, 4294901760
      %3993 = vmatmul.f32.gmra.mxu0 %v3992
      %v3994 = vpop.f32.mrf.mxu0
      %v3995 = vadd.f32 %v3868, %v3994
      %v3996 = vand.u32 %v839, 4294901760
      %v3997 = vsub.f32 %v839, %v3996
      %v3998 = vand.u32 %v3997, 4294901760
      %3999 = vmatmul.f32.gmra.mxu0 %v3998
      %v4000 = vpop.f32.mrf.mxu0
      %v4001 = vadd.f32 %v3873, %v4000
      %v4002 = vand.u32 %v840, 4294901760
      %v4003 = vsub.f32 %v840, %v4002
      %v4004 = vand.u32 %v4003, 4294901760
      %4005 = vmatmul.f32.gmra.mxu0 %v4004
      %v4006 = vpop.f32.mrf.mxu0
      %v4007 = vadd.f32 %v3878, %v4006
      %4008 = vdwg.mxu0
      %v4009 = vand.u32 %v952, 4294901760
      %v4010 = vsub.f32 %v952, %v4009
      %v4011 = vand.u32 %v4010, 4294901760
      %4012 = vmatpush.msra.mxu0 %v4011
      %v4013 = vand.u32 %v950, 4294901760
      %v4014 = vsub.f32 %v950, %v4013
      %v4015 = vand.u32 %v4014, 4294901760
      %4016 = vmatpush.msra.mxu0 %v4015
      %v4017 = vand.u32 %v948, 4294901760
      %v4018 = vsub.f32 %v948, %v4017
      %v4019 = vand.u32 %v4018, 4294901760
      %4020 = vmatpush.msra.mxu0 %v4019
      %v4021 = vand.u32 %v946, 4294901760
      %v4022 = vsub.f32 %v946, %v4021
      %v4023 = vand.u32 %v4022, 4294901760
      %4024 = vmatpush.msra.mxu0 %v4023
      %v4025 = vand.u32 %v944, 4294901760
      %v4026 = vsub.f32 %v944, %v4025
      %v4027 = vand.u32 %v4026, 4294901760
      %4028 = vmatpush.msra.mxu0 %v4027
      %v4029 = vand.u32 %v942, 4294901760
      %v4030 = vsub.f32 %v942, %v4029
      %v4031 = vand.u32 %v4030, 4294901760
      %4032 = vmatpush.msra.mxu0 %v4031
      %v4033 = vand.u32 %v940, 4294901760
      %v4034 = vsub.f32 %v940, %v4033
      %v4035 = vand.u32 %v4034, 4294901760
      %4036 = vmatpush.msra.mxu0 %v4035
      %v4037 = vand.u32 %v938, 4294901760
      %v4038 = vsub.f32 %v938, %v4037
      %v4039 = vand.u32 %v4038, 4294901760
      %4040 = vmatpush.msra.mxu0 %v4039
      %v4041 = vand.u32 %v936, 4294901760
      %v4042 = vsub.f32 %v936, %v4041
      %v4043 = vand.u32 %v4042, 4294901760
      %4044 = vmatpush.msra.mxu0 %v4043
      %v4045 = vand.u32 %v934, 4294901760
      %v4046 = vsub.f32 %v934, %v4045
      %v4047 = vand.u32 %v4046, 4294901760
      %4048 = vmatpush.msra.mxu0 %v4047
      %v4049 = vand.u32 %v932, 4294901760
      %v4050 = vsub.f32 %v932, %v4049
      %v4051 = vand.u32 %v4050, 4294901760
      %4052 = vmatpush.msra.mxu0 %v4051
      %v4053 = vand.u32 %v930, 4294901760
      %v4054 = vsub.f32 %v930, %v4053
      %v4055 = vand.u32 %v4054, 4294901760
      %4056 = vmatpush.msra.mxu0 %v4055
      %v4057 = vand.u32 %v928, 4294901760
      %v4058 = vsub.f32 %v928, %v4057
      %v4059 = vand.u32 %v4058, 4294901760
      %4060 = vmatpush.msra.mxu0 %v4059
      %v4061 = vand.u32 %v926, 4294901760
      %v4062 = vsub.f32 %v926, %v4061
      %v4063 = vand.u32 %v4062, 4294901760
      %4064 = vmatpush.msra.mxu0 %v4063
      %v4065 = vand.u32 %v924, 4294901760
      %v4066 = vsub.f32 %v924, %v4065
      %v4067 = vand.u32 %v4066, 4294901760
      %4068 = vmatpush.msra.mxu0 %v4067
      %v4069 = vand.u32 %v922, 4294901760
      %v4070 = vsub.f32 %v922, %v4069
      %v4071 = vand.u32 %v4070, 4294901760
      %4072 = vmatpush.msra.mxu0 %v4071
      %v4073 = vand.u32 %v825, 4294901760
      %4074 = vmatmul.f32.gmra.mxu0 %v4073
      %v4075 = vpop.f32.mrf.mxu0
      %v4076 = vadd.f32 %v3917, %v4075
      %v4077 = vand.u32 %v826, 4294901760
      %4078 = vmatmul.f32.gmra.mxu0 %v4077
      %v4079 = vpop.f32.mrf.mxu0
      %v4080 = vadd.f32 %v3923, %v4079
      %v4081 = vand.u32 %v827, 4294901760
      %4082 = vmatmul.f32.gmra.mxu0 %v4081
      %v4083 = vpop.f32.mrf.mxu0
      %v4084 = vadd.f32 %v3929, %v4083
      %v4085 = vand.u32 %v828, 4294901760
      %4086 = vmatmul.f32.gmra.mxu0 %v4085
      %v4087 = vpop.f32.mrf.mxu0
      %v4088 = vadd.f32 %v3935, %v4087
      %v4089 = vand.u32 %v829, 4294901760
      %4090 = vmatmul.f32.gmra.mxu0 %v4089
      %v4091 = vpop.f32.mrf.mxu0
      %v4092 = vadd.f32 %v3941, %v4091
      %v4093 = vand.u32 %v830, 4294901760
      %4094 = vmatmul.f32.gmra.mxu0 %v4093
      %v4095 = vpop.f32.mrf.mxu0
      %v4096 = vadd.f32 %v3947, %v4095
      %v4097 = vand.u32 %v831, 4294901760
      %4098 = vmatmul.f32.gmra.mxu0 %v4097
      %v4099 = vpop.f32.mrf.mxu0
      %v4100 = vadd.f32 %v3953, %v4099
      %v4101 = vand.u32 %v832, 4294901760
      %4102 = vmatmul.f32.gmra.mxu0 %v4101
      %v4103 = vpop.f32.mrf.mxu0
      %v4104 = vadd.f32 %v3959, %v4103
      %v4105 = vand.u32 %v833, 4294901760
      %4106 = vmatmul.f32.gmra.mxu0 %v4105
      %v4107 = vpop.f32.mrf.mxu0
      %v4108 = vadd.f32 %v3965, %v4107
      %v4109 = vand.u32 %v834, 4294901760
      %4110 = vmatmul.f32.gmra.mxu0 %v4109
      %v4111 = vpop.f32.mrf.mxu0
      %v4112 = vadd.f32 %v3971, %v4111
      %v4113 = vand.u32 %v835, 4294901760
      %4114 = vmatmul.f32.gmra.mxu0 %v4113
      %v4115 = vpop.f32.mrf.mxu0
      %v4116 = vadd.f32 %v3977, %v4115
      %v4117 = vand.u32 %v836, 4294901760
      %4118 = vmatmul.f32.gmra.mxu0 %v4117
      %v4119 = vpop.f32.mrf.mxu0
      %v4120 = vadd.f32 %v3983, %v4119
      %v4121 = vand.u32 %v837, 4294901760
      %4122 = vmatmul.f32.gmra.mxu0 %v4121
      %v4123 = vpop.f32.mrf.mxu0
      %v4124 = vadd.f32 %v3989, %v4123
      %v4125 = vand.u32 %v838, 4294901760
      %4126 = vmatmul.f32.gmra.mxu0 %v4125
      %v4127 = vpop.f32.mrf.mxu0
      %v4128 = vadd.f32 %v3995, %v4127
      %v4129 = vand.u32 %v839, 4294901760
      %4130 = vmatmul.f32.gmra.mxu0 %v4129
      %v4131 = vpop.f32.mrf.mxu0
      %v4132 = vadd.f32 %v4001, %v4131
      %v4133 = vand.u32 %v840, 4294901760
      %4134 = vmatmul.f32.gmra.mxu0 %v4133
      %v4135 = vpop.f32.mrf.mxu0
      %v4136 = vadd.f32 %v4007, %v4135
      %4137 = vdwg.mxu0
      %v4138 = vand.u32 %v952, 4294901760
      %4139 = vmatpush.msra.mxu0 %v4138
      %v4140 = vand.u32 %v950, 4294901760
      %4141 = vmatpush.msra.mxu0 %v4140
      %v4142 = vand.u32 %v948, 4294901760
      %4143 = vmatpush.msra.mxu0 %v4142
      %v4144 = vand.u32 %v946, 4294901760
      %4145 = vmatpush.msra.mxu0 %v4144
      %v4146 = vand.u32 %v944, 4294901760
      %4147 = vmatpush.msra.mxu0 %v4146
      %v4148 = vand.u32 %v942, 4294901760
      %4149 = vmatpush.msra.mxu0 %v4148
      %v4150 = vand.u32 %v940, 4294901760
      %4151 = vmatpush.msra.mxu0 %v4150
      %v4152 = vand.u32 %v938, 4294901760
      %4153 = vmatpush.msra.mxu0 %v4152
      %v4154 = vand.u32 %v936, 4294901760
      %4155 = vmatpush.msra.mxu0 %v4154
      %v4156 = vand.u32 %v934, 4294901760
      %4157 = vmatpush.msra.mxu0 %v4156
      %v4158 = vand.u32 %v932, 4294901760
      %4159 = vmatpush.msra.mxu0 %v4158
      %v4160 = vand.u32 %v930, 4294901760
      %4161 = vmatpush.msra.mxu0 %v4160
      %v4162 = vand.u32 %v928, 4294901760
      %4163 = vmatpush.msra.mxu0 %v4162
      %v4164 = vand.u32 %v926, 4294901760
      %4165 = vmatpush.msra.mxu0 %v4164
      %v4166 = vand.u32 %v924, 4294901760
      %4167 = vmatpush.msra.mxu0 %v4166
      %v4168 = vand.u32 %v922, 4294901760
      %4169 = vmatpush.msra.mxu0 %v4168
      %v4170 = vand.u32 %v825, 4294901760
      %4171 = vmatmul.f32.gmra.mxu0 %v4170
      %v4172 = vpop.f32.mrf.mxu0
      %v4173 = vadd.f32 %v4076, %v4172
      %v4174 = vand.u32 %v826, 4294901760
      %4175 = vmatmul.f32.gmra.mxu0 %v4174
      %v4176 = vpop.f32.mrf.mxu0
      %v4177 = vadd.f32 %v4080, %v4176
      %v4178 = vand.u32 %v827, 4294901760
      %4179 = vmatmul.f32.gmra.mxu0 %v4178
      %v4180 = vpop.f32.mrf.mxu0
      %v4181 = vadd.f32 %v4084, %v4180
      %v4182 = vand.u32 %v828, 4294901760
      %4183 = vmatmul.f32.gmra.mxu0 %v4182
      %v4184 = vpop.f32.mrf.mxu0
      %v4185 = vadd.f32 %v4088, %v4184
      %v4186 = vand.u32 %v829, 4294901760
      %4187 = vmatmul.f32.gmra.mxu0 %v4186
      %v4188 = vpop.f32.mrf.mxu0
      %v4189 = vadd.f32 %v4092, %v4188
      %v4190 = vand.u32 %v830, 4294901760
      %4191 = vmatmul.f32.gmra.mxu0 %v4190
      %v4192 = vpop.f32.mrf.mxu0
      %v4193 = vadd.f32 %v4096, %v4192
      %v4194 = vand.u32 %v831, 4294901760
      %4195 = vmatmul.f32.gmra.mxu0 %v4194
      %v4196 = vpop.f32.mrf.mxu0
      %v4197 = vadd.f32 %v4100, %v4196
      %v4198 = vand.u32 %v832, 4294901760
      %4199 = vmatmul.f32.gmra.mxu0 %v4198
      %v4200 = vpop.f32.mrf.mxu0
      %v4201 = vadd.f32 %v4104, %v4200
      %v4202 = vand.u32 %v833, 4294901760
      %4203 = vmatmul.f32.gmra.mxu0 %v4202
      %v4204 = vpop.f32.mrf.mxu0
      %v4205 = vadd.f32 %v4108, %v4204
      %v4206 = vand.u32 %v834, 4294901760
      %4207 = vmatmul.f32.gmra.mxu0 %v4206
      %v4208 = vpop.f32.mrf.mxu0
      %v4209 = vadd.f32 %v4112, %v4208
      %v4210 = vand.u32 %v835, 4294901760
      %4211 = vmatmul.f32.gmra.mxu0 %v4210
      %v4212 = vpop.f32.mrf.mxu0
      %v4213 = vadd.f32 %v4116, %v4212
      %v4214 = vand.u32 %v836, 4294901760
      %4215 = vmatmul.f32.gmra.mxu0 %v4214
      %v4216 = vpop.f32.mrf.mxu0
      %v4217 = vadd.f32 %v4120, %v4216
      %v4218 = vand.u32 %v837, 4294901760
      %4219 = vmatmul.f32.gmra.mxu0 %v4218
      %v4220 = vpop.f32.mrf.mxu0
      %v4221 = vadd.f32 %v4124, %v4220
      %v4222 = vand.u32 %v838, 4294901760
      %4223 = vmatmul.f32.gmra.mxu0 %v4222
      %v4224 = vpop.f32.mrf.mxu0
      %v4225 = vadd.f32 %v4128, %v4224
      %v4226 = vand.u32 %v839, 4294901760
      %4227 = vmatmul.f32.gmra.mxu0 %v4226
      %v4228 = vpop.f32.mrf.mxu0
      %v4229 = vadd.f32 %v4132, %v4228
      %v4230 = vand.u32 %v840, 4294901760
      %4231 = vmatmul.f32.gmra.mxu0 %v4230
      %v4232 = vpop.f32.mrf.mxu0
      %v4233 = vadd.f32 %v4136, %v4232
      %4234 = vdwg.mxu0
      %v4235 = vand.u32 %v984, 4294901760
      %4236 = vmatpush.msra.mxu0 %v4235
      %v4237 = vand.u32 %v982, 4294901760
      %4238 = vmatpush.msra.mxu0 %v4237
      %v4239 = vand.u32 %v980, 4294901760
      %4240 = vmatpush.msra.mxu0 %v4239
      %v4241 = vand.u32 %v978, 4294901760
      %4242 = vmatpush.msra.mxu0 %v4241
      %v4243 = vand.u32 %v976, 4294901760
      %4244 = vmatpush.msra.mxu0 %v4243
      %v4245 = vand.u32 %v974, 4294901760
      %4246 = vmatpush.msra.mxu0 %v4245
      %v4247 = vand.u32 %v972, 4294901760
      %4248 = vmatpush.msra.mxu0 %v4247
      %v4249 = vand.u32 %v970, 4294901760
      %4250 = vmatpush.msra.mxu0 %v4249
      %v4251 = vand.u32 %v968, 4294901760
      %4252 = vmatpush.msra.mxu0 %v4251
      %v4253 = vand.u32 %v966, 4294901760
      %4254 = vmatpush.msra.mxu0 %v4253
      %v4255 = vand.u32 %v964, 4294901760
      %4256 = vmatpush.msra.mxu0 %v4255
      %v4257 = vand.u32 %v962, 4294901760
      %4258 = vmatpush.msra.mxu0 %v4257
      %v4259 = vand.u32 %v960, 4294901760
      %4260 = vmatpush.msra.mxu0 %v4259
      %v4261 = vand.u32 %v958, 4294901760
      %4262 = vmatpush.msra.mxu0 %v4261
      %v4263 = vand.u32 %v956, 4294901760
      %4264 = vmatpush.msra.mxu0 %v4263
      %v4265 = vand.u32 %v954, 4294901760
      %4266 = vmatpush.msra.mxu0 %v4265
      %v4267 = vand.u32 %v873, 4294901760
      %v4268 = vsub.f32 %v873, %v4267
      %v4269 = vand.u32 %v4268, 4294901760
      %v4270 = vsub.f32 %v4268, %v4269
      %v4271 = vand.u32 %v4270, 4294901760
      %4272 = vmatmul.f32.gmra.mxu0 %v4271
      %v4273 = vpop.f32.mrf.mxu0
      %v4274 = vadd.f32 %v4173, %v4273
      %v4275 = vand.u32 %v874, 4294901760
      %v4276 = vsub.f32 %v874, %v4275
      %v4277 = vand.u32 %v4276, 4294901760
      %v4278 = vsub.f32 %v4276, %v4277
      %v4279 = vand.u32 %v4278, 4294901760
      %4280 = vmatmul.f32.gmra.mxu0 %v4279
      %v4281 = vpop.f32.mrf.mxu0
      %v4282 = vadd.f32 %v4177, %v4281
      %v4283 = vand.u32 %v875, 4294901760
      %v4284 = vsub.f32 %v875, %v4283
      %v4285 = vand.u32 %v4284, 4294901760
      %v4286 = vsub.f32 %v4284, %v4285
      %v4287 = vand.u32 %v4286, 4294901760
      %4288 = vmatmul.f32.gmra.mxu0 %v4287
      %v4289 = vpop.f32.mrf.mxu0
      %v4290 = vadd.f32 %v4181, %v4289
      %v4291 = vand.u32 %v876, 4294901760
      %v4292 = vsub.f32 %v876, %v4291
      %v4293 = vand.u32 %v4292, 4294901760
      %v4294 = vsub.f32 %v4292, %v4293
      %v4295 = vand.u32 %v4294, 4294901760
      %4296 = vmatmul.f32.gmra.mxu0 %v4295
      %v4297 = vpop.f32.mrf.mxu0
      %v4298 = vadd.f32 %v4185, %v4297
      %v4299 = vand.u32 %v877, 4294901760
      %v4300 = vsub.f32 %v877, %v4299
      %v4301 = vand.u32 %v4300, 4294901760
      %v4302 = vsub.f32 %v4300, %v4301
      %v4303 = vand.u32 %v4302, 4294901760
      %4304 = vmatmul.f32.gmra.mxu0 %v4303
      %v4305 = vpop.f32.mrf.mxu0
      %v4306 = vadd.f32 %v4189, %v4305
      %v4307 = vand.u32 %v878, 4294901760
      %v4308 = vsub.f32 %v878, %v4307
      %v4309 = vand.u32 %v4308, 4294901760
      %v4310 = vsub.f32 %v4308, %v4309
      %v4311 = vand.u32 %v4310, 4294901760
      %4312 = vmatmul.f32.gmra.mxu0 %v4311
      %v4313 = vpop.f32.mrf.mxu0
      %v4314 = vadd.f32 %v4193, %v4313
      %v4315 = vand.u32 %v879, 4294901760
      %v4316 = vsub.f32 %v879, %v4315
      %v4317 = vand.u32 %v4316, 4294901760
      %v4318 = vsub.f32 %v4316, %v4317
      %v4319 = vand.u32 %v4318, 4294901760
      %4320 = vmatmul.f32.gmra.mxu0 %v4319
      %v4321 = vpop.f32.mrf.mxu0
      %v4322 = vadd.f32 %v4197, %v4321
      %v4323 = vand.u32 %v880, 4294901760
      %v4324 = vsub.f32 %v880, %v4323
      %v4325 = vand.u32 %v4324, 4294901760
      %v4326 = vsub.f32 %v4324, %v4325
      %v4327 = vand.u32 %v4326, 4294901760
      %4328 = vmatmul.f32.gmra.mxu0 %v4327
      %v4329 = vpop.f32.mrf.mxu0
      %v4330 = vadd.f32 %v4201, %v4329
      %v4331 = vand.u32 %v881, 4294901760
      %v4332 = vsub.f32 %v881, %v4331
      %v4333 = vand.u32 %v4332, 4294901760
      %v4334 = vsub.f32 %v4332, %v4333
      %v4335 = vand.u32 %v4334, 4294901760
      %4336 = vmatmul.f32.gmra.mxu0 %v4335
      %v4337 = vpop.f32.mrf.mxu0
      %v4338 = vadd.f32 %v4205, %v4337
      %v4339 = vand.u32 %v882, 4294901760
      %v4340 = vsub.f32 %v882, %v4339
      %v4341 = vand.u32 %v4340, 4294901760
      %v4342 = vsub.f32 %v4340, %v4341
      %v4343 = vand.u32 %v4342, 4294901760
      %4344 = vmatmul.f32.gmra.mxu0 %v4343
      %v4345 = vpop.f32.mrf.mxu0
      %v4346 = vadd.f32 %v4209, %v4345
      %v4347 = vand.u32 %v883, 4294901760
      %v4348 = vsub.f32 %v883, %v4347
      %v4349 = vand.u32 %v4348, 4294901760
      %v4350 = vsub.f32 %v4348, %v4349
      %v4351 = vand.u32 %v4350, 4294901760
      %4352 = vmatmul.f32.gmra.mxu0 %v4351
      %v4353 = vpop.f32.mrf.mxu0
      %v4354 = vadd.f32 %v4213, %v4353
      %v4355 = vand.u32 %v884, 4294901760
      %v4356 = vsub.f32 %v884, %v4355
      %v4357 = vand.u32 %v4356, 4294901760
      %v4358 = vsub.f32 %v4356, %v4357
      %v4359 = vand.u32 %v4358, 4294901760
      %4360 = vmatmul.f32.gmra.mxu0 %v4359
      %v4361 = vpop.f32.mrf.mxu0
      %v4362 = vadd.f32 %v4217, %v4361
      %v4363 = vand.u32 %v885, 4294901760
      %v4364 = vsub.f32 %v885, %v4363
      %v4365 = vand.u32 %v4364, 4294901760
      %v4366 = vsub.f32 %v4364, %v4365
      %v4367 = vand.u32 %v4366, 4294901760
      %4368 = vmatmul.f32.gmra.mxu0 %v4367
      %v4369 = vpop.f32.mrf.mxu0
      %v4370 = vadd.f32 %v4221, %v4369
      %v4371 = vand.u32 %v886, 4294901760
      %v4372 = vsub.f32 %v886, %v4371
      %v4373 = vand.u32 %v4372, 4294901760
      %v4374 = vsub.f32 %v4372, %v4373
      %v4375 = vand.u32 %v4374, 4294901760
      %4376 = vmatmul.f32.gmra.mxu0 %v4375
      %v4377 = vpop.f32.mrf.mxu0
      %v4378 = vadd.f32 %v4225, %v4377
      %v4379 = vand.u32 %v887, 4294901760
      %v4380 = vsub.f32 %v887, %v4379
      %v4381 = vand.u32 %v4380, 4294901760
      %v4382 = vsub.f32 %v4380, %v4381
      %v4383 = vand.u32 %v4382, 4294901760
      %4384 = vmatmul.f32.gmra.mxu0 %v4383
      %v4385 = vpop.f32.mrf.mxu0
      %v4386 = vadd.f32 %v4229, %v4385
      %v4387 = vand.u32 %v888, 4294901760
      %v4388 = vsub.f32 %v888, %v4387
      %v4389 = vand.u32 %v4388, 4294901760
      %v4390 = vsub.f32 %v4388, %v4389
      %v4391 = vand.u32 %v4390, 4294901760
      %4392 = vmatmul.f32.gmra.mxu0 %v4391
      %v4393 = vpop.f32.mrf.mxu0
      %v4394 = vadd.f32 %v4233, %v4393
      %4395 = vdwg.mxu0
      %v4396 = vand.u32 %v984, 4294901760
      %v4397 = vsub.f32 %v984, %v4396
      %v4398 = vand.u32 %v4397, 4294901760
      %v4399 = vsub.f32 %v4397, %v4398
      %v4400 = vand.u32 %v4399, 4294901760
      %4401 = vmatpush.msra.mxu0 %v4400
      %v4402 = vand.u32 %v982, 4294901760
      %v4403 = vsub.f32 %v982, %v4402
      %v4404 = vand.u32 %v4403, 4294901760
      %v4405 = vsub.f32 %v4403, %v4404
      %v4406 = vand.u32 %v4405, 4294901760
      %4407 = vmatpush.msra.mxu0 %v4406
      %v4408 = vand.u32 %v980, 4294901760
      %v4409 = vsub.f32 %v980, %v4408
      %v4410 = vand.u32 %v4409, 4294901760
      %v4411 = vsub.f32 %v4409, %v4410
      %v4412 = vand.u32 %v4411, 4294901760
      %4413 = vmatpush.msra.mxu0 %v4412
      %v4414 = vand.u32 %v978, 4294901760
      %v4415 = vsub.f32 %v978, %v4414
      %v4416 = vand.u32 %v4415, 4294901760
      %v4417 = vsub.f32 %v4415, %v4416
      %v4418 = vand.u32 %v4417, 4294901760
      %4419 = vmatpush.msra.mxu0 %v4418
      %v4420 = vand.u32 %v976, 4294901760
      %v4421 = vsub.f32 %v976, %v4420
      %v4422 = vand.u32 %v4421, 4294901760
      %v4423 = vsub.f32 %v4421, %v4422
      %v4424 = vand.u32 %v4423, 4294901760
      %4425 = vmatpush.msra.mxu0 %v4424
      %v4426 = vand.u32 %v974, 4294901760
      %v4427 = vsub.f32 %v974, %v4426
      %v4428 = vand.u32 %v4427, 4294901760
      %v4429 = vsub.f32 %v4427, %v4428
      %v4430 = vand.u32 %v4429, 4294901760
      %4431 = vmatpush.msra.mxu0 %v4430
      %v4432 = vand.u32 %v972, 4294901760
      %v4433 = vsub.f32 %v972, %v4432
      %v4434 = vand.u32 %v4433, 4294901760
      %v4435 = vsub.f32 %v4433, %v4434
      %v4436 = vand.u32 %v4435, 4294901760
      %4437 = vmatpush.msra.mxu0 %v4436
      %v4438 = vand.u32 %v970, 4294901760
      %v4439 = vsub.f32 %v970, %v4438
      %v4440 = vand.u32 %v4439, 4294901760
      %v4441 = vsub.f32 %v4439, %v4440
      %v4442 = vand.u32 %v4441, 4294901760
      %4443 = vmatpush.msra.mxu0 %v4442
      %v4444 = vand.u32 %v968, 4294901760
      %v4445 = vsub.f32 %v968, %v4444
      %v4446 = vand.u32 %v4445, 4294901760
      %v4447 = vsub.f32 %v4445, %v4446
      %v4448 = vand.u32 %v4447, 4294901760
      %4449 = vmatpush.msra.mxu0 %v4448
      %v4450 = vand.u32 %v966, 4294901760
      %v4451 = vsub.f32 %v966, %v4450
      %v4452 = vand.u32 %v4451, 4294901760
      %v4453 = vsub.f32 %v4451, %v4452
      %v4454 = vand.u32 %v4453, 4294901760
      %4455 = vmatpush.msra.mxu0 %v4454
      %v4456 = vand.u32 %v964, 4294901760
      %v4457 = vsub.f32 %v964, %v4456
      %v4458 = vand.u32 %v4457, 4294901760
      %v4459 = vsub.f32 %v4457, %v4458
      %v4460 = vand.u32 %v4459, 4294901760
      %4461 = vmatpush.msra.mxu0 %v4460
      %v4462 = vand.u32 %v962, 4294901760
      %v4463 = vsub.f32 %v962, %v4462
      %v4464 = vand.u32 %v4463, 4294901760
      %v4465 = vsub.f32 %v4463, %v4464
      %v4466 = vand.u32 %v4465, 4294901760
      %4467 = vmatpush.msra.mxu0 %v4466
      %v4468 = vand.u32 %v960, 4294901760
      %v4469 = vsub.f32 %v960, %v4468
      %v4470 = vand.u32 %v4469, 4294901760
      %v4471 = vsub.f32 %v4469, %v4470
      %v4472 = vand.u32 %v4471, 4294901760
      %4473 = vmatpush.msra.mxu0 %v4472
      %v4474 = vand.u32 %v958, 4294901760
      %v4475 = vsub.f32 %v958, %v4474
      %v4476 = vand.u32 %v4475, 4294901760
      %v4477 = vsub.f32 %v4475, %v4476
      %v4478 = vand.u32 %v4477, 4294901760
      %4479 = vmatpush.msra.mxu0 %v4478
      %v4480 = vand.u32 %v956, 4294901760
      %v4481 = vsub.f32 %v956, %v4480
      %v4482 = vand.u32 %v4481, 4294901760
      %v4483 = vsub.f32 %v4481, %v4482
      %v4484 = vand.u32 %v4483, 4294901760
      %4485 = vmatpush.msra.mxu0 %v4484
      %v4486 = vand.u32 %v954, 4294901760
      %v4487 = vsub.f32 %v954, %v4486
      %v4488 = vand.u32 %v4487, 4294901760
      %v4489 = vsub.f32 %v4487, %v4488
      %v4490 = vand.u32 %v4489, 4294901760
      %4491 = vmatpush.msra.mxu0 %v4490
      %v4492 = vand.u32 %v873, 4294901760
      %4493 = vmatmul.f32.gmra.mxu0 %v4492
      %v4494 = vpop.f32.mrf.mxu0
      %v4495 = vadd.f32 %v4274, %v4494
      %v4496 = vand.u32 %v874, 4294901760
      %4497 = vmatmul.f32.gmra.mxu0 %v4496
      %v4498 = vpop.f32.mrf.mxu0
      %v4499 = vadd.f32 %v4282, %v4498
      %v4500 = vand.u32 %v875, 4294901760
      %4501 = vmatmul.f32.gmra.mxu0 %v4500
      %v4502 = vpop.f32.mrf.mxu0
      %v4503 = vadd.f32 %v4290, %v4502
      %v4504 = vand.u32 %v876, 4294901760
      %4505 = vmatmul.f32.gmra.mxu0 %v4504
      %v4506 = vpop.f32.mrf.mxu0
      %v4507 = vadd.f32 %v4298, %v4506
      %v4508 = vand.u32 %v877, 4294901760
      %4509 = vmatmul.f32.gmra.mxu0 %v4508
      %v4510 = vpop.f32.mrf.mxu0
      %v4511 = vadd.f32 %v4306, %v4510
      %v4512 = vand.u32 %v878, 4294901760
      %4513 = vmatmul.f32.gmra.mxu0 %v4512
      %v4514 = vpop.f32.mrf.mxu0
      %v4515 = vadd.f32 %v4314, %v4514
      %v4516 = vand.u32 %v879, 4294901760
      %4517 = vmatmul.f32.gmra.mxu0 %v4516
      %v4518 = vpop.f32.mrf.mxu0
      %v4519 = vadd.f32 %v4322, %v4518
      %v4520 = vand.u32 %v880, 4294901760
      %4521 = vmatmul.f32.gmra.mxu0 %v4520
      %v4522 = vpop.f32.mrf.mxu0
      %v4523 = vadd.f32 %v4330, %v4522
      %v4524 = vand.u32 %v881, 4294901760
      %4525 = vmatmul.f32.gmra.mxu0 %v4524
      %v4526 = vpop.f32.mrf.mxu0
      %v4527 = vadd.f32 %v4338, %v4526
      %v4528 = vand.u32 %v882, 4294901760
      %4529 = vmatmul.f32.gmra.mxu0 %v4528
      %v4530 = vpop.f32.mrf.mxu0
      %v4531 = vadd.f32 %v4346, %v4530
      %v4532 = vand.u32 %v883, 4294901760
      %4533 = vmatmul.f32.gmra.mxu0 %v4532
      %v4534 = vpop.f32.mrf.mxu0
      %v4535 = vadd.f32 %v4354, %v4534
      %v4536 = vand.u32 %v884, 4294901760
      %4537 = vmatmul.f32.gmra.mxu0 %v4536
      %v4538 = vpop.f32.mrf.mxu0
      %v4539 = vadd.f32 %v4362, %v4538
      %v4540 = vand.u32 %v885, 4294901760
      %4541 = vmatmul.f32.gmra.mxu0 %v4540
      %v4542 = vpop.f32.mrf.mxu0
      %v4543 = vadd.f32 %v4370, %v4542
      %v4544 = vand.u32 %v886, 4294901760
      %4545 = vmatmul.f32.gmra.mxu0 %v4544
      %v4546 = vpop.f32.mrf.mxu0
      %v4547 = vadd.f32 %v4378, %v4546
      %v4548 = vand.u32 %v887, 4294901760
      %4549 = vmatmul.f32.gmra.mxu0 %v4548
      %v4550 = vpop.f32.mrf.mxu0
      %v4551 = vadd.f32 %v4386, %v4550
      %v4552 = vand.u32 %v888, 4294901760
      %4553 = vmatmul.f32.gmra.mxu0 %v4552
      %v4554 = vpop.f32.mrf.mxu0
      %v4555 = vadd.f32 %v4394, %v4554
      %4556 = vdwg.mxu0
      %v4557 = vand.u32 %v984, 4294901760
      %v4558 = vsub.f32 %v984, %v4557
      %4559 = vmatpush.msra.mxu0 %v4558
      %v4560 = vand.u32 %v982, 4294901760
      %v4561 = vsub.f32 %v982, %v4560
      %4562 = vmatpush.msra.mxu0 %v4561
      %v4563 = vand.u32 %v980, 4294901760
      %v4564 = vsub.f32 %v980, %v4563
      %4565 = vmatpush.msra.mxu0 %v4564
      %v4566 = vand.u32 %v978, 4294901760
      %v4567 = vsub.f32 %v978, %v4566
      %4568 = vmatpush.msra.mxu0 %v4567
      %v4569 = vand.u32 %v976, 4294901760
      %v4570 = vsub.f32 %v976, %v4569
      %4571 = vmatpush.msra.mxu0 %v4570
      %v4572 = vand.u32 %v974, 4294901760
      %v4573 = vsub.f32 %v974, %v4572
      %4574 = vmatpush.msra.mxu0 %v4573
      %v4575 = vand.u32 %v972, 4294901760
      %v4576 = vsub.f32 %v972, %v4575
      %4577 = vmatpush.msra.mxu0 %v4576
      %v4578 = vand.u32 %v970, 4294901760
      %v4579 = vsub.f32 %v970, %v4578
      %4580 = vmatpush.msra.mxu0 %v4579
      %v4581 = vand.u32 %v968, 4294901760
      %v4582 = vsub.f32 %v968, %v4581
      %4583 = vmatpush.msra.mxu0 %v4582
      %v4584 = vand.u32 %v966, 4294901760
      %v4585 = vsub.f32 %v966, %v4584
      %4586 = vmatpush.msra.mxu0 %v4585
      %v4587 = vand.u32 %v964, 4294901760
      %v4588 = vsub.f32 %v964, %v4587
      %4589 = vmatpush.msra.mxu0 %v4588
      %v4590 = vand.u32 %v962, 4294901760
      %v4591 = vsub.f32 %v962, %v4590
      %4592 = vmatpush.msra.mxu0 %v4591
      %v4593 = vand.u32 %v960, 4294901760
      %v4594 = vsub.f32 %v960, %v4593
      %4595 = vmatpush.msra.mxu0 %v4594
      %v4596 = vand.u32 %v958, 4294901760
      %v4597 = vsub.f32 %v958, %v4596
      %4598 = vmatpush.msra.mxu0 %v4597
      %v4599 = vand.u32 %v956, 4294901760
      %v4600 = vsub.f32 %v956, %v4599
      %4601 = vmatpush.msra.mxu0 %v4600
      %v4602 = vand.u32 %v954, 4294901760
      %v4603 = vsub.f32 %v954, %v4602
      %4604 = vmatpush.msra.mxu0 %v4603
      %v4605 = vand.u32 %v873, 4294901760
      %v4606 = vsub.f32 %v873, %v4605
      %4607 = vmatmul.f32.gmra.mxu0 %v4606
      %v4608 = vpop.f32.mrf.mxu0
      %v4609 = vadd.f32 %v4495, %v4608
      %v4610 = vand.u32 %v874, 4294901760
      %v4611 = vsub.f32 %v874, %v4610
      %4612 = vmatmul.f32.gmra.mxu0 %v4611
      %v4613 = vpop.f32.mrf.mxu0
      %v4614 = vadd.f32 %v4499, %v4613
      %v4615 = vand.u32 %v875, 4294901760
      %v4616 = vsub.f32 %v875, %v4615
      %4617 = vmatmul.f32.gmra.mxu0 %v4616
      %v4618 = vpop.f32.mrf.mxu0
      %v4619 = vadd.f32 %v4503, %v4618
      %v4620 = vand.u32 %v876, 4294901760
      %v4621 = vsub.f32 %v876, %v4620
      %4622 = vmatmul.f32.gmra.mxu0 %v4621
      %v4623 = vpop.f32.mrf.mxu0
      %v4624 = vadd.f32 %v4507, %v4623
      %v4625 = vand.u32 %v877, 4294901760
      %v4626 = vsub.f32 %v877, %v4625
      %4627 = vmatmul.f32.gmra.mxu0 %v4626
      %v4628 = vpop.f32.mrf.mxu0
      %v4629 = vadd.f32 %v4511, %v4628
      %v4630 = vand.u32 %v878, 4294901760
      %v4631 = vsub.f32 %v878, %v4630
      %4632 = vmatmul.f32.gmra.mxu0 %v4631
      %v4633 = vpop.f32.mrf.mxu0
      %v4634 = vadd.f32 %v4515, %v4633
      %v4635 = vand.u32 %v879, 4294901760
      %v4636 = vsub.f32 %v879, %v4635
      %4637 = vmatmul.f32.gmra.mxu0 %v4636
      %v4638 = vpop.f32.mrf.mxu0
      %v4639 = vadd.f32 %v4519, %v4638
      %v4640 = vand.u32 %v880, 4294901760
      %v4641 = vsub.f32 %v880, %v4640
      %4642 = vmatmul.f32.gmra.mxu0 %v4641
      %v4643 = vpop.f32.mrf.mxu0
      %v4644 = vadd.f32 %v4523, %v4643
      %v4645 = vand.u32 %v881, 4294901760
      %v4646 = vsub.f32 %v881, %v4645
      %4647 = vmatmul.f32.gmra.mxu0 %v4646
      %v4648 = vpop.f32.mrf.mxu0
      %v4649 = vadd.f32 %v4527, %v4648
      %v4650 = vand.u32 %v882, 4294901760
      %v4651 = vsub.f32 %v882, %v4650
      %4652 = vmatmul.f32.gmra.mxu0 %v4651
      %v4653 = vpop.f32.mrf.mxu0
      %v4654 = vadd.f32 %v4531, %v4653
      %v4655 = vand.u32 %v883, 4294901760
      %v4656 = vsub.f32 %v883, %v4655
      %4657 = vmatmul.f32.gmra.mxu0 %v4656
      %v4658 = vpop.f32.mrf.mxu0
      %v4659 = vadd.f32 %v4535, %v4658
      %v4660 = vand.u32 %v884, 4294901760
      %v4661 = vsub.f32 %v884, %v4660
      %4662 = vmatmul.f32.gmra.mxu0 %v4661
      %v4663 = vpop.f32.mrf.mxu0
      %v4664 = vadd.f32 %v4539, %v4663
      %v4665 = vand.u32 %v885, 4294901760
      %v4666 = vsub.f32 %v885, %v4665
      %4667 = vmatmul.f32.gmra.mxu0 %v4666
      %v4668 = vpop.f32.mrf.mxu0
      %v4669 = vadd.f32 %v4543, %v4668
      %v4670 = vand.u32 %v886, 4294901760
      %v4671 = vsub.f32 %v886, %v4670
      %4672 = vmatmul.f32.gmra.mxu0 %v4671
      %v4673 = vpop.f32.mrf.mxu0
      %v4674 = vadd.f32 %v4547, %v4673
      %v4675 = vand.u32 %v887, 4294901760
      %v4676 = vsub.f32 %v887, %v4675
      %4677 = vmatmul.f32.gmra.mxu0 %v4676
      %v4678 = vpop.f32.mrf.mxu0
      %v4679 = vadd.f32 %v4551, %v4678
      %v4680 = vand.u32 %v888, 4294901760
      %v4681 = vsub.f32 %v888, %v4680
      %4682 = vmatmul.f32.gmra.mxu0 %v4681
      %v4683 = vpop.f32.mrf.mxu0
      %v4684 = vadd.f32 %v4555, %v4683
      %4685 = vdwg.mxu0
      %v4686 = vand.u32 %v984, 4294901760
      %4687 = vmatpush.msra.mxu0 %v4686
      %v4688 = vand.u32 %v982, 4294901760
      %4689 = vmatpush.msra.mxu0 %v4688
      %v4690 = vand.u32 %v980, 4294901760
      %4691 = vmatpush.msra.mxu0 %v4690
      %v4692 = vand.u32 %v978, 4294901760
      %4693 = vmatpush.msra.mxu0 %v4692
      %v4694 = vand.u32 %v976, 4294901760
      %4695 = vmatpush.msra.mxu0 %v4694
      %v4696 = vand.u32 %v974, 4294901760
      %4697 = vmatpush.msra.mxu0 %v4696
      %v4698 = vand.u32 %v972, 4294901760
      %4699 = vmatpush.msra.mxu0 %v4698
      %v4700 = vand.u32 %v970, 4294901760
      %4701 = vmatpush.msra.mxu0 %v4700
      %v4702 = vand.u32 %v968, 4294901760
      %4703 = vmatpush.msra.mxu0 %v4702
      %v4704 = vand.u32 %v966, 4294901760
      %4705 = vmatpush.msra.mxu0 %v4704
      %v4706 = vand.u32 %v964, 4294901760
      %4707 = vmatpush.msra.mxu0 %v4706
      %v4708 = vand.u32 %v962, 4294901760
      %4709 = vmatpush.msra.mxu0 %v4708
      %v4710 = vand.u32 %v960, 4294901760
      %4711 = vmatpush.msra.mxu0 %v4710
      %v4712 = vand.u32 %v958, 4294901760
      %4713 = vmatpush.msra.mxu0 %v4712
      %v4714 = vand.u32 %v956, 4294901760
      %4715 = vmatpush.msra.mxu0 %v4714
      %v4716 = vand.u32 %v954, 4294901760
      %4717 = vmatpush.msra.mxu0 %v4716
      %v4718 = vand.u32 %v873, 4294901760
      %v4719 = vsub.f32 %v873, %v4718
      %v4720 = vand.u32 %v4719, 4294901760
      %4721 = vmatmul.f32.gmra.mxu0 %v4720
      %v4722 = vpop.f32.mrf.mxu0
      %v4723 = vadd.f32 %v4609, %v4722
      %v4724 = vand.u32 %v874, 4294901760
      %v4725 = vsub.f32 %v874, %v4724
      %v4726 = vand.u32 %v4725, 4294901760
      %4727 = vmatmul.f32.gmra.mxu0 %v4726
      %v4728 = vpop.f32.mrf.mxu0
      %v4729 = vadd.f32 %v4614, %v4728
      %v4730 = vand.u32 %v875, 4294901760
      %v4731 = vsub.f32 %v875, %v4730
      %v4732 = vand.u32 %v4731, 4294901760
      %4733 = vmatmul.f32.gmra.mxu0 %v4732
      %v4734 = vpop.f32.mrf.mxu0
      %v4735 = vadd.f32 %v4619, %v4734
      %v4736 = vand.u32 %v876, 4294901760
      %v4737 = vsub.f32 %v876, %v4736
      %v4738 = vand.u32 %v4737, 4294901760
      %4739 = vmatmul.f32.gmra.mxu0 %v4738
      %v4740 = vpop.f32.mrf.mxu0
      %v4741 = vadd.f32 %v4624, %v4740
      %v4742 = vand.u32 %v877, 4294901760
      %v4743 = vsub.f32 %v877, %v4742
      %v4744 = vand.u32 %v4743, 4294901760
      %4745 = vmatmul.f32.gmra.mxu0 %v4744
      %v4746 = vpop.f32.mrf.mxu0
      %v4747 = vadd.f32 %v4629, %v4746
      %v4748 = vand.u32 %v878, 4294901760
      %v4749 = vsub.f32 %v878, %v4748
      %v4750 = vand.u32 %v4749, 4294901760
      %4751 = vmatmul.f32.gmra.mxu0 %v4750
      %v4752 = vpop.f32.mrf.mxu0
      %v4753 = vadd.f32 %v4634, %v4752
      %v4754 = vand.u32 %v879, 4294901760
      %v4755 = vsub.f32 %v879, %v4754
      %v4756 = vand.u32 %v4755, 4294901760
      %4757 = vmatmul.f32.gmra.mxu0 %v4756
      %v4758 = vpop.f32.mrf.mxu0
      %v4759 = vadd.f32 %v4639, %v4758
      %v4760 = vand.u32 %v880, 4294901760
      %v4761 = vsub.f32 %v880, %v4760
      %v4762 = vand.u32 %v4761, 4294901760
      %4763 = vmatmul.f32.gmra.mxu0 %v4762
      %v4764 = vpop.f32.mrf.mxu0
      %v4765 = vadd.f32 %v4644, %v4764
      %v4766 = vand.u32 %v881, 4294901760
      %v4767 = vsub.f32 %v881, %v4766
      %v4768 = vand.u32 %v4767, 4294901760
      %4769 = vmatmul.f32.gmra.mxu0 %v4768
      %v4770 = vpop.f32.mrf.mxu0
      %v4771 = vadd.f32 %v4649, %v4770
      %v4772 = vand.u32 %v882, 4294901760
      %v4773 = vsub.f32 %v882, %v4772
      %v4774 = vand.u32 %v4773, 4294901760
      %4775 = vmatmul.f32.gmra.mxu0 %v4774
      %v4776 = vpop.f32.mrf.mxu0
      %v4777 = vadd.f32 %v4654, %v4776
      %v4778 = vand.u32 %v883, 4294901760
      %v4779 = vsub.f32 %v883, %v4778
      %v4780 = vand.u32 %v4779, 4294901760
      %4781 = vmatmul.f32.gmra.mxu0 %v4780
      %v4782 = vpop.f32.mrf.mxu0
      %v4783 = vadd.f32 %v4659, %v4782
      %v4784 = vand.u32 %v884, 4294901760
      %v4785 = vsub.f32 %v884, %v4784
      %v4786 = vand.u32 %v4785, 4294901760
      %4787 = vmatmul.f32.gmra.mxu0 %v4786
      %v4788 = vpop.f32.mrf.mxu0
      %v4789 = vadd.f32 %v4664, %v4788
      %v4790 = vand.u32 %v885, 4294901760
      %v4791 = vsub.f32 %v885, %v4790
      %v4792 = vand.u32 %v4791, 4294901760
      %4793 = vmatmul.f32.gmra.mxu0 %v4792
      %v4794 = vpop.f32.mrf.mxu0
      %v4795 = vadd.f32 %v4669, %v4794
      %v4796 = vand.u32 %v886, 4294901760
      %v4797 = vsub.f32 %v886, %v4796
      %v4798 = vand.u32 %v4797, 4294901760
      %4799 = vmatmul.f32.gmra.mxu0 %v4798
      %v4800 = vpop.f32.mrf.mxu0
      %v4801 = vadd.f32 %v4674, %v4800
      %v4802 = vand.u32 %v887, 4294901760
      %v4803 = vsub.f32 %v887, %v4802
      %v4804 = vand.u32 %v4803, 4294901760
      %4805 = vmatmul.f32.gmra.mxu0 %v4804
      %v4806 = vpop.f32.mrf.mxu0
      %v4807 = vadd.f32 %v4679, %v4806
      %v4808 = vand.u32 %v888, 4294901760
      %v4809 = vsub.f32 %v888, %v4808
      %v4810 = vand.u32 %v4809, 4294901760
      %4811 = vmatmul.f32.gmra.mxu0 %v4810
      %v4812 = vpop.f32.mrf.mxu0
      %v4813 = vadd.f32 %v4684, %v4812
      %4814 = vdwg.mxu0
      %v4815 = vand.u32 %v984, 4294901760
      %v4816 = vsub.f32 %v984, %v4815
      %v4817 = vand.u32 %v4816, 4294901760
      %4818 = vmatpush.msra.mxu0 %v4817
      %v4819 = vand.u32 %v982, 4294901760
      %v4820 = vsub.f32 %v982, %v4819
      %v4821 = vand.u32 %v4820, 4294901760
      %4822 = vmatpush.msra.mxu0 %v4821
      %v4823 = vand.u32 %v980, 4294901760
      %v4824 = vsub.f32 %v980, %v4823
      %v4825 = vand.u32 %v4824, 4294901760
      %4826 = vmatpush.msra.mxu0 %v4825
      %v4827 = vand.u32 %v978, 4294901760
      %v4828 = vsub.f32 %v978, %v4827
      %v4829 = vand.u32 %v4828, 4294901760
      %4830 = vmatpush.msra.mxu0 %v4829
      %v4831 = vand.u32 %v976, 4294901760
      %v4832 = vsub.f32 %v976, %v4831
      %v4833 = vand.u32 %v4832, 4294901760
      %4834 = vmatpush.msra.mxu0 %v4833
      %v4835 = vand.u32 %v974, 4294901760
      %v4836 = vsub.f32 %v974, %v4835
      %v4837 = vand.u32 %v4836, 4294901760
      %4838 = vmatpush.msra.mxu0 %v4837
      %v4839 = vand.u32 %v972, 4294901760
      %v4840 = vsub.f32 %v972, %v4839
      %v4841 = vand.u32 %v4840, 4294901760
      %4842 = vmatpush.msra.mxu0 %v4841
      %v4843 = vand.u32 %v970, 4294901760
      %v4844 = vsub.f32 %v970, %v4843
      %v4845 = vand.u32 %v4844, 4294901760
      %4846 = vmatpush.msra.mxu0 %v4845
      %v4847 = vand.u32 %v968, 4294901760
      %v4848 = vsub.f32 %v968, %v4847
      %v4849 = vand.u32 %v4848, 4294901760
      %4850 = vmatpush.msra.mxu0 %v4849
      %v4851 = vand.u32 %v966, 4294901760
      %v4852 = vsub.f32 %v966, %v4851
      %v4853 = vand.u32 %v4852, 4294901760
      %4854 = vmatpush.msra.mxu0 %v4853
      %v4855 = vand.u32 %v964, 4294901760
      %v4856 = vsub.f32 %v964, %v4855
      %v4857 = vand.u32 %v4856, 4294901760
      %4858 = vmatpush.msra.mxu0 %v4857
      %v4859 = vand.u32 %v962, 4294901760
      %v4860 = vsub.f32 %v962, %v4859
      %v4861 = vand.u32 %v4860, 4294901760
      %4862 = vmatpush.msra.mxu0 %v4861
      %v4863 = vand.u32 %v960, 4294901760
      %v4864 = vsub.f32 %v960, %v4863
      %v4865 = vand.u32 %v4864, 4294901760
      %4866 = vmatpush.msra.mxu0 %v4865
      %v4867 = vand.u32 %v958, 4294901760
      %v4868 = vsub.f32 %v958, %v4867
      %v4869 = vand.u32 %v4868, 4294901760
      %4870 = vmatpush.msra.mxu0 %v4869
      %v4871 = vand.u32 %v956, 4294901760
      %v4872 = vsub.f32 %v956, %v4871
      %v4873 = vand.u32 %v4872, 4294901760
      %4874 = vmatpush.msra.mxu0 %v4873
      %v4875 = vand.u32 %v954, 4294901760
      %v4876 = vsub.f32 %v954, %v4875
      %v4877 = vand.u32 %v4876, 4294901760
      %4878 = vmatpush.msra.mxu0 %v4877
      %v4879 = vand.u32 %v873, 4294901760
      %4880 = vmatmul.f32.gmra.mxu0 %v4879
      %v4881 = vpop.f32.mrf.mxu0
      %v4882 = vadd.f32 %v4723, %v4881
      %v4883 = vand.u32 %v874, 4294901760
      %4884 = vmatmul.f32.gmra.mxu0 %v4883
      %v4885 = vpop.f32.mrf.mxu0
      %v4886 = vadd.f32 %v4729, %v4885
      %v4887 = vand.u32 %v875, 4294901760
      %4888 = vmatmul.f32.gmra.mxu0 %v4887
      %v4889 = vpop.f32.mrf.mxu0
      %v4890 = vadd.f32 %v4735, %v4889
      %v4891 = vand.u32 %v876, 4294901760
      %4892 = vmatmul.f32.gmra.mxu0 %v4891
      %v4893 = vpop.f32.mrf.mxu0
      %v4894 = vadd.f32 %v4741, %v4893
      %v4895 = vand.u32 %v877, 4294901760
      %4896 = vmatmul.f32.gmra.mxu0 %v4895
      %v4897 = vpop.f32.mrf.mxu0
      %v4898 = vadd.f32 %v4747, %v4897
      %v4899 = vand.u32 %v878, 4294901760
      %4900 = vmatmul.f32.gmra.mxu0 %v4899
      %v4901 = vpop.f32.mrf.mxu0
      %v4902 = vadd.f32 %v4753, %v4901
      %v4903 = vand.u32 %v879, 4294901760
      %4904 = vmatmul.f32.gmra.mxu0 %v4903
      %v4905 = vpop.f32.mrf.mxu0
      %v4906 = vadd.f32 %v4759, %v4905
      %v4907 = vand.u32 %v880, 4294901760
      %4908 = vmatmul.f32.gmra.mxu0 %v4907
      %v4909 = vpop.f32.mrf.mxu0
      %v4910 = vadd.f32 %v4765, %v4909
      %v4911 = vand.u32 %v881, 4294901760
      %4912 = vmatmul.f32.gmra.mxu0 %v4911
      %v4913 = vpop.f32.mrf.mxu0
      %v4914 = vadd.f32 %v4771, %v4913
      %v4915 = vand.u32 %v882, 4294901760
      %4916 = vmatmul.f32.gmra.mxu0 %v4915
      %v4917 = vpop.f32.mrf.mxu0
      %v4918 = vadd.f32 %v4777, %v4917
      %v4919 = vand.u32 %v883, 4294901760
      %4920 = vmatmul.f32.gmra.mxu0 %v4919
      %v4921 = vpop.f32.mrf.mxu0
      %v4922 = vadd.f32 %v4783, %v4921
      %v4923 = vand.u32 %v884, 4294901760
      %4924 = vmatmul.f32.gmra.mxu0 %v4923
      %v4925 = vpop.f32.mrf.mxu0
      %v4926 = vadd.f32 %v4789, %v4925
      %v4927 = vand.u32 %v885, 4294901760
      %4928 = vmatmul.f32.gmra.mxu0 %v4927
      %v4929 = vpop.f32.mrf.mxu0
      %v4930 = vadd.f32 %v4795, %v4929
      %v4931 = vand.u32 %v886, 4294901760
      %4932 = vmatmul.f32.gmra.mxu0 %v4931
      %v4933 = vpop.f32.mrf.mxu0
      %v4934 = vadd.f32 %v4801, %v4933
      %v4935 = vand.u32 %v887, 4294901760
      %4936 = vmatmul.f32.gmra.mxu0 %v4935
      %v4937 = vpop.f32.mrf.mxu0
      %v4938 = vadd.f32 %v4807, %v4937
      %v4939 = vand.u32 %v888, 4294901760
      %4940 = vmatmul.f32.gmra.mxu0 %v4939
      %v4941 = vpop.f32.mrf.mxu0
      %v4942 = vadd.f32 %v4813, %v4941
      %4943 = vdwg.mxu0
      %v4944 = vand.u32 %v984, 4294901760
      %4945 = vmatpush.msra.mxu0 %v4944
      %v4946 = vand.u32 %v982, 4294901760
      %4947 = vmatpush.msra.mxu0 %v4946
      %v4948 = vand.u32 %v980, 4294901760
      %4949 = vmatpush.msra.mxu0 %v4948
      %v4950 = vand.u32 %v978, 4294901760
      %4951 = vmatpush.msra.mxu0 %v4950
      %v4952 = vand.u32 %v976, 4294901760
      %4953 = vmatpush.msra.mxu0 %v4952
      %v4954 = vand.u32 %v974, 4294901760
      %4955 = vmatpush.msra.mxu0 %v4954
      %v4956 = vand.u32 %v972, 4294901760
      %4957 = vmatpush.msra.mxu0 %v4956
      %v4958 = vand.u32 %v970, 4294901760
      %4959 = vmatpush.msra.mxu0 %v4958
      %v4960 = vand.u32 %v968, 4294901760
      %4961 = vmatpush.msra.mxu0 %v4960
      %v4962 = vand.u32 %v966, 4294901760
      %4963 = vmatpush.msra.mxu0 %v4962
      %v4964 = vand.u32 %v964, 4294901760
      %4965 = vmatpush.msra.mxu0 %v4964
      %v4966 = vand.u32 %v962, 4294901760
      %4967 = vmatpush.msra.mxu0 %v4966
      %v4968 = vand.u32 %v960, 4294901760
      %4969 = vmatpush.msra.mxu0 %v4968
      %v4970 = vand.u32 %v958, 4294901760
      %4971 = vmatpush.msra.mxu0 %v4970
      %v4972 = vand.u32 %v956, 4294901760
      %4973 = vmatpush.msra.mxu0 %v4972
      %v4974 = vand.u32 %v954, 4294901760
      %4975 = vmatpush.msra.mxu0 %v4974
      %v4976 = vand.u32 %v873, 4294901760
      %4977 = vmatmul.f32.gmra.mxu0 %v4976
      %v4978 = vpop.f32.mrf.mxu0
      %v4979 = vadd.f32 %v4882, %v4978
      %v4980 = vand.u32 %v874, 4294901760
      %4981 = vmatmul.f32.gmra.mxu0 %v4980
      %v4982 = vpop.f32.mrf.mxu0
      %v4983 = vadd.f32 %v4886, %v4982
      %v4984 = vand.u32 %v875, 4294901760
      %4985 = vmatmul.f32.gmra.mxu0 %v4984
      %v4986 = vpop.f32.mrf.mxu0
      %v4987 = vadd.f32 %v4890, %v4986
      %v4988 = vand.u32 %v876, 4294901760
      %4989 = vmatmul.f32.gmra.mxu0 %v4988
      %v4990 = vpop.f32.mrf.mxu0
      %v4991 = vadd.f32 %v4894, %v4990
      %v4992 = vand.u32 %v877, 4294901760
      %4993 = vmatmul.f32.gmra.mxu0 %v4992
      %v4994 = vpop.f32.mrf.mxu0
      %v4995 = vadd.f32 %v4898, %v4994
      %v4996 = vand.u32 %v878, 4294901760
      %4997 = vmatmul.f32.gmra.mxu0 %v4996
      %v4998 = vpop.f32.mrf.mxu0
      %v4999 = vadd.f32 %v4902, %v4998
      %v5000 = vand.u32 %v879, 4294901760
      %5001 = vmatmul.f32.gmra.mxu0 %v5000
      %v5002 = vpop.f32.mrf.mxu0
      %v5003 = vadd.f32 %v4906, %v5002
      %v5004 = vand.u32 %v880, 4294901760
      %5005 = vmatmul.f32.gmra.mxu0 %v5004
      %v5006 = vpop.f32.mrf.mxu0
      %v5007 = vadd.f32 %v4910, %v5006
      %v5008 = vand.u32 %v881, 4294901760
      %5009 = vmatmul.f32.gmra.mxu0 %v5008
      %v5010 = vpop.f32.mrf.mxu0
      %v5011 = vadd.f32 %v4914, %v5010
      %v5012 = vand.u32 %v882, 4294901760
      %5013 = vmatmul.f32.gmra.mxu0 %v5012
      %v5014 = vpop.f32.mrf.mxu0
      %v5015 = vadd.f32 %v4918, %v5014
      %v5016 = vand.u32 %v883, 4294901760
      %5017 = vmatmul.f32.gmra.mxu0 %v5016
      %v5018 = vpop.f32.mrf.mxu0
      %v5019 = vadd.f32 %v4922, %v5018
      %v5020 = vand.u32 %v884, 4294901760
      %5021 = vmatmul.f32.gmra.mxu0 %v5020
      %v5022 = vpop.f32.mrf.mxu0
      %v5023 = vadd.f32 %v4926, %v5022
      %v5024 = vand.u32 %v885, 4294901760
      %5025 = vmatmul.f32.gmra.mxu0 %v5024
      %v5026 = vpop.f32.mrf.mxu0
      %v5027 = vadd.f32 %v4930, %v5026
      %v5028 = vand.u32 %v886, 4294901760
      %5029 = vmatmul.f32.gmra.mxu0 %v5028
      %v5030 = vpop.f32.mrf.mxu0
      %v5031 = vadd.f32 %v4934, %v5030
      %v5032 = vand.u32 %v887, 4294901760
      %5033 = vmatmul.f32.gmra.mxu0 %v5032
      %v5034 = vpop.f32.mrf.mxu0
      %v5035 = vadd.f32 %v4938, %v5034
      %v5036 = vand.u32 %v888, 4294901760
      %5037 = vmatmul.f32.gmra.mxu0 %v5036
      %v5038 = vpop.f32.mrf.mxu0
      %v5039 = vadd.f32 %v4942, %v5038
      %5040 = vdwg.mxu0
      %5041 = vmatpush.msra.mxu0 0.0
      %5042 = vmatpush.msra.mxu0 0.0
      %5043 = vmatpush.msra.mxu0 0.0
      %5044 = vmatpush.msra.mxu0 0.0
      %v5045 = vand.u32 %v1008, 4294901760
      %5046 = vmatpush.msra.mxu0 %v5045
      %v5047 = vand.u32 %v1006, 4294901760
      %5048 = vmatpush.msra.mxu0 %v5047
      %v5049 = vand.u32 %v1004, 4294901760
      %5050 = vmatpush.msra.mxu0 %v5049
      %v5051 = vand.u32 %v1002, 4294901760
      %5052 = vmatpush.msra.mxu0 %v5051
      %v5053 = vand.u32 %v1000, 4294901760
      %5054 = vmatpush.msra.mxu0 %v5053
      %v5055 = vand.u32 %v998, 4294901760
      %5056 = vmatpush.msra.mxu0 %v5055
      %v5057 = vand.u32 %v996, 4294901760
      %5058 = vmatpush.msra.mxu0 %v5057
      %v5059 = vand.u32 %v994, 4294901760
      %5060 = vmatpush.msra.mxu0 %v5059
      %v5061 = vand.u32 %v992, 4294901760
      %5062 = vmatpush.msra.mxu0 %v5061
      %v5063 = vand.u32 %v990, 4294901760
      %5064 = vmatpush.msra.mxu0 %v5063
      %v5065 = vand.u32 %v988, 4294901760
      %5066 = vmatpush.msra.mxu0 %v5065
      %v5067 = vand.u32 %v986, 4294901760
      %5068 = vmatpush.msra.mxu0 %v5067
      %v5069 = vand.u32 %v1016, 4294901760
      %v5070 = vsub.f32 %v1016, %v5069
      %v5071 = vand.u32 %v5070, 4294901760
      %v5072 = vsub.f32 %v5070, %v5071
      %v5073 = vand.u32 %v5072, 4294901760
      %5074 = vmatmul.f32.gmra.mxu0 %v5073
      %v5075 = vpop.f32.mrf.mxu0
      %v5076 = vadd.f32 %v4979, %v5075
      %v5077 = vand.u32 %v1019, 4294901760
      %v5078 = vsub.f32 %v1019, %v5077
      %v5079 = vand.u32 %v5078, 4294901760
      %v5080 = vsub.f32 %v5078, %v5079
      %v5081 = vand.u32 %v5080, 4294901760
      %5082 = vmatmul.f32.gmra.mxu0 %v5081
      %v5083 = vpop.f32.mrf.mxu0
      %v5084 = vadd.f32 %v4983, %v5083
      %v5085 = vand.u32 %v1022, 4294901760
      %v5086 = vsub.f32 %v1022, %v5085
      %v5087 = vand.u32 %v5086, 4294901760
      %v5088 = vsub.f32 %v5086, %v5087
      %v5089 = vand.u32 %v5088, 4294901760
      %5090 = vmatmul.f32.gmra.mxu0 %v5089
      %v5091 = vpop.f32.mrf.mxu0
      %v5092 = vadd.f32 %v4987, %v5091
      %v5093 = vand.u32 %v1025, 4294901760
      %v5094 = vsub.f32 %v1025, %v5093
      %v5095 = vand.u32 %v5094, 4294901760
      %v5096 = vsub.f32 %v5094, %v5095
      %v5097 = vand.u32 %v5096, 4294901760
      %5098 = vmatmul.f32.gmra.mxu0 %v5097
      %v5099 = vpop.f32.mrf.mxu0
      %v5100 = vadd.f32 %v4991, %v5099
      %v5101 = vand.u32 %v1028, 4294901760
      %v5102 = vsub.f32 %v1028, %v5101
      %v5103 = vand.u32 %v5102, 4294901760
      %v5104 = vsub.f32 %v5102, %v5103
      %v5105 = vand.u32 %v5104, 4294901760
      %5106 = vmatmul.f32.gmra.mxu0 %v5105
      %v5107 = vpop.f32.mrf.mxu0
      %v5108 = vadd.f32 %v4995, %v5107
      %v5109 = vand.u32 %v1031, 4294901760
      %v5110 = vsub.f32 %v1031, %v5109
      %v5111 = vand.u32 %v5110, 4294901760
      %v5112 = vsub.f32 %v5110, %v5111
      %v5113 = vand.u32 %v5112, 4294901760
      %5114 = vmatmul.f32.gmra.mxu0 %v5113
      %v5115 = vpop.f32.mrf.mxu0
      %v5116 = vadd.f32 %v4999, %v5115
      %v5117 = vand.u32 %v1034, 4294901760
      %v5118 = vsub.f32 %v1034, %v5117
      %v5119 = vand.u32 %v5118, 4294901760
      %v5120 = vsub.f32 %v5118, %v5119
      %v5121 = vand.u32 %v5120, 4294901760
      %5122 = vmatmul.f32.gmra.mxu0 %v5121
      %v5123 = vpop.f32.mrf.mxu0
      %v5124 = vadd.f32 %v5003, %v5123
      %v5125 = vand.u32 %v1037, 4294901760
      %v5126 = vsub.f32 %v1037, %v5125
      %v5127 = vand.u32 %v5126, 4294901760
      %v5128 = vsub.f32 %v5126, %v5127
      %v5129 = vand.u32 %v5128, 4294901760
      %5130 = vmatmul.f32.gmra.mxu0 %v5129
      %v5131 = vpop.f32.mrf.mxu0
      %v5132 = vadd.f32 %v5007, %v5131
      %v5133 = vand.u32 %v1040, 4294901760
      %v5134 = vsub.f32 %v1040, %v5133
      %v5135 = vand.u32 %v5134, 4294901760
      %v5136 = vsub.f32 %v5134, %v5135
      %v5137 = vand.u32 %v5136, 4294901760
      %5138 = vmatmul.f32.gmra.mxu0 %v5137
      %v5139 = vpop.f32.mrf.mxu0
      %v5140 = vadd.f32 %v5011, %v5139
      %v5141 = vand.u32 %v1043, 4294901760
      %v5142 = vsub.f32 %v1043, %v5141
      %v5143 = vand.u32 %v5142, 4294901760
      %v5144 = vsub.f32 %v5142, %v5143
      %v5145 = vand.u32 %v5144, 4294901760
      %5146 = vmatmul.f32.gmra.mxu0 %v5145
      %v5147 = vpop.f32.mrf.mxu0
      %v5148 = vadd.f32 %v5015, %v5147
      %v5149 = vand.u32 %v1046, 4294901760
      %v5150 = vsub.f32 %v1046, %v5149
      %v5151 = vand.u32 %v5150, 4294901760
      %v5152 = vsub.f32 %v5150, %v5151
      %v5153 = vand.u32 %v5152, 4294901760
      %5154 = vmatmul.f32.gmra.mxu0 %v5153
      %v5155 = vpop.f32.mrf.mxu0
      %v5156 = vadd.f32 %v5019, %v5155
      %v5157 = vand.u32 %v1049, 4294901760
      %v5158 = vsub.f32 %v1049, %v5157
      %v5159 = vand.u32 %v5158, 4294901760
      %v5160 = vsub.f32 %v5158, %v5159
      %v5161 = vand.u32 %v5160, 4294901760
      %5162 = vmatmul.f32.gmra.mxu0 %v5161
      %v5163 = vpop.f32.mrf.mxu0
      %v5164 = vadd.f32 %v5023, %v5163
      %v5165 = vand.u32 %v1052, 4294901760
      %v5166 = vsub.f32 %v1052, %v5165
      %v5167 = vand.u32 %v5166, 4294901760
      %v5168 = vsub.f32 %v5166, %v5167
      %v5169 = vand.u32 %v5168, 4294901760
      %5170 = vmatmul.f32.gmra.mxu0 %v5169
      %v5171 = vpop.f32.mrf.mxu0
      %v5172 = vadd.f32 %v5027, %v5171
      %v5173 = vand.u32 %v1055, 4294901760
      %v5174 = vsub.f32 %v1055, %v5173
      %v5175 = vand.u32 %v5174, 4294901760
      %v5176 = vsub.f32 %v5174, %v5175
      %v5177 = vand.u32 %v5176, 4294901760
      %5178 = vmatmul.f32.gmra.mxu0 %v5177
      %v5179 = vpop.f32.mrf.mxu0
      %v5180 = vadd.f32 %v5031, %v5179
      %v5181 = vand.u32 %v1058, 4294901760
      %v5182 = vsub.f32 %v1058, %v5181
      %v5183 = vand.u32 %v5182, 4294901760
      %v5184 = vsub.f32 %v5182, %v5183
      %v5185 = vand.u32 %v5184, 4294901760
      %5186 = vmatmul.f32.gmra.mxu0 %v5185
      %v5187 = vpop.f32.mrf.mxu0
      %v5188 = vadd.f32 %v5035, %v5187
      %v5189 = vand.u32 %v1061, 4294901760
      %v5190 = vsub.f32 %v1061, %v5189
      %v5191 = vand.u32 %v5190, 4294901760
      %v5192 = vsub.f32 %v5190, %v5191
      %v5193 = vand.u32 %v5192, 4294901760
      %5194 = vmatmul.f32.gmra.mxu0 %v5193
      %v5195 = vpop.f32.mrf.mxu0
      %v5196 = vadd.f32 %v5039, %v5195
      %5197 = vdwg.mxu0
      %5198 = vmatpush.msra.mxu0 0.0
      %5199 = vmatpush.msra.mxu0 0.0
      %5200 = vmatpush.msra.mxu0 0.0
      %5201 = vmatpush.msra.mxu0 0.0
      %v5202 = vand.u32 %v1008, 4294901760
      %v5203 = vsub.f32 %v1008, %v5202
      %v5204 = vand.u32 %v5203, 4294901760
      %v5205 = vsub.f32 %v5203, %v5204
      %v5206 = vand.u32 %v5205, 4294901760
      %5207 = vmatpush.msra.mxu0 %v5206
      %v5208 = vand.u32 %v1006, 4294901760
      %v5209 = vsub.f32 %v1006, %v5208
      %v5210 = vand.u32 %v5209, 4294901760
      %v5211 = vsub.f32 %v5209, %v5210
      %v5212 = vand.u32 %v5211, 4294901760
      %5213 = vmatpush.msra.mxu0 %v5212
      %v5214 = vand.u32 %v1004, 4294901760
      %v5215 = vsub.f32 %v1004, %v5214
      %v5216 = vand.u32 %v5215, 4294901760
      %v5217 = vsub.f32 %v5215, %v5216
      %v5218 = vand.u32 %v5217, 4294901760
      %5219 = vmatpush.msra.mxu0 %v5218
      %v5220 = vand.u32 %v1002, 4294901760
      %v5221 = vsub.f32 %v1002, %v5220
      %v5222 = vand.u32 %v5221, 4294901760
      %v5223 = vsub.f32 %v5221, %v5222
      %v5224 = vand.u32 %v5223, 4294901760
      %5225 = vmatpush.msra.mxu0 %v5224
      %v5226 = vand.u32 %v1000, 4294901760
      %v5227 = vsub.f32 %v1000, %v5226
      %v5228 = vand.u32 %v5227, 4294901760
      %v5229 = vsub.f32 %v5227, %v5228
      %v5230 = vand.u32 %v5229, 4294901760
      %5231 = vmatpush.msra.mxu0 %v5230
      %v5232 = vand.u32 %v998, 4294901760
      %v5233 = vsub.f32 %v998, %v5232
      %v5234 = vand.u32 %v5233, 4294901760
      %v5235 = vsub.f32 %v5233, %v5234
      %v5236 = vand.u32 %v5235, 4294901760
      %5237 = vmatpush.msra.mxu0 %v5236
      %v5238 = vand.u32 %v996, 4294901760
      %v5239 = vsub.f32 %v996, %v5238
      %v5240 = vand.u32 %v5239, 4294901760
      %v5241 = vsub.f32 %v5239, %v5240
      %v5242 = vand.u32 %v5241, 4294901760
      %5243 = vmatpush.msra.mxu0 %v5242
      %v5244 = vand.u32 %v994, 4294901760
      %v5245 = vsub.f32 %v994, %v5244
      %v5246 = vand.u32 %v5245, 4294901760
      %v5247 = vsub.f32 %v5245, %v5246
      %v5248 = vand.u32 %v5247, 4294901760
      %5249 = vmatpush.msra.mxu0 %v5248
      %v5250 = vand.u32 %v992, 4294901760
      %v5251 = vsub.f32 %v992, %v5250
      %v5252 = vand.u32 %v5251, 4294901760
      %v5253 = vsub.f32 %v5251, %v5252
      %v5254 = vand.u32 %v5253, 4294901760
      %5255 = vmatpush.msra.mxu0 %v5254
      %v5256 = vand.u32 %v990, 4294901760
      %v5257 = vsub.f32 %v990, %v5256
      %v5258 = vand.u32 %v5257, 4294901760
      %v5259 = vsub.f32 %v5257, %v5258
      %v5260 = vand.u32 %v5259, 4294901760
      %5261 = vmatpush.msra.mxu0 %v5260
      %v5262 = vand.u32 %v988, 4294901760
      %v5263 = vsub.f32 %v988, %v5262
      %v5264 = vand.u32 %v5263, 4294901760
      %v5265 = vsub.f32 %v5263, %v5264
      %v5266 = vand.u32 %v5265, 4294901760
      %5267 = vmatpush.msra.mxu0 %v5266
      %v5268 = vand.u32 %v986, 4294901760
      %v5269 = vsub.f32 %v986, %v5268
      %v5270 = vand.u32 %v5269, 4294901760
      %v5271 = vsub.f32 %v5269, %v5270
      %v5272 = vand.u32 %v5271, 4294901760
      %5273 = vmatpush.msra.mxu0 %v5272
      %v5274 = vand.u32 %v1016, 4294901760
      %5275 = vmatmul.f32.gmra.mxu0 %v5274
      %v5276 = vpop.f32.mrf.mxu0
      %v5277 = vadd.f32 %v5076, %v5276
      %v5278 = vand.u32 %v1019, 4294901760
      %5279 = vmatmul.f32.gmra.mxu0 %v5278
      %v5280 = vpop.f32.mrf.mxu0
      %v5281 = vadd.f32 %v5084, %v5280
      %v5282 = vand.u32 %v1022, 4294901760
      %5283 = vmatmul.f32.gmra.mxu0 %v5282
      %v5284 = vpop.f32.mrf.mxu0
      %v5285 = vadd.f32 %v5092, %v5284
      %v5286 = vand.u32 %v1025, 4294901760
      %5287 = vmatmul.f32.gmra.mxu0 %v5286
      %v5288 = vpop.f32.mrf.mxu0
      %v5289 = vadd.f32 %v5100, %v5288
      %v5290 = vand.u32 %v1028, 4294901760
      %5291 = vmatmul.f32.gmra.mxu0 %v5290
      %v5292 = vpop.f32.mrf.mxu0
      %v5293 = vadd.f32 %v5108, %v5292
      %v5294 = vand.u32 %v1031, 4294901760
      %5295 = vmatmul.f32.gmra.mxu0 %v5294
      %v5296 = vpop.f32.mrf.mxu0
      %v5297 = vadd.f32 %v5116, %v5296
      %v5298 = vand.u32 %v1034, 4294901760
      %5299 = vmatmul.f32.gmra.mxu0 %v5298
      %v5300 = vpop.f32.mrf.mxu0
      %v5301 = vadd.f32 %v5124, %v5300
      %v5302 = vand.u32 %v1037, 4294901760
      %5303 = vmatmul.f32.gmra.mxu0 %v5302
      %v5304 = vpop.f32.mrf.mxu0
      %v5305 = vadd.f32 %v5132, %v5304
      %v5306 = vand.u32 %v1040, 4294901760
      %5307 = vmatmul.f32.gmra.mxu0 %v5306
      %v5308 = vpop.f32.mrf.mxu0
      %v5309 = vadd.f32 %v5140, %v5308
      %v5310 = vand.u32 %v1043, 4294901760
      %5311 = vmatmul.f32.gmra.mxu0 %v5310
      %v5312 = vpop.f32.mrf.mxu0
      %v5313 = vadd.f32 %v5148, %v5312
      %v5314 = vand.u32 %v1046, 4294901760
      %5315 = vmatmul.f32.gmra.mxu0 %v5314
      %v5316 = vpop.f32.mrf.mxu0
      %v5317 = vadd.f32 %v5156, %v5316
      %v5318 = vand.u32 %v1049, 4294901760
      %5319 = vmatmul.f32.gmra.mxu0 %v5318
      %v5320 = vpop.f32.mrf.mxu0
      %v5321 = vadd.f32 %v5164, %v5320
      %v5322 = vand.u32 %v1052, 4294901760
      %5323 = vmatmul.f32.gmra.mxu0 %v5322
      %v5324 = vpop.f32.mrf.mxu0
      %v5325 = vadd.f32 %v5172, %v5324
      %v5326 = vand.u32 %v1055, 4294901760
      %5327 = vmatmul.f32.gmra.mxu0 %v5326
      %v5328 = vpop.f32.mrf.mxu0
      %v5329 = vadd.f32 %v5180, %v5328
      %v5330 = vand.u32 %v1058, 4294901760
      %5331 = vmatmul.f32.gmra.mxu0 %v5330
      %v5332 = vpop.f32.mrf.mxu0
      %v5333 = vadd.f32 %v5188, %v5332
      %v5334 = vand.u32 %v1061, 4294901760
      %5335 = vmatmul.f32.gmra.mxu0 %v5334
      %v5336 = vpop.f32.mrf.mxu0
      %v5337 = vadd.f32 %v5196, %v5336
      %5338 = vdwg.mxu0
      %5339 = vmatpush.msra.mxu0 0.0
      %5340 = vmatpush.msra.mxu0 0.0
      %5341 = vmatpush.msra.mxu0 0.0
      %5342 = vmatpush.msra.mxu0 0.0
      %v5343 = vand.u32 %v1008, 4294901760
      %v5344 = vsub.f32 %v1008, %v5343
      %5345 = vmatpush.msra.mxu0 %v5344
      %v5346 = vand.u32 %v1006, 4294901760
      %v5347 = vsub.f32 %v1006, %v5346
      %5348 = vmatpush.msra.mxu0 %v5347
      %v5349 = vand.u32 %v1004, 4294901760
      %v5350 = vsub.f32 %v1004, %v5349
      %5351 = vmatpush.msra.mxu0 %v5350
      %v5352 = vand.u32 %v1002, 4294901760
      %v5353 = vsub.f32 %v1002, %v5352
      %5354 = vmatpush.msra.mxu0 %v5353
      %v5355 = vand.u32 %v1000, 4294901760
      %v5356 = vsub.f32 %v1000, %v5355
      %5357 = vmatpush.msra.mxu0 %v5356
      %v5358 = vand.u32 %v998, 4294901760
      %v5359 = vsub.f32 %v998, %v5358
      %5360 = vmatpush.msra.mxu0 %v5359
      %v5361 = vand.u32 %v996, 4294901760
      %v5362 = vsub.f32 %v996, %v5361
      %5363 = vmatpush.msra.mxu0 %v5362
      %v5364 = vand.u32 %v994, 4294901760
      %v5365 = vsub.f32 %v994, %v5364
      %5366 = vmatpush.msra.mxu0 %v5365
      %v5367 = vand.u32 %v992, 4294901760
      %v5368 = vsub.f32 %v992, %v5367
      %5369 = vmatpush.msra.mxu0 %v5368
      %v5370 = vand.u32 %v990, 4294901760
      %v5371 = vsub.f32 %v990, %v5370
      %5372 = vmatpush.msra.mxu0 %v5371
      %v5373 = vand.u32 %v988, 4294901760
      %v5374 = vsub.f32 %v988, %v5373
      %5375 = vmatpush.msra.mxu0 %v5374
      %v5376 = vand.u32 %v986, 4294901760
      %v5377 = vsub.f32 %v986, %v5376
      %5378 = vmatpush.msra.mxu0 %v5377
      %v5379 = vand.u32 %v1016, 4294901760
      %v5380 = vsub.f32 %v1016, %v5379
      %5381 = vmatmul.f32.gmra.mxu0 %v5380
      %v5382 = vpop.f32.mrf.mxu0
      %v5383 = vadd.f32 %v5277, %v5382
      %v5384 = vand.u32 %v1019, 4294901760
      %v5385 = vsub.f32 %v1019, %v5384
      %5386 = vmatmul.f32.gmra.mxu0 %v5385
      %v5387 = vpop.f32.mrf.mxu0
      %v5388 = vadd.f32 %v5281, %v5387
      %v5389 = vand.u32 %v1022, 4294901760
      %v5390 = vsub.f32 %v1022, %v5389
      %5391 = vmatmul.f32.gmra.mxu0 %v5390
      %v5392 = vpop.f32.mrf.mxu0
      %v5393 = vadd.f32 %v5285, %v5392
      %v5394 = vand.u32 %v1025, 4294901760
      %v5395 = vsub.f32 %v1025, %v5394
      %5396 = vmatmul.f32.gmra.mxu0 %v5395
      %v5397 = vpop.f32.mrf.mxu0
      %v5398 = vadd.f32 %v5289, %v5397
      %v5399 = vand.u32 %v1028, 4294901760
      %v5400 = vsub.f32 %v1028, %v5399
      %5401 = vmatmul.f32.gmra.mxu0 %v5400
      %v5402 = vpop.f32.mrf.mxu0
      %v5403 = vadd.f32 %v5293, %v5402
      %v5404 = vand.u32 %v1031, 4294901760
      %v5405 = vsub.f32 %v1031, %v5404
      %5406 = vmatmul.f32.gmra.mxu0 %v5405
      %v5407 = vpop.f32.mrf.mxu0
      %v5408 = vadd.f32 %v5297, %v5407
      %v5409 = vand.u32 %v1034, 4294901760
      %v5410 = vsub.f32 %v1034, %v5409
      %5411 = vmatmul.f32.gmra.mxu0 %v5410
      %v5412 = vpop.f32.mrf.mxu0
      %v5413 = vadd.f32 %v5301, %v5412
      %v5414 = vand.u32 %v1037, 4294901760
      %v5415 = vsub.f32 %v1037, %v5414
      %5416 = vmatmul.f32.gmra.mxu0 %v5415
      %v5417 = vpop.f32.mrf.mxu0
      %v5418 = vadd.f32 %v5305, %v5417
      %v5419 = vand.u32 %v1040, 4294901760
      %v5420 = vsub.f32 %v1040, %v5419
      %5421 = vmatmul.f32.gmra.mxu0 %v5420
      %v5422 = vpop.f32.mrf.mxu0
      %v5423 = vadd.f32 %v5309, %v5422
      %v5424 = vand.u32 %v1043, 4294901760
      %v5425 = vsub.f32 %v1043, %v5424
      %5426 = vmatmul.f32.gmra.mxu0 %v5425
      %v5427 = vpop.f32.mrf.mxu0
      %v5428 = vadd.f32 %v5313, %v5427
      %v5429 = vand.u32 %v1046, 4294901760
      %v5430 = vsub.f32 %v1046, %v5429
      %5431 = vmatmul.f32.gmra.mxu0 %v5430
      %v5432 = vpop.f32.mrf.mxu0
      %v5433 = vadd.f32 %v5317, %v5432
      %v5434 = vand.u32 %v1049, 4294901760
      %v5435 = vsub.f32 %v1049, %v5434
      %5436 = vmatmul.f32.gmra.mxu0 %v5435
      %v5437 = vpop.f32.mrf.mxu0
      %v5438 = vadd.f32 %v5321, %v5437
      %v5439 = vand.u32 %v1052, 4294901760
      %v5440 = vsub.f32 %v1052, %v5439
      %5441 = vmatmul.f32.gmra.mxu0 %v5440
      %v5442 = vpop.f32.mrf.mxu0
      %v5443 = vadd.f32 %v5325, %v5442
      %v5444 = vand.u32 %v1055, 4294901760
      %v5445 = vsub.f32 %v1055, %v5444
      %5446 = vmatmul.f32.gmra.mxu0 %v5445
      %v5447 = vpop.f32.mrf.mxu0
      %v5448 = vadd.f32 %v5329, %v5447
      %v5449 = vand.u32 %v1058, 4294901760
      %v5450 = vsub.f32 %v1058, %v5449
      %5451 = vmatmul.f32.gmra.mxu0 %v5450
      %v5452 = vpop.f32.mrf.mxu0
      %v5453 = vadd.f32 %v5333, %v5452
      %v5454 = vand.u32 %v1061, 4294901760
      %v5455 = vsub.f32 %v1061, %v5454
      %5456 = vmatmul.f32.gmra.mxu0 %v5455
      %v5457 = vpop.f32.mrf.mxu0
      %v5458 = vadd.f32 %v5337, %v5457
      %5459 = vdwg.mxu0
      %5460 = vmatpush.msra.mxu0 0.0
      %5461 = vmatpush.msra.mxu0 0.0
      %5462 = vmatpush.msra.mxu0 0.0
      %5463 = vmatpush.msra.mxu0 0.0
      %v5464 = vand.u32 %v1008, 4294901760
      %5465 = vmatpush.msra.mxu0 %v5464
      %v5466 = vand.u32 %v1006, 4294901760
      %5467 = vmatpush.msra.mxu0 %v5466
      %v5468 = vand.u32 %v1004, 4294901760
      %5469 = vmatpush.msra.mxu0 %v5468
      %v5470 = vand.u32 %v1002, 4294901760
      %5471 = vmatpush.msra.mxu0 %v5470
      %v5472 = vand.u32 %v1000, 4294901760
      %5473 = vmatpush.msra.mxu0 %v5472
      %v5474 = vand.u32 %v998, 4294901760
      %5475 = vmatpush.msra.mxu0 %v5474
      %v5476 = vand.u32 %v996, 4294901760
      %5477 = vmatpush.msra.mxu0 %v5476
      %v5478 = vand.u32 %v994, 4294901760
      %5479 = vmatpush.msra.mxu0 %v5478
      %v5480 = vand.u32 %v992, 4294901760
      %5481 = vmatpush.msra.mxu0 %v5480
      %v5482 = vand.u32 %v990, 4294901760
      %5483 = vmatpush.msra.mxu0 %v5482
      %v5484 = vand.u32 %v988, 4294901760
      %5485 = vmatpush.msra.mxu0 %v5484
      %v5486 = vand.u32 %v986, 4294901760
      %5487 = vmatpush.msra.mxu0 %v5486
      %v5488 = vand.u32 %v1016, 4294901760
      %v5489 = vsub.f32 %v1016, %v5488
      %v5490 = vand.u32 %v5489, 4294901760
      %5491 = vmatmul.f32.gmra.mxu0 %v5490
      %v5492 = vpop.f32.mrf.mxu0
      %v5493 = vadd.f32 %v5383, %v5492
      %v5494 = vand.u32 %v1019, 4294901760
      %v5495 = vsub.f32 %v1019, %v5494
      %v5496 = vand.u32 %v5495, 4294901760
      %5497 = vmatmul.f32.gmra.mxu0 %v5496
      %v5498 = vpop.f32.mrf.mxu0
      %v5499 = vadd.f32 %v5388, %v5498
      %v5500 = vand.u32 %v1022, 4294901760
      %v5501 = vsub.f32 %v1022, %v5500
      %v5502 = vand.u32 %v5501, 4294901760
      %5503 = vmatmul.f32.gmra.mxu0 %v5502
      %v5504 = vpop.f32.mrf.mxu0
      %v5505 = vadd.f32 %v5393, %v5504
      %v5506 = vand.u32 %v1025, 4294901760
      %v5507 = vsub.f32 %v1025, %v5506
      %v5508 = vand.u32 %v5507, 4294901760
      %5509 = vmatmul.f32.gmra.mxu0 %v5508
      %v5510 = vpop.f32.mrf.mxu0
      %v5511 = vadd.f32 %v5398, %v5510
      %v5512 = vand.u32 %v1028, 4294901760
      %v5513 = vsub.f32 %v1028, %v5512
      %v5514 = vand.u32 %v5513, 4294901760
      %5515 = vmatmul.f32.gmra.mxu0 %v5514
      %v5516 = vpop.f32.mrf.mxu0
      %v5517 = vadd.f32 %v5403, %v5516
      %v5518 = vand.u32 %v1031, 4294901760
      %v5519 = vsub.f32 %v1031, %v5518
      %v5520 = vand.u32 %v5519, 4294901760
      %5521 = vmatmul.f32.gmra.mxu0 %v5520
      %v5522 = vpop.f32.mrf.mxu0
      %v5523 = vadd.f32 %v5408, %v5522
      %v5524 = vand.u32 %v1034, 4294901760
      %v5525 = vsub.f32 %v1034, %v5524
      %v5526 = vand.u32 %v5525, 4294901760
      %5527 = vmatmul.f32.gmra.mxu0 %v5526
      %v5528 = vpop.f32.mrf.mxu0
      %v5529 = vadd.f32 %v5413, %v5528
      %v5530 = vand.u32 %v1037, 4294901760
      %v5531 = vsub.f32 %v1037, %v5530
      %v5532 = vand.u32 %v5531, 4294901760
      %5533 = vmatmul.f32.gmra.mxu0 %v5532
      %v5534 = vpop.f32.mrf.mxu0
      %v5535 = vadd.f32 %v5418, %v5534
      %v5536 = vand.u32 %v1040, 4294901760
      %v5537 = vsub.f32 %v1040, %v5536
      %v5538 = vand.u32 %v5537, 4294901760
      %5539 = vmatmul.f32.gmra.mxu0 %v5538
      %v5540 = vpop.f32.mrf.mxu0
      %v5541 = vadd.f32 %v5423, %v5540
      %v5542 = vand.u32 %v1043, 4294901760
      %v5543 = vsub.f32 %v1043, %v5542
      %v5544 = vand.u32 %v5543, 4294901760
      %5545 = vmatmul.f32.gmra.mxu0 %v5544
      %v5546 = vpop.f32.mrf.mxu0
      %v5547 = vadd.f32 %v5428, %v5546
      %v5548 = vand.u32 %v1046, 4294901760
      %v5549 = vsub.f32 %v1046, %v5548
      %v5550 = vand.u32 %v5549, 4294901760
      %5551 = vmatmul.f32.gmra.mxu0 %v5550
      %v5552 = vpop.f32.mrf.mxu0
      %v5553 = vadd.f32 %v5433, %v5552
      %v5554 = vand.u32 %v1049, 4294901760
      %v5555 = vsub.f32 %v1049, %v5554
      %v5556 = vand.u32 %v5555, 4294901760
      %5557 = vmatmul.f32.gmra.mxu0 %v5556
      %v5558 = vpop.f32.mrf.mxu0
      %v5559 = vadd.f32 %v5438, %v5558
      %v5560 = vand.u32 %v1052, 4294901760
      %v5561 = vsub.f32 %v1052, %v5560
      %v5562 = vand.u32 %v5561, 4294901760
      %5563 = vmatmul.f32.gmra.mxu0 %v5562
      %v5564 = vpop.f32.mrf.mxu0
      %v5565 = vadd.f32 %v5443, %v5564
      %v5566 = vand.u32 %v1055, 4294901760
      %v5567 = vsub.f32 %v1055, %v5566
      %v5568 = vand.u32 %v5567, 4294901760
      %5569 = vmatmul.f32.gmra.mxu0 %v5568
      %v5570 = vpop.f32.mrf.mxu0
      %v5571 = vadd.f32 %v5448, %v5570
      %v5572 = vand.u32 %v1058, 4294901760
      %v5573 = vsub.f32 %v1058, %v5572
      %v5574 = vand.u32 %v5573, 4294901760
      %5575 = vmatmul.f32.gmra.mxu0 %v5574
      %v5576 = vpop.f32.mrf.mxu0
      %v5577 = vadd.f32 %v5453, %v5576
      %v5578 = vand.u32 %v1061, 4294901760
      %v5579 = vsub.f32 %v1061, %v5578
      %v5580 = vand.u32 %v5579, 4294901760
      %5581 = vmatmul.f32.gmra.mxu0 %v5580
      %v5582 = vpop.f32.mrf.mxu0
      %v5583 = vadd.f32 %v5458, %v5582
      %5584 = vdwg.mxu0
      %5585 = vmatpush.msra.mxu0 0.0
      %5586 = vmatpush.msra.mxu0 0.0
      %5587 = vmatpush.msra.mxu0 0.0
      %5588 = vmatpush.msra.mxu0 0.0
      %v5589 = vand.u32 %v1008, 4294901760
      %v5590 = vsub.f32 %v1008, %v5589
      %v5591 = vand.u32 %v5590, 4294901760
      %5592 = vmatpush.msra.mxu0 %v5591
      %v5593 = vand.u32 %v1006, 4294901760
      %v5594 = vsub.f32 %v1006, %v5593
      %v5595 = vand.u32 %v5594, 4294901760
      %5596 = vmatpush.msra.mxu0 %v5595
      %v5597 = vand.u32 %v1004, 4294901760
      %v5598 = vsub.f32 %v1004, %v5597
      %v5599 = vand.u32 %v5598, 4294901760
      %5600 = vmatpush.msra.mxu0 %v5599
      %v5601 = vand.u32 %v1002, 4294901760
      %v5602 = vsub.f32 %v1002, %v5601
      %v5603 = vand.u32 %v5602, 4294901760
      %5604 = vmatpush.msra.mxu0 %v5603
      %v5605 = vand.u32 %v1000, 4294901760
      %v5606 = vsub.f32 %v1000, %v5605
      %v5607 = vand.u32 %v5606, 4294901760
      %5608 = vmatpush.msra.mxu0 %v5607
      %v5609 = vand.u32 %v998, 4294901760
      %v5610 = vsub.f32 %v998, %v5609
      %v5611 = vand.u32 %v5610, 4294901760
      %5612 = vmatpush.msra.mxu0 %v5611
      %v5613 = vand.u32 %v996, 4294901760
      %v5614 = vsub.f32 %v996, %v5613
      %v5615 = vand.u32 %v5614, 4294901760
      %5616 = vmatpush.msra.mxu0 %v5615
      %v5617 = vand.u32 %v994, 4294901760
      %v5618 = vsub.f32 %v994, %v5617
      %v5619 = vand.u32 %v5618, 4294901760
      %5620 = vmatpush.msra.mxu0 %v5619
      %v5621 = vand.u32 %v992, 4294901760
      %v5622 = vsub.f32 %v992, %v5621
      %v5623 = vand.u32 %v5622, 4294901760
      %5624 = vmatpush.msra.mxu0 %v5623
      %v5625 = vand.u32 %v990, 4294901760
      %v5626 = vsub.f32 %v990, %v5625
      %v5627 = vand.u32 %v5626, 4294901760
      %5628 = vmatpush.msra.mxu0 %v5627
      %v5629 = vand.u32 %v988, 4294901760
      %v5630 = vsub.f32 %v988, %v5629
      %v5631 = vand.u32 %v5630, 4294901760
      %5632 = vmatpush.msra.mxu0 %v5631
      %v5633 = vand.u32 %v986, 4294901760
      %v5634 = vsub.f32 %v986, %v5633
      %v5635 = vand.u32 %v5634, 4294901760
      %5636 = vmatpush.msra.mxu0 %v5635
      %v5637 = vand.u32 %v1016, 4294901760
      %5638 = vmatmul.f32.gmra.mxu0 %v5637
      %v5639 = vpop.f32.mrf.mxu0
      %v5640 = vadd.f32 %v5493, %v5639
      %v5641 = vand.u32 %v1019, 4294901760
      %5642 = vmatmul.f32.gmra.mxu0 %v5641
      %v5643 = vpop.f32.mrf.mxu0
      %v5644 = vadd.f32 %v5499, %v5643
      %v5645 = vand.u32 %v1022, 4294901760
      %5646 = vmatmul.f32.gmra.mxu0 %v5645
      %v5647 = vpop.f32.mrf.mxu0
      %v5648 = vadd.f32 %v5505, %v5647
      %v5649 = vand.u32 %v1025, 4294901760
      %5650 = vmatmul.f32.gmra.mxu0 %v5649
      %v5651 = vpop.f32.mrf.mxu0
      %v5652 = vadd.f32 %v5511, %v5651
      %v5653 = vand.u32 %v1028, 4294901760
      %5654 = vmatmul.f32.gmra.mxu0 %v5653
      %v5655 = vpop.f32.mrf.mxu0
      %v5656 = vadd.f32 %v5517, %v5655
      %v5657 = vand.u32 %v1031, 4294901760
      %5658 = vmatmul.f32.gmra.mxu0 %v5657
      %v5659 = vpop.f32.mrf.mxu0
      %v5660 = vadd.f32 %v5523, %v5659
      %v5661 = vand.u32 %v1034, 4294901760
      %5662 = vmatmul.f32.gmra.mxu0 %v5661
      %v5663 = vpop.f32.mrf.mxu0
      %v5664 = vadd.f32 %v5529, %v5663
      %v5665 = vand.u32 %v1037, 4294901760
      %5666 = vmatmul.f32.gmra.mxu0 %v5665
      %v5667 = vpop.f32.mrf.mxu0
      %v5668 = vadd.f32 %v5535, %v5667
      %v5669 = vand.u32 %v1040, 4294901760
      %5670 = vmatmul.f32.gmra.mxu0 %v5669
      %v5671 = vpop.f32.mrf.mxu0
      %v5672 = vadd.f32 %v5541, %v5671
      %v5673 = vand.u32 %v1043, 4294901760
      %5674 = vmatmul.f32.gmra.mxu0 %v5673
      %v5675 = vpop.f32.mrf.mxu0
      %v5676 = vadd.f32 %v5547, %v5675
      %v5677 = vand.u32 %v1046, 4294901760
      %5678 = vmatmul.f32.gmra.mxu0 %v5677
      %v5679 = vpop.f32.mrf.mxu0
      %v5680 = vadd.f32 %v5553, %v5679
      %v5681 = vand.u32 %v1049, 4294901760
      %5682 = vmatmul.f32.gmra.mxu0 %v5681
      %v5683 = vpop.f32.mrf.mxu0
      %v5684 = vadd.f32 %v5559, %v5683
      %v5685 = vand.u32 %v1052, 4294901760
      %5686 = vmatmul.f32.gmra.mxu0 %v5685
      %v5687 = vpop.f32.mrf.mxu0
      %v5688 = vadd.f32 %v5565, %v5687
      %v5689 = vand.u32 %v1055, 4294901760
      %5690 = vmatmul.f32.gmra.mxu0 %v5689
      %v5691 = vpop.f32.mrf.mxu0
      %v5692 = vadd.f32 %v5571, %v5691
      %v5693 = vand.u32 %v1058, 4294901760
      %5694 = vmatmul.f32.gmra.mxu0 %v5693
      %v5695 = vpop.f32.mrf.mxu0
      %v5696 = vadd.f32 %v5577, %v5695
      %v5697 = vand.u32 %v1061, 4294901760
      %5698 = vmatmul.f32.gmra.mxu0 %v5697
      %v5699 = vpop.f32.mrf.mxu0
      %v5700 = vadd.f32 %v5583, %v5699
      %5701 = vdwg.mxu0
      %5702 = vmatpush.msra.mxu0 0.0
      %5703 = vmatpush.msra.mxu0 0.0
      %5704 = vmatpush.msra.mxu0 0.0
      %5705 = vmatpush.msra.mxu0 0.0
      %v5706 = vand.u32 %v1008, 4294901760
      %5707 = vmatpush.msra.mxu0 %v5706
      %v5708 = vand.u32 %v1006, 4294901760
      %5709 = vmatpush.msra.mxu0 %v5708
      %v5710 = vand.u32 %v1004, 4294901760
      %5711 = vmatpush.msra.mxu0 %v5710
      %v5712 = vand.u32 %v1002, 4294901760
      %5713 = vmatpush.msra.mxu0 %v5712
      %v5714 = vand.u32 %v1000, 4294901760
      %5715 = vmatpush.msra.mxu0 %v5714
      %v5716 = vand.u32 %v998, 4294901760
      %5717 = vmatpush.msra.mxu0 %v5716
      %v5718 = vand.u32 %v996, 4294901760
      %5719 = vmatpush.msra.mxu0 %v5718
      %v5720 = vand.u32 %v994, 4294901760
      %5721 = vmatpush.msra.mxu0 %v5720
      %v5722 = vand.u32 %v992, 4294901760
      %5723 = vmatpush.msra.mxu0 %v5722
      %v5724 = vand.u32 %v990, 4294901760
      %5725 = vmatpush.msra.mxu0 %v5724
      %v5726 = vand.u32 %v988, 4294901760
      %5727 = vmatpush.msra.mxu0 %v5726
      %v5728 = vand.u32 %v986, 4294901760
      %5729 = vmatpush.msra.mxu0 %v5728
      %v5730 = vand.u32 %v1016, 4294901760
      %5731 = vmatmul.f32.gmra.mxu0 %v5730
      %v5732 = vpop.f32.mrf.mxu0
      %v5733 = vadd.f32 %v5640, %v5732
      %v5734 = vand.u32 %v1019, 4294901760
      %5735 = vmatmul.f32.gmra.mxu0 %v5734
      %v5736 = vpop.f32.mrf.mxu0
      %v5737 = vadd.f32 %v5644, %v5736
      %v5738 = vand.u32 %v1022, 4294901760
      %5739 = vmatmul.f32.gmra.mxu0 %v5738
      %v5740 = vpop.f32.mrf.mxu0
      %v5741 = vadd.f32 %v5648, %v5740
      %v5742 = vand.u32 %v1025, 4294901760
      %5743 = vmatmul.f32.gmra.mxu0 %v5742
      %v5744 = vpop.f32.mrf.mxu0
      %v5745 = vadd.f32 %v5652, %v5744
      %v5746 = vand.u32 %v1028, 4294901760
      %5747 = vmatmul.f32.gmra.mxu0 %v5746
      %v5748 = vpop.f32.mrf.mxu0
      %v5749 = vadd.f32 %v5656, %v5748
      %v5750 = vand.u32 %v1031, 4294901760
      %5751 = vmatmul.f32.gmra.mxu0 %v5750
      %v5752 = vpop.f32.mrf.mxu0
      %v5753 = vadd.f32 %v5660, %v5752
      %v5754 = vand.u32 %v1034, 4294901760
      %5755 = vmatmul.f32.gmra.mxu0 %v5754
      %v5756 = vpop.f32.mrf.mxu0
      %v5757 = vadd.f32 %v5664, %v5756
      %v5758 = vand.u32 %v1037, 4294901760
      %5759 = vmatmul.f32.gmra.mxu0 %v5758
      %v5760 = vpop.f32.mrf.mxu0
      %v5761 = vadd.f32 %v5668, %v5760
      %v5762 = vand.u32 %v1040, 4294901760
      %5763 = vmatmul.f32.gmra.mxu0 %v5762
      %v5764 = vpop.f32.mrf.mxu0
      %v5765 = vadd.f32 %v5672, %v5764
      %v5766 = vand.u32 %v1043, 4294901760
      %5767 = vmatmul.f32.gmra.mxu0 %v5766
      %v5768 = vpop.f32.mrf.mxu0
      %v5769 = vadd.f32 %v5676, %v5768
      %v5770 = vand.u32 %v1046, 4294901760
      %5771 = vmatmul.f32.gmra.mxu0 %v5770
      %v5772 = vpop.f32.mrf.mxu0
      %v5773 = vadd.f32 %v5680, %v5772
      %v5774 = vand.u32 %v1049, 4294901760
      %5775 = vmatmul.f32.gmra.mxu0 %v5774
      %v5776 = vpop.f32.mrf.mxu0
      %v5777 = vadd.f32 %v5684, %v5776
      %v5778 = vand.u32 %v1052, 4294901760
      %5779 = vmatmul.f32.gmra.mxu0 %v5778
      %v5780 = vpop.f32.mrf.mxu0
      %v5781 = vadd.f32 %v5688, %v5780
      %v5782 = vand.u32 %v1055, 4294901760
      %5783 = vmatmul.f32.gmra.mxu0 %v5782
      %v5784 = vpop.f32.mrf.mxu0
      %v5785 = vadd.f32 %v5692, %v5784
      %v5786 = vand.u32 %v1058, 4294901760
      %5787 = vmatmul.f32.gmra.mxu0 %v5786
      %v5788 = vpop.f32.mrf.mxu0
      %v5789 = vadd.f32 %v5696, %v5788
      %v5790 = vand.u32 %v1061, 4294901760
      %5791 = vmatmul.f32.gmra.mxu0 %v5790
      %v5792 = vpop.f32.mrf.mxu0
      %v5793 = vadd.f32 %v5700, %v5792
      %5794 = vdwg.mxu0
      %v5795 = vmax.f32 %v3367, 0.0
      %v5796 = vmax.f32 %v5733, 0.0
      %v5797 = vmax.f32 %v3371, 0.0
      %v5798 = vmax.f32 %v5737, 0.0
      %v5799 = vmax.f32 %v3375, 0.0
      %v5800 = vmax.f32 %v5741, 0.0
      %v5801 = vmax.f32 %v3379, 0.0
      %v5802 = vmax.f32 %v5745, 0.0
      %v5803 = vmax.f32 %v3383, 0.0
      %v5804 = vmax.f32 %v5749, 0.0
      %v5805 = vmax.f32 %v3387, 0.0
      %v5806 = vmax.f32 %v5753, 0.0
      %v5807 = vmax.f32 %v3391, 0.0
      %v5808 = vmax.f32 %v5757, 0.0
      %v5809 = vmax.f32 %v3395, 0.0
      %v5810 = vmax.f32 %v5761, 0.0
      %v5811 = vmax.f32 %v3399, 0.0
      %v5812 = vmax.f32 %v5765, 0.0
      %v5813 = vmax.f32 %v3403, 0.0
      %v5814 = vmax.f32 %v5769, 0.0
      %v5815 = vmax.f32 %v3407, 0.0
      %v5816 = vmax.f32 %v5773, 0.0
      %v5817 = vmax.f32 %v3411, 0.0
      %v5818 = vmax.f32 %v5777, 0.0
      %v5819 = vmax.f32 %v3415, 0.0
      %v5820 = vmax.f32 %v5781, 0.0
      %v5821 = vmax.f32 %v3419, 0.0
      %v5822 = vmax.f32 %v5785, 0.0
      %v5823 = vmax.f32 %v3423, 0.0
      %v5824 = vmax.f32 %v5789, 0.0
      %v5825 = vmax.f32 %v3427, 0.0
      %v5826 = vmax.f32 %v5793, 0.0
      %v5827 = vld [vmem:[%s3] sm:$0xff]
      %v5828 = vld [vmem:[%s3 + $0x8] sm:$0xff]
      %v5829 = vld [vmem:[%s3 + $0x10] sm:$0xff]
      %v5830 = vld [vmem:[%s3 + $0x18] sm:$0xff]
      %v5831 = vld [vmem:[%s3 + $0x20] sm:$0xff]
      %v5832 = vld [vmem:[%s3 + $0x28] sm:$0xff]
      %v5833 = vld [vmem:[%s3 + $0x30] sm:$0xff]
      %v5834 = vld [vmem:[%s3 + $0x38] sm:$0xff]
      %v5835 = vld [vmem:[%s3 + $0x40] sm:$0xff]
      %v5836 = vld [vmem:[%s3 + $0x48] sm:$0xff]
      %v5837 = vld [vmem:[%s3 + $0x50] sm:$0xff]
      %v5838 = vld [vmem:[%s3 + $0x58] sm:$0xff]
      %v5839 = vld [vmem:[%s3 + $0x60] sm:$0xff]
      %v5840 = vld [vmem:[%s3 + $0x68] sm:$0xff]
      %v5841 = vld [vmem:[%s3 + $0x70] sm:$0xff]
      %v5842 = vld [vmem:[%s3 + $0x78] sm:$0xff]
      %v5843 = vld [vmem:[%s3 + $0x80] sm:$0xff]
      %v5844 = vld [vmem:[%s3 + $0x88] sm:$0xff]
      %v5845 = vld [vmem:[%s3 + $0x90] sm:$0xff]
      %v5846 = vld [vmem:[%s3 + $0x98] sm:$0xff]
      %v5847 = vld [vmem:[%s4] sm:$0x1]
      %v5849 = vperm.slane %v5847, 0
      %v5852 = vsel %vm793, %v5796, 0
      %v5855 = vsel %vm793, %v5798, 0
      %v5858 = vsel %vm793, %v5800, 0
      %v5861 = vsel %vm793, %v5802, 0
      %v5864 = vsel %vm793, %v5804, 0
      %v5867 = vsel %vm793, %v5806, 0
      %v5870 = vsel %vm793, %v5808, 0
      %v5873 = vsel %vm793, %v5810, 0
      %v5876 = vsel %vm793, %v5812, 0
      %v5879 = vsel %vm793, %v5814, 0
      %v5882 = vsel %vm793, %v5816, 0
      %v5885 = vsel %vm793, %v5818, 0
      %v5888 = vsel %vm793, %v5820, 0
      %v5891 = vsel %vm793, %v5822, 0
      %v5894 = vsel %vm793, %v5824, 0
      %v5897 = vsel %vm793, %v5826, 0
      %v5899 = vand.u32 %v5842, 4294901760
      %5900 = vmatpush.msra.mxu0 %v5899
      %v5901 = vand.u32 %v5841, 4294901760
      %5902 = vmatpush.msra.mxu0 %v5901
      %v5903 = vand.u32 %v5840, 4294901760
      %5904 = vmatpush.msra.mxu0 %v5903
      %v5905 = vand.u32 %v5839, 4294901760
      %5906 = vmatpush.msra.mxu0 %v5905
      %v5907 = vand.u32 %v5838, 4294901760
      %5908 = vmatpush.msra.mxu0 %v5907
      %v5909 = vand.u32 %v5837, 4294901760
      %5910 = vmatpush.msra.mxu0 %v5909
      %v5911 = vand.u32 %v5836, 4294901760
      %5912 = vmatpush.msra.mxu0 %v5911
      %v5913 = vand.u32 %v5835, 4294901760
      %5914 = vmatpush.msra.mxu0 %v5913
      %v5915 = vand.u32 %v5834, 4294901760
      %5916 = vmatpush.msra.mxu0 %v5915
      %v5917 = vand.u32 %v5833, 4294901760
      %5918 = vmatpush.msra.mxu0 %v5917
      %v5919 = vand.u32 %v5832, 4294901760
      %5920 = vmatpush.msra.mxu0 %v5919
      %v5921 = vand.u32 %v5831, 4294901760
      %5922 = vmatpush.msra.mxu0 %v5921
      %v5923 = vand.u32 %v5830, 4294901760
      %5924 = vmatpush.msra.mxu0 %v5923
      %v5925 = vand.u32 %v5829, 4294901760
      %5926 = vmatpush.msra.mxu0 %v5925
      %v5927 = vand.u32 %v5828, 4294901760
      %5928 = vmatpush.msra.mxu0 %v5927
      %v5929 = vand.u32 %v5827, 4294901760
      %5930 = vmatpush.msra.mxu0 %v5929
      %v5931 = vand.u32 %v5795, 4294901760
      %v5932 = vsub.f32 %v5795, %v5931
      %v5933 = vand.u32 %v5932, 4294901760
      %v5934 = vsub.f32 %v5932, %v5933
      %v5935 = vand.u32 %v5934, 4294901760
      %5936 = vmatmul.f32.gmra.mxu0 %v5935
      %v5937 = vpop.f32.mrf.mxu0
      %v5938 = vadd.f32 %v5849, %v5937
      %v5939 = vand.u32 %v5797, 4294901760
      %v5940 = vsub.f32 %v5797, %v5939
      %v5941 = vand.u32 %v5940, 4294901760
      %v5942 = vsub.f32 %v5940, %v5941
      %v5943 = vand.u32 %v5942, 4294901760
      %5944 = vmatmul.f32.gmra.mxu0 %v5943
      %v5945 = vpop.f32.mrf.mxu0
      %v5946 = vadd.f32 %v5849, %v5945
      %v5947 = vand.u32 %v5799, 4294901760
      %v5948 = vsub.f32 %v5799, %v5947
      %v5949 = vand.u32 %v5948, 4294901760
      %v5950 = vsub.f32 %v5948, %v5949
      %v5951 = vand.u32 %v5950, 4294901760
      %5952 = vmatmul.f32.gmra.mxu0 %v5951
      %v5953 = vpop.f32.mrf.mxu0
      %v5954 = vadd.f32 %v5849, %v5953
      %v5955 = vand.u32 %v5801, 4294901760
      %v5956 = vsub.f32 %v5801, %v5955
      %v5957 = vand.u32 %v5956, 4294901760
      %v5958 = vsub.f32 %v5956, %v5957
      %v5959 = vand.u32 %v5958, 4294901760
      %5960 = vmatmul.f32.gmra.mxu0 %v5959
      %v5961 = vpop.f32.mrf.mxu0
      %v5962 = vadd.f32 %v5849, %v5961
      %v5963 = vand.u32 %v5803, 4294901760
      %v5964 = vsub.f32 %v5803, %v5963
      %v5965 = vand.u32 %v5964, 4294901760
      %v5966 = vsub.f32 %v5964, %v5965
      %v5967 = vand.u32 %v5966, 4294901760
      %5968 = vmatmul.f32.gmra.mxu0 %v5967
      %v5969 = vpop.f32.mrf.mxu0
      %v5970 = vadd.f32 %v5849, %v5969
      %v5971 = vand.u32 %v5805, 4294901760
      %v5972 = vsub.f32 %v5805, %v5971
      %v5973 = vand.u32 %v5972, 4294901760
      %v5974 = vsub.f32 %v5972, %v5973
      %v5975 = vand.u32 %v5974, 4294901760
      %5976 = vmatmul.f32.gmra.mxu0 %v5975
      %v5977 = vpop.f32.mrf.mxu0
      %v5978 = vadd.f32 %v5849, %v5977
      %v5979 = vand.u32 %v5807, 4294901760
      %v5980 = vsub.f32 %v5807, %v5979
      %v5981 = vand.u32 %v5980, 4294901760
      %v5982 = vsub.f32 %v5980, %v5981
      %v5983 = vand.u32 %v5982, 4294901760
      %5984 = vmatmul.f32.gmra.mxu0 %v5983
      %v5985 = vpop.f32.mrf.mxu0
      %v5986 = vadd.f32 %v5849, %v5985
      %v5987 = vand.u32 %v5809, 4294901760
      %v5988 = vsub.f32 %v5809, %v5987
      %v5989 = vand.u32 %v5988, 4294901760
      %v5990 = vsub.f32 %v5988, %v5989
      %v5991 = vand.u32 %v5990, 4294901760
      %5992 = vmatmul.f32.gmra.mxu0 %v5991
      %v5993 = vpop.f32.mrf.mxu0
      %v5994 = vadd.f32 %v5849, %v5993
      %v5995 = vand.u32 %v5811, 4294901760
      %v5996 = vsub.f32 %v5811, %v5995
      %v5997 = vand.u32 %v5996, 4294901760
      %v5998 = vsub.f32 %v5996, %v5997
      %v5999 = vand.u32 %v5998, 4294901760
      %6000 = vmatmul.f32.gmra.mxu0 %v5999
      %v6001 = vpop.f32.mrf.mxu0
      %v6002 = vadd.f32 %v5849, %v6001
      %v6003 = vand.u32 %v5813, 4294901760
      %v6004 = vsub.f32 %v5813, %v6003
      %v6005 = vand.u32 %v6004, 4294901760
      %v6006 = vsub.f32 %v6004, %v6005
      %v6007 = vand.u32 %v6006, 4294901760
      %6008 = vmatmul.f32.gmra.mxu0 %v6007
      %v6009 = vpop.f32.mrf.mxu0
      %v6010 = vadd.f32 %v5849, %v6009
      %v6011 = vand.u32 %v5815, 4294901760
      %v6012 = vsub.f32 %v5815, %v6011
      %v6013 = vand.u32 %v6012, 4294901760
      %v6014 = vsub.f32 %v6012, %v6013
      %v6015 = vand.u32 %v6014, 4294901760
      %6016 = vmatmul.f32.gmra.mxu0 %v6015
      %v6017 = vpop.f32.mrf.mxu0
      %v6018 = vadd.f32 %v5849, %v6017
      %v6019 = vand.u32 %v5817, 4294901760
      %v6020 = vsub.f32 %v5817, %v6019
      %v6021 = vand.u32 %v6020, 4294901760
      %v6022 = vsub.f32 %v6020, %v6021
      %v6023 = vand.u32 %v6022, 4294901760
      %6024 = vmatmul.f32.gmra.mxu0 %v6023
      %v6025 = vpop.f32.mrf.mxu0
      %v6026 = vadd.f32 %v5849, %v6025
      %v6027 = vand.u32 %v5819, 4294901760
      %v6028 = vsub.f32 %v5819, %v6027
      %v6029 = vand.u32 %v6028, 4294901760
      %v6030 = vsub.f32 %v6028, %v6029
      %v6031 = vand.u32 %v6030, 4294901760
      %6032 = vmatmul.f32.gmra.mxu0 %v6031
      %v6033 = vpop.f32.mrf.mxu0
      %v6034 = vadd.f32 %v5849, %v6033
      %v6035 = vand.u32 %v5821, 4294901760
      %v6036 = vsub.f32 %v5821, %v6035
      %v6037 = vand.u32 %v6036, 4294901760
      %v6038 = vsub.f32 %v6036, %v6037
      %v6039 = vand.u32 %v6038, 4294901760
      %6040 = vmatmul.f32.gmra.mxu0 %v6039
      %v6041 = vpop.f32.mrf.mxu0
      %v6042 = vadd.f32 %v5849, %v6041
      %v6043 = vand.u32 %v5823, 4294901760
      %v6044 = vsub.f32 %v5823, %v6043
      %v6045 = vand.u32 %v6044, 4294901760
      %v6046 = vsub.f32 %v6044, %v6045
      %v6047 = vand.u32 %v6046, 4294901760
      %6048 = vmatmul.f32.gmra.mxu0 %v6047
      %v6049 = vpop.f32.mrf.mxu0
      %v6050 = vadd.f32 %v5849, %v6049
      %v6051 = vand.u32 %v5825, 4294901760
      %v6052 = vsub.f32 %v5825, %v6051
      %v6053 = vand.u32 %v6052, 4294901760
      %v6054 = vsub.f32 %v6052, %v6053
      %v6055 = vand.u32 %v6054, 4294901760
      %6056 = vmatmul.f32.gmra.mxu0 %v6055
      %v6057 = vpop.f32.mrf.mxu0
      %v6058 = vadd.f32 %v5849, %v6057
      %6059 = vdwg.mxu0
      %v6060 = vand.u32 %v5842, 4294901760
      %v6061 = vsub.f32 %v5842, %v6060
      %v6062 = vand.u32 %v6061, 4294901760
      %v6063 = vsub.f32 %v6061, %v6062
      %v6064 = vand.u32 %v6063, 4294901760
      %6065 = vmatpush.msra.mxu0 %v6064
      %v6066 = vand.u32 %v5841, 4294901760
      %v6067 = vsub.f32 %v5841, %v6066
      %v6068 = vand.u32 %v6067, 4294901760
      %v6069 = vsub.f32 %v6067, %v6068
      %v6070 = vand.u32 %v6069, 4294901760
      %6071 = vmatpush.msra.mxu0 %v6070
      %v6072 = vand.u32 %v5840, 4294901760
      %v6073 = vsub.f32 %v5840, %v6072
      %v6074 = vand.u32 %v6073, 4294901760
      %v6075 = vsub.f32 %v6073, %v6074
      %v6076 = vand.u32 %v6075, 4294901760
      %6077 = vmatpush.msra.mxu0 %v6076
      %v6078 = vand.u32 %v5839, 4294901760
      %v6079 = vsub.f32 %v5839, %v6078
      %v6080 = vand.u32 %v6079, 4294901760
      %v6081 = vsub.f32 %v6079, %v6080
      %v6082 = vand.u32 %v6081, 4294901760
      %6083 = vmatpush.msra.mxu0 %v6082
      %v6084 = vand.u32 %v5838, 4294901760
      %v6085 = vsub.f32 %v5838, %v6084
      %v6086 = vand.u32 %v6085, 4294901760
      %v6087 = vsub.f32 %v6085, %v6086
      %v6088 = vand.u32 %v6087, 4294901760
      %6089 = vmatpush.msra.mxu0 %v6088
      %v6090 = vand.u32 %v5837, 4294901760
      %v6091 = vsub.f32 %v5837, %v6090
      %v6092 = vand.u32 %v6091, 4294901760
      %v6093 = vsub.f32 %v6091, %v6092
      %v6094 = vand.u32 %v6093, 4294901760
      %6095 = vmatpush.msra.mxu0 %v6094
      %v6096 = vand.u32 %v5836, 4294901760
      %v6097 = vsub.f32 %v5836, %v6096
      %v6098 = vand.u32 %v6097, 4294901760
      %v6099 = vsub.f32 %v6097, %v6098
      %v6100 = vand.u32 %v6099, 4294901760
      %6101 = vmatpush.msra.mxu0 %v6100
      %v6102 = vand.u32 %v5835, 4294901760
      %v6103 = vsub.f32 %v5835, %v6102
      %v6104 = vand.u32 %v6103, 4294901760
      %v6105 = vsub.f32 %v6103, %v6104
      %v6106 = vand.u32 %v6105, 4294901760
      %6107 = vmatpush.msra.mxu0 %v6106
      %v6108 = vand.u32 %v5834, 4294901760
      %v6109 = vsub.f32 %v5834, %v6108
      %v6110 = vand.u32 %v6109, 4294901760
      %v6111 = vsub.f32 %v6109, %v6110
      %v6112 = vand.u32 %v6111, 4294901760
      %6113 = vmatpush.msra.mxu0 %v6112
      %v6114 = vand.u32 %v5833, 4294901760
      %v6115 = vsub.f32 %v5833, %v6114
      %v6116 = vand.u32 %v6115, 4294901760
      %v6117 = vsub.f32 %v6115, %v6116
      %v6118 = vand.u32 %v6117, 4294901760
      %6119 = vmatpush.msra.mxu0 %v6118
      %v6120 = vand.u32 %v5832, 4294901760
      %v6121 = vsub.f32 %v5832, %v6120
      %v6122 = vand.u32 %v6121, 4294901760
      %v6123 = vsub.f32 %v6121, %v6122
      %v6124 = vand.u32 %v6123, 4294901760
      %6125 = vmatpush.msra.mxu0 %v6124
      %v6126 = vand.u32 %v5831, 4294901760
      %v6127 = vsub.f32 %v5831, %v6126
      %v6128 = vand.u32 %v6127, 4294901760
      %v6129 = vsub.f32 %v6127, %v6128
      %v6130 = vand.u32 %v6129, 4294901760
      %6131 = vmatpush.msra.mxu0 %v6130
      %v6132 = vand.u32 %v5830, 4294901760
      %v6133 = vsub.f32 %v5830, %v6132
      %v6134 = vand.u32 %v6133, 4294901760
      %v6135 = vsub.f32 %v6133, %v6134
      %v6136 = vand.u32 %v6135, 4294901760
      %6137 = vmatpush.msra.mxu0 %v6136
      %v6138 = vand.u32 %v5829, 4294901760
      %v6139 = vsub.f32 %v5829, %v6138
      %v6140 = vand.u32 %v6139, 4294901760
      %v6141 = vsub.f32 %v6139, %v6140
      %v6142 = vand.u32 %v6141, 4294901760
      %6143 = vmatpush.msra.mxu0 %v6142
      %v6144 = vand.u32 %v5828, 4294901760
      %v6145 = vsub.f32 %v5828, %v6144
      %v6146 = vand.u32 %v6145, 4294901760
      %v6147 = vsub.f32 %v6145, %v6146
      %v6148 = vand.u32 %v6147, 4294901760
      %6149 = vmatpush.msra.mxu0 %v6148
      %v6150 = vand.u32 %v5827, 4294901760
      %v6151 = vsub.f32 %v5827, %v6150
      %v6152 = vand.u32 %v6151, 4294901760
      %v6153 = vsub.f32 %v6151, %v6152
      %v6154 = vand.u32 %v6153, 4294901760
      %6155 = vmatpush.msra.mxu0 %v6154
      %v6156 = vand.u32 %v5795, 4294901760
      %6157 = vmatmul.f32.gmra.mxu0 %v6156
      %v6158 = vpop.f32.mrf.mxu0
      %v6159 = vadd.f32 %v5938, %v6158
      %v6160 = vand.u32 %v5797, 4294901760
      %6161 = vmatmul.f32.gmra.mxu0 %v6160
      %v6162 = vpop.f32.mrf.mxu0
      %v6163 = vadd.f32 %v5946, %v6162
      %v6164 = vand.u32 %v5799, 4294901760
      %6165 = vmatmul.f32.gmra.mxu0 %v6164
      %v6166 = vpop.f32.mrf.mxu0
      %v6167 = vadd.f32 %v5954, %v6166
      %v6168 = vand.u32 %v5801, 4294901760
      %6169 = vmatmul.f32.gmra.mxu0 %v6168
      %v6170 = vpop.f32.mrf.mxu0
      %v6171 = vadd.f32 %v5962, %v6170
      %v6172 = vand.u32 %v5803, 4294901760
      %6173 = vmatmul.f32.gmra.mxu0 %v6172
      %v6174 = vpop.f32.mrf.mxu0
      %v6175 = vadd.f32 %v5970, %v6174
      %v6176 = vand.u32 %v5805, 4294901760
      %6177 = vmatmul.f32.gmra.mxu0 %v6176
      %v6178 = vpop.f32.mrf.mxu0
      %v6179 = vadd.f32 %v5978, %v6178
      %v6180 = vand.u32 %v5807, 4294901760
      %6181 = vmatmul.f32.gmra.mxu0 %v6180
      %v6182 = vpop.f32.mrf.mxu0
      %v6183 = vadd.f32 %v5986, %v6182
      %v6184 = vand.u32 %v5809, 4294901760
      %6185 = vmatmul.f32.gmra.mxu0 %v6184
      %v6186 = vpop.f32.mrf.mxu0
      %v6187 = vadd.f32 %v5994, %v6186
      %v6188 = vand.u32 %v5811, 4294901760
      %6189 = vmatmul.f32.gmra.mxu0 %v6188
      %v6190 = vpop.f32.mrf.mxu0
      %v6191 = vadd.f32 %v6002, %v6190
      %v6192 = vand.u32 %v5813, 4294901760
      %6193 = vmatmul.f32.gmra.mxu0 %v6192
      %v6194 = vpop.f32.mrf.mxu0
      %v6195 = vadd.f32 %v6010, %v6194
      %v6196 = vand.u32 %v5815, 4294901760
      %6197 = vmatmul.f32.gmra.mxu0 %v6196
      %v6198 = vpop.f32.mrf.mxu0
      %v6199 = vadd.f32 %v6018, %v6198
      %v6200 = vand.u32 %v5817, 4294901760
      %6201 = vmatmul.f32.gmra.mxu0 %v6200
      %v6202 = vpop.f32.mrf.mxu0
      %v6203 = vadd.f32 %v6026, %v6202
      %v6204 = vand.u32 %v5819, 4294901760
      %6205 = vmatmul.f32.gmra.mxu0 %v6204
      %v6206 = vpop.f32.mrf.mxu0
      %v6207 = vadd.f32 %v6034, %v6206
      %v6208 = vand.u32 %v5821, 4294901760
      %6209 = vmatmul.f32.gmra.mxu0 %v6208
      %v6210 = vpop.f32.mrf.mxu0
      %v6211 = vadd.f32 %v6042, %v6210
      %v6212 = vand.u32 %v5823, 4294901760
      %6213 = vmatmul.f32.gmra.mxu0 %v6212
      %v6214 = vpop.f32.mrf.mxu0
      %v6215 = vadd.f32 %v6050, %v6214
      %v6216 = vand.u32 %v5825, 4294901760
      %6217 = vmatmul.f32.gmra.mxu0 %v6216
      %v6218 = vpop.f32.mrf.mxu0
      %v6219 = vadd.f32 %v6058, %v6218
      %6220 = vdwg.mxu0
      %v6221 = vand.u32 %v5842, 4294901760
      %v6222 = vsub.f32 %v5842, %v6221
      %6223 = vmatpush.msra.mxu0 %v6222
      %v6224 = vand.u32 %v5841, 4294901760
      %v6225 = vsub.f32 %v5841, %v6224
      %6226 = vmatpush.msra.mxu0 %v6225
      %v6227 = vand.u32 %v5840, 4294901760
      %v6228 = vsub.f32 %v5840, %v6227
      %6229 = vmatpush.msra.mxu0 %v6228
      %v6230 = vand.u32 %v5839, 4294901760
      %v6231 = vsub.f32 %v5839, %v6230
      %6232 = vmatpush.msra.mxu0 %v6231
      %v6233 = vand.u32 %v5838, 4294901760
      %v6234 = vsub.f32 %v5838, %v6233
      %6235 = vmatpush.msra.mxu0 %v6234
      %v6236 = vand.u32 %v5837, 4294901760
      %v6237 = vsub.f32 %v5837, %v6236
      %6238 = vmatpush.msra.mxu0 %v6237
      %v6239 = vand.u32 %v5836, 4294901760
      %v6240 = vsub.f32 %v5836, %v6239
      %6241 = vmatpush.msra.mxu0 %v6240
      %v6242 = vand.u32 %v5835, 4294901760
      %v6243 = vsub.f32 %v5835, %v6242
      %6244 = vmatpush.msra.mxu0 %v6243
      %v6245 = vand.u32 %v5834, 4294901760
      %v6246 = vsub.f32 %v5834, %v6245
      %6247 = vmatpush.msra.mxu0 %v6246
      %v6248 = vand.u32 %v5833, 4294901760
      %v6249 = vsub.f32 %v5833, %v6248
      %6250 = vmatpush.msra.mxu0 %v6249
      %v6251 = vand.u32 %v5832, 4294901760
      %v6252 = vsub.f32 %v5832, %v6251
      %6253 = vmatpush.msra.mxu0 %v6252
      %v6254 = vand.u32 %v5831, 4294901760
      %v6255 = vsub.f32 %v5831, %v6254
      %6256 = vmatpush.msra.mxu0 %v6255
      %v6257 = vand.u32 %v5830, 4294901760
      %v6258 = vsub.f32 %v5830, %v6257
      %6259 = vmatpush.msra.mxu0 %v6258
      %v6260 = vand.u32 %v5829, 4294901760
      %v6261 = vsub.f32 %v5829, %v6260
      %6262 = vmatpush.msra.mxu0 %v6261
      %v6263 = vand.u32 %v5828, 4294901760
      %v6264 = vsub.f32 %v5828, %v6263
      %6265 = vmatpush.msra.mxu0 %v6264
      %v6266 = vand.u32 %v5827, 4294901760
      %v6267 = vsub.f32 %v5827, %v6266
      %6268 = vmatpush.msra.mxu0 %v6267
      %v6269 = vand.u32 %v5795, 4294901760
      %v6270 = vsub.f32 %v5795, %v6269
      %6271 = vmatmul.f32.gmra.mxu0 %v6270
      %v6272 = vpop.f32.mrf.mxu0
      %v6273 = vadd.f32 %v6159, %v6272
      %v6274 = vand.u32 %v5797, 4294901760
      %v6275 = vsub.f32 %v5797, %v6274
      %6276 = vmatmul.f32.gmra.mxu0 %v6275
      %v6277 = vpop.f32.mrf.mxu0
      %v6278 = vadd.f32 %v6163, %v6277
      %v6279 = vand.u32 %v5799, 4294901760
      %v6280 = vsub.f32 %v5799, %v6279
      %6281 = vmatmul.f32.gmra.mxu0 %v6280
      %v6282 = vpop.f32.mrf.mxu0
      %v6283 = vadd.f32 %v6167, %v6282
      %v6284 = vand.u32 %v5801, 4294901760
      %v6285 = vsub.f32 %v5801, %v6284
      %6286 = vmatmul.f32.gmra.mxu0 %v6285
      %v6287 = vpop.f32.mrf.mxu0
      %v6288 = vadd.f32 %v6171, %v6287
      %v6289 = vand.u32 %v5803, 4294901760
      %v6290 = vsub.f32 %v5803, %v6289
      %6291 = vmatmul.f32.gmra.mxu0 %v6290
      %v6292 = vpop.f32.mrf.mxu0
      %v6293 = vadd.f32 %v6175, %v6292
      %v6294 = vand.u32 %v5805, 4294901760
      %v6295 = vsub.f32 %v5805, %v6294
      %6296 = vmatmul.f32.gmra.mxu0 %v6295
      %v6297 = vpop.f32.mrf.mxu0
      %v6298 = vadd.f32 %v6179, %v6297
      %v6299 = vand.u32 %v5807, 4294901760
      %v6300 = vsub.f32 %v5807, %v6299
      %6301 = vmatmul.f32.gmra.mxu0 %v6300
      %v6302 = vpop.f32.mrf.mxu0
      %v6303 = vadd.f32 %v6183, %v6302
      %v6304 = vand.u32 %v5809, 4294901760
      %v6305 = vsub.f32 %v5809, %v6304
      %6306 = vmatmul.f32.gmra.mxu0 %v6305
      %v6307 = vpop.f32.mrf.mxu0
      %v6308 = vadd.f32 %v6187, %v6307
      %v6309 = vand.u32 %v5811, 4294901760
      %v6310 = vsub.f32 %v5811, %v6309
      %6311 = vmatmul.f32.gmra.mxu0 %v6310
      %v6312 = vpop.f32.mrf.mxu0
      %v6313 = vadd.f32 %v6191, %v6312
      %v6314 = vand.u32 %v5813, 4294901760
      %v6315 = vsub.f32 %v5813, %v6314
      %6316 = vmatmul.f32.gmra.mxu0 %v6315
      %v6317 = vpop.f32.mrf.mxu0
      %v6318 = vadd.f32 %v6195, %v6317
      %v6319 = vand.u32 %v5815, 4294901760
      %v6320 = vsub.f32 %v5815, %v6319
      %6321 = vmatmul.f32.gmra.mxu0 %v6320
      %v6322 = vpop.f32.mrf.mxu0
      %v6323 = vadd.f32 %v6199, %v6322
      %v6324 = vand.u32 %v5817, 4294901760
      %v6325 = vsub.f32 %v5817, %v6324
      %6326 = vmatmul.f32.gmra.mxu0 %v6325
      %v6327 = vpop.f32.mrf.mxu0
      %v6328 = vadd.f32 %v6203, %v6327
      %v6329 = vand.u32 %v5819, 4294901760
      %v6330 = vsub.f32 %v5819, %v6329
      %6331 = vmatmul.f32.gmra.mxu0 %v6330
      %v6332 = vpop.f32.mrf.mxu0
      %v6333 = vadd.f32 %v6207, %v6332
      %v6334 = vand.u32 %v5821, 4294901760
      %v6335 = vsub.f32 %v5821, %v6334
      %6336 = vmatmul.f32.gmra.mxu0 %v6335
      %v6337 = vpop.f32.mrf.mxu0
      %v6338 = vadd.f32 %v6211, %v6337
      %v6339 = vand.u32 %v5823, 4294901760
      %v6340 = vsub.f32 %v5823, %v6339
      %6341 = vmatmul.f32.gmra.mxu0 %v6340
      %v6342 = vpop.f32.mrf.mxu0
      %v6343 = vadd.f32 %v6215, %v6342
      %v6344 = vand.u32 %v5825, 4294901760
      %v6345 = vsub.f32 %v5825, %v6344
      %6346 = vmatmul.f32.gmra.mxu0 %v6345
      %v6347 = vpop.f32.mrf.mxu0
      %v6348 = vadd.f32 %v6219, %v6347
      %6349 = vdwg.mxu0
      %v6350 = vand.u32 %v5842, 4294901760
      %6351 = vmatpush.msra.mxu0 %v6350
      %v6352 = vand.u32 %v5841, 4294901760
      %6353 = vmatpush.msra.mxu0 %v6352
      %v6354 = vand.u32 %v5840, 4294901760
      %6355 = vmatpush.msra.mxu0 %v6354
      %v6356 = vand.u32 %v5839, 4294901760
      %6357 = vmatpush.msra.mxu0 %v6356
      %v6358 = vand.u32 %v5838, 4294901760
      %6359 = vmatpush.msra.mxu0 %v6358
      %v6360 = vand.u32 %v5837, 4294901760
      %6361 = vmatpush.msra.mxu0 %v6360
      %v6362 = vand.u32 %v5836, 4294901760
      %6363 = vmatpush.msra.mxu0 %v6362
      %v6364 = vand.u32 %v5835, 4294901760
      %6365 = vmatpush.msra.mxu0 %v6364
      %v6366 = vand.u32 %v5834, 4294901760
      %6367 = vmatpush.msra.mxu0 %v6366
      %v6368 = vand.u32 %v5833, 4294901760
      %6369 = vmatpush.msra.mxu0 %v6368
      %v6370 = vand.u32 %v5832, 4294901760
      %6371 = vmatpush.msra.mxu0 %v6370
      %v6372 = vand.u32 %v5831, 4294901760
      %6373 = vmatpush.msra.mxu0 %v6372
      %v6374 = vand.u32 %v5830, 4294901760
      %6375 = vmatpush.msra.mxu0 %v6374
      %v6376 = vand.u32 %v5829, 4294901760
      %6377 = vmatpush.msra.mxu0 %v6376
      %v6378 = vand.u32 %v5828, 4294901760
      %6379 = vmatpush.msra.mxu0 %v6378
      %v6380 = vand.u32 %v5827, 4294901760
      %6381 = vmatpush.msra.mxu0 %v6380
      %v6382 = vand.u32 %v5795, 4294901760
      %v6383 = vsub.f32 %v5795, %v6382
      %v6384 = vand.u32 %v6383, 4294901760
      %6385 = vmatmul.f32.gmra.mxu0 %v6384
      %v6386 = vpop.f32.mrf.mxu0
      %v6387 = vadd.f32 %v6273, %v6386
      %v6388 = vand.u32 %v5797, 4294901760
      %v6389 = vsub.f32 %v5797, %v6388
      %v6390 = vand.u32 %v6389, 4294901760
      %6391 = vmatmul.f32.gmra.mxu0 %v6390
      %v6392 = vpop.f32.mrf.mxu0
      %v6393 = vadd.f32 %v6278, %v6392
      %v6394 = vand.u32 %v5799, 4294901760
      %v6395 = vsub.f32 %v5799, %v6394
      %v6396 = vand.u32 %v6395, 4294901760
      %6397 = vmatmul.f32.gmra.mxu0 %v6396
      %v6398 = vpop.f32.mrf.mxu0
      %v6399 = vadd.f32 %v6283, %v6398
      %v6400 = vand.u32 %v5801, 4294901760
      %v6401 = vsub.f32 %v5801, %v6400
      %v6402 = vand.u32 %v6401, 4294901760
      %6403 = vmatmul.f32.gmra.mxu0 %v6402
      %v6404 = vpop.f32.mrf.mxu0
      %v6405 = vadd.f32 %v6288, %v6404
      %v6406 = vand.u32 %v5803, 4294901760
      %v6407 = vsub.f32 %v5803, %v6406
      %v6408 = vand.u32 %v6407, 4294901760
      %6409 = vmatmul.f32.gmra.mxu0 %v6408
      %v6410 = vpop.f32.mrf.mxu0
      %v6411 = vadd.f32 %v6293, %v6410
      %v6412 = vand.u32 %v5805, 4294901760
      %v6413 = vsub.f32 %v5805, %v6412
      %v6414 = vand.u32 %v6413, 4294901760
      %6415 = vmatmul.f32.gmra.mxu0 %v6414
      %v6416 = vpop.f32.mrf.mxu0
      %v6417 = vadd.f32 %v6298, %v6416
      %v6418 = vand.u32 %v5807, 4294901760
      %v6419 = vsub.f32 %v5807, %v6418
      %v6420 = vand.u32 %v6419, 4294901760
      %6421 = vmatmul.f32.gmra.mxu0 %v6420
      %v6422 = vpop.f32.mrf.mxu0
      %v6423 = vadd.f32 %v6303, %v6422
      %v6424 = vand.u32 %v5809, 4294901760
      %v6425 = vsub.f32 %v5809, %v6424
      %v6426 = vand.u32 %v6425, 4294901760
      %6427 = vmatmul.f32.gmra.mxu0 %v6426
      %v6428 = vpop.f32.mrf.mxu0
      %v6429 = vadd.f32 %v6308, %v6428
      %v6430 = vand.u32 %v5811, 4294901760
      %v6431 = vsub.f32 %v5811, %v6430
      %v6432 = vand.u32 %v6431, 4294901760
      %6433 = vmatmul.f32.gmra.mxu0 %v6432
      %v6434 = vpop.f32.mrf.mxu0
      %v6435 = vadd.f32 %v6313, %v6434
      %v6436 = vand.u32 %v5813, 4294901760
      %v6437 = vsub.f32 %v5813, %v6436
      %v6438 = vand.u32 %v6437, 4294901760
      %6439 = vmatmul.f32.gmra.mxu0 %v6438
      %v6440 = vpop.f32.mrf.mxu0
      %v6441 = vadd.f32 %v6318, %v6440
      %v6442 = vand.u32 %v5815, 4294901760
      %v6443 = vsub.f32 %v5815, %v6442
      %v6444 = vand.u32 %v6443, 4294901760
      %6445 = vmatmul.f32.gmra.mxu0 %v6444
      %v6446 = vpop.f32.mrf.mxu0
      %v6447 = vadd.f32 %v6323, %v6446
      %v6448 = vand.u32 %v5817, 4294901760
      %v6449 = vsub.f32 %v5817, %v6448
      %v6450 = vand.u32 %v6449, 4294901760
      %6451 = vmatmul.f32.gmra.mxu0 %v6450
      %v6452 = vpop.f32.mrf.mxu0
      %v6453 = vadd.f32 %v6328, %v6452
      %v6454 = vand.u32 %v5819, 4294901760
      %v6455 = vsub.f32 %v5819, %v6454
      %v6456 = vand.u32 %v6455, 4294901760
      %6457 = vmatmul.f32.gmra.mxu0 %v6456
      %v6458 = vpop.f32.mrf.mxu0
      %v6459 = vadd.f32 %v6333, %v6458
      %v6460 = vand.u32 %v5821, 4294901760
      %v6461 = vsub.f32 %v5821, %v6460
      %v6462 = vand.u32 %v6461, 4294901760
      %6463 = vmatmul.f32.gmra.mxu0 %v6462
      %v6464 = vpop.f32.mrf.mxu0
      %v6465 = vadd.f32 %v6338, %v6464
      %v6466 = vand.u32 %v5823, 4294901760
      %v6467 = vsub.f32 %v5823, %v6466
      %v6468 = vand.u32 %v6467, 4294901760
      %6469 = vmatmul.f32.gmra.mxu0 %v6468
      %v6470 = vpop.f32.mrf.mxu0
      %v6471 = vadd.f32 %v6343, %v6470
      %v6472 = vand.u32 %v5825, 4294901760
      %v6473 = vsub.f32 %v5825, %v6472
      %v6474 = vand.u32 %v6473, 4294901760
      %6475 = vmatmul.f32.gmra.mxu0 %v6474
      %v6476 = vpop.f32.mrf.mxu0
      %v6477 = vadd.f32 %v6348, %v6476
      %6478 = vdwg.mxu0
      %v6479 = vand.u32 %v5842, 4294901760
      %v6480 = vsub.f32 %v5842, %v6479
      %v6481 = vand.u32 %v6480, 4294901760
      %6482 = vmatpush.msra.mxu0 %v6481
      %v6483 = vand.u32 %v5841, 4294901760
      %v6484 = vsub.f32 %v5841, %v6483
      %v6485 = vand.u32 %v6484, 4294901760
      %6486 = vmatpush.msra.mxu0 %v6485
      %v6487 = vand.u32 %v5840, 4294901760
      %v6488 = vsub.f32 %v5840, %v6487
      %v6489 = vand.u32 %v6488, 4294901760
      %6490 = vmatpush.msra.mxu0 %v6489
      %v6491 = vand.u32 %v5839, 4294901760
      %v6492 = vsub.f32 %v5839, %v6491
      %v6493 = vand.u32 %v6492, 4294901760
      %6494 = vmatpush.msra.mxu0 %v6493
      %v6495 = vand.u32 %v5838, 4294901760
      %v6496 = vsub.f32 %v5838, %v6495
      %v6497 = vand.u32 %v6496, 4294901760
      %6498 = vmatpush.msra.mxu0 %v6497
      %v6499 = vand.u32 %v5837, 4294901760
      %v6500 = vsub.f32 %v5837, %v6499
      %v6501 = vand.u32 %v6500, 4294901760
      %6502 = vmatpush.msra.mxu0 %v6501
      %v6503 = vand.u32 %v5836, 4294901760
      %v6504 = vsub.f32 %v5836, %v6503
      %v6505 = vand.u32 %v6504, 4294901760
      %6506 = vmatpush.msra.mxu0 %v6505
      %v6507 = vand.u32 %v5835, 4294901760
      %v6508 = vsub.f32 %v5835, %v6507
      %v6509 = vand.u32 %v6508, 4294901760
      %6510 = vmatpush.msra.mxu0 %v6509
      %v6511 = vand.u32 %v5834, 4294901760
      %v6512 = vsub.f32 %v5834, %v6511
      %v6513 = vand.u32 %v6512, 4294901760
      %6514 = vmatpush.msra.mxu0 %v6513
      %v6515 = vand.u32 %v5833, 4294901760
      %v6516 = vsub.f32 %v5833, %v6515
      %v6517 = vand.u32 %v6516, 4294901760
      %6518 = vmatpush.msra.mxu0 %v6517
      %v6519 = vand.u32 %v5832, 4294901760
      %v6520 = vsub.f32 %v5832, %v6519
      %v6521 = vand.u32 %v6520, 4294901760
      %6522 = vmatpush.msra.mxu0 %v6521
      %v6523 = vand.u32 %v5831, 4294901760
      %v6524 = vsub.f32 %v5831, %v6523
      %v6525 = vand.u32 %v6524, 4294901760
      %6526 = vmatpush.msra.mxu0 %v6525
      %v6527 = vand.u32 %v5830, 4294901760
      %v6528 = vsub.f32 %v5830, %v6527
      %v6529 = vand.u32 %v6528, 4294901760
      %6530 = vmatpush.msra.mxu0 %v6529
      %v6531 = vand.u32 %v5829, 4294901760
      %v6532 = vsub.f32 %v5829, %v6531
      %v6533 = vand.u32 %v6532, 4294901760
      %6534 = vmatpush.msra.mxu0 %v6533
      %v6535 = vand.u32 %v5828, 4294901760
      %v6536 = vsub.f32 %v5828, %v6535
      %v6537 = vand.u32 %v6536, 4294901760
      %6538 = vmatpush.msra.mxu0 %v6537
      %v6539 = vand.u32 %v5827, 4294901760
      %v6540 = vsub.f32 %v5827, %v6539
      %v6541 = vand.u32 %v6540, 4294901760
      %6542 = vmatpush.msra.mxu0 %v6541
      %v6543 = vand.u32 %v5795, 4294901760
      %6544 = vmatmul.f32.gmra.mxu0 %v6543
      %v6545 = vpop.f32.mrf.mxu0
      %v6546 = vadd.f32 %v6387, %v6545
      %v6547 = vand.u32 %v5797, 4294901760
      %6548 = vmatmul.f32.gmra.mxu0 %v6547
      %v6549 = vpop.f32.mrf.mxu0
      %v6550 = vadd.f32 %v6393, %v6549
      %v6551 = vand.u32 %v5799, 4294901760
      %6552 = vmatmul.f32.gmra.mxu0 %v6551
      %v6553 = vpop.f32.mrf.mxu0
      %v6554 = vadd.f32 %v6399, %v6553
      %v6555 = vand.u32 %v5801, 4294901760
      %6556 = vmatmul.f32.gmra.mxu0 %v6555
      %v6557 = vpop.f32.mrf.mxu0
      %v6558 = vadd.f32 %v6405, %v6557
      %v6559 = vand.u32 %v5803, 4294901760
      %6560 = vmatmul.f32.gmra.mxu0 %v6559
      %v6561 = vpop.f32.mrf.mxu0
      %v6562 = vadd.f32 %v6411, %v6561
      %v6563 = vand.u32 %v5805, 4294901760
      %6564 = vmatmul.f32.gmra.mxu0 %v6563
      %v6565 = vpop.f32.mrf.mxu0
      %v6566 = vadd.f32 %v6417, %v6565
      %v6567 = vand.u32 %v5807, 4294901760
      %6568 = vmatmul.f32.gmra.mxu0 %v6567
      %v6569 = vpop.f32.mrf.mxu0
      %v6570 = vadd.f32 %v6423, %v6569
      %v6571 = vand.u32 %v5809, 4294901760
      %6572 = vmatmul.f32.gmra.mxu0 %v6571
      %v6573 = vpop.f32.mrf.mxu0
      %v6574 = vadd.f32 %v6429, %v6573
      %v6575 = vand.u32 %v5811, 4294901760
      %6576 = vmatmul.f32.gmra.mxu0 %v6575
      %v6577 = vpop.f32.mrf.mxu0
      %v6578 = vadd.f32 %v6435, %v6577
      %v6579 = vand.u32 %v5813, 4294901760
      %6580 = vmatmul.f32.gmra.mxu0 %v6579
      %v6581 = vpop.f32.mrf.mxu0
      %v6582 = vadd.f32 %v6441, %v6581
      %v6583 = vand.u32 %v5815, 4294901760
      %6584 = vmatmul.f32.gmra.mxu0 %v6583
      %v6585 = vpop.f32.mrf.mxu0
      %v6586 = vadd.f32 %v6447, %v6585
      %v6587 = vand.u32 %v5817, 4294901760
      %6588 = vmatmul.f32.gmra.mxu0 %v6587
      %v6589 = vpop.f32.mrf.mxu0
      %v6590 = vadd.f32 %v6453, %v6589
      %v6591 = vand.u32 %v5819, 4294901760
      %6592 = vmatmul.f32.gmra.mxu0 %v6591
      %v6593 = vpop.f32.mrf.mxu0
      %v6594 = vadd.f32 %v6459, %v6593
      %v6595 = vand.u32 %v5821, 4294901760
      %6596 = vmatmul.f32.gmra.mxu0 %v6595
      %v6597 = vpop.f32.mrf.mxu0
      %v6598 = vadd.f32 %v6465, %v6597
      %v6599 = vand.u32 %v5823, 4294901760
      %6600 = vmatmul.f32.gmra.mxu0 %v6599
      %v6601 = vpop.f32.mrf.mxu0
      %v6602 = vadd.f32 %v6471, %v6601
      %v6603 = vand.u32 %v5825, 4294901760
      %6604 = vmatmul.f32.gmra.mxu0 %v6603
      %v6605 = vpop.f32.mrf.mxu0
      %v6606 = vadd.f32 %v6477, %v6605
      %6607 = vdwg.mxu0
      %v6608 = vand.u32 %v5842, 4294901760
      %6609 = vmatpush.msra.mxu0 %v6608
      %v6610 = vand.u32 %v5841, 4294901760
      %6611 = vmatpush.msra.mxu0 %v6610
      %v6612 = vand.u32 %v5840, 4294901760
      %6613 = vmatpush.msra.mxu0 %v6612
      %v6614 = vand.u32 %v5839, 4294901760
      %6615 = vmatpush.msra.mxu0 %v6614
      %v6616 = vand.u32 %v5838, 4294901760
      %6617 = vmatpush.msra.mxu0 %v6616
      %v6618 = vand.u32 %v5837, 4294901760
      %6619 = vmatpush.msra.mxu0 %v6618
      %v6620 = vand.u32 %v5836, 4294901760
      %6621 = vmatpush.msra.mxu0 %v6620
      %v6622 = vand.u32 %v5835, 4294901760
      %6623 = vmatpush.msra.mxu0 %v6622
      %v6624 = vand.u32 %v5834, 4294901760
      %6625 = vmatpush.msra.mxu0 %v6624
      %v6626 = vand.u32 %v5833, 4294901760
      %6627 = vmatpush.msra.mxu0 %v6626
      %v6628 = vand.u32 %v5832, 4294901760
      %6629 = vmatpush.msra.mxu0 %v6628
      %v6630 = vand.u32 %v5831, 4294901760
      %6631 = vmatpush.msra.mxu0 %v6630
      %v6632 = vand.u32 %v5830, 4294901760
      %6633 = vmatpush.msra.mxu0 %v6632
      %v6634 = vand.u32 %v5829, 4294901760
      %6635 = vmatpush.msra.mxu0 %v6634
      %v6636 = vand.u32 %v5828, 4294901760
      %6637 = vmatpush.msra.mxu0 %v6636
      %v6638 = vand.u32 %v5827, 4294901760
      %6639 = vmatpush.msra.mxu0 %v6638
      %v6640 = vand.u32 %v5795, 4294901760
      %6641 = vmatmul.f32.gmra.mxu0 %v6640
      %v6642 = vpop.f32.mrf.mxu0
      %v6643 = vadd.f32 %v6546, %v6642
      %v6644 = vand.u32 %v5797, 4294901760
      %6645 = vmatmul.f32.gmra.mxu0 %v6644
      %v6646 = vpop.f32.mrf.mxu0
      %v6647 = vadd.f32 %v6550, %v6646
      %v6648 = vand.u32 %v5799, 4294901760
      %6649 = vmatmul.f32.gmra.mxu0 %v6648
      %v6650 = vpop.f32.mrf.mxu0
      %v6651 = vadd.f32 %v6554, %v6650
      %v6652 = vand.u32 %v5801, 4294901760
      %6653 = vmatmul.f32.gmra.mxu0 %v6652
      %v6654 = vpop.f32.mrf.mxu0
      %v6655 = vadd.f32 %v6558, %v6654
      %v6656 = vand.u32 %v5803, 4294901760
      %6657 = vmatmul.f32.gmra.mxu0 %v6656
      %v6658 = vpop.f32.mrf.mxu0
      %v6659 = vadd.f32 %v6562, %v6658
      %v6660 = vand.u32 %v5805, 4294901760
      %6661 = vmatmul.f32.gmra.mxu0 %v6660
      %v6662 = vpop.f32.mrf.mxu0
      %v6663 = vadd.f32 %v6566, %v6662
      %v6664 = vand.u32 %v5807, 4294901760
      %6665 = vmatmul.f32.gmra.mxu0 %v6664
      %v6666 = vpop.f32.mrf.mxu0
      %v6667 = vadd.f32 %v6570, %v6666
      %v6668 = vand.u32 %v5809, 4294901760
      %6669 = vmatmul.f32.gmra.mxu0 %v6668
      %v6670 = vpop.f32.mrf.mxu0
      %v6671 = vadd.f32 %v6574, %v6670
      %v6672 = vand.u32 %v5811, 4294901760
      %6673 = vmatmul.f32.gmra.mxu0 %v6672
      %v6674 = vpop.f32.mrf.mxu0
      %v6675 = vadd.f32 %v6578, %v6674
      %v6676 = vand.u32 %v5813, 4294901760
      %6677 = vmatmul.f32.gmra.mxu0 %v6676
      %v6678 = vpop.f32.mrf.mxu0
      %v6679 = vadd.f32 %v6582, %v6678
      %v6680 = vand.u32 %v5815, 4294901760
      %6681 = vmatmul.f32.gmra.mxu0 %v6680
      %v6682 = vpop.f32.mrf.mxu0
      %v6683 = vadd.f32 %v6586, %v6682
      %v6684 = vand.u32 %v5817, 4294901760
      %6685 = vmatmul.f32.gmra.mxu0 %v6684
      %v6686 = vpop.f32.mrf.mxu0
      %v6687 = vadd.f32 %v6590, %v6686
      %v6688 = vand.u32 %v5819, 4294901760
      %6689 = vmatmul.f32.gmra.mxu0 %v6688
      %v6690 = vpop.f32.mrf.mxu0
      %v6691 = vadd.f32 %v6594, %v6690
      %v6692 = vand.u32 %v5821, 4294901760
      %6693 = vmatmul.f32.gmra.mxu0 %v6692
      %v6694 = vpop.f32.mrf.mxu0
      %v6695 = vadd.f32 %v6598, %v6694
      %v6696 = vand.u32 %v5823, 4294901760
      %6697 = vmatmul.f32.gmra.mxu0 %v6696
      %v6698 = vpop.f32.mrf.mxu0
      %v6699 = vadd.f32 %v6602, %v6698
      %v6700 = vand.u32 %v5825, 4294901760
      %6701 = vmatmul.f32.gmra.mxu0 %v6700
      %v6702 = vpop.f32.mrf.mxu0
      %v6703 = vadd.f32 %v6606, %v6702
      %6704 = vdwg.mxu0
      %6705 = vmatpush.msra.mxu0 0.0
      %6706 = vmatpush.msra.mxu0 0.0
      %6707 = vmatpush.msra.mxu0 0.0
      %6708 = vmatpush.msra.mxu0 0.0
      %6709 = vmatpush.msra.mxu0 0.0
      %6710 = vmatpush.msra.mxu0 0.0
      %6711 = vmatpush.msra.mxu0 0.0
      %6712 = vmatpush.msra.mxu0 0.0
      %6713 = vmatpush.msra.mxu0 0.0
      %6714 = vmatpush.msra.mxu0 0.0
      %6715 = vmatpush.msra.mxu0 0.0
      %6716 = vmatpush.msra.mxu0 0.0
      %v6717 = vand.u32 %v5846, 4294901760
      %6718 = vmatpush.msra.mxu0 %v6717
      %v6719 = vand.u32 %v5845, 4294901760
      %6720 = vmatpush.msra.mxu0 %v6719
      %v6721 = vand.u32 %v5844, 4294901760
      %6722 = vmatpush.msra.mxu0 %v6721
      %v6723 = vand.u32 %v5843, 4294901760
      %6724 = vmatpush.msra.mxu0 %v6723
      %v6725 = vand.u32 %v5852, 4294901760
      %v6726 = vsub.f32 %v5852, %v6725
      %v6727 = vand.u32 %v6726, 4294901760
      %v6728 = vsub.f32 %v6726, %v6727
      %v6729 = vand.u32 %v6728, 4294901760
      %6730 = vmatmul.f32.gmra.mxu0 %v6729
      %v6731 = vpop.f32.mrf.mxu0
      %v6732 = vadd.f32 %v6643, %v6731
      %v6733 = vand.u32 %v5855, 4294901760
      %v6734 = vsub.f32 %v5855, %v6733
      %v6735 = vand.u32 %v6734, 4294901760
      %v6736 = vsub.f32 %v6734, %v6735
      %v6737 = vand.u32 %v6736, 4294901760
      %6738 = vmatmul.f32.gmra.mxu0 %v6737
      %v6739 = vpop.f32.mrf.mxu0
      %v6740 = vadd.f32 %v6647, %v6739
      %v6741 = vand.u32 %v5858, 4294901760
      %v6742 = vsub.f32 %v5858, %v6741
      %v6743 = vand.u32 %v6742, 4294901760
      %v6744 = vsub.f32 %v6742, %v6743
      %v6745 = vand.u32 %v6744, 4294901760
      %6746 = vmatmul.f32.gmra.mxu0 %v6745
      %v6747 = vpop.f32.mrf.mxu0
      %v6748 = vadd.f32 %v6651, %v6747
      %v6749 = vand.u32 %v5861, 4294901760
      %v6750 = vsub.f32 %v5861, %v6749
      %v6751 = vand.u32 %v6750, 4294901760
      %v6752 = vsub.f32 %v6750, %v6751
      %v6753 = vand.u32 %v6752, 4294901760
      %6754 = vmatmul.f32.gmra.mxu0 %v6753
      %v6755 = vpop.f32.mrf.mxu0
      %v6756 = vadd.f32 %v6655, %v6755
      %v6757 = vand.u32 %v5864, 4294901760
      %v6758 = vsub.f32 %v5864, %v6757
      %v6759 = vand.u32 %v6758, 4294901760
      %v6760 = vsub.f32 %v6758, %v6759
      %v6761 = vand.u32 %v6760, 4294901760
      %6762 = vmatmul.f32.gmra.mxu0 %v6761
      %v6763 = vpop.f32.mrf.mxu0
      %v6764 = vadd.f32 %v6659, %v6763
      %v6765 = vand.u32 %v5867, 4294901760
      %v6766 = vsub.f32 %v5867, %v6765
      %v6767 = vand.u32 %v6766, 4294901760
      %v6768 = vsub.f32 %v6766, %v6767
      %v6769 = vand.u32 %v6768, 4294901760
      %6770 = vmatmul.f32.gmra.mxu0 %v6769
      %v6771 = vpop.f32.mrf.mxu0
      %v6772 = vadd.f32 %v6663, %v6771
      %v6773 = vand.u32 %v5870, 4294901760
      %v6774 = vsub.f32 %v5870, %v6773
      %v6775 = vand.u32 %v6774, 4294901760
      %v6776 = vsub.f32 %v6774, %v6775
      %v6777 = vand.u32 %v6776, 4294901760
      %6778 = vmatmul.f32.gmra.mxu0 %v6777
      %v6779 = vpop.f32.mrf.mxu0
      %v6780 = vadd.f32 %v6667, %v6779
      %v6781 = vand.u32 %v5873, 4294901760
      %v6782 = vsub.f32 %v5873, %v6781
      %v6783 = vand.u32 %v6782, 4294901760
      %v6784 = vsub.f32 %v6782, %v6783
      %v6785 = vand.u32 %v6784, 4294901760
      %6786 = vmatmul.f32.gmra.mxu0 %v6785
      %v6787 = vpop.f32.mrf.mxu0
      %v6788 = vadd.f32 %v6671, %v6787
      %v6789 = vand.u32 %v5876, 4294901760
      %v6790 = vsub.f32 %v5876, %v6789
      %v6791 = vand.u32 %v6790, 4294901760
      %v6792 = vsub.f32 %v6790, %v6791
      %v6793 = vand.u32 %v6792, 4294901760
      %6794 = vmatmul.f32.gmra.mxu0 %v6793
      %v6795 = vpop.f32.mrf.mxu0
      %v6796 = vadd.f32 %v6675, %v6795
      %v6797 = vand.u32 %v5879, 4294901760
      %v6798 = vsub.f32 %v5879, %v6797
      %v6799 = vand.u32 %v6798, 4294901760
      %v6800 = vsub.f32 %v6798, %v6799
      %v6801 = vand.u32 %v6800, 4294901760
      %6802 = vmatmul.f32.gmra.mxu0 %v6801
      %v6803 = vpop.f32.mrf.mxu0
      %v6804 = vadd.f32 %v6679, %v6803
      %v6805 = vand.u32 %v5882, 4294901760
      %v6806 = vsub.f32 %v5882, %v6805
      %v6807 = vand.u32 %v6806, 4294901760
      %v6808 = vsub.f32 %v6806, %v6807
      %v6809 = vand.u32 %v6808, 4294901760
      %6810 = vmatmul.f32.gmra.mxu0 %v6809
      %v6811 = vpop.f32.mrf.mxu0
      %v6812 = vadd.f32 %v6683, %v6811
      %v6813 = vand.u32 %v5885, 4294901760
      %v6814 = vsub.f32 %v5885, %v6813
      %v6815 = vand.u32 %v6814, 4294901760
      %v6816 = vsub.f32 %v6814, %v6815
      %v6817 = vand.u32 %v6816, 4294901760
      %6818 = vmatmul.f32.gmra.mxu0 %v6817
      %v6819 = vpop.f32.mrf.mxu0
      %v6820 = vadd.f32 %v6687, %v6819
      %v6821 = vand.u32 %v5888, 4294901760
      %v6822 = vsub.f32 %v5888, %v6821
      %v6823 = vand.u32 %v6822, 4294901760
      %v6824 = vsub.f32 %v6822, %v6823
      %v6825 = vand.u32 %v6824, 4294901760
      %6826 = vmatmul.f32.gmra.mxu0 %v6825
      %v6827 = vpop.f32.mrf.mxu0
      %v6828 = vadd.f32 %v6691, %v6827
      %v6829 = vand.u32 %v5891, 4294901760
      %v6830 = vsub.f32 %v5891, %v6829
      %v6831 = vand.u32 %v6830, 4294901760
      %v6832 = vsub.f32 %v6830, %v6831
      %v6833 = vand.u32 %v6832, 4294901760
      %6834 = vmatmul.f32.gmra.mxu0 %v6833
      %v6835 = vpop.f32.mrf.mxu0
      %v6836 = vadd.f32 %v6695, %v6835
      %v6837 = vand.u32 %v5894, 4294901760
      %v6838 = vsub.f32 %v5894, %v6837
      %v6839 = vand.u32 %v6838, 4294901760
      %v6840 = vsub.f32 %v6838, %v6839
      %v6841 = vand.u32 %v6840, 4294901760
      %6842 = vmatmul.f32.gmra.mxu0 %v6841
      %v6843 = vpop.f32.mrf.mxu0
      %v6844 = vadd.f32 %v6699, %v6843
      %v6845 = vand.u32 %v5897, 4294901760
      %v6846 = vsub.f32 %v5897, %v6845
      %v6847 = vand.u32 %v6846, 4294901760
      %v6848 = vsub.f32 %v6846, %v6847
      %v6849 = vand.u32 %v6848, 4294901760
      %6850 = vmatmul.f32.gmra.mxu0 %v6849
      %v6851 = vpop.f32.mrf.mxu0
      %v6852 = vadd.f32 %v6703, %v6851
      %6853 = vdwg.mxu0
      %6854 = vmatpush.msra.mxu0 0.0
      %6855 = vmatpush.msra.mxu0 0.0
      %6856 = vmatpush.msra.mxu0 0.0
      %6857 = vmatpush.msra.mxu0 0.0
      %6858 = vmatpush.msra.mxu0 0.0
      %6859 = vmatpush.msra.mxu0 0.0
      %6860 = vmatpush.msra.mxu0 0.0
      %6861 = vmatpush.msra.mxu0 0.0
      %6862 = vmatpush.msra.mxu0 0.0
      %6863 = vmatpush.msra.mxu0 0.0
      %6864 = vmatpush.msra.mxu0 0.0
      %6865 = vmatpush.msra.mxu0 0.0
      %v6866 = vand.u32 %v5846, 4294901760
      %v6867 = vsub.f32 %v5846, %v6866
      %v6868 = vand.u32 %v6867, 4294901760
      %v6869 = vsub.f32 %v6867, %v6868
      %v6870 = vand.u32 %v6869, 4294901760
      %6871 = vmatpush.msra.mxu0 %v6870
      %v6872 = vand.u32 %v5845, 4294901760
      %v6873 = vsub.f32 %v5845, %v6872
      %v6874 = vand.u32 %v6873, 4294901760
      %v6875 = vsub.f32 %v6873, %v6874
      %v6876 = vand.u32 %v6875, 4294901760
      %6877 = vmatpush.msra.mxu0 %v6876
      %v6878 = vand.u32 %v5844, 4294901760
      %v6879 = vsub.f32 %v5844, %v6878
      %v6880 = vand.u32 %v6879, 4294901760
      %v6881 = vsub.f32 %v6879, %v6880
      %v6882 = vand.u32 %v6881, 4294901760
      %6883 = vmatpush.msra.mxu0 %v6882
      %v6884 = vand.u32 %v5843, 4294901760
      %v6885 = vsub.f32 %v5843, %v6884
      %v6886 = vand.u32 %v6885, 4294901760
      %v6887 = vsub.f32 %v6885, %v6886
      %v6888 = vand.u32 %v6887, 4294901760
      %6889 = vmatpush.msra.mxu0 %v6888
      %v6890 = vand.u32 %v5852, 4294901760
      %6891 = vmatmul.f32.gmra.mxu0 %v6890
      %v6892 = vpop.f32.mrf.mxu0
      %v6893 = vadd.f32 %v6732, %v6892
      %v6894 = vand.u32 %v5855, 4294901760
      %6895 = vmatmul.f32.gmra.mxu0 %v6894
      %v6896 = vpop.f32.mrf.mxu0
      %v6897 = vadd.f32 %v6740, %v6896
      %v6898 = vand.u32 %v5858, 4294901760
      %6899 = vmatmul.f32.gmra.mxu0 %v6898
      %v6900 = vpop.f32.mrf.mxu0
      %v6901 = vadd.f32 %v6748, %v6900
      %v6902 = vand.u32 %v5861, 4294901760
      %6903 = vmatmul.f32.gmra.mxu0 %v6902
      %v6904 = vpop.f32.mrf.mxu0
      %v6905 = vadd.f32 %v6756, %v6904
      %v6906 = vand.u32 %v5864, 4294901760
      %6907 = vmatmul.f32.gmra.mxu0 %v6906
      %v6908 = vpop.f32.mrf.mxu0
      %v6909 = vadd.f32 %v6764, %v6908
      %v6910 = vand.u32 %v5867, 4294901760
      %6911 = vmatmul.f32.gmra.mxu0 %v6910
      %v6912 = vpop.f32.mrf.mxu0
      %v6913 = vadd.f32 %v6772, %v6912
      %v6914 = vand.u32 %v5870, 4294901760
      %6915 = vmatmul.f32.gmra.mxu0 %v6914
      %v6916 = vpop.f32.mrf.mxu0
      %v6917 = vadd.f32 %v6780, %v6916
      %v6918 = vand.u32 %v5873, 4294901760
      %6919 = vmatmul.f32.gmra.mxu0 %v6918
      %v6920 = vpop.f32.mrf.mxu0
      %v6921 = vadd.f32 %v6788, %v6920
      %v6922 = vand.u32 %v5876, 4294901760
      %6923 = vmatmul.f32.gmra.mxu0 %v6922
      %v6924 = vpop.f32.mrf.mxu0
      %v6925 = vadd.f32 %v6796, %v6924
      %v6926 = vand.u32 %v5879, 4294901760
      %6927 = vmatmul.f32.gmra.mxu0 %v6926
      %v6928 = vpop.f32.mrf.mxu0
      %v6929 = vadd.f32 %v6804, %v6928
      %v6930 = vand.u32 %v5882, 4294901760
      %6931 = vmatmul.f32.gmra.mxu0 %v6930
      %v6932 = vpop.f32.mrf.mxu0
      %v6933 = vadd.f32 %v6812, %v6932
      %v6934 = vand.u32 %v5885, 4294901760
      %6935 = vmatmul.f32.gmra.mxu0 %v6934
      %v6936 = vpop.f32.mrf.mxu0
      %v6937 = vadd.f32 %v6820, %v6936
      %v6938 = vand.u32 %v5888, 4294901760
      %6939 = vmatmul.f32.gmra.mxu0 %v6938
      %v6940 = vpop.f32.mrf.mxu0
      %v6941 = vadd.f32 %v6828, %v6940
      %v6942 = vand.u32 %v5891, 4294901760
      %6943 = vmatmul.f32.gmra.mxu0 %v6942
      %v6944 = vpop.f32.mrf.mxu0
      %v6945 = vadd.f32 %v6836, %v6944
      %v6946 = vand.u32 %v5894, 4294901760
      %6947 = vmatmul.f32.gmra.mxu0 %v6946
      %v6948 = vpop.f32.mrf.mxu0
      %v6949 = vadd.f32 %v6844, %v6948
      %v6950 = vand.u32 %v5897, 4294901760
      %6951 = vmatmul.f32.gmra.mxu0 %v6950
      %v6952 = vpop.f32.mrf.mxu0
      %v6953 = vadd.f32 %v6852, %v6952
      %6954 = vdwg.mxu0
      %6955 = vmatpush.msra.mxu0 0.0
      %6956 = vmatpush.msra.mxu0 0.0
      %6957 = vmatpush.msra.mxu0 0.0
      %6958 = vmatpush.msra.mxu0 0.0
      %6959 = vmatpush.msra.mxu0 0.0
      %6960 = vmatpush.msra.mxu0 0.0
      %6961 = vmatpush.msra.mxu0 0.0
      %6962 = vmatpush.msra.mxu0 0.0
      %6963 = vmatpush.msra.mxu0 0.0
      %6964 = vmatpush.msra.mxu0 0.0
      %6965 = vmatpush.msra.mxu0 0.0
      %6966 = vmatpush.msra.mxu0 0.0
      %v6967 = vand.u32 %v5846, 4294901760
      %v6968 = vsub.f32 %v5846, %v6967
      %6969 = vmatpush.msra.mxu0 %v6968
      %v6970 = vand.u32 %v5845, 4294901760
      %v6971 = vsub.f32 %v5845, %v6970
      %6972 = vmatpush.msra.mxu0 %v6971
      %v6973 = vand.u32 %v5844, 4294901760
      %v6974 = vsub.f32 %v5844, %v6973
      %6975 = vmatpush.msra.mxu0 %v6974
      %v6976 = vand.u32 %v5843, 4294901760
      %v6977 = vsub.f32 %v5843, %v6976
      %6978 = vmatpush.msra.mxu0 %v6977
      %v6979 = vand.u32 %v5852, 4294901760
      %v6980 = vsub.f32 %v5852, %v6979
      %6981 = vmatmul.f32.gmra.mxu0 %v6980
      %v6982 = vpop.f32.mrf.mxu0
      %v6983 = vadd.f32 %v6893, %v6982
      %v6984 = vand.u32 %v5855, 4294901760
      %v6985 = vsub.f32 %v5855, %v6984
      %6986 = vmatmul.f32.gmra.mxu0 %v6985
      %v6987 = vpop.f32.mrf.mxu0
      %v6988 = vadd.f32 %v6897, %v6987
      %v6989 = vand.u32 %v5858, 4294901760
      %v6990 = vsub.f32 %v5858, %v6989
      %6991 = vmatmul.f32.gmra.mxu0 %v6990
      %v6992 = vpop.f32.mrf.mxu0
      %v6993 = vadd.f32 %v6901, %v6992
      %v6994 = vand.u32 %v5861, 4294901760
      %v6995 = vsub.f32 %v5861, %v6994
      %6996 = vmatmul.f32.gmra.mxu0 %v6995
      %v6997 = vpop.f32.mrf.mxu0
      %v6998 = vadd.f32 %v6905, %v6997
      %v6999 = vand.u32 %v5864, 4294901760
      %v7000 = vsub.f32 %v5864, %v6999
      %7001 = vmatmul.f32.gmra.mxu0 %v7000
      %v7002 = vpop.f32.mrf.mxu0
      %v7003 = vadd.f32 %v6909, %v7002
      %v7004 = vand.u32 %v5867, 4294901760
      %v7005 = vsub.f32 %v5867, %v7004
      %7006 = vmatmul.f32.gmra.mxu0 %v7005
      %v7007 = vpop.f32.mrf.mxu0
      %v7008 = vadd.f32 %v6913, %v7007
      %v7009 = vand.u32 %v5870, 4294901760
      %v7010 = vsub.f32 %v5870, %v7009
      %7011 = vmatmul.f32.gmra.mxu0 %v7010
      %v7012 = vpop.f32.mrf.mxu0
      %v7013 = vadd.f32 %v6917, %v7012
      %v7014 = vand.u32 %v5873, 4294901760
      %v7015 = vsub.f32 %v5873, %v7014
      %7016 = vmatmul.f32.gmra.mxu0 %v7015
      %v7017 = vpop.f32.mrf.mxu0
      %v7018 = vadd.f32 %v6921, %v7017
      %v7019 = vand.u32 %v5876, 4294901760
      %v7020 = vsub.f32 %v5876, %v7019
      %7021 = vmatmul.f32.gmra.mxu0 %v7020
      %v7022 = vpop.f32.mrf.mxu0
      %v7023 = vadd.f32 %v6925, %v7022
      %v7024 = vand.u32 %v5879, 4294901760
      %v7025 = vsub.f32 %v5879, %v7024
      %7026 = vmatmul.f32.gmra.mxu0 %v7025
      %v7027 = vpop.f32.mrf.mxu0
      %v7028 = vadd.f32 %v6929, %v7027
      %v7029 = vand.u32 %v5882, 4294901760
      %v7030 = vsub.f32 %v5882, %v7029
      %7031 = vmatmul.f32.gmra.mxu0 %v7030
      %v7032 = vpop.f32.mrf.mxu0
      %v7033 = vadd.f32 %v6933, %v7032
      %v7034 = vand.u32 %v5885, 4294901760
      %v7035 = vsub.f32 %v5885, %v7034
      %7036 = vmatmul.f32.gmra.mxu0 %v7035
      %v7037 = vpop.f32.mrf.mxu0
      %v7038 = vadd.f32 %v6937, %v7037
      %v7039 = vand.u32 %v5888, 4294901760
      %v7040 = vsub.f32 %v5888, %v7039
      %7041 = vmatmul.f32.gmra.mxu0 %v7040
      %v7042 = vpop.f32.mrf.mxu0
      %v7043 = vadd.f32 %v6941, %v7042
      %v7044 = vand.u32 %v5891, 4294901760
      %v7045 = vsub.f32 %v5891, %v7044
      %7046 = vmatmul.f32.gmra.mxu0 %v7045
      %v7047 = vpop.f32.mrf.mxu0
      %v7048 = vadd.f32 %v6945, %v7047
      %v7049 = vand.u32 %v5894, 4294901760
      %v7050 = vsub.f32 %v5894, %v7049
      %7051 = vmatmul.f32.gmra.mxu0 %v7050
      %v7052 = vpop.f32.mrf.mxu0
      %v7053 = vadd.f32 %v6949, %v7052
      %v7054 = vand.u32 %v5897, 4294901760
      %v7055 = vsub.f32 %v5897, %v7054
      %7056 = vmatmul.f32.gmra.mxu0 %v7055
      %v7057 = vpop.f32.mrf.mxu0
      %v7058 = vadd.f32 %v6953, %v7057
      %7059 = vdwg.mxu0
      %7060 = vmatpush.msra.mxu0 0.0
      %7061 = vmatpush.msra.mxu0 0.0
      %7062 = vmatpush.msra.mxu0 0.0
      %7063 = vmatpush.msra.mxu0 0.0
      %7064 = vmatpush.msra.mxu0 0.0
      %7065 = vmatpush.msra.mxu0 0.0
      %7066 = vmatpush.msra.mxu0 0.0
      %7067 = vmatpush.msra.mxu0 0.0
      %7068 = vmatpush.msra.mxu0 0.0
      %7069 = vmatpush.msra.mxu0 0.0
      %7070 = vmatpush.msra.mxu0 0.0
      %7071 = vmatpush.msra.mxu0 0.0
      %v7072 = vand.u32 %v5846, 4294901760
      %7073 = vmatpush.msra.mxu0 %v7072
      %v7074 = vand.u32 %v5845, 4294901760
      %7075 = vmatpush.msra.mxu0 %v7074
      %v7076 = vand.u32 %v5844, 4294901760
      %7077 = vmatpush.msra.mxu0 %v7076
      %v7078 = vand.u32 %v5843, 4294901760
      %7079 = vmatpush.msra.mxu0 %v7078
      %v7080 = vand.u32 %v5852, 4294901760
      %v7081 = vsub.f32 %v5852, %v7080
      %v7082 = vand.u32 %v7081, 4294901760
      %7083 = vmatmul.f32.gmra.mxu0 %v7082
      %v7084 = vpop.f32.mrf.mxu0
      %v7085 = vadd.f32 %v6983, %v7084
      %v7086 = vand.u32 %v5855, 4294901760
      %v7087 = vsub.f32 %v5855, %v7086
      %v7088 = vand.u32 %v7087, 4294901760
      %7089 = vmatmul.f32.gmra.mxu0 %v7088
      %v7090 = vpop.f32.mrf.mxu0
      %v7091 = vadd.f32 %v6988, %v7090
      %v7092 = vand.u32 %v5858, 4294901760
      %v7093 = vsub.f32 %v5858, %v7092
      %v7094 = vand.u32 %v7093, 4294901760
      %7095 = vmatmul.f32.gmra.mxu0 %v7094
      %v7096 = vpop.f32.mrf.mxu0
      %v7097 = vadd.f32 %v6993, %v7096
      %v7098 = vand.u32 %v5861, 4294901760
      %v7099 = vsub.f32 %v5861, %v7098
      %v7100 = vand.u32 %v7099, 4294901760
      %7101 = vmatmul.f32.gmra.mxu0 %v7100
      %v7102 = vpop.f32.mrf.mxu0
      %v7103 = vadd.f32 %v6998, %v7102
      %v7104 = vand.u32 %v5864, 4294901760
      %v7105 = vsub.f32 %v5864, %v7104
      %v7106 = vand.u32 %v7105, 4294901760
      %7107 = vmatmul.f32.gmra.mxu0 %v7106
      %v7108 = vpop.f32.mrf.mxu0
      %v7109 = vadd.f32 %v7003, %v7108
      %v7110 = vand.u32 %v5867, 4294901760
      %v7111 = vsub.f32 %v5867, %v7110
      %v7112 = vand.u32 %v7111, 4294901760
      %7113 = vmatmul.f32.gmra.mxu0 %v7112
      %v7114 = vpop.f32.mrf.mxu0
      %v7115 = vadd.f32 %v7008, %v7114
      %v7116 = vand.u32 %v5870, 4294901760
      %v7117 = vsub.f32 %v5870, %v7116
      %v7118 = vand.u32 %v7117, 4294901760
      %7119 = vmatmul.f32.gmra.mxu0 %v7118
      %v7120 = vpop.f32.mrf.mxu0
      %v7121 = vadd.f32 %v7013, %v7120
      %v7122 = vand.u32 %v5873, 4294901760
      %v7123 = vsub.f32 %v5873, %v7122
      %v7124 = vand.u32 %v7123, 4294901760
      %7125 = vmatmul.f32.gmra.mxu0 %v7124
      %v7126 = vpop.f32.mrf.mxu0
      %v7127 = vadd.f32 %v7018, %v7126
      %v7128 = vand.u32 %v5876, 4294901760
      %v7129 = vsub.f32 %v5876, %v7128
      %v7130 = vand.u32 %v7129, 4294901760
      %7131 = vmatmul.f32.gmra.mxu0 %v7130
      %v7132 = vpop.f32.mrf.mxu0
      %v7133 = vadd.f32 %v7023, %v7132
      %v7134 = vand.u32 %v5879, 4294901760
      %v7135 = vsub.f32 %v5879, %v7134
      %v7136 = vand.u32 %v7135, 4294901760
      %7137 = vmatmul.f32.gmra.mxu0 %v7136
      %v7138 = vpop.f32.mrf.mxu0
      %v7139 = vadd.f32 %v7028, %v7138
      %v7140 = vand.u32 %v5882, 4294901760
      %v7141 = vsub.f32 %v5882, %v7140
      %v7142 = vand.u32 %v7141, 4294901760
      %7143 = vmatmul.f32.gmra.mxu0 %v7142
      %v7144 = vpop.f32.mrf.mxu0
      %v7145 = vadd.f32 %v7033, %v7144
      %v7146 = vand.u32 %v5885, 4294901760
      %v7147 = vsub.f32 %v5885, %v7146
      %v7148 = vand.u32 %v7147, 4294901760
      %7149 = vmatmul.f32.gmra.mxu0 %v7148
      %v7150 = vpop.f32.mrf.mxu0
      %v7151 = vadd.f32 %v7038, %v7150
      %v7152 = vand.u32 %v5888, 4294901760
      %v7153 = vsub.f32 %v5888, %v7152
      %v7154 = vand.u32 %v7153, 4294901760
      %7155 = vmatmul.f32.gmra.mxu0 %v7154
      %v7156 = vpop.f32.mrf.mxu0
      %v7157 = vadd.f32 %v7043, %v7156
      %v7158 = vand.u32 %v5891, 4294901760
      %v7159 = vsub.f32 %v5891, %v7158
      %v7160 = vand.u32 %v7159, 4294901760
      %7161 = vmatmul.f32.gmra.mxu0 %v7160
      %v7162 = vpop.f32.mrf.mxu0
      %v7163 = vadd.f32 %v7048, %v7162
      %v7164 = vand.u32 %v5894, 4294901760
      %v7165 = vsub.f32 %v5894, %v7164
      %v7166 = vand.u32 %v7165, 4294901760
      %7167 = vmatmul.f32.gmra.mxu0 %v7166
      %v7168 = vpop.f32.mrf.mxu0
      %v7169 = vadd.f32 %v7053, %v7168
      %v7170 = vand.u32 %v5897, 4294901760
      %v7171 = vsub.f32 %v5897, %v7170
      %v7172 = vand.u32 %v7171, 4294901760
      %7173 = vmatmul.f32.gmra.mxu0 %v7172
      %v7174 = vpop.f32.mrf.mxu0
      %v7175 = vadd.f32 %v7058, %v7174
      %7176 = vdwg.mxu0
      %7177 = vmatpush.msra.mxu0 0.0
      %7178 = vmatpush.msra.mxu0 0.0
      %7179 = vmatpush.msra.mxu0 0.0
      %7180 = vmatpush.msra.mxu0 0.0
      %7181 = vmatpush.msra.mxu0 0.0
      %7182 = vmatpush.msra.mxu0 0.0
      %7183 = vmatpush.msra.mxu0 0.0
      %7184 = vmatpush.msra.mxu0 0.0
      %7185 = vmatpush.msra.mxu0 0.0
      %7186 = vmatpush.msra.mxu0 0.0
      %7187 = vmatpush.msra.mxu0 0.0
      %7188 = vmatpush.msra.mxu0 0.0
      %v7189 = vand.u32 %v5846, 4294901760
      %v7190 = vsub.f32 %v5846, %v7189
      %v7191 = vand.u32 %v7190, 4294901760
      %7192 = vmatpush.msra.mxu0 %v7191
      %v7193 = vand.u32 %v5845, 4294901760
      %v7194 = vsub.f32 %v5845, %v7193
      %v7195 = vand.u32 %v7194, 4294901760
      %7196 = vmatpush.msra.mxu0 %v7195
      %v7197 = vand.u32 %v5844, 4294901760
      %v7198 = vsub.f32 %v5844, %v7197
      %v7199 = vand.u32 %v7198, 4294901760
      %7200 = vmatpush.msra.mxu0 %v7199
      %v7201 = vand.u32 %v5843, 4294901760
      %v7202 = vsub.f32 %v5843, %v7201
      %v7203 = vand.u32 %v7202, 4294901760
      %7204 = vmatpush.msra.mxu0 %v7203
      %v7205 = vand.u32 %v5852, 4294901760
      %7206 = vmatmul.f32.gmra.mxu0 %v7205
      %v7207 = vpop.f32.mrf.mxu0
      %v7208 = vadd.f32 %v7085, %v7207
      %v7209 = vand.u32 %v5855, 4294901760
      %7210 = vmatmul.f32.gmra.mxu0 %v7209
      %v7211 = vpop.f32.mrf.mxu0
      %v7212 = vadd.f32 %v7091, %v7211
      %v7213 = vand.u32 %v5858, 4294901760
      %7214 = vmatmul.f32.gmra.mxu0 %v7213
      %v7215 = vpop.f32.mrf.mxu0
      %v7216 = vadd.f32 %v7097, %v7215
      %v7217 = vand.u32 %v5861, 4294901760
      %7218 = vmatmul.f32.gmra.mxu0 %v7217
      %v7219 = vpop.f32.mrf.mxu0
      %v7220 = vadd.f32 %v7103, %v7219
      %v7221 = vand.u32 %v5864, 4294901760
      %7222 = vmatmul.f32.gmra.mxu0 %v7221
      %v7223 = vpop.f32.mrf.mxu0
      %v7224 = vadd.f32 %v7109, %v7223
      %v7225 = vand.u32 %v5867, 4294901760
      %7226 = vmatmul.f32.gmra.mxu0 %v7225
      %v7227 = vpop.f32.mrf.mxu0
      %v7228 = vadd.f32 %v7115, %v7227
      %v7229 = vand.u32 %v5870, 4294901760
      %7230 = vmatmul.f32.gmra.mxu0 %v7229
      %v7231 = vpop.f32.mrf.mxu0
      %v7232 = vadd.f32 %v7121, %v7231
      %v7233 = vand.u32 %v5873, 4294901760
      %7234 = vmatmul.f32.gmra.mxu0 %v7233
      %v7235 = vpop.f32.mrf.mxu0
      %v7236 = vadd.f32 %v7127, %v7235
      %v7237 = vand.u32 %v5876, 4294901760
      %7238 = vmatmul.f32.gmra.mxu0 %v7237
      %v7239 = vpop.f32.mrf.mxu0
      %v7240 = vadd.f32 %v7133, %v7239
      %v7241 = vand.u32 %v5879, 4294901760
      %7242 = vmatmul.f32.gmra.mxu0 %v7241
      %v7243 = vpop.f32.mrf.mxu0
      %v7244 = vadd.f32 %v7139, %v7243
      %v7245 = vand.u32 %v5882, 4294901760
      %7246 = vmatmul.f32.gmra.mxu0 %v7245
      %v7247 = vpop.f32.mrf.mxu0
      %v7248 = vadd.f32 %v7145, %v7247
      %v7249 = vand.u32 %v5885, 4294901760
      %7250 = vmatmul.f32.gmra.mxu0 %v7249
      %v7251 = vpop.f32.mrf.mxu0
      %v7252 = vadd.f32 %v7151, %v7251
      %v7253 = vand.u32 %v5888, 4294901760
      %7254 = vmatmul.f32.gmra.mxu0 %v7253
      %v7255 = vpop.f32.mrf.mxu0
      %v7256 = vadd.f32 %v7157, %v7255
      %v7257 = vand.u32 %v5891, 4294901760
      %7258 = vmatmul.f32.gmra.mxu0 %v7257
      %v7259 = vpop.f32.mrf.mxu0
      %v7260 = vadd.f32 %v7163, %v7259
      %v7261 = vand.u32 %v5894, 4294901760
      %7262 = vmatmul.f32.gmra.mxu0 %v7261
      %v7263 = vpop.f32.mrf.mxu0
      %v7264 = vadd.f32 %v7169, %v7263
      %v7265 = vand.u32 %v5897, 4294901760
      %7266 = vmatmul.f32.gmra.mxu0 %v7265
      %v7267 = vpop.f32.mrf.mxu0
      %v7268 = vadd.f32 %v7175, %v7267
      %7269 = vdwg.mxu0
      %7270 = vmatpush.msra.mxu0 0.0
      %7271 = vmatpush.msra.mxu0 0.0
      %7272 = vmatpush.msra.mxu0 0.0
      %7273 = vmatpush.msra.mxu0 0.0
      %7274 = vmatpush.msra.mxu0 0.0
      %7275 = vmatpush.msra.mxu0 0.0
      %7276 = vmatpush.msra.mxu0 0.0
      %7277 = vmatpush.msra.mxu0 0.0
      %7278 = vmatpush.msra.mxu0 0.0
      %7279 = vmatpush.msra.mxu0 0.0
      %7280 = vmatpush.msra.mxu0 0.0
      %7281 = vmatpush.msra.mxu0 0.0
      %v7282 = vand.u32 %v5846, 4294901760
      %7283 = vmatpush.msra.mxu0 %v7282
      %v7284 = vand.u32 %v5845, 4294901760
      %7285 = vmatpush.msra.mxu0 %v7284
      %v7286 = vand.u32 %v5844, 4294901760
      %7287 = vmatpush.msra.mxu0 %v7286
      %v7288 = vand.u32 %v5843, 4294901760
      %7289 = vmatpush.msra.mxu0 %v7288
      %v7290 = vand.u32 %v5852, 4294901760
      %7291 = vmatmul.f32.gmra.mxu0 %v7290
      %v7292 = vpop.f32.mrf.mxu0
      %v7293 = vadd.f32 %v7208, %v7292
      %v7294 = vand.u32 %v5855, 4294901760
      %7295 = vmatmul.f32.gmra.mxu0 %v7294
      %v7296 = vpop.f32.mrf.mxu0
      %v7297 = vadd.f32 %v7212, %v7296
      %v7298 = vand.u32 %v5858, 4294901760
      %7299 = vmatmul.f32.gmra.mxu0 %v7298
      %v7300 = vpop.f32.mrf.mxu0
      %v7301 = vadd.f32 %v7216, %v7300
      %v7302 = vand.u32 %v5861, 4294901760
      %7303 = vmatmul.f32.gmra.mxu0 %v7302
      %v7304 = vpop.f32.mrf.mxu0
      %v7305 = vadd.f32 %v7220, %v7304
      %v7306 = vand.u32 %v5864, 4294901760
      %7307 = vmatmul.f32.gmra.mxu0 %v7306
      %v7308 = vpop.f32.mrf.mxu0
      %v7309 = vadd.f32 %v7224, %v7308
      %v7310 = vand.u32 %v5867, 4294901760
      %7311 = vmatmul.f32.gmra.mxu0 %v7310
      %v7312 = vpop.f32.mrf.mxu0
      %v7313 = vadd.f32 %v7228, %v7312
      %v7314 = vand.u32 %v5870, 4294901760
      %7315 = vmatmul.f32.gmra.mxu0 %v7314
      %v7316 = vpop.f32.mrf.mxu0
      %v7317 = vadd.f32 %v7232, %v7316
      %v7318 = vand.u32 %v5873, 4294901760
      %7319 = vmatmul.f32.gmra.mxu0 %v7318
      %v7320 = vpop.f32.mrf.mxu0
      %v7321 = vadd.f32 %v7236, %v7320
      %v7322 = vand.u32 %v5876, 4294901760
      %7323 = vmatmul.f32.gmra.mxu0 %v7322
      %v7324 = vpop.f32.mrf.mxu0
      %v7325 = vadd.f32 %v7240, %v7324
      %v7326 = vand.u32 %v5879, 4294901760
      %7327 = vmatmul.f32.gmra.mxu0 %v7326
      %v7328 = vpop.f32.mrf.mxu0
      %v7329 = vadd.f32 %v7244, %v7328
      %v7330 = vand.u32 %v5882, 4294901760
      %7331 = vmatmul.f32.gmra.mxu0 %v7330
      %v7332 = vpop.f32.mrf.mxu0
      %v7333 = vadd.f32 %v7248, %v7332
      %v7334 = vand.u32 %v5885, 4294901760
      %7335 = vmatmul.f32.gmra.mxu0 %v7334
      %v7336 = vpop.f32.mrf.mxu0
      %v7337 = vadd.f32 %v7252, %v7336
      %v7338 = vand.u32 %v5888, 4294901760
      %7339 = vmatmul.f32.gmra.mxu0 %v7338
      %v7340 = vpop.f32.mrf.mxu0
      %v7341 = vadd.f32 %v7256, %v7340
      %v7342 = vand.u32 %v5891, 4294901760
      %7343 = vmatmul.f32.gmra.mxu0 %v7342
      %v7344 = vpop.f32.mrf.mxu0
      %v7345 = vadd.f32 %v7260, %v7344
      %v7346 = vand.u32 %v5894, 4294901760
      %7347 = vmatmul.f32.gmra.mxu0 %v7346
      %v7348 = vpop.f32.mrf.mxu0
      %v7349 = vadd.f32 %v7264, %v7348
      %v7350 = vand.u32 %v5897, 4294901760
      %7351 = vmatmul.f32.gmra.mxu0 %v7350
      %v7352 = vpop.f32.mrf.mxu0
      %v7353 = vadd.f32 %v7268, %v7352
      %7354 = vdwg.mxu0
      %v7355 = vsel %vm793, %v7293, 0.0
      %7356 = vadd.xlane.f32.xlu0 %v7355
      %v7357 = vpop.xlane.xlu0 %7356
      %v7358 = vsel %vm793, %v7297, 0.0
      %7359 = vadd.xlane.f32.xlu0 %v7358
      %v7360 = vpop.xlane.xlu0 %7359
      %v7361 = vsel %vm793, %v7301, 0.0
      %7362 = vadd.xlane.f32.xlu0 %v7361
      %v7363 = vpop.xlane.xlu0 %7362
      %v7364 = vsel %vm793, %v7305, 0.0
      %7365 = vadd.xlane.f32.xlu0 %v7364
      %v7366 = vpop.xlane.xlu0 %7365
      %v7367 = vsel %vm793, %v7309, 0.0
      %7368 = vadd.xlane.f32.xlu0 %v7367
      %v7369 = vpop.xlane.xlu0 %7368
      %v7370 = vsel %vm793, %v7313, 0.0
      %7371 = vadd.xlane.f32.xlu0 %v7370
      %v7372 = vpop.xlane.xlu0 %7371
      %v7373 = vsel %vm793, %v7317, 0.0
      %7374 = vadd.xlane.f32.xlu0 %v7373
      %v7375 = vpop.xlane.xlu0 %7374
      %v7376 = vsel %vm793, %v7321, 0.0
      %7377 = vadd.xlane.f32.xlu0 %v7376
      %v7378 = vpop.xlane.xlu0 %7377
      %v7379 = vsel %vm793, %v7325, 0.0
      %7380 = vadd.xlane.f32.xlu0 %v7379
      %v7381 = vpop.xlane.xlu0 %7380
      %v7382 = vsel %vm793, %v7329, 0.0
      %7383 = vadd.xlane.f32.xlu0 %v7382
      %v7384 = vpop.xlane.xlu0 %7383
      %v7385 = vsel %vm793, %v7333, 0.0
      %7386 = vadd.xlane.f32.xlu0 %v7385
      %v7387 = vpop.xlane.xlu0 %7386
      %v7388 = vsel %vm793, %v7337, 0.0
      %7389 = vadd.xlane.f32.xlu0 %v7388
      %v7390 = vpop.xlane.xlu0 %7389
      %v7391 = vsel %vm793, %v7341, 0.0
      %7392 = vadd.xlane.f32.xlu0 %v7391
      %v7393 = vpop.xlane.xlu0 %7392
      %v7394 = vsel %vm793, %v7345, 0.0
      %7395 = vadd.xlane.f32.xlu0 %v7394
      %v7396 = vpop.xlane.xlu0 %7395
      %v7397 = vsel %vm793, %v7349, 0.0
      %7398 = vadd.xlane.f32.xlu0 %v7397
      %v7399 = vpop.xlane.xlu0 %7398
      %v7400 = vsel %vm793, %v7353, 0.0
      %7401 = vadd.xlane.f32.xlu0 %v7400
      %v7402 = vpop.xlane.xlu0 %7401
      %v7403 = vrcp.pop 32.0
      %v7404 = vmul.f32 32.0, %v7403
      %v7405 = vsub.f32 1.0, %v7404
      %v7406 = vmul.f32 %v7403, %v7405
      %v7407 = vadd.f32 %v7403, %v7406
      %vm7408 = vweird.f32 %v7403
      %v7409 = vsel %vm7408, %v7403, %v7407
      %v7410 = vmul.f32 %v7357, %v7409
      %v7411 = vmul.f32 %v7360, %v7409
      %v7412 = vmul.f32 %v7363, %v7409
      %v7413 = vmul.f32 %v7366, %v7409
      %v7414 = vmul.f32 %v7369, %v7409
      %v7415 = vmul.f32 %v7372, %v7409
      %v7416 = vmul.f32 %v7375, %v7409
      %v7417 = vmul.f32 %v7378, %v7409
      %v7418 = vmul.f32 %v7381, %v7409
      %v7419 = vmul.f32 %v7384, %v7409
      %v7420 = vmul.f32 %v7387, %v7409
      %v7421 = vmul.f32 %v7390, %v7409
      %v7422 = vmul.f32 %v7393, %v7409
      %v7423 = vmul.f32 %v7396, %v7409
      %v7424 = vmul.f32 %v7399, %v7409
      %v7425 = vmul.f32 %v7402, %v7409
      %v7426 = vsub.f32 %v7293, %v7410
      %v7427 = vsub.f32 %v7297, %v7411
      %v7428 = vsub.f32 %v7301, %v7412
      %v7429 = vsub.f32 %v7305, %v7413
      %v7430 = vsub.f32 %v7309, %v7414
      %v7431 = vsub.f32 %v7313, %v7415
      %v7432 = vsub.f32 %v7317, %v7416
      %v7433 = vsub.f32 %v7321, %v7417
      %v7434 = vsub.f32 %v7325, %v7418
      %v7435 = vsub.f32 %v7329, %v7419
      %v7436 = vsub.f32 %v7333, %v7420
      %v7437 = vsub.f32 %v7337, %v7421
      %v7438 = vsub.f32 %v7341, %v7422
      %v7439 = vsub.f32 %v7345, %v7423
      %v7440 = vsub.f32 %v7349, %v7424
      %v7441 = vsub.f32 %v7353, %v7425
      %v7442 = vmul.f32 %v7426, %v7426
      %v7443 = vmul.f32 %v7427, %v7427
      %v7444 = vmul.f32 %v7428, %v7428
      %v7445 = vmul.f32 %v7429, %v7429
      %v7446 = vmul.f32 %v7430, %v7430
      %v7447 = vmul.f32 %v7431, %v7431
      %v7448 = vmul.f32 %v7432, %v7432
      %v7449 = vmul.f32 %v7433, %v7433
      %v7450 = vmul.f32 %v7434, %v7434
      %v7451 = vmul.f32 %v7435, %v7435
      %v7452 = vmul.f32 %v7436, %v7436
      %v7453 = vmul.f32 %v7437, %v7437
      %v7454 = vmul.f32 %v7438, %v7438
      %v7455 = vmul.f32 %v7439, %v7439
      %v7456 = vmul.f32 %v7440, %v7440
      %v7457 = vmul.f32 %v7441, %v7441
      %v7458 = vsel %vm793, %v7442, 0.0
      %7459 = vadd.xlane.f32.xlu0 %v7458
      %v7460 = vpop.xlane.xlu0 %7459
      %v7461 = vsel %vm793, %v7443, 0.0
      %7462 = vadd.xlane.f32.xlu0 %v7461
      %v7463 = vpop.xlane.xlu0 %7462
      %v7464 = vsel %vm793, %v7444, 0.0
      %7465 = vadd.xlane.f32.xlu0 %v7464
      %v7466 = vpop.xlane.xlu0 %7465
      %v7467 = vsel %vm793, %v7445, 0.0
      %7468 = vadd.xlane.f32.xlu0 %v7467
      %v7469 = vpop.xlane.xlu0 %7468
      %v7470 = vsel %vm793, %v7446, 0.0
      %7471 = vadd.xlane.f32.xlu0 %v7470
      %v7472 = vpop.xlane.xlu0 %7471
      %v7473 = vsel %vm793, %v7447, 0.0
      %7474 = vadd.xlane.f32.xlu0 %v7473
      %v7475 = vpop.xlane.xlu0 %7474
      %v7476 = vsel %vm793, %v7448, 0.0
      %7477 = vadd.xlane.f32.xlu0 %v7476
      %v7478 = vpop.xlane.xlu0 %7477
      %v7479 = vsel %vm793, %v7449, 0.0
      %7480 = vadd.xlane.f32.xlu0 %v7479
      %v7481 = vpop.xlane.xlu0 %7480
      %v7482 = vsel %vm793, %v7450, 0.0
      %7483 = vadd.xlane.f32.xlu0 %v7482
      %v7484 = vpop.xlane.xlu0 %7483
      %v7485 = vsel %vm793, %v7451, 0.0
      %7486 = vadd.xlane.f32.xlu0 %v7485
      %v7487 = vpop.xlane.xlu0 %7486
      %v7488 = vsel %vm793, %v7452, 0.0
      %7489 = vadd.xlane.f32.xlu0 %v7488
      %v7490 = vpop.xlane.xlu0 %7489
      %v7491 = vsel %vm793, %v7453, 0.0
      %7492 = vadd.xlane.f32.xlu0 %v7491
      %v7493 = vpop.xlane.xlu0 %7492
      %v7494 = vsel %vm793, %v7454, 0.0
      %7495 = vadd.xlane.f32.xlu0 %v7494
      %v7496 = vpop.xlane.xlu0 %7495
      %v7497 = vsel %vm793, %v7455, 0.0
      %7498 = vadd.xlane.f32.xlu0 %v7497
      %v7499 = vpop.xlane.xlu0 %7498
      %v7500 = vsel %vm793, %v7456, 0.0
      %7501 = vadd.xlane.f32.xlu0 %v7500
      %v7502 = vpop.xlane.xlu0 %7501
      %v7503 = vsel %vm793, %v7457, 0.0
      %7504 = vadd.xlane.f32.xlu0 %v7503
      %v7505 = vpop.xlane.xlu0 %7504
      %v7506 = vmul.f32 %v7460, %v7409
      %v7507 = vmul.f32 %v7463, %v7409
      %v7508 = vmul.f32 %v7466, %v7409
      %v7509 = vmul.f32 %v7469, %v7409
      %v7510 = vmul.f32 %v7472, %v7409
      %v7511 = vmul.f32 %v7475, %v7409
      %v7512 = vmul.f32 %v7478, %v7409
      %v7513 = vmul.f32 %v7481, %v7409
      %v7514 = vmul.f32 %v7484, %v7409
      %v7515 = vmul.f32 %v7487, %v7409
      %v7516 = vmul.f32 %v7490, %v7409
      %v7517 = vmul.f32 %v7493, %v7409
      %v7518 = vmul.f32 %v7496, %v7409
      %v7519 = vmul.f32 %v7499, %v7409
      %v7520 = vmul.f32 %v7502, %v7409
      %v7521 = vmul.f32 %v7505, %v7409
      %v7522 = vadd.f32 %v7506, 1e-05
      %v7523 = vadd.f32 %v7507, 1e-05
      %v7524 = vadd.f32 %v7508, 1e-05
      %v7525 = vadd.f32 %v7509, 1e-05
      %v7526 = vadd.f32 %v7510, 1e-05
      %v7527 = vadd.f32 %v7511, 1e-05
      %v7528 = vadd.f32 %v7512, 1e-05
      %v7529 = vadd.f32 %v7513, 1e-05
      %v7530 = vadd.f32 %v7514, 1e-05
      %v7531 = vadd.f32 %v7515, 1e-05
      %v7532 = vadd.f32 %v7516, 1e-05
      %v7533 = vadd.f32 %v7517, 1e-05
      %v7534 = vadd.f32 %v7518, 1e-05
      %v7535 = vadd.f32 %v7519, 1e-05
      %v7536 = vadd.f32 %v7520, 1e-05
      %v7537 = vadd.f32 %v7521, 1e-05
      %v7538 = vrsqrt.pop %v7522
      %v7539 = vmul.f32 %v7538, %v7522
      %v7540 = vmul.f32 %v7539, %v7538
      %v7541 = vmul.f32 0.5, %v7540
      %v7542 = vsub.f32 1.5, %v7541
      %v7543 = vmul.f32 %v7538, %v7542
      %vm7544 = vweird.f32 %v7522
      %vm7545 = vweird.f32 %v7538
      %vm7546 = vmor %vm7544, %vm7545
      %v7547 = vsel %vm7546, %v7538, %v7543
      %v7548 = vrsqrt.pop %v7523
      %v7549 = vmul.f32 %v7548, %v7523
      %v7550 = vmul.f32 %v7549, %v7548
      %v7551 = vmul.f32 0.5, %v7550
      %v7552 = vsub.f32 1.5, %v7551
      %v7553 = vmul.f32 %v7548, %v7552
      %vm7554 = vweird.f32 %v7523
      %vm7555 = vweird.f32 %v7548
      %vm7556 = vmor %vm7554, %vm7555
      %v7557 = vsel %vm7556, %v7548, %v7553
      %v7558 = vrsqrt.pop %v7524
      %v7559 = vmul.f32 %v7558, %v7524
      %v7560 = vmul.f32 %v7559, %v7558
      %v7561 = vmul.f32 0.5, %v7560
      %v7562 = vsub.f32 1.5, %v7561
      %v7563 = vmul.f32 %v7558, %v7562
      %vm7564 = vweird.f32 %v7524
      %vm7565 = vweird.f32 %v7558
      %vm7566 = vmor %vm7564, %vm7565
      %v7567 = vsel %vm7566, %v7558, %v7563
      %v7568 = vrsqrt.pop %v7525
      %v7569 = vmul.f32 %v7568, %v7525
      %v7570 = vmul.f32 %v7569, %v7568
      %v7571 = vmul.f32 0.5, %v7570
      %v7572 = vsub.f32 1.5, %v7571
      %v7573 = vmul.f32 %v7568, %v7572
      %vm7574 = vweird.f32 %v7525
      %vm7575 = vweird.f32 %v7568
      %vm7576 = vmor %vm7574, %vm7575
      %v7577 = vsel %vm7576, %v7568, %v7573
      %v7578 = vrsqrt.pop %v7526
      %v7579 = vmul.f32 %v7578, %v7526
      %v7580 = vmul.f32 %v7579, %v7578
      %v7581 = vmul.f32 0.5, %v7580
      %v7582 = vsub.f32 1.5, %v7581
      %v7583 = vmul.f32 %v7578, %v7582
      %vm7584 = vweird.f32 %v7526
      %vm7585 = vweird.f32 %v7578
      %vm7586 = vmor %vm7584, %vm7585
      %v7587 = vsel %vm7586, %v7578, %v7583
      %v7588 = vrsqrt.pop %v7527
      %v7589 = vmul.f32 %v7588, %v7527
      %v7590 = vmul.f32 %v7589, %v7588
      %v7591 = vmul.f32 0.5, %v7590
      %v7592 = vsub.f32 1.5, %v7591
      %v7593 = vmul.f32 %v7588, %v7592
      %vm7594 = vweird.f32 %v7527
      %vm7595 = vweird.f32 %v7588
      %vm7596 = vmor %vm7594, %vm7595
      %v7597 = vsel %vm7596, %v7588, %v7593
      %v7598 = vrsqrt.pop %v7528
      %v7599 = vmul.f32 %v7598, %v7528
      %v7600 = vmul.f32 %v7599, %v7598
      %v7601 = vmul.f32 0.5, %v7600
      %v7602 = vsub.f32 1.5, %v7601
      %v7603 = vmul.f32 %v7598, %v7602
      %vm7604 = vweird.f32 %v7528
      %vm7605 = vweird.f32 %v7598
      %vm7606 = vmor %vm7604, %vm7605
      %v7607 = vsel %vm7606, %v7598, %v7603
      %v7608 = vrsqrt.pop %v7529
      %v7609 = vmul.f32 %v7608, %v7529
      %v7610 = vmul.f32 %v7609, %v7608
      %v7611 = vmul.f32 0.5, %v7610
      %v7612 = vsub.f32 1.5, %v7611
      %v7613 = vmul.f32 %v7608, %v7612
      %vm7614 = vweird.f32 %v7529
      %vm7615 = vweird.f32 %v7608
      %vm7616 = vmor %vm7614, %vm7615
      %v7617 = vsel %vm7616, %v7608, %v7613
      %v7618 = vrsqrt.pop %v7530
      %v7619 = vmul.f32 %v7618, %v7530
      %v7620 = vmul.f32 %v7619, %v7618
      %v7621 = vmul.f32 0.5, %v7620
      %v7622 = vsub.f32 1.5, %v7621
      %v7623 = vmul.f32 %v7618, %v7622
      %vm7624 = vweird.f32 %v7530
      %vm7625 = vweird.f32 %v7618
      %vm7626 = vmor %vm7624, %vm7625
      %v7627 = vsel %vm7626, %v7618, %v7623
      %v7628 = vrsqrt.pop %v7531
      %v7629 = vmul.f32 %v7628, %v7531
      %v7630 = vmul.f32 %v7629, %v7628
      %v7631 = vmul.f32 0.5, %v7630
      %v7632 = vsub.f32 1.5, %v7631
      %v7633 = vmul.f32 %v7628, %v7632
      %vm7634 = vweird.f32 %v7531
      %vm7635 = vweird.f32 %v7628
      %vm7636 = vmor %vm7634, %vm7635
      %v7637 = vsel %vm7636, %v7628, %v7633
      %v7638 = vrsqrt.pop %v7532
      %v7639 = vmul.f32 %v7638, %v7532
      %v7640 = vmul.f32 %v7639, %v7638
      %v7641 = vmul.f32 0.5, %v7640
      %v7642 = vsub.f32 1.5, %v7641
      %v7643 = vmul.f32 %v7638, %v7642
      %vm7644 = vweird.f32 %v7532
      %vm7645 = vweird.f32 %v7638
      %vm7646 = vmor %vm7644, %vm7645
      %v7647 = vsel %vm7646, %v7638, %v7643
      %v7648 = vrsqrt.pop %v7533
      %v7649 = vmul.f32 %v7648, %v7533
      %v7650 = vmul.f32 %v7649, %v7648
      %v7651 = vmul.f32 0.5, %v7650
      %v7652 = vsub.f32 1.5, %v7651
      %v7653 = vmul.f32 %v7648, %v7652
      %vm7654 = vweird.f32 %v7533
      %vm7655 = vweird.f32 %v7648
      %vm7656 = vmor %vm7654, %vm7655
      %v7657 = vsel %vm7656, %v7648, %v7653
      %v7658 = vrsqrt.pop %v7534
      %v7659 = vmul.f32 %v7658, %v7534
      %v7660 = vmul.f32 %v7659, %v7658
      %v7661 = vmul.f32 0.5, %v7660
      %v7662 = vsub.f32 1.5, %v7661
      %v7663 = vmul.f32 %v7658, %v7662
      %vm7664 = vweird.f32 %v7534
      %vm7665 = vweird.f32 %v7658
      %vm7666 = vmor %vm7664, %vm7665
      %v7667 = vsel %vm7666, %v7658, %v7663
      %v7668 = vrsqrt.pop %v7535
      %v7669 = vmul.f32 %v7668, %v7535
      %v7670 = vmul.f32 %v7669, %v7668
      %v7671 = vmul.f32 0.5, %v7670
      %v7672 = vsub.f32 1.5, %v7671
      %v7673 = vmul.f32 %v7668, %v7672
      %vm7674 = vweird.f32 %v7535
      %vm7675 = vweird.f32 %v7668
      %vm7676 = vmor %vm7674, %vm7675
      %v7677 = vsel %vm7676, %v7668, %v7673
      %v7678 = vrsqrt.pop %v7536
      %v7679 = vmul.f32 %v7678, %v7536
      %v7680 = vmul.f32 %v7679, %v7678
      %v7681 = vmul.f32 0.5, %v7680
      %v7682 = vsub.f32 1.5, %v7681
      %v7683 = vmul.f32 %v7678, %v7682
      %vm7684 = vweird.f32 %v7536
      %vm7685 = vweird.f32 %v7678
      %vm7686 = vmor %vm7684, %vm7685
      %v7687 = vsel %vm7686, %v7678, %v7683
      %v7688 = vrsqrt.pop %v7537
      %v7689 = vmul.f32 %v7688, %v7537
      %v7690 = vmul.f32 %v7689, %v7688
      %v7691 = vmul.f32 0.5, %v7690
      %v7692 = vsub.f32 1.5, %v7691
      %v7693 = vmul.f32 %v7688, %v7692
      %vm7694 = vweird.f32 %v7537
      %vm7695 = vweird.f32 %v7688
      %vm7696 = vmor %vm7694, %vm7695
      %v7697 = vsel %vm7696, %v7688, %v7693
      %v7698 = vmul.f32 %v7426, %v7547
      %v7699 = vmul.f32 %v7427, %v7557
      %v7700 = vmul.f32 %v7428, %v7567
      %v7701 = vmul.f32 %v7429, %v7577
      %v7702 = vmul.f32 %v7430, %v7587
      %v7703 = vmul.f32 %v7431, %v7597
      %v7704 = vmul.f32 %v7432, %v7607
      %v7705 = vmul.f32 %v7433, %v7617
      %v7706 = vmul.f32 %v7434, %v7627
      %v7707 = vmul.f32 %v7435, %v7637
      %v7708 = vmul.f32 %v7436, %v7647
      %v7709 = vmul.f32 %v7437, %v7657
      %v7710 = vmul.f32 %v7438, %v7667
      %v7711 = vmul.f32 %v7439, %v7677
      %v7712 = vmul.f32 %v7440, %v7687
      %v7713 = vmul.f32 %v7441, %v7697
      %v7714 = vld [vmem:[%s5] sm:$0x1]
      %v7716 = vperm.slane %v7714, 0
      %v7718 = vmul.f32 %v7698, %v7716
      %v7719 = vmul.f32 %v7699, %v7716
      %v7720 = vmul.f32 %v7700, %v7716
      %v7721 = vmul.f32 %v7701, %v7716
      %v7722 = vmul.f32 %v7702, %v7716
      %v7723 = vmul.f32 %v7703, %v7716
      %v7724 = vmul.f32 %v7704, %v7716
      %v7725 = vmul.f32 %v7705, %v7716
      %v7726 = vmul.f32 %v7706, %v7716
      %v7727 = vmul.f32 %v7707, %v7716
      %v7728 = vmul.f32 %v7708, %v7716
      %v7729 = vmul.f32 %v7709, %v7716
      %v7730 = vmul.f32 %v7710, %v7716
      %v7731 = vmul.f32 %v7711, %v7716
      %v7732 = vmul.f32 %v7712, %v7716
      %v7733 = vmul.f32 %v7713, %v7716
      %v7734 = vld [vmem:[%s6] sm:$0x1]
      %v7736 = vperm.slane %v7734, 0
      %v7738 = vadd.f32 %v7718, %v7736
      %v7739 = vadd.f32 %v7719, %v7736
      %v7740 = vadd.f32 %v7720, %v7736
      %v7741 = vadd.f32 %v7721, %v7736
      %v7742 = vadd.f32 %v7722, %v7736
      %v7743 = vadd.f32 %v7723, %v7736
      %v7744 = vadd.f32 %v7724, %v7736
      %v7745 = vadd.f32 %v7725, %v7736
      %v7746 = vadd.f32 %v7726, %v7736
      %v7747 = vadd.f32 %v7727, %v7736
      %v7748 = vadd.f32 %v7728, %v7736
      %v7749 = vadd.f32 %v7729, %v7736
      %v7750 = vadd.f32 %v7730, %v7736
      %v7751 = vadd.f32 %v7731, %v7736
      %v7752 = vadd.f32 %v7732, %v7736
      %v7753 = vadd.f32 %v7733, %v7736
      %v7754 = vadd.f32 %v7738, %v284
      %v7755 = vadd.f32 %v7739, %v285
      %v7756 = vadd.f32 %v7740, %v286
      %v7757 = vadd.f32 %v7741, %v287
      %v7758 = vadd.f32 %v7742, %v288
      %v7759 = vadd.f32 %v7743, %v289
      %v7760 = vadd.f32 %v7744, %v290
      %v7761 = vadd.f32 %v7745, %v291
      %v7762 = vadd.f32 %v7746, %v292
      %v7763 = vadd.f32 %v7747, %v293
      %v7764 = vadd.f32 %v7748, %v294
      %v7765 = vadd.f32 %v7749, %v295
      %v7766 = vadd.f32 %v7750, %v296
      %v7767 = vadd.f32 %v7751, %v297
      %v7768 = vadd.f32 %v7752, %v298
      %v7769 = vadd.f32 %v7753, %v299
      %7774 = vrot.lane.b32.xlu0 %v7758, 32
      %v7775 = vpop.permute.xlu0 %7774
      %7776 = vrot.lane.b32.xlu0 %v7759, 32
      %v7777 = vpop.permute.xlu0 %7776
      %7778 = vrot.lane.b32.xlu0 %v7760, 32
      %v7779 = vpop.permute.xlu0 %7778
      %7780 = vrot.lane.b32.xlu0 %v7761, 32
      %v7781 = vpop.permute.xlu0 %7780
      %7790 = vrot.lane.b32.xlu0 %v7762, 64
      %v7791 = vpop.permute.xlu0 %7790
      %7792 = vrot.lane.b32.xlu0 %v7763, 64
      %v7793 = vpop.permute.xlu0 %7792
      %7794 = vrot.lane.b32.xlu0 %v7764, 64
      %v7795 = vpop.permute.xlu0 %7794
      %7796 = vrot.lane.b32.xlu0 %v7765, 64
      %v7797 = vpop.permute.xlu0 %7796
      %7806 = vrot.lane.b32.xlu0 %v7766, 96
      %v7807 = vpop.permute.xlu0 %7806
      %7808 = vrot.lane.b32.xlu0 %v7767, 96
      %v7809 = vpop.permute.xlu0 %7808
      %7810 = vrot.lane.b32.xlu0 %v7768, 96
      %v7811 = vpop.permute.xlu0 %7810
      %7812 = vrot.lane.b32.xlu0 %v7769, 96
      %v7813 = vpop.permute.xlu0 %7812
      %v7818 = vsel %vm793, %v7754, %v7775
      %v7819 = vsel %vm793, %v7755, %v7777
      %v7820 = vsel %vm793, %v7756, %v7779
      %v7821 = vsel %vm793, %v7757, %v7781
      %v7822 = vsel %vm807, %v7818, %v7791
      %v7823 = vsel %vm807, %v7819, %v7793
      %v7824 = vsel %vm807, %v7820, %v7795
      %v7825 = vsel %vm807, %v7821, %v7797
      %v7826 = vsel %vm824, %v7822, %v7807
      %v7827 = vsel %vm824, %v7823, %v7809
      %v7828 = vsel %vm824, %v7824, %v7811
      %v7829 = vsel %vm824, %v7825, %v7813
      %7830 = vst [vmem:[%s283] sm:$0xff] %v7826
      %7831 = vst [vmem:[%s283 + $0x8] sm:$0xff] %v7827
      %7832 = vst [vmem:[%s283 + $0x10] sm:$0xff] %v7828
      %7833 = vst [vmem:[%s283 + $0x18] sm:$0xff] %v7829
      %p7834 = scmp.lt.s32.totalorder %s18, 1
      %s7835 = scalar_select %p7834, %s18, 1
      %s7836 = smul.addr %s7835, 4
      %s7837 = smul.addr %s7836, 8
      %s7838 = scalar_lea.vmem %s7, %s7837
      // Predicated region
      $region49: #{tcn_forward.1} parent=47 // pred_check
        %p7839 = pneg %p188
      $region50: #{tcn_forward.1} parent=47 // pred_check_branch
        %7841 = sbr.rel (%p7839) target = $region52
      $region51: #{tcn_forward.1} parent=47 // pred_region
        _
      $region52: #{tcn_forward.1} parent=47 // pred_fallthru
        _
    $region48: #{tcn_forward.1} parent=5 // pred_fallthru
      _
    %p7842 = scmp.le.s32.totalorder 2, %s13
    // Predicated region
    $region53: #{tcn_forward.1} parent=5 // pred_check
      %p7843 = pneg %p7842
    $region54: #{tcn_forward.1} parent=5 // pred_check_branch
      %7845 = sbr.rel (%p7843) target = $region56
    $region55: #{tcn_forward.1} parent=5 // pred_region
      %s7846 = ssub.s32 %s13, 2
      // Predicated region
      $region57: #{tcn_forward.1} parent=55 // pred_check
        %p7847 = pneg %p194
      $region58: #{tcn_forward.1} parent=55 // pred_check_branch
        %7849 = sbr.rel (%p7847) target = $region60
      $region59: #{tcn_forward.1} parent=55 // pred_region
        %p7850 = scmp.lt.s32.totalorder %s19, 1
        %s7851 = scalar_select %p7850, %s19, 1
        %s7852 = smul.addr %s7851, 4
        %s7853 = smul.addr %s7852, 8
        %s7854 = scalar_lea.vmem %s7, %s7853
      $region60: #{tcn_forward.1} parent=55 // pred_fallthru
        _
    $region56: #{tcn_forward.1} parent=5 // pred_fallthru
      _
  $region6: #{tcn_forward.1} parent=0 // loop_footer
    %s17 = sadd.s32 1, %s13
  $region7: #{tcn_forward.1} parent=0 // loop_footer_branch
    %12 = sbr.rel target = $region3
  $region8: #{tcn_forward.1} parent=0 // loop_exit
    _

</llo_original>
